<compile_context>
chip_gen: v7x
topology: tpu7x:2x2x1
jax: 0.10.0
libtpu: 0.0.40
codegen_flags: <defaults>
</compile_context>

<pallas_src>
import math
import numpy as np
import jax
import jax.numpy as jnp
from jax.experimental import pallas as pl
from jax.experimental.pallas import tpu as pltpu


# ----------------------------------------------------------------------------
# Morton-code index computation (host-side, mirrors morton_code_extraction)
# ----------------------------------------------------------------------------
def _spread_bits(v):
    v = (v | (v << 8)) & 0x00FF00FF
    v = (v | (v << 4)) & 0x0F0F0F0F
    v = (v | (v << 2)) & 0x33333333
    v = (v | (v << 1)) & 0x55555555
    return v


def morton_indices(H, W):
    rows, cols = np.meshgrid(np.arange(H, dtype=np.int64),
                             np.arange(W, dtype=np.int64), indexing="ij")
    rows = rows.ravel()
    cols = cols.ravel()
    xs = _spread_bits(cols)
    ys = _spread_bits(rows)
    m1 = (xs << 1) | ys   # interleave_bits(col, row)
    m2 = (ys << 1) | xs   # interleave_bits_x_last(col, row)
    s1 = np.argsort(m1)
    s2 = np.argsort(m2)
    lin1 = rows[s1] * W + cols[s1]
    lin2 = rows[s2] * W + cols[s2]
    return lin1.astype(np.int32), lin2.astype(np.int32)


# ----------------------------------------------------------------------------
# Small helpers
# ----------------------------------------------------------------------------
def _silu(v):
    return v * (1.0 / (1.0 + jnp.exp(-v)))


def _softplus(v):
    return jnp.maximum(v, 0.0) + jnp.log(1.0 + jnp.exp(-jnp.abs(v)))


def _round_up(v, m):
    return ((v + m - 1) // m) * m


def col_layout(d_model, d_state, nheads):
    """Lane-friendly column layout of the zero-padded in_proj output."""
    off_z = 0
    off_x = d_model
    off_b = 2 * d_model
    off_c = off_b + _round_up(d_state, 8)
    off_dt = off_c + _round_up(d_state, 8)
    din_pad = _round_up(off_dt + nheads, 128)
    return (off_z, off_x, off_b, off_c, off_dt), din_pad


# ----------------------------------------------------------------------------
# Fused Pallas kernel
# ----------------------------------------------------------------------------
def build_fused_kernel(d_model, d_state, nheads, headdim, L, offs, bblk):
    C = d_model
    N = d_state
    NH = nheads
    HD = headdim
    off_z, off_x, off_b, off_c, off_dt = offs

    def kernel(x_ref, p_ref, win_ref, wout_ref, vec_ref, scal_ref,
               o_ref, xm_s, y_s):
        # x_ref   : (bblk, C, L)       f32   input block, channel-major
        # p_ref   : (4, L, L)          bf16  [P_H, P_H^T, P_V, P_V^T]
        # win_ref : (2, C, DIN_PAD)    bf16  stacked, zero-padded in_proj weights (H, V)
        # wout_ref: (2C, C)            bf16  out_proj weight
        # vec_ref : (4, C)             f32   [gamma, beta, dt_bias_H(pad), dt_bias_V(pad)]
        # scal_ref: (4*NH,)            f32   SMEM: [A_H, D_H, A_V, D_V]
        # o_ref   : (bblk, C, L)       f32   channel-major output block
        # xm_s    : VMEM (bblk*L, C)   bf16  stacked morton-gathered inputs (reused per branch)
        # y_s     : VMEM (bblk*L, 2C)  f32   [y_H | y_V] slab fed to out_proj

        # Masks / identity built once per grid step (shared by all static sub-loops).
        t_idx = jax.lax.broadcasted_iota(jnp.int32, (L, L), 0)
        s_idx = jax.lax.broadcasted_iota(jnp.int32, (L, L), 1)
        tril_f = (t_idx >= s_idx).astype(jnp.float32)          # causal mask (incl. diag)
        ones_col = jnp.ones((L, 1), jnp.float32)
        ci = jax.lax.broadcasted_iota(jnp.int32, (C, C), 0)
        cj = jax.lax.broadcasted_iota(jnp.int32, (C, C), 1)
        eye_c = (ci == cj).astype(jnp.float32)

        vecs = vec_ref[...]                                    # (4, C) f32
        gamma = vecs[0:1, :]
        beta = vecs[1:2, :]

        x_bf = [x_ref[b].astype(jnp.bfloat16) for b in range(bblk)]   # each (C, L)

        for bi in range(2):                                    # 0 = H branch, 1 = V branch
            p_fwd = p_ref[2 * bi]                              # (L, L) bf16
            p_inv = p_ref[2 * bi + 1]                          # (L, L) bf16
            w_in = win_ref[bi]                                 # (C, DIN_PAD) bf16
            base = 2 * NH * bi                                 # SMEM offset of [A, D]
            dtb_row = vecs[2 + bi:3 + bi, 0:NH]                # (1, NH)

            # Morton gather (+ layout change to token-major), stacked across the batch block.
            for b in range(bblk):
                xm_b = jax.lax.dot_general(
                    p_fwd, x_bf[b], (((1,), (1,)), ((), ())),
                    preferred_element_type=jnp.float32)        # (L, C)
                xm_s[b * L:(b + 1) * L, :] = xm_b.astype(jnp.bfloat16)

            # One lane-dense in_proj matmul for the whole batch block (M = bblk*L, N = 128k).
            zx = jnp.dot(xm_s[...], w_in,
                         preferred_element_type=jnp.float32)   # (bblk*L, DIN_PAD)
            z_all = zx[:, off_z:off_z + C]                     # (bblk*L, C)
            xs_all = _silu(zx[:, off_x:off_x + C])             # (bblk*L, C)
            B_all = _silu(zx[:, off_b:off_b + N])              # (bblk*L, N)
            C_all = _silu(zx[:, off_c:off_c + N])              # (bblk*L, N)
            dt_all = _softplus(zx[:, off_dt:off_dt + NH] + dtb_row)   # (bblk*L, NH)

            for b in range(bblk):                              # static per-batch SSD loop
                r0, r1 = b * L, (b + 1) * L
                # CB[t, s] = C[t] . B[s]  (g = 1, shared across heads); causal mask folded once.
                cb = jax.lax.dot_general(
                    C_all[r0:r1].astype(jnp.bfloat16),
                    B_all[r0:r1].astype(jnp.bfloat16),
                    (((1,), (1,)), ((), ())),
                    preferred_element_type=jnp.float32) * tril_f        # (L, L)
                dt_b = dt_all[r0:r1]                                     # (L, NH)
                # Inclusive cumsum of dt for all heads with one skinny f32 matmul.
                cum = jnp.dot(tril_f, dt_b,
                              preferred_element_type=jnp.float32)        # (L, NH)
                for h in range(NH):                                      # static head loop
                    A = scal_ref[base + h]                               # scalar (SMEM)
                    Dv = scal_ref[base + NH + h]
                    cum_h = cum[:, h:h + 1]                              # (L, 1)
                    # Row-broadcast cum[s] via a rank-1 matmul (robust lane relayout).
                    cum_row = jax.lax.dot_general(
                        ones_col, cum_h, (((1,), (1,)), ((), ())),
                        preferred_element_type=jnp.float32)              # (L, L) = cum[s]
                    # Decay exp(A*(cum[t]-cum[s])); clamp so the masked (t<s) area is
                    # exp(0)*0 instead of inf*0.
                    ldec = jnp.exp(jnp.minimum(A * (cum_h - cum_row), 0.0))
                    m = (cb * ldec).astype(jnp.bfloat16)                 # (L, L)
                    xh = xs_all[r0:r1, h * HD:(h + 1) * HD]              # (L, HD)
                    xdt = (xh * dt_b[:, h:h + 1]).astype(jnp.bfloat16)   # dt[s] folded into x
                    y_h = jnp.dot(m, xdt,
                                  preferred_element_type=jnp.float32)    # (L, HD)
                    y_h = y_h + Dv * xh                                  # D skip
                    y_h = y_h * _silu(z_all[r0:r1, h * HD:(h + 1) * HD])  # z gating
                    # Inverse morton reorder (row permutation) per head; write straight into
                    # the (bblk*L, 2C) slab at a fixed column offset (no narrow concats).
                    y_nat = jnp.dot(p_inv, y_h.astype(jnp.bfloat16),
                                    preferred_element_type=jnp.float32)  # (L, HD)
                    y_s[r0:r1, bi * C + h * HD: bi * C + (h + 1) * HD] = y_nat

        # out_proj + LayerNorm over the whole batch block (M = bblk*L).
        out = jnp.dot(y_s[...].astype(jnp.bfloat16), wout_ref[...],
                      preferred_element_type=jnp.float32)                # (bblk*L, C)
        mu = jnp.mean(out, axis=-1, keepdims=True)
        var = jnp.mean((out - mu) ** 2, axis=-1, keepdims=True)
        ln = (out - mu) * jax.lax.rsqrt(var + 1e-6) * gamma + beta       # (bblk*L, C)

        # Channel-major store: transpose fused in-kernel via an exact f32 identity matmul
        # (so the wrapper needs no XLA transpose and the output store is lane-dense in L).
        ln_t = jax.lax.dot_general(eye_c, ln, (((1,), (1,)), ((), ())),
                                   preferred_element_type=jnp.float32)   # (C, bblk*L)
        for b in range(bblk):
            o_ref[b] = ln_t[:, b * L:(b + 1) * L]

    return kernel


# ----------------------------------------------------------------------------
# Parameters (deterministic, in-script) and forward
# ----------------------------------------------------------------------------
def init_params(key, d_model=32, d_state=4, headdim=16, H=8, W=8,
                dt_min=0.001, dt_max=0.1, dt_init_floor=1e-4):
    assert d_model % headdim == 0
    nheads = d_model // headdim
    d_in_proj = 2 * d_model + 2 * d_state + nheads
    L = H * W
    offs, din_pad = col_layout(d_model, d_state, nheads)
    off_z, off_x, off_b, off_c, off_dt = offs
    C, N = d_model, d_state
    ks = jax.random.split(key, 7)

    s_in = 1.0 / math.sqrt(d_model)
    s_out = 1.0 / math.sqrt(2 * d_model)
    W_in_H = jax.random.uniform(ks[0], (d_model, d_in_proj), jnp.float32, -s_in, s_in)
    W_in_V = jax.random.uniform(ks[1], (d_model, d_in_proj), jnp.float32, -s_in, s_in)
    W_out = jax.random.uniform(ks[2], (2 * d_model, d_model), jnp.float32, -s_out, s_out)

    def pack_in(w):
        """Scatter the (C, d_in_proj) weight into the zero-padded, lane-aligned layout."""
        wp = jnp.zeros((C, din_pad), jnp.float32)
        wp = wp.at[:, off_z:off_z + C].set(w[:, 0:C])
        wp = wp.at[:, off_x:off_x + C].set(w[:, C:2 * C])
        wp = wp.at[:, off_b:off_b + N].set(w[:, 2 * C:2 * C + N])
        wp = wp.at[:, off_c:off_c + N].set(w[:, 2 * C + N:2 * C + 2 * N])
        wp = wp.at[:, off_dt:off_dt + nheads].set(w[:, 2 * C + 2 * N:2 * C + 2 * N + nheads])
        return wp

    def make_dt_bias(k):
        dt = jnp.exp(jax.random.uniform(k, (nheads,), jnp.float32)
                     * (math.log(dt_max) - math.log(dt_min)) + math.log(dt_min))
        dt = jnp.maximum(dt, dt_init_floor)
        return dt + jnp.log(-jnp.expm1(-dt))

    dt_bias_H = make_dt_bias(ks[3])
    dt_bias_V = make_dt_bias(ks[4])
    A_log_H = jnp.log(jax.random.uniform(ks[5], (nheads,), jnp.float32, 1.0, 16.0))
    A_log_V = jnp.log(jax.random.uniform(ks[6], (nheads,), jnp.float32, 1.0, 16.0))
    D_H = jnp.ones((nheads,), jnp.float32)
    D_V = jnp.ones((nheads,), jnp.float32)

    # Morton permutation matrices (forward gather and its inverse as the transpose), bf16.
    mH, mV = morton_indices(H, W)
    PH = np.zeros((L, L), np.float32)
    PH[np.arange(L), mH] = 1.0
    PV = np.zeros((L, L), np.float32)
    PV[np.arange(L), mV] = 1.0
    p_stack = jnp.asarray(np.stack([PH, PH.T, PV, PV.T]), dtype=jnp.bfloat16)   # (4, L, L)

    # Small vector table: [LN gamma, LN beta, dt_bias_H (zero-padded), dt_bias_V (zero-padded)].
    vecs = jnp.zeros((4, C), jnp.float32)
    vecs = vecs.at[0, :].set(1.0)
    vecs = vecs.at[2, :nheads].set(dt_bias_H)
    vecs = vecs.at[3, :nheads].set(dt_bias_V)

    # Per-head scalar table for SMEM: [A_H, D_H, A_V, D_V] (A = -exp(A_log)).
    scalars = jnp.concatenate([
        -jnp.exp(A_log_H), D_H,
        -jnp.exp(A_log_V), D_V]).astype(jnp.float32)                            # (4*nheads,)

    return dict(
        d_model=d_model, d_state=d_state, nheads=nheads, headdim=headdim,
        L=L, din_pad=din_pad, offs=offs,
        w_in=jnp.stack([pack_in(W_in_H), pack_in(W_in_V)]).astype(jnp.bfloat16),  # (2, C, DIN_PAD)
        w_out=W_out.astype(jnp.bfloat16),                                          # (2C, C)
        vecs=vecs,                                                                  # (4, C)
        p_stack=p_stack,                                                            # (4, L, L)
        scalars=scalars,                                                            # (4*NH,)
    )


def second_mamba_block_forward(x, params, batch_block=None):
    B, C, H, W = x.shape
    L = H * W
    assert C == params["d_model"] and L == params["L"]
    din_pad = params["din_pad"]

    if batch_block is None:
        # Largest divisor of B up to 8 that still leaves >= 2 grid steps
        # (so both v7x TensorCores get work via the "parallel" grid axis).
        batch_block = 1
        for cand in (8, 4, 2):
            if B % cand == 0 and B // cand >= 2:
                batch_block = cand
                break
    assert B % batch_block == 0
    grid = (B // batch_block,)

    kernel = build_fused_kernel(C, params["d_state"], params["nheads"],
                                params["headdim"], L, params["offs"], batch_block)

    x_cl = x.reshape(B, C, L)   # channel-major; the in-kernel permutation matmul handles layout

    out = pl.pallas_call(
        kernel,
        out_shape=jax.ShapeDtypeStruct((B, C, L), jnp.float32),
        grid=grid,
        in_specs=[
            pl.BlockSpec((batch_block, C, L), lambda g: (g, 0, 0)),     # x (batch block)
            pl.BlockSpec((4, L, L), lambda g: (0, 0, 0)),               # morton perms (bf16)
            pl.BlockSpec((2, C, din_pad), lambda g: (0, 0, 0)),         # in_proj weights (bf16)
            pl.BlockSpec((2 * C, C), lambda g: (0, 0)),                 # out_proj weight (bf16)
            pl.BlockSpec((4, C), lambda g: (0, 0)),                     # gamma/beta/dt_bias
            pl.BlockSpec(memory_space=pltpu.MemorySpace.SMEM),          # per-head scalars
        ],
        out_specs=pl.BlockSpec((batch_block, C, L), lambda g: (g, 0, 0)),
        scratch_shapes=[
            pltpu.VMEM((batch_block * L, C), jnp.bfloat16),             # stacked morton input
            pltpu.VMEM((batch_block * L, 2 * C), jnp.float32),          # [y_H | y_V] slab
        ],
        compiler_params=pltpu.CompilerParams(dimension_semantics=("parallel",)),
    )(x_cl, params["p_stack"], params["w_in"], params["w_out"],
      params["vecs"], params["scalars"])

    # Output is already channel-major (B, C, L): free reshape only, no XLA transpose.
    return out.reshape(B, C, H, W)


if __name__ == "__main__":
    key = jax.random.PRNGKey(0)
    pkey, xkey = jax.random.split(key)
    d_model, d_state, headdim, H, W, B = 32, 4, 16, 8, 8, 4
    params = init_params(pkey, d_model=d_model, d_state=d_state, headdim=headdim, H=H, W=W)
    x = jax.random.normal(xkey, (B, d_model, H, W), jnp.float32)
    out = second_mamba_block_forward(x, params)
    jax.block_until_ready(out)
    assert out.shape == (B, d_model, H, W)
    assert bool(jnp.all(jnp.isfinite(out)))
    print("KERNEL_OK")
</pallas_src>

<mosaic_0001>
module attributes {stable_mosaic.version = 11 : i64} {
  func.func @kernel(%arg0: i32, %arg1: memref<2x32x64xf32, #tpu.memory_space<vmem>>, %arg2: memref<4x64x64xbf16, #tpu.memory_space<vmem>>, %arg3: memref<2x32x128xbf16, #tpu.memory_space<vmem>>, %arg4: memref<64x32xbf16, #tpu.memory_space<vmem>>, %arg5: memref<4x32xf32, #tpu.memory_space<vmem>>, %arg6: memref<8xf32, #tpu.memory_space<smem>>, %arg7: memref<2x32x64xf32, #tpu.memory_space<vmem>>, %arg8: memref<128x32xbf16, #tpu.memory_space<vmem>>, %arg9: memref<128x64xf32, #tpu.memory_space<vmem>>) attributes {dimension_semantics = [#tpu.dimension_semantics<parallel>], iteration_bounds = array<i64: 2>, scalar_prefetch = 0 : i64, scratch_operands = 2 : i64, tpu.core_type = #tpu.core_type<tc>, window_params = [{transform_indices = @transform_0, window_bounds = array<i64: 2, 32, 64>}, {pipeline_mode = #tpu.pipeline_mode<synchronous>, transform_indices = @transform_1, window_bounds = array<i64: 4, 64, 64>}, {pipeline_mode = #tpu.pipeline_mode<synchronous>, transform_indices = @transform_2, window_bounds = array<i64: 2, 32, 128>}, {pipeline_mode = #tpu.pipeline_mode<synchronous>, transform_indices = @transform_3, window_bounds = array<i64: 64, 32>}, {pipeline_mode = #tpu.pipeline_mode<synchronous>, transform_indices = @transform_4, window_bounds = array<i64: 4, 32>}, {transform_indices = @transform_5, window_bounds = array<i64: 8>}, {transform_indices = @transform_6, window_bounds = array<i64: 2, 32, 64>}]} {
    %0 = tpu.iota {dimensions = array<i32: 0>} : vector<64x64xi32>
    %1 = tpu.iota {dimensions = array<i32: 1>} : vector<64x64xi32>
    %2 = arith.cmpi sge, %0, %1 : vector<64x64xi32>
    %3 = arith.extui %2 : vector<64x64xi1> to vector<64x64xi32>
    %4 = arith.sitofp %3 : vector<64x64xi32> to vector<64x64xf32>
    %cst = arith.constant 1.000000e+00 : f32
    %5 = vector.broadcast %cst : f32 to vector<64x1xf32>
    %6 = tpu.iota {dimensions = array<i32: 0>} : vector<32x32xi32>
    %7 = tpu.iota {dimensions = array<i32: 1>} : vector<32x32xi32>
    %8 = arith.cmpi eq, %6, %7 : vector<32x32xi32>
    %9 = arith.extui %8 : vector<32x32xi1> to vector<32x32xi32>
    %10 = arith.sitofp %9 : vector<32x32xi32> to vector<32x32xf32>
    %c0 = arith.constant 0 : index
    %c0_0 = arith.constant 0 : index
    %11 = vector.load %arg5[%c0, %c0_0] : memref<4x32xf32, #tpu.memory_space<vmem>>, vector<4x32xf32>
    %12 = vector.extract_strided_slice %11 {offsets = [0, 0], sizes = [1, 32], strides = [1, 1]} : vector<4x32xf32> to vector<1x32xf32>
    %13 = vector.extract_strided_slice %11 {offsets = [1, 0], sizes = [1, 32], strides = [1, 1]} : vector<4x32xf32> to vector<1x32xf32>
    %c0_1 = arith.constant 0 : index
    %c0_2 = arith.constant 0 : index
    %c0_3 = arith.constant 0 : index
    %14 = vector.load %arg1[%c0_1, %c0_2, %c0_3] : memref<2x32x64xf32, #tpu.memory_space<vmem>>, vector<1x32x64xf32>
    %15 = vector.shape_cast %14 : vector<1x32x64xf32> to vector<32x64xf32>
    %16 = arith.truncf %15 : vector<32x64xf32> to vector<32x64xbf16>
    %c1 = arith.constant 1 : index
    %c0_4 = arith.constant 0 : index
    %c0_5 = arith.constant 0 : index
    %17 = vector.load %arg1[%c1, %c0_4, %c0_5] : memref<2x32x64xf32, #tpu.memory_space<vmem>>, vector<1x32x64xf32>
    %18 = vector.shape_cast %17 : vector<1x32x64xf32> to vector<32x64xf32>
    %19 = arith.truncf %18 : vector<32x64xf32> to vector<32x64xbf16>
    %c0_6 = arith.constant 0 : index
    %c0_7 = arith.constant 0 : index
    %c0_8 = arith.constant 0 : index
    %20 = vector.load %arg2[%c0_6, %c0_7, %c0_8] : memref<4x64x64xbf16, #tpu.memory_space<vmem>>, vector<1x64x64xbf16>
    %21 = vector.shape_cast %20 : vector<1x64x64xbf16> to vector<64x64xbf16>
    %c1_9 = arith.constant 1 : index
    %c0_10 = arith.constant 0 : index
    %c0_11 = arith.constant 0 : index
    %22 = vector.load %arg2[%c1_9, %c0_10, %c0_11] : memref<4x64x64xbf16, #tpu.memory_space<vmem>>, vector<1x64x64xbf16>
    %23 = vector.shape_cast %22 : vector<1x64x64xbf16> to vector<64x64xbf16>
    %c0_12 = arith.constant 0 : index
    %c0_13 = arith.constant 0 : index
    %c0_14 = arith.constant 0 : index
    %24 = vector.load %arg3[%c0_12, %c0_13, %c0_14] : memref<2x32x128xbf16, #tpu.memory_space<vmem>>, vector<1x32x128xbf16>
    %25 = vector.shape_cast %24 : vector<1x32x128xbf16> to vector<32x128xbf16>
    %26 = vector.extract_strided_slice %11 {offsets = [2, 0], sizes = [1, 2], strides = [1, 1]} : vector<4x32xf32> to vector<1x2xf32>
    %cst_15 = arith.constant dense<0.000000e+00> : vector<64x32xf32>
    %27 = tpu.matmul %21, %16, %cst_15 {dimension_numbers = #tpu.dot_dimension_numbers<[1], [1], [0], [0], [0, 0, 1, 0], [], []>} : vector<64x64xbf16>, vector<32x64xbf16>, vector<64x32xf32> -> vector<64x32xf32>
    %28 = arith.truncf %27 : vector<64x32xf32> to vector<64x32xbf16>
    %c0_16 = arith.constant 0 : index
    %c0_17 = arith.constant 0 : index
    %29 = vector.load %arg8[%c0_16, %c0_17] : memref<128x32xbf16, #tpu.memory_space<vmem>>, vector<64x32xbf16>
    tpu.vector_store %arg8[%c0_16, %c0_17], %28 {strides = array<i32>} : memref<128x32xbf16, #tpu.memory_space<vmem>>, vector<64x32xbf16>,
    %cst_18 = arith.constant dense<0.000000e+00> : vector<64x32xf32>
    %30 = tpu.matmul %21, %19, %cst_18 {dimension_numbers = #tpu.dot_dimension_numbers<[1], [1], [0], [0], [0, 0, 1, 0], [], []>} : vector<64x64xbf16>, vector<32x64xbf16>, vector<64x32xf32> -> vector<64x32xf32>
    %31 = arith.truncf %30 : vector<64x32xf32> to vector<64x32xbf16>
    %c64 = arith.constant 64 : index
    %c0_19 = arith.constant 0 : index
    %32 = vector.load %arg8[%c64, %c0_19] : memref<128x32xbf16, #tpu.memory_space<vmem>>, vector<64x32xbf16>
    tpu.vector_store %arg8[%c64, %c0_19], %31 {strides = array<i32>} : memref<128x32xbf16, #tpu.memory_space<vmem>>, vector<64x32xbf16>,
    %c0_20 = arith.constant 0 : index
    %c0_21 = arith.constant 0 : index
    %33 = vector.load %arg8[%c0_20, %c0_21] : memref<128x32xbf16, #tpu.memory_space<vmem>>, vector<128x32xbf16>
    %cst_22 = arith.constant dense<0.000000e+00> : vector<128x128xf32>
    %34 = tpu.matmul %33, %25, %cst_22 {dimension_numbers = #tpu.dot_dimension_numbers<[1], [0], [0], [1], [0, 0, 1, 1], [], []>} : vector<128x32xbf16>, vector<32x128xbf16>, vector<128x128xf32> -> vector<128x128xf32>
    %35 = vector.extract_strided_slice %34 {offsets = [0, 0], sizes = [128, 32], strides = [1, 1]} : vector<128x128xf32> to vector<128x32xf32>
    %36 = vector.extract_strided_slice %34 {offsets = [0, 32], sizes = [128, 32], strides = [1, 1]} : vector<128x128xf32> to vector<128x32xf32>
    %cst_23 = arith.constant 0.000000e+00 : f32
    %37 = vector.broadcast %cst_23 : f32 to vector<128x32xf32>
    %38 = arith.subf %37, %36 : vector<128x32xf32>
    %39 = math.exp %38 : vector<128x32xf32>
    %cst_24 = arith.constant 1.000000e+00 : f32
    %40 = vector.broadcast %cst_24 : f32 to vector<128x32xf32>
    %41 = arith.addf %40, %39 : vector<128x32xf32>
    %cst_25 = arith.constant 1.000000e+00 : f32
    %42 = vector.broadcast %cst_25 : f32 to vector<128x32xf32>
    %43 = arith.divf %42, %41 : vector<128x32xf32>
    %44 = arith.mulf %36, %43 : vector<128x32xf32>
    %45 = vector.extract_strided_slice %34 {offsets = [0, 64], sizes = [128, 4], strides = [1, 1]} : vector<128x128xf32> to vector<128x4xf32>
    %cst_26 = arith.constant 0.000000e+00 : f32
    %46 = vector.broadcast %cst_26 : f32 to vector<128x4xf32>
    %47 = arith.subf %46, %45 : vector<128x4xf32>
    %48 = math.exp %47 : vector<128x4xf32>
    %cst_27 = arith.constant 1.000000e+00 : f32
    %49 = vector.broadcast %cst_27 : f32 to vector<128x4xf32>
    %50 = arith.addf %49, %48 : vector<128x4xf32>
    %cst_28 = arith.constant 1.000000e+00 : f32
    %51 = vector.broadcast %cst_28 : f32 to vector<128x4xf32>
    %52 = arith.divf %51, %50 : vector<128x4xf32>
    %53 = arith.mulf %45, %52 : vector<128x4xf32>
    %54 = vector.extract_strided_slice %34 {offsets = [0, 72], sizes = [128, 4], strides = [1, 1]} : vector<128x128xf32> to vector<128x4xf32>
    %cst_29 = arith.constant 0.000000e+00 : f32
    %55 = vector.broadcast %cst_29 : f32 to vector<128x4xf32>
    %56 = arith.subf %55, %54 : vector<128x4xf32>
    %57 = math.exp %56 : vector<128x4xf32>
    %cst_30 = arith.constant 1.000000e+00 : f32
    %58 = vector.broadcast %cst_30 : f32 to vector<128x4xf32>
    %59 = arith.addf %58, %57 : vector<128x4xf32>
    %cst_31 = arith.constant 1.000000e+00 : f32
    %60 = vector.broadcast %cst_31 : f32 to vector<128x4xf32>
    %61 = arith.divf %60, %59 : vector<128x4xf32>
    %62 = arith.mulf %54, %61 : vector<128x4xf32>
    %63 = vector.extract_strided_slice %34 {offsets = [0, 80], sizes = [128, 2], strides = [1, 1]} : vector<128x128xf32> to vector<128x2xf32>
    %64 = vector.broadcast %26 : vector<1x2xf32> to vector<128x2xf32>
    %65 = arith.addf %63, %64 : vector<128x2xf32>
    %cst_32 = arith.constant 0.000000e+00 : f32
    %66 = vector.broadcast %cst_32 : f32 to vector<128x2xf32>
    %67 = arith.maximumf %65, %66 : vector<128x2xf32>
    %68 = math.absf %65 : vector<128x2xf32>
    %cst_33 = arith.constant 0.000000e+00 : f32
    %69 = vector.broadcast %cst_33 : f32 to vector<128x2xf32>
    %70 = arith.subf %69, %68 : vector<128x2xf32>
    %71 = math.exp %70 : vector<128x2xf32>
    %cst_34 = arith.constant 1.000000e+00 : f32
    %72 = vector.broadcast %cst_34 : f32 to vector<128x2xf32>
    %73 = arith.addf %72, %71 : vector<128x2xf32>
    %74 = math.log %73 : vector<128x2xf32>
    %75 = arith.addf %67, %74 : vector<128x2xf32>
    %76 = vector.extract_strided_slice %62 {offsets = [0, 0], sizes = [64, 4], strides = [1, 1]} : vector<128x4xf32> to vector<64x4xf32>
    %77 = arith.truncf %76 : vector<64x4xf32> to vector<64x4xbf16>
    %78 = vector.extract_strided_slice %53 {offsets = [0, 0], sizes = [64, 4], strides = [1, 1]} : vector<128x4xf32> to vector<64x4xf32>
    %79 = arith.truncf %78 : vector<64x4xf32> to vector<64x4xbf16>
    %cst_35 = arith.constant dense<0.000000e+00> : vector<64x64xf32>
    %80 = tpu.matmul %77, %79, %cst_35 {dimension_numbers = #tpu.dot_dimension_numbers<[1], [1], [0], [0], [0, 0, 1, 0], [], []>} : vector<64x4xbf16>, vector<64x4xbf16>, vector<64x64xf32> -> vector<64x64xf32>
    %81 = arith.mulf %80, %4 : vector<64x64xf32>
    %82 = vector.extract_strided_slice %75 {offsets = [0, 0], sizes = [64, 2], strides = [1, 1]} : vector<128x2xf32> to vector<64x2xf32>
    %cst_36 = arith.constant dense<0.000000e+00> : vector<64x2xf32>
    %83 = tpu.matmul %4, %82, %cst_36 {dimension_numbers = #tpu.dot_dimension_numbers<[1], [0], [0], [1], [0, 0, 1, 1], [], []>} : vector<64x64xf32>, vector<64x2xf32>, vector<64x2xf32> -> vector<64x2xf32>
    %c0_37 = arith.constant 0 : index
    %84 = memref.load %arg6[%c0_37] : memref<8xf32, #tpu.memory_space<smem>>
    %c2 = arith.constant 2 : index
    %85 = memref.load %arg6[%c2] : memref<8xf32, #tpu.memory_space<smem>>
    %86 = vector.extract_strided_slice %83 {offsets = [0, 0], sizes = [64, 1], strides = [1, 1]} : vector<64x2xf32> to vector<64x1xf32>
    %cst_38 = arith.constant dense<0.000000e+00> : vector<64x64xf32>
    %87 = tpu.matmul %5, %86, %cst_38 {dimension_numbers = #tpu.dot_dimension_numbers<[1], [1], [0], [0], [0, 0, 1, 0], [], []>} : vector<64x1xf32>, vector<64x1xf32>, vector<64x64xf32> -> vector<64x64xf32>
    %88 = vector.broadcast %86 : vector<64x1xf32> to vector<64x64xf32>
    %89 = arith.subf %88, %87 : vector<64x64xf32>
    %90 = vector.broadcast %84 : f32 to vector<64x64xf32>
    %91 = arith.mulf %90, %89 : vector<64x64xf32>
    %cst_39 = arith.constant 0.000000e+00 : f32
    %92 = vector.broadcast %cst_39 : f32 to vector<64x64xf32>
    %93 = arith.minimumf %91, %92 : vector<64x64xf32>
    %94 = math.exp %93 : vector<64x64xf32>
    %95 = arith.mulf %81, %94 : vector<64x64xf32>
    %96 = arith.truncf %95 : vector<64x64xf32> to vector<64x64xbf16>
    %97 = vector.extract_strided_slice %44 {offsets = [0, 0], sizes = [64, 16], strides = [1, 1]} : vector<128x32xf32> to vector<64x16xf32>
    %98 = vector.extract_strided_slice %82 {offsets = [0, 0], sizes = [64, 1], strides = [1, 1]} : vector<64x2xf32> to vector<64x1xf32>
    %99 = vector.broadcast %98 : vector<64x1xf32> to vector<64x16xf32>
    %100 = arith.mulf %97, %99 : vector<64x16xf32>
    %101 = arith.truncf %100 : vector<64x16xf32> to vector<64x16xbf16>
    %cst_40 = arith.constant dense<0.000000e+00> : vector<64x16xf32>
    %102 = tpu.matmul %96, %101, %cst_40 {dimension_numbers = #tpu.dot_dimension_numbers<[1], [0], [0], [1], [0, 0, 1, 1], [], []>} : vector<64x64xbf16>, vector<64x16xbf16>, vector<64x16xf32> -> vector<64x16xf32>
    %103 = vector.broadcast %85 : f32 to vector<64x16xf32>
    %104 = arith.mulf %103, %97 : vector<64x16xf32>
    %105 = arith.addf %102, %104 : vector<64x16xf32>
    %106 = vector.extract_strided_slice %35 {offsets = [0, 0], sizes = [64, 16], strides = [1, 1]} : vector<128x32xf32> to vector<64x16xf32>
    %cst_41 = arith.constant 0.000000e+00 : f32
    %107 = vector.broadcast %cst_41 : f32 to vector<64x16xf32>
    %108 = arith.subf %107, %106 : vector<64x16xf32>
    %109 = math.exp %108 : vector<64x16xf32>
    %cst_42 = arith.constant 1.000000e+00 : f32
    %110 = vector.broadcast %cst_42 : f32 to vector<64x16xf32>
    %111 = arith.addf %110, %109 : vector<64x16xf32>
    %cst_43 = arith.constant 1.000000e+00 : f32
    %112 = vector.broadcast %cst_43 : f32 to vector<64x16xf32>
    %113 = arith.divf %112, %111 : vector<64x16xf32>
    %114 = arith.mulf %106, %113 : vector<64x16xf32>
    %115 = arith.mulf %105, %114 : vector<64x16xf32>
    %116 = arith.truncf %115 : vector<64x16xf32> to vector<64x16xbf16>
    %cst_44 = arith.constant dense<0.000000e+00> : vector<64x16xf32>
    %117 = tpu.matmul %23, %116, %cst_44 {dimension_numbers = #tpu.dot_dimension_numbers<[1], [0], [0], [1], [0, 0, 1, 1], [], []>} : vector<64x64xbf16>, vector<64x16xbf16>, vector<64x16xf32> -> vector<64x16xf32>
    %c0_45 = arith.constant 0 : index
    %c0_46 = arith.constant 0 : index
    %118 = vector.load %arg9[%c0_45, %c0_46] : memref<128x64xf32, #tpu.memory_space<vmem>>, vector<64x16xf32>
    tpu.vector_store %arg9[%c0_45, %c0_46], %117 {strides = array<i32>} : memref<128x64xf32, #tpu.memory_space<vmem>>, vector<64x16xf32>,
    %c1_47 = arith.constant 1 : index
    %119 = memref.load %arg6[%c1_47] : memref<8xf32, #tpu.memory_space<smem>>
    %c3 = arith.constant 3 : index
    %120 = memref.load %arg6[%c3] : memref<8xf32, #tpu.memory_space<smem>>
    %121 = vector.extract_strided_slice %83 {offsets = [0, 1], sizes = [64, 1], strides = [1, 1]} : vector<64x2xf32> to vector<64x1xf32>
    %cst_48 = arith.constant dense<0.000000e+00> : vector<64x64xf32>
    %122 = tpu.matmul %5, %121, %cst_48 {dimension_numbers = #tpu.dot_dimension_numbers<[1], [1], [0], [0], [0, 0, 1, 0], [], []>} : vector<64x1xf32>, vector<64x1xf32>, vector<64x64xf32> -> vector<64x64xf32>
    %123 = vector.broadcast %121 : vector<64x1xf32> to vector<64x64xf32>
    %124 = arith.subf %123, %122 : vector<64x64xf32>
    %125 = vector.broadcast %119 : f32 to vector<64x64xf32>
    %126 = arith.mulf %125, %124 : vector<64x64xf32>
    %cst_49 = arith.constant 0.000000e+00 : f32
    %127 = vector.broadcast %cst_49 : f32 to vector<64x64xf32>
    %128 = arith.minimumf %126, %127 : vector<64x64xf32>
    %129 = math.exp %128 : vector<64x64xf32>
    %130 = arith.mulf %81, %129 : vector<64x64xf32>
    %131 = arith.truncf %130 : vector<64x64xf32> to vector<64x64xbf16>
    %132 = vector.extract_strided_slice %44 {offsets = [0, 16], sizes = [64, 16], strides = [1, 1]} : vector<128x32xf32> to vector<64x16xf32>
    %133 = vector.extract_strided_slice %82 {offsets = [0, 1], sizes = [64, 1], strides = [1, 1]} : vector<64x2xf32> to vector<64x1xf32>
    %134 = vector.broadcast %133 : vector<64x1xf32> to vector<64x16xf32>
    %135 = arith.mulf %132, %134 : vector<64x16xf32>
    %136 = arith.truncf %135 : vector<64x16xf32> to vector<64x16xbf16>
    %cst_50 = arith.constant dense<0.000000e+00> : vector<64x16xf32>
    %137 = tpu.matmul %131, %136, %cst_50 {dimension_numbers = #tpu.dot_dimension_numbers<[1], [0], [0], [1], [0, 0, 1, 1], [], []>} : vector<64x64xbf16>, vector<64x16xbf16>, vector<64x16xf32> -> vector<64x16xf32>
    %138 = vector.broadcast %120 : f32 to vector<64x16xf32>
    %139 = arith.mulf %138, %132 : vector<64x16xf32>
    %140 = arith.addf %137, %139 : vector<64x16xf32>
    %141 = vector.extract_strided_slice %35 {offsets = [0, 16], sizes = [64, 16], strides = [1, 1]} : vector<128x32xf32> to vector<64x16xf32>
    %cst_51 = arith.constant 0.000000e+00 : f32
    %142 = vector.broadcast %cst_51 : f32 to vector<64x16xf32>
    %143 = arith.subf %142, %141 : vector<64x16xf32>
    %144 = math.exp %143 : vector<64x16xf32>
    %cst_52 = arith.constant 1.000000e+00 : f32
    %145 = vector.broadcast %cst_52 : f32 to vector<64x16xf32>
    %146 = arith.addf %145, %144 : vector<64x16xf32>
    %cst_53 = arith.constant 1.000000e+00 : f32
    %147 = vector.broadcast %cst_53 : f32 to vector<64x16xf32>
    %148 = arith.divf %147, %146 : vector<64x16xf32>
    %149 = arith.mulf %141, %148 : vector<64x16xf32>
    %150 = arith.mulf %140, %149 : vector<64x16xf32>
    %151 = arith.truncf %150 : vector<64x16xf32> to vector<64x16xbf16>
    %cst_54 = arith.constant dense<0.000000e+00> : vector<64x16xf32>
    %152 = tpu.matmul %23, %151, %cst_54 {dimension_numbers = #tpu.dot_dimension_numbers<[1], [0], [0], [1], [0, 0, 1, 1], [], []>} : vector<64x64xbf16>, vector<64x16xbf16>, vector<64x16xf32> -> vector<64x16xf32>
    %c0_55 = arith.constant 0 : index
    %c16 = arith.constant 16 : index
    %153 = vector.load %arg9[%c0_55, %c16] : memref<128x64xf32, #tpu.memory_space<vmem>>, vector<64x16xf32>
    tpu.vector_store %arg9[%c0_55, %c16], %152 {strides = array<i32>} : memref<128x64xf32, #tpu.memory_space<vmem>>, vector<64x16xf32>,
    %154 = vector.extract_strided_slice %62 {offsets = [64, 0], sizes = [64, 4], strides = [1, 1]} : vector<128x4xf32> to vector<64x4xf32>
    %155 = arith.truncf %154 : vector<64x4xf32> to vector<64x4xbf16>
    %156 = vector.extract_strided_slice %53 {offsets = [64, 0], sizes = [64, 4], strides = [1, 1]} : vector<128x4xf32> to vector<64x4xf32>
    %157 = arith.truncf %156 : vector<64x4xf32> to vector<64x4xbf16>
    %cst_56 = arith.constant dense<0.000000e+00> : vector<64x64xf32>
    %158 = tpu.matmul %155, %157, %cst_56 {dimension_numbers = #tpu.dot_dimension_numbers<[1], [1], [0], [0], [0, 0, 1, 0], [], []>} : vector<64x4xbf16>, vector<64x4xbf16>, vector<64x64xf32> -> vector<64x64xf32>
    %159 = arith.mulf %158, %4 : vector<64x64xf32>
    %160 = vector.extract_strided_slice %75 {offsets = [64, 0], sizes = [64, 2], strides = [1, 1]} : vector<128x2xf32> to vector<64x2xf32>
    %cst_57 = arith.constant dense<0.000000e+00> : vector<64x2xf32>
    %161 = tpu.matmul %4, %160, %cst_57 {dimension_numbers = #tpu.dot_dimension_numbers<[1], [0], [0], [1], [0, 0, 1, 1], [], []>} : vector<64x64xf32>, vector<64x2xf32>, vector<64x2xf32> -> vector<64x2xf32>
    %c0_58 = arith.constant 0 : index
    %162 = memref.load %arg6[%c0_58] : memref<8xf32, #tpu.memory_space<smem>>
    %c2_59 = arith.constant 2 : index
    %163 = memref.load %arg6[%c2_59] : memref<8xf32, #tpu.memory_space<smem>>
    %164 = vector.extract_strided_slice %161 {offsets = [0, 0], sizes = [64, 1], strides = [1, 1]} : vector<64x2xf32> to vector<64x1xf32>
    %cst_60 = arith.constant dense<0.000000e+00> : vector<64x64xf32>
    %165 = tpu.matmul %5, %164, %cst_60 {dimension_numbers = #tpu.dot_dimension_numbers<[1], [1], [0], [0], [0, 0, 1, 0], [], []>} : vector<64x1xf32>, vector<64x1xf32>, vector<64x64xf32> -> vector<64x64xf32>
    %166 = vector.broadcast %164 : vector<64x1xf32> to vector<64x64xf32>
    %167 = arith.subf %166, %165 : vector<64x64xf32>
    %168 = vector.broadcast %162 : f32 to vector<64x64xf32>
    %169 = arith.mulf %168, %167 : vector<64x64xf32>
    %cst_61 = arith.constant 0.000000e+00 : f32
    %170 = vector.broadcast %cst_61 : f32 to vector<64x64xf32>
    %171 = arith.minimumf %169, %170 : vector<64x64xf32>
    %172 = math.exp %171 : vector<64x64xf32>
    %173 = arith.mulf %159, %172 : vector<64x64xf32>
    %174 = arith.truncf %173 : vector<64x64xf32> to vector<64x64xbf16>
    %175 = vector.extract_strided_slice %44 {offsets = [64, 0], sizes = [64, 16], strides = [1, 1]} : vector<128x32xf32> to vector<64x16xf32>
    %176 = vector.extract_strided_slice %160 {offsets = [0, 0], sizes = [64, 1], strides = [1, 1]} : vector<64x2xf32> to vector<64x1xf32>
    %177 = vector.broadcast %176 : vector<64x1xf32> to vector<64x16xf32>
    %178 = arith.mulf %175, %177 : vector<64x16xf32>
    %179 = arith.truncf %178 : vector<64x16xf32> to vector<64x16xbf16>
    %cst_62 = arith.constant dense<0.000000e+00> : vector<64x16xf32>
    %180 = tpu.matmul %174, %179, %cst_62 {dimension_numbers = #tpu.dot_dimension_numbers<[1], [0], [0], [1], [0, 0, 1, 1], [], []>} : vector<64x64xbf16>, vector<64x16xbf16>, vector<64x16xf32> -> vector<64x16xf32>
    %181 = vector.broadcast %163 : f32 to vector<64x16xf32>
    %182 = arith.mulf %181, %175 : vector<64x16xf32>
    %183 = arith.addf %180, %182 : vector<64x16xf32>
    %184 = vector.extract_strided_slice %35 {offsets = [64, 0], sizes = [64, 16], strides = [1, 1]} : vector<128x32xf32> to vector<64x16xf32>
    %cst_63 = arith.constant 0.000000e+00 : f32
    %185 = vector.broadcast %cst_63 : f32 to vector<64x16xf32>
    %186 = arith.subf %185, %184 : vector<64x16xf32>
    %187 = math.exp %186 : vector<64x16xf32>
    %cst_64 = arith.constant 1.000000e+00 : f32
    %188 = vector.broadcast %cst_64 : f32 to vector<64x16xf32>
    %189 = arith.addf %188, %187 : vector<64x16xf32>
    %cst_65 = arith.constant 1.000000e+00 : f32
    %190 = vector.broadcast %cst_65 : f32 to vector<64x16xf32>
    %191 = arith.divf %190, %189 : vector<64x16xf32>
    %192 = arith.mulf %184, %191 : vector<64x16xf32>
    %193 = arith.mulf %183, %192 : vector<64x16xf32>
    %194 = arith.truncf %193 : vector<64x16xf32> to vector<64x16xbf16>
    %cst_66 = arith.constant dense<0.000000e+00> : vector<64x16xf32>
    %195 = tpu.matmul %23, %194, %cst_66 {dimension_numbers = #tpu.dot_dimension_numbers<[1], [0], [0], [1], [0, 0, 1, 1], [], []>} : vector<64x64xbf16>, vector<64x16xbf16>, vector<64x16xf32> -> vector<64x16xf32>
    %c64_67 = arith.constant 64 : index
    %c0_68 = arith.constant 0 : index
    %196 = vector.load %arg9[%c64_67, %c0_68] : memref<128x64xf32, #tpu.memory_space<vmem>>, vector<64x16xf32>
    tpu.vector_store %arg9[%c64_67, %c0_68], %195 {strides = array<i32>} : memref<128x64xf32, #tpu.memory_space<vmem>>, vector<64x16xf32>,
    %c1_69 = arith.constant 1 : index
    %197 = memref.load %arg6[%c1_69] : memref<8xf32, #tpu.memory_space<smem>>
    %c3_70 = arith.constant 3 : index
    %198 = memref.load %arg6[%c3_70] : memref<8xf32, #tpu.memory_space<smem>>
    %199 = vector.extract_strided_slice %161 {offsets = [0, 1], sizes = [64, 1], strides = [1, 1]} : vector<64x2xf32> to vector<64x1xf32>
    %cst_71 = arith.constant dense<0.000000e+00> : vector<64x64xf32>
    %200 = tpu.matmul %5, %199, %cst_71 {dimension_numbers = #tpu.dot_dimension_numbers<[1], [1], [0], [0], [0, 0, 1, 0], [], []>} : vector<64x1xf32>, vector<64x1xf32>, vector<64x64xf32> -> vector<64x64xf32>
    %201 = vector.broadcast %199 : vector<64x1xf32> to vector<64x64xf32>
    %202 = arith.subf %201, %200 : vector<64x64xf32>
    %203 = vector.broadcast %197 : f32 to vector<64x64xf32>
    %204 = arith.mulf %203, %202 : vector<64x64xf32>
    %cst_72 = arith.constant 0.000000e+00 : f32
    %205 = vector.broadcast %cst_72 : f32 to vector<64x64xf32>
    %206 = arith.minimumf %204, %205 : vector<64x64xf32>
    %207 = math.exp %206 : vector<64x64xf32>
    %208 = arith.mulf %159, %207 : vector<64x64xf32>
    %209 = arith.truncf %208 : vector<64x64xf32> to vector<64x64xbf16>
    %210 = vector.extract_strided_slice %44 {offsets = [64, 16], sizes = [64, 16], strides = [1, 1]} : vector<128x32xf32> to vector<64x16xf32>
    %211 = vector.extract_strided_slice %160 {offsets = [0, 1], sizes = [64, 1], strides = [1, 1]} : vector<64x2xf32> to vector<64x1xf32>
    %212 = vector.broadcast %211 : vector<64x1xf32> to vector<64x16xf32>
    %213 = arith.mulf %210, %212 : vector<64x16xf32>
    %214 = arith.truncf %213 : vector<64x16xf32> to vector<64x16xbf16>
    %cst_73 = arith.constant dense<0.000000e+00> : vector<64x16xf32>
    %215 = tpu.matmul %209, %214, %cst_73 {dimension_numbers = #tpu.dot_dimension_numbers<[1], [0], [0], [1], [0, 0, 1, 1], [], []>} : vector<64x64xbf16>, vector<64x16xbf16>, vector<64x16xf32> -> vector<64x16xf32>
    %216 = vector.broadcast %198 : f32 to vector<64x16xf32>
    %217 = arith.mulf %216, %210 : vector<64x16xf32>
    %218 = arith.addf %215, %217 : vector<64x16xf32>
    %219 = vector.extract_strided_slice %35 {offsets = [64, 16], sizes = [64, 16], strides = [1, 1]} : vector<128x32xf32> to vector<64x16xf32>
    %cst_74 = arith.constant 0.000000e+00 : f32
    %220 = vector.broadcast %cst_74 : f32 to vector<64x16xf32>
    %221 = arith.subf %220, %219 : vector<64x16xf32>
    %222 = math.exp %221 : vector<64x16xf32>
    %cst_75 = arith.constant 1.000000e+00 : f32
    %223 = vector.broadcast %cst_75 : f32 to vector<64x16xf32>
    %224 = arith.addf %223, %222 : vector<64x16xf32>
    %cst_76 = arith.constant 1.000000e+00 : f32
    %225 = vector.broadcast %cst_76 : f32 to vector<64x16xf32>
    %226 = arith.divf %225, %224 : vector<64x16xf32>
    %227 = arith.mulf %219, %226 : vector<64x16xf32>
    %228 = arith.mulf %218, %227 : vector<64x16xf32>
    %229 = arith.truncf %228 : vector<64x16xf32> to vector<64x16xbf16>
    %cst_77 = arith.constant dense<0.000000e+00> : vector<64x16xf32>
    %230 = tpu.matmul %23, %229, %cst_77 {dimension_numbers = #tpu.dot_dimension_numbers<[1], [0], [0], [1], [0, 0, 1, 1], [], []>} : vector<64x64xbf16>, vector<64x16xbf16>, vector<64x16xf32> -> vector<64x16xf32>
    %c64_78 = arith.constant 64 : index
    %c16_79 = arith.constant 16 : index
    %231 = vector.load %arg9[%c64_78, %c16_79] : memref<128x64xf32, #tpu.memory_space<vmem>>, vector<64x16xf32>
    tpu.vector_store %arg9[%c64_78, %c16_79], %230 {strides = array<i32>} : memref<128x64xf32, #tpu.memory_space<vmem>>, vector<64x16xf32>,
    %c2_80 = arith.constant 2 : index
    %c0_81 = arith.constant 0 : index
    %c0_82 = arith.constant 0 : index
    %232 = vector.load %arg2[%c2_80, %c0_81, %c0_82] : memref<4x64x64xbf16, #tpu.memory_space<vmem>>, vector<1x64x64xbf16>
    %233 = vector.shape_cast %232 : vector<1x64x64xbf16> to vector<64x64xbf16>
    %c3_83 = arith.constant 3 : index
    %c0_84 = arith.constant 0 : index
    %c0_85 = arith.constant 0 : index
    %234 = vector.load %arg2[%c3_83, %c0_84, %c0_85] : memref<4x64x64xbf16, #tpu.memory_space<vmem>>, vector<1x64x64xbf16>
    %235 = vector.shape_cast %234 : vector<1x64x64xbf16> to vector<64x64xbf16>
    %c1_86 = arith.constant 1 : index
    %c0_87 = arith.constant 0 : index
    %c0_88 = arith.constant 0 : index
    %236 = vector.load %arg3[%c1_86, %c0_87, %c0_88] : memref<2x32x128xbf16, #tpu.memory_space<vmem>>, vector<1x32x128xbf16>
    %237 = vector.shape_cast %236 : vector<1x32x128xbf16> to vector<32x128xbf16>
    %238 = vector.extract_strided_slice %11 {offsets = [3, 0], sizes = [1, 2], strides = [1, 1]} : vector<4x32xf32> to vector<1x2xf32>
    %cst_89 = arith.constant dense<0.000000e+00> : vector<64x32xf32>
    %239 = tpu.matmul %233, %16, %cst_89 {dimension_numbers = #tpu.dot_dimension_numbers<[1], [1], [0], [0], [0, 0, 1, 0], [], []>} : vector<64x64xbf16>, vector<32x64xbf16>, vector<64x32xf32> -> vector<64x32xf32>
    %240 = arith.truncf %239 : vector<64x32xf32> to vector<64x32xbf16>
    %c0_90 = arith.constant 0 : index
    %c0_91 = arith.constant 0 : index
    %241 = vector.load %arg8[%c0_90, %c0_91] : memref<128x32xbf16, #tpu.memory_space<vmem>>, vector<64x32xbf16>
    tpu.vector_store %arg8[%c0_90, %c0_91], %240 {strides = array<i32>} : memref<128x32xbf16, #tpu.memory_space<vmem>>, vector<64x32xbf16>,
    %cst_92 = arith.constant dense<0.000000e+00> : vector<64x32xf32>
    %242 = tpu.matmul %233, %19, %cst_92 {dimension_numbers = #tpu.dot_dimension_numbers<[1], [1], [0], [0], [0, 0, 1, 0], [], []>} : vector<64x64xbf16>, vector<32x64xbf16>, vector<64x32xf32> -> vector<64x32xf32>
    %243 = arith.truncf %242 : vector<64x32xf32> to vector<64x32xbf16>
    %c64_93 = arith.constant 64 : index
    %c0_94 = arith.constant 0 : index
    %244 = vector.load %arg8[%c64_93, %c0_94] : memref<128x32xbf16, #tpu.memory_space<vmem>>, vector<64x32xbf16>
    tpu.vector_store %arg8[%c64_93, %c0_94], %243 {strides = array<i32>} : memref<128x32xbf16, #tpu.memory_space<vmem>>, vector<64x32xbf16>,
    %c0_95 = arith.constant 0 : index
    %c0_96 = arith.constant 0 : index
    %245 = vector.load %arg8[%c0_95, %c0_96] : memref<128x32xbf16, #tpu.memory_space<vmem>>, vector<128x32xbf16>
    %cst_97 = arith.constant dense<0.000000e+00> : vector<128x128xf32>
    %246 = tpu.matmul %245, %237, %cst_97 {dimension_numbers = #tpu.dot_dimension_numbers<[1], [0], [0], [1], [0, 0, 1, 1], [], []>} : vector<128x32xbf16>, vector<32x128xbf16>, vector<128x128xf32> -> vector<128x128xf32>
    %247 = vector.extract_strided_slice %246 {offsets = [0, 0], sizes = [128, 32], strides = [1, 1]} : vector<128x128xf32> to vector<128x32xf32>
    %248 = vector.extract_strided_slice %246 {offsets = [0, 32], sizes = [128, 32], strides = [1, 1]} : vector<128x128xf32> to vector<128x32xf32>
    %cst_98 = arith.constant 0.000000e+00 : f32
    %249 = vector.broadcast %cst_98 : f32 to vector<128x32xf32>
    %250 = arith.subf %249, %248 : vector<128x32xf32>
    %251 = math.exp %250 : vector<128x32xf32>
    %cst_99 = arith.constant 1.000000e+00 : f32
    %252 = vector.broadcast %cst_99 : f32 to vector<128x32xf32>
    %253 = arith.addf %252, %251 : vector<128x32xf32>
    %cst_100 = arith.constant 1.000000e+00 : f32
    %254 = vector.broadcast %cst_100 : f32 to vector<128x32xf32>
    %255 = arith.divf %254, %253 : vector<128x32xf32>
    %256 = arith.mulf %248, %255 : vector<128x32xf32>
    %257 = vector.extract_strided_slice %246 {offsets = [0, 64], sizes = [128, 4], strides = [1, 1]} : vector<128x128xf32> to vector<128x4xf32>
    %cst_101 = arith.constant 0.000000e+00 : f32
    %258 = vector.broadcast %cst_101 : f32 to vector<128x4xf32>
    %259 = arith.subf %258, %257 : vector<128x4xf32>
    %260 = math.exp %259 : vector<128x4xf32>
    %cst_102 = arith.constant 1.000000e+00 : f32
    %261 = vector.broadcast %cst_102 : f32 to vector<128x4xf32>
    %262 = arith.addf %261, %260 : vector<128x4xf32>
    %cst_103 = arith.constant 1.000000e+00 : f32
    %263 = vector.broadcast %cst_103 : f32 to vector<128x4xf32>
    %264 = arith.divf %263, %262 : vector<128x4xf32>
    %265 = arith.mulf %257, %264 : vector<128x4xf32>
    %266 = vector.extract_strided_slice %246 {offsets = [0, 72], sizes = [128, 4], strides = [1, 1]} : vector<128x128xf32> to vector<128x4xf32>
    %cst_104 = arith.constant 0.000000e+00 : f32
    %267 = vector.broadcast %cst_104 : f32 to vector<128x4xf32>
    %268 = arith.subf %267, %266 : vector<128x4xf32>
    %269 = math.exp %268 : vector<128x4xf32>
    %cst_105 = arith.constant 1.000000e+00 : f32
    %270 = vector.broadcast %cst_105 : f32 to vector<128x4xf32>
    %271 = arith.addf %270, %269 : vector<128x4xf32>
    %cst_106 = arith.constant 1.000000e+00 : f32
    %272 = vector.broadcast %cst_106 : f32 to vector<128x4xf32>
    %273 = arith.divf %272, %271 : vector<128x4xf32>
    %274 = arith.mulf %266, %273 : vector<128x4xf32>
    %275 = vector.extract_strided_slice %246 {offsets = [0, 80], sizes = [128, 2], strides = [1, 1]} : vector<128x128xf32> to vector<128x2xf32>
    %276 = vector.broadcast %238 : vector<1x2xf32> to vector<128x2xf32>
    %277 = arith.addf %275, %276 : vector<128x2xf32>
    %cst_107 = arith.constant 0.000000e+00 : f32
    %278 = vector.broadcast %cst_107 : f32 to vector<128x2xf32>
    %279 = arith.maximumf %277, %278 : vector<128x2xf32>
    %280 = math.absf %277 : vector<128x2xf32>
    %cst_108 = arith.constant 0.000000e+00 : f32
    %281 = vector.broadcast %cst_108 : f32 to vector<128x2xf32>
    %282 = arith.subf %281, %280 : vector<128x2xf32>
    %283 = math.exp %282 : vector<128x2xf32>
    %cst_109 = arith.constant 1.000000e+00 : f32
    %284 = vector.broadcast %cst_109 : f32 to vector<128x2xf32>
    %285 = arith.addf %284, %283 : vector<128x2xf32>
    %286 = math.log %285 : vector<128x2xf32>
    %287 = arith.addf %279, %286 : vector<128x2xf32>
    %288 = vector.extract_strided_slice %274 {offsets = [0, 0], sizes = [64, 4], strides = [1, 1]} : vector<128x4xf32> to vector<64x4xf32>
    %289 = arith.truncf %288 : vector<64x4xf32> to vector<64x4xbf16>
    %290 = vector.extract_strided_slice %265 {offsets = [0, 0], sizes = [64, 4], strides = [1, 1]} : vector<128x4xf32> to vector<64x4xf32>
    %291 = arith.truncf %290 : vector<64x4xf32> to vector<64x4xbf16>
    %cst_110 = arith.constant dense<0.000000e+00> : vector<64x64xf32>
    %292 = tpu.matmul %289, %291, %cst_110 {dimension_numbers = #tpu.dot_dimension_numbers<[1], [1], [0], [0], [0, 0, 1, 0], [], []>} : vector<64x4xbf16>, vector<64x4xbf16>, vector<64x64xf32> -> vector<64x64xf32>
    %293 = arith.mulf %292, %4 : vector<64x64xf32>
    %294 = vector.extract_strided_slice %287 {offsets = [0, 0], sizes = [64, 2], strides = [1, 1]} : vector<128x2xf32> to vector<64x2xf32>
    %cst_111 = arith.constant dense<0.000000e+00> : vector<64x2xf32>
    %295 = tpu.matmul %4, %294, %cst_111 {dimension_numbers = #tpu.dot_dimension_numbers<[1], [0], [0], [1], [0, 0, 1, 1], [], []>} : vector<64x64xf32>, vector<64x2xf32>, vector<64x2xf32> -> vector<64x2xf32>
    %c4 = arith.constant 4 : index
    %296 = memref.load %arg6[%c4] : memref<8xf32, #tpu.memory_space<smem>>
    %c6 = arith.constant 6 : index
    %297 = memref.load %arg6[%c6] : memref<8xf32, #tpu.memory_space<smem>>
    %298 = vector.extract_strided_slice %295 {offsets = [0, 0], sizes = [64, 1], strides = [1, 1]} : vector<64x2xf32> to vector<64x1xf32>
    %cst_112 = arith.constant dense<0.000000e+00> : vector<64x64xf32>
    %299 = tpu.matmul %5, %298, %cst_112 {dimension_numbers = #tpu.dot_dimension_numbers<[1], [1], [0], [0], [0, 0, 1, 0], [], []>} : vector<64x1xf32>, vector<64x1xf32>, vector<64x64xf32> -> vector<64x64xf32>
    %300 = vector.broadcast %298 : vector<64x1xf32> to vector<64x64xf32>
    %301 = arith.subf %300, %299 : vector<64x64xf32>
    %302 = vector.broadcast %296 : f32 to vector<64x64xf32>
    %303 = arith.mulf %302, %301 : vector<64x64xf32>
    %cst_113 = arith.constant 0.000000e+00 : f32
    %304 = vector.broadcast %cst_113 : f32 to vector<64x64xf32>
    %305 = arith.minimumf %303, %304 : vector<64x64xf32>
    %306 = math.exp %305 : vector<64x64xf32>
    %307 = arith.mulf %293, %306 : vector<64x64xf32>
    %308 = arith.truncf %307 : vector<64x64xf32> to vector<64x64xbf16>
    %309 = vector.extract_strided_slice %256 {offsets = [0, 0], sizes = [64, 16], strides = [1, 1]} : vector<128x32xf32> to vector<64x16xf32>
    %310 = vector.extract_strided_slice %294 {offsets = [0, 0], sizes = [64, 1], strides = [1, 1]} : vector<64x2xf32> to vector<64x1xf32>
    %311 = vector.broadcast %310 : vector<64x1xf32> to vector<64x16xf32>
    %312 = arith.mulf %309, %311 : vector<64x16xf32>
    %313 = arith.truncf %312 : vector<64x16xf32> to vector<64x16xbf16>
    %cst_114 = arith.constant dense<0.000000e+00> : vector<64x16xf32>
    %314 = tpu.matmul %308, %313, %cst_114 {dimension_numbers = #tpu.dot_dimension_numbers<[1], [0], [0], [1], [0, 0, 1, 1], [], []>} : vector<64x64xbf16>, vector<64x16xbf16>, vector<64x16xf32> -> vector<64x16xf32>
    %315 = vector.broadcast %297 : f32 to vector<64x16xf32>
    %316 = arith.mulf %315, %309 : vector<64x16xf32>
    %317 = arith.addf %314, %316 : vector<64x16xf32>
    %318 = vector.extract_strided_slice %247 {offsets = [0, 0], sizes = [64, 16], strides = [1, 1]} : vector<128x32xf32> to vector<64x16xf32>
    %cst_115 = arith.constant 0.000000e+00 : f32
    %319 = vector.broadcast %cst_115 : f32 to vector<64x16xf32>
    %320 = arith.subf %319, %318 : vector<64x16xf32>
    %321 = math.exp %320 : vector<64x16xf32>
    %cst_116 = arith.constant 1.000000e+00 : f32
    %322 = vector.broadcast %cst_116 : f32 to vector<64x16xf32>
    %323 = arith.addf %322, %321 : vector<64x16xf32>
    %cst_117 = arith.constant 1.000000e+00 : f32
    %324 = vector.broadcast %cst_117 : f32 to vector<64x16xf32>
    %325 = arith.divf %324, %323 : vector<64x16xf32>
    %326 = arith.mulf %318, %325 : vector<64x16xf32>
    %327 = arith.mulf %317, %326 : vector<64x16xf32>
    %328 = arith.truncf %327 : vector<64x16xf32> to vector<64x16xbf16>
    %cst_118 = arith.constant dense<0.000000e+00> : vector<64x16xf32>
    %329 = tpu.matmul %235, %328, %cst_118 {dimension_numbers = #tpu.dot_dimension_numbers<[1], [0], [0], [1], [0, 0, 1, 1], [], []>} : vector<64x64xbf16>, vector<64x16xbf16>, vector<64x16xf32> -> vector<64x16xf32>
    %c0_119 = arith.constant 0 : index
    %c32 = arith.constant 32 : index
    %330 = vector.load %arg9[%c0_119, %c32] : memref<128x64xf32, #tpu.memory_space<vmem>>, vector<64x16xf32>
    tpu.vector_store %arg9[%c0_119, %c32], %329 {strides = array<i32>} : memref<128x64xf32, #tpu.memory_space<vmem>>, vector<64x16xf32>,
    %c5 = arith.constant 5 : index
    %331 = memref.load %arg6[%c5] : memref<8xf32, #tpu.memory_space<smem>>
    %c7 = arith.constant 7 : index
    %332 = memref.load %arg6[%c7] : memref<8xf32, #tpu.memory_space<smem>>
    %333 = vector.extract_strided_slice %295 {offsets = [0, 1], sizes = [64, 1], strides = [1, 1]} : vector<64x2xf32> to vector<64x1xf32>
    %cst_120 = arith.constant dense<0.000000e+00> : vector<64x64xf32>
    %334 = tpu.matmul %5, %333, %cst_120 {dimension_numbers = #tpu.dot_dimension_numbers<[1], [1], [0], [0], [0, 0, 1, 0], [], []>} : vector<64x1xf32>, vector<64x1xf32>, vector<64x64xf32> -> vector<64x64xf32>
    %335 = vector.broadcast %333 : vector<64x1xf32> to vector<64x64xf32>
    %336 = arith.subf %335, %334 : vector<64x64xf32>
    %337 = vector.broadcast %331 : f32 to vector<64x64xf32>
    %338 = arith.mulf %337, %336 : vector<64x64xf32>
    %cst_121 = arith.constant 0.000000e+00 : f32
    %339 = vector.broadcast %cst_121 : f32 to vector<64x64xf32>
    %340 = arith.minimumf %338, %339 : vector<64x64xf32>
    %341 = math.exp %340 : vector<64x64xf32>
    %342 = arith.mulf %293, %341 : vector<64x64xf32>
    %343 = arith.truncf %342 : vector<64x64xf32> to vector<64x64xbf16>
    %344 = vector.extract_strided_slice %256 {offsets = [0, 16], sizes = [64, 16], strides = [1, 1]} : vector<128x32xf32> to vector<64x16xf32>
    %345 = vector.extract_strided_slice %294 {offsets = [0, 1], sizes = [64, 1], strides = [1, 1]} : vector<64x2xf32> to vector<64x1xf32>
    %346 = vector.broadcast %345 : vector<64x1xf32> to vector<64x16xf32>
    %347 = arith.mulf %344, %346 : vector<64x16xf32>
    %348 = arith.truncf %347 : vector<64x16xf32> to vector<64x16xbf16>
    %cst_122 = arith.constant dense<0.000000e+00> : vector<64x16xf32>
    %349 = tpu.matmul %343, %348, %cst_122 {dimension_numbers = #tpu.dot_dimension_numbers<[1], [0], [0], [1], [0, 0, 1, 1], [], []>} : vector<64x64xbf16>, vector<64x16xbf16>, vector<64x16xf32> -> vector<64x16xf32>
    %350 = vector.broadcast %332 : f32 to vector<64x16xf32>
    %351 = arith.mulf %350, %344 : vector<64x16xf32>
    %352 = arith.addf %349, %351 : vector<64x16xf32>
    %353 = vector.extract_strided_slice %247 {offsets = [0, 16], sizes = [64, 16], strides = [1, 1]} : vector<128x32xf32> to vector<64x16xf32>
    %cst_123 = arith.constant 0.000000e+00 : f32
    %354 = vector.broadcast %cst_123 : f32 to vector<64x16xf32>
    %355 = arith.subf %354, %353 : vector<64x16xf32>
    %356 = math.exp %355 : vector<64x16xf32>
    %cst_124 = arith.constant 1.000000e+00 : f32
    %357 = vector.broadcast %cst_124 : f32 to vector<64x16xf32>
    %358 = arith.addf %357, %356 : vector<64x16xf32>
    %cst_125 = arith.constant 1.000000e+00 : f32
    %359 = vector.broadcast %cst_125 : f32 to vector<64x16xf32>
    %360 = arith.divf %359, %358 : vector<64x16xf32>
    %361 = arith.mulf %353, %360 : vector<64x16xf32>
    %362 = arith.mulf %352, %361 : vector<64x16xf32>
    %363 = arith.truncf %362 : vector<64x16xf32> to vector<64x16xbf16>
    %cst_126 = arith.constant dense<0.000000e+00> : vector<64x16xf32>
    %364 = tpu.matmul %235, %363, %cst_126 {dimension_numbers = #tpu.dot_dimension_numbers<[1], [0], [0], [1], [0, 0, 1, 1], [], []>} : vector<64x64xbf16>, vector<64x16xbf16>, vector<64x16xf32> -> vector<64x16xf32>
    %c0_127 = arith.constant 0 : index
    %c48 = arith.constant 48 : index
    %365 = vector.load %arg9[%c0_127, %c48] : memref<128x64xf32, #tpu.memory_space<vmem>>, vector<64x16xf32>
    tpu.vector_store %arg9[%c0_127, %c48], %364 {strides = array<i32>} : memref<128x64xf32, #tpu.memory_space<vmem>>, vector<64x16xf32>,
    %366 = vector.extract_strided_slice %274 {offsets = [64, 0], sizes = [64, 4], strides = [1, 1]} : vector<128x4xf32> to vector<64x4xf32>
    %367 = arith.truncf %366 : vector<64x4xf32> to vector<64x4xbf16>
    %368 = vector.extract_strided_slice %265 {offsets = [64, 0], sizes = [64, 4], strides = [1, 1]} : vector<128x4xf32> to vector<64x4xf32>
    %369 = arith.truncf %368 : vector<64x4xf32> to vector<64x4xbf16>
    %cst_128 = arith.constant dense<0.000000e+00> : vector<64x64xf32>
    %370 = tpu.matmul %367, %369, %cst_128 {dimension_numbers = #tpu.dot_dimension_numbers<[1], [1], [0], [0], [0, 0, 1, 0], [], []>} : vector<64x4xbf16>, vector<64x4xbf16>, vector<64x64xf32> -> vector<64x64xf32>
    %371 = arith.mulf %370, %4 : vector<64x64xf32>
    %372 = vector.extract_strided_slice %287 {offsets = [64, 0], sizes = [64, 2], strides = [1, 1]} : vector<128x2xf32> to vector<64x2xf32>
    %cst_129 = arith.constant dense<0.000000e+00> : vector<64x2xf32>
    %373 = tpu.matmul %4, %372, %cst_129 {dimension_numbers = #tpu.dot_dimension_numbers<[1], [0], [0], [1], [0, 0, 1, 1], [], []>} : vector<64x64xf32>, vector<64x2xf32>, vector<64x2xf32> -> vector<64x2xf32>
    %c4_130 = arith.constant 4 : index
    %374 = memref.load %arg6[%c4_130] : memref<8xf32, #tpu.memory_space<smem>>
    %c6_131 = arith.constant 6 : index
    %375 = memref.load %arg6[%c6_131] : memref<8xf32, #tpu.memory_space<smem>>
    %376 = vector.extract_strided_slice %373 {offsets = [0, 0], sizes = [64, 1], strides = [1, 1]} : vector<64x2xf32> to vector<64x1xf32>
    %cst_132 = arith.constant dense<0.000000e+00> : vector<64x64xf32>
    %377 = tpu.matmul %5, %376, %cst_132 {dimension_numbers = #tpu.dot_dimension_numbers<[1], [1], [0], [0], [0, 0, 1, 0], [], []>} : vector<64x1xf32>, vector<64x1xf32>, vector<64x64xf32> -> vector<64x64xf32>
    %378 = vector.broadcast %376 : vector<64x1xf32> to vector<64x64xf32>
    %379 = arith.subf %378, %377 : vector<64x64xf32>
    %380 = vector.broadcast %374 : f32 to vector<64x64xf32>
    %381 = arith.mulf %380, %379 : vector<64x64xf32>
    %cst_133 = arith.constant 0.000000e+00 : f32
    %382 = vector.broadcast %cst_133 : f32 to vector<64x64xf32>
    %383 = arith.minimumf %381, %382 : vector<64x64xf32>
    %384 = math.exp %383 : vector<64x64xf32>
    %385 = arith.mulf %371, %384 : vector<64x64xf32>
    %386 = arith.truncf %385 : vector<64x64xf32> to vector<64x64xbf16>
    %387 = vector.extract_strided_slice %256 {offsets = [64, 0], sizes = [64, 16], strides = [1, 1]} : vector<128x32xf32> to vector<64x16xf32>
    %388 = vector.extract_strided_slice %372 {offsets = [0, 0], sizes = [64, 1], strides = [1, 1]} : vector<64x2xf32> to vector<64x1xf32>
    %389 = vector.broadcast %388 : vector<64x1xf32> to vector<64x16xf32>
    %390 = arith.mulf %387, %389 : vector<64x16xf32>
    %391 = arith.truncf %390 : vector<64x16xf32> to vector<64x16xbf16>
    %cst_134 = arith.constant dense<0.000000e+00> : vector<64x16xf32>
    %392 = tpu.matmul %386, %391, %cst_134 {dimension_numbers = #tpu.dot_dimension_numbers<[1], [0], [0], [1], [0, 0, 1, 1], [], []>} : vector<64x64xbf16>, vector<64x16xbf16>, vector<64x16xf32> -> vector<64x16xf32>
    %393 = vector.broadcast %375 : f32 to vector<64x16xf32>
    %394 = arith.mulf %393, %387 : vector<64x16xf32>
    %395 = arith.addf %392, %394 : vector<64x16xf32>
    %396 = vector.extract_strided_slice %247 {offsets = [64, 0], sizes = [64, 16], strides = [1, 1]} : vector<128x32xf32> to vector<64x16xf32>
    %cst_135 = arith.constant 0.000000e+00 : f32
    %397 = vector.broadcast %cst_135 : f32 to vector<64x16xf32>
    %398 = arith.subf %397, %396 : vector<64x16xf32>
    %399 = math.exp %398 : vector<64x16xf32>
    %cst_136 = arith.constant 1.000000e+00 : f32
    %400 = vector.broadcast %cst_136 : f32 to vector<64x16xf32>
    %401 = arith.addf %400, %399 : vector<64x16xf32>
    %cst_137 = arith.constant 1.000000e+00 : f32
    %402 = vector.broadcast %cst_137 : f32 to vector<64x16xf32>
    %403 = arith.divf %402, %401 : vector<64x16xf32>
    %404 = arith.mulf %396, %403 : vector<64x16xf32>
    %405 = arith.mulf %395, %404 : vector<64x16xf32>
    %406 = arith.truncf %405 : vector<64x16xf32> to vector<64x16xbf16>
    %cst_138 = arith.constant dense<0.000000e+00> : vector<64x16xf32>
    %407 = tpu.matmul %235, %406, %cst_138 {dimension_numbers = #tpu.dot_dimension_numbers<[1], [0], [0], [1], [0, 0, 1, 1], [], []>} : vector<64x64xbf16>, vector<64x16xbf16>, vector<64x16xf32> -> vector<64x16xf32>
    %c64_139 = arith.constant 64 : index
    %c32_140 = arith.constant 32 : index
    %408 = vector.load %arg9[%c64_139, %c32_140] : memref<128x64xf32, #tpu.memory_space<vmem>>, vector<64x16xf32>
    tpu.vector_store %arg9[%c64_139, %c32_140], %407 {strides = array<i32>} : memref<128x64xf32, #tpu.memory_space<vmem>>, vector<64x16xf32>,
    %c5_141 = arith.constant 5 : index
    %409 = memref.load %arg6[%c5_141] : memref<8xf32, #tpu.memory_space<smem>>
    %c7_142 = arith.constant 7 : index
    %410 = memref.load %arg6[%c7_142] : memref<8xf32, #tpu.memory_space<smem>>
    %411 = vector.extract_strided_slice %373 {offsets = [0, 1], sizes = [64, 1], strides = [1, 1]} : vector<64x2xf32> to vector<64x1xf32>
    %cst_143 = arith.constant dense<0.000000e+00> : vector<64x64xf32>
    %412 = tpu.matmul %5, %411, %cst_143 {dimension_numbers = #tpu.dot_dimension_numbers<[1], [1], [0], [0], [0, 0, 1, 0], [], []>} : vector<64x1xf32>, vector<64x1xf32>, vector<64x64xf32> -> vector<64x64xf32>
    %413 = vector.broadcast %411 : vector<64x1xf32> to vector<64x64xf32>
    %414 = arith.subf %413, %412 : vector<64x64xf32>
    %415 = vector.broadcast %409 : f32 to vector<64x64xf32>
    %416 = arith.mulf %415, %414 : vector<64x64xf32>
    %cst_144 = arith.constant 0.000000e+00 : f32
    %417 = vector.broadcast %cst_144 : f32 to vector<64x64xf32>
    %418 = arith.minimumf %416, %417 : vector<64x64xf32>
    %419 = math.exp %418 : vector<64x64xf32>
    %420 = arith.mulf %371, %419 : vector<64x64xf32>
    %421 = arith.truncf %420 : vector<64x64xf32> to vector<64x64xbf16>
    %422 = vector.extract_strided_slice %256 {offsets = [64, 16], sizes = [64, 16], strides = [1, 1]} : vector<128x32xf32> to vector<64x16xf32>
    %423 = vector.extract_strided_slice %372 {offsets = [0, 1], sizes = [64, 1], strides = [1, 1]} : vector<64x2xf32> to vector<64x1xf32>
    %424 = vector.broadcast %423 : vector<64x1xf32> to vector<64x16xf32>
    %425 = arith.mulf %422, %424 : vector<64x16xf32>
    %426 = arith.truncf %425 : vector<64x16xf32> to vector<64x16xbf16>
    %cst_145 = arith.constant dense<0.000000e+00> : vector<64x16xf32>
    %427 = tpu.matmul %421, %426, %cst_145 {dimension_numbers = #tpu.dot_dimension_numbers<[1], [0], [0], [1], [0, 0, 1, 1], [], []>} : vector<64x64xbf16>, vector<64x16xbf16>, vector<64x16xf32> -> vector<64x16xf32>
    %428 = vector.broadcast %410 : f32 to vector<64x16xf32>
    %429 = arith.mulf %428, %422 : vector<64x16xf32>
    %430 = arith.addf %427, %429 : vector<64x16xf32>
    %431 = vector.extract_strided_slice %247 {offsets = [64, 16], sizes = [64, 16], strides = [1, 1]} : vector<128x32xf32> to vector<64x16xf32>
    %cst_146 = arith.constant 0.000000e+00 : f32
    %432 = vector.broadcast %cst_146 : f32 to vector<64x16xf32>
    %433 = arith.subf %432, %431 : vector<64x16xf32>
    %434 = math.exp %433 : vector<64x16xf32>
    %cst_147 = arith.constant 1.000000e+00 : f32
    %435 = vector.broadcast %cst_147 : f32 to vector<64x16xf32>
    %436 = arith.addf %435, %434 : vector<64x16xf32>
    %cst_148 = arith.constant 1.000000e+00 : f32
    %437 = vector.broadcast %cst_148 : f32 to vector<64x16xf32>
    %438 = arith.divf %437, %436 : vector<64x16xf32>
    %439 = arith.mulf %431, %438 : vector<64x16xf32>
    %440 = arith.mulf %430, %439 : vector<64x16xf32>
    %441 = arith.truncf %440 : vector<64x16xf32> to vector<64x16xbf16>
    %cst_149 = arith.constant dense<0.000000e+00> : vector<64x16xf32>
    %442 = tpu.matmul %235, %441, %cst_149 {dimension_numbers = #tpu.dot_dimension_numbers<[1], [0], [0], [1], [0, 0, 1, 1], [], []>} : vector<64x64xbf16>, vector<64x16xbf16>, vector<64x16xf32> -> vector<64x16xf32>
    %c64_150 = arith.constant 64 : index
    %c48_151 = arith.constant 48 : index
    %443 = vector.load %arg9[%c64_150, %c48_151] : memref<128x64xf32, #tpu.memory_space<vmem>>, vector<64x16xf32>
    tpu.vector_store %arg9[%c64_150, %c48_151], %442 {strides = array<i32>} : memref<128x64xf32, #tpu.memory_space<vmem>>, vector<64x16xf32>,
    %c0_152 = arith.constant 0 : index
    %c0_153 = arith.constant 0 : index
    %444 = vector.load %arg9[%c0_152, %c0_153] : memref<128x64xf32, #tpu.memory_space<vmem>>, vector<128x64xf32>
    %445 = arith.truncf %444 : vector<128x64xf32> to vector<128x64xbf16>
    %c0_154 = arith.constant 0 : index
    %c0_155 = arith.constant 0 : index
    %446 = vector.load %arg4[%c0_154, %c0_155] : memref<64x32xbf16, #tpu.memory_space<vmem>>, vector<64x32xbf16>
    %cst_156 = arith.constant dense<0.000000e+00> : vector<128x32xf32>
    %447 = tpu.matmul %445, %446, %cst_156 {dimension_numbers = #tpu.dot_dimension_numbers<[1], [0], [0], [1], [0, 0, 1, 1], [], []>} : vector<128x64xbf16>, vector<64x32xbf16>, vector<128x32xf32> -> vector<128x32xf32>
    %cst_157 = arith.constant dense<0.000000e+00> : vector<128xf32>
    %448 = vector.multi_reduction <add>, %447, %cst_157 [1] : vector<128x32xf32> to vector<128xf32>
    %449 = vector.shape_cast %448 : vector<128xf32> to vector<128x1xf32>
    %cst_158 = arith.constant 3.200000e+01 : f32
    %450 = vector.broadcast %cst_158 : f32 to vector<128x1xf32>
    %451 = arith.divf %449, %450 : vector<128x1xf32>
    %452 = vector.broadcast %451 : vector<128x1xf32> to vector<128x32xf32>
    %453 = arith.subf %447, %452 : vector<128x32xf32>
    %454 = arith.mulf %453, %453 : vector<128x32xf32>
    %cst_159 = arith.constant dense<0.000000e+00> : vector<128xf32>
    %455 = vector.multi_reduction <add>, %454, %cst_159 [1] : vector<128x32xf32> to vector<128xf32>
    %456 = vector.shape_cast %455 : vector<128xf32> to vector<128x1xf32>
    %cst_160 = arith.constant 3.200000e+01 : f32
    %457 = vector.broadcast %cst_160 : f32 to vector<128x1xf32>
    %458 = arith.divf %456, %457 : vector<128x1xf32>
    %459 = vector.broadcast %451 : vector<128x1xf32> to vector<128x32xf32>
    %460 = arith.subf %447, %459 : vector<128x32xf32>
    %cst_161 = arith.constant 9.99999997E-7 : f32
    %461 = vector.broadcast %cst_161 : f32 to vector<128x1xf32>
    %462 = arith.addf %458, %461 : vector<128x1xf32>
    %463 = math.rsqrt %462 : vector<128x1xf32>
    %464 = vector.broadcast %463 : vector<128x1xf32> to vector<128x32xf32>
    %465 = arith.mulf %460, %464 : vector<128x32xf32>
    %466 = vector.broadcast %12 : vector<1x32xf32> to vector<128x32xf32>
    %467 = arith.mulf %465, %466 : vector<128x32xf32>
    %468 = vector.broadcast %13 : vector<1x32xf32> to vector<128x32xf32>
    %469 = arith.addf %467, %468 : vector<128x32xf32>
    %cst_162 = arith.constant dense<0.000000e+00> : vector<32x128xf32>
    %470 = tpu.matmul %10, %469, %cst_162 {dimension_numbers = #tpu.dot_dimension_numbers<[1], [1], [0], [0], [0, 0, 1, 0], [], []>} : vector<32x32xf32>, vector<128x32xf32>, vector<32x128xf32> -> vector<32x128xf32>
    %471 = vector.extract_strided_slice %470 {offsets = [0, 0], sizes = [32, 64], strides = [1, 1]} : vector<32x128xf32> to vector<32x64xf32>
    %c0_163 = arith.constant 0 : index
    %c0_164 = arith.constant 0 : index
    %c0_165 = arith.constant 0 : index
    %472 = vector.load %arg7[%c0_163, %c0_164, %c0_165] : memref<2x32x64xf32, #tpu.memory_space<vmem>>, vector<1x32x64xf32>
    %473 = vector.shape_cast %472 : vector<1x32x64xf32> to vector<32x64xf32>
    %474 = vector.shape_cast %471 : vector<32x64xf32> to vector<1x32x64xf32>
    tpu.vector_store %arg7[%c0_163, %c0_164, %c0_165], %474 {strides = array<i32>} : memref<2x32x64xf32, #tpu.memory_space<vmem>>, vector<1x32x64xf32>,
    %475 = vector.extract_strided_slice %470 {offsets = [0, 64], sizes = [32, 64], strides = [1, 1]} : vector<32x128xf32> to vector<32x64xf32>
    %c1_166 = arith.constant 1 : index
    %c0_167 = arith.constant 0 : index
    %c0_168 = arith.constant 0 : index
    %476 = vector.load %arg7[%c1_166, %c0_167, %c0_168] : memref<2x32x64xf32, #tpu.memory_space<vmem>>, vector<1x32x64xf32>
    %477 = vector.shape_cast %476 : vector<1x32x64xf32> to vector<32x64xf32>
    %478 = vector.shape_cast %475 : vector<32x64xf32> to vector<1x32x64xf32>
    tpu.vector_store %arg7[%c1_166, %c0_167, %c0_168], %478 {strides = array<i32>} : memref<2x32x64xf32, #tpu.memory_space<vmem>>, vector<1x32x64xf32>,
    return
  }
  func.func @transform_0(%arg0: i32) -> (i32, i32, i32) {
    %c0_i32 = arith.constant 0 : i32
    %c0_i32_0 = arith.constant 0 : i32
    %c0_i32_1 = arith.constant 0 : i32
    return %arg0, %c0_i32, %c0_i32_0 : i32, i32, i32
  }
  func.func @transform_1(%arg0: i32) -> (i32, i32, i32) {
    %c0_i32 = arith.constant 0 : i32
    %c0_i32_0 = arith.constant 0 : i32
    %c0_i32_1 = arith.constant 0 : i32
    %c0_i32_2 = arith.constant 0 : i32
    return %c0_i32, %c0_i32_0, %c0_i32_1 : i32, i32, i32
  }
  func.func @transform_2(%arg0: i32) -> (i32, i32, i32) {
    %c0_i32 = arith.constant 0 : i32
    %c0_i32_0 = arith.constant 0 : i32
    %c0_i32_1 = arith.constant 0 : i32
    %c0_i32_2 = arith.constant 0 : i32
    return %c0_i32, %c0_i32_0, %c0_i32_1 : i32, i32, i32
  }
  func.func @transform_3(%arg0: i32) -> (i32, i32) {
    %c0_i32 = arith.constant 0 : i32
    %c0_i32_0 = arith.constant 0 : i32
    %c0_i32_1 = arith.constant 0 : i32
    return %c0_i32, %c0_i32_0 : i32, i32
  }
  func.func @transform_4(%arg0: i32) -> (i32, i32) {
    %c0_i32 = arith.constant 0 : i32
    %c0_i32_0 = arith.constant 0 : i32
    %c0_i32_1 = arith.constant 0 : i32
    return %c0_i32, %c0_i32_0 : i32, i32
  }
  func.func @transform_5(%arg0: i32) -> i32 {
    %c0_i32 = arith.constant 0 : i32
    %c0_i32_0 = arith.constant 0 : i32
    return %c0_i32 : i32
  }
  func.func @transform_6(%arg0: i32) -> (i32, i32, i32) {
    %c0_i32 = arith.constant 0 : i32
    %c0_i32_0 = arith.constant 0 : i32
    %c0_i32_1 = arith.constant 0 : i32
    return %arg0, %c0_i32, %c0_i32_0 : i32, i32, i32
  }
}

</mosaic_0001>

<llo_original>
// kernel: tpu_custom_call.1
$region0: #{tpu_custom_call.1}
  #allocation0 [shape = 'u32[]', space=smem, size = 0x4, offset = 0x4, fixed_abs, tag = 'smem constant byte address 0x4 - core index']
  #allocation1 [shape = 'u32[144,128]{1,0:T(1,128)}', space=vmem, size = 0x12000, scoped, tag = 'internal scratch']
  #allocation2 [shape = 'bf16[128,32]{1,0:T(16,128)(2,1)}', space=vmem, size = 0x8000, scoped, tag = 'scratch operand']
  #allocation3 [shape = 'f32[128,64]{1,0:T(8,128)}', space=vmem, size = 0x10000, scoped, tag = 'scratch operand']
  %s0 = inlined_call_operand.hbm [shape: f32[4,32,64], index: 0, kind: input, shape index: {}]
  %s1 = inlined_call_operand.hbm [shape: bf16[4,64,64], index: 1, kind: input, shape index: {}]
  %s2 = inlined_call_operand.vmem [shape: bf16[2,32,128], index: 2, kind: input, shape index: {}]
  %s3 = inlined_call_operand.vmem [shape: bf16[64,32], index: 3, kind: input, shape index: {}]
  %s4 = inlined_call_operand.vmem [shape: f32[4,32], index: 4, kind: input, shape index: {}]
  %s5 = inlined_call_operand.vmem [shape: f32[8], index: 5, kind: input, shape index: {}]
  %s6 = inlined_call_operand.hbm [shape: f32[4,32,64], index: 6, kind: output, shape index: {}]
  %s7 = sld [smem:[#allocation0]]
  $region69: #{tpu_custom_call.1} parent=0
    _
  %s9 = ssub.s32 1, %s7
  %s10 = scalar_select 0, %s9, %s7
  $region1: #{tpu_custom_call.1} parent=0
    #allocation4 [shape = 'u8[65536]{0}', space=vmem, size = 0x10000, scoped, tag = 'input window, operand 0']
    #allocation5 [shape = 's32[2]{0}', space=sflag, size = 0x8, scoped, tag = 'scoped memory for tpu_custom_call.1']
    #allocation6 [shape = 's32[2]{0}', space=sflag, size = 0x8, scoped, tag = 'scoped memory for tpu_custom_call.1']
    #allocation7 [shape = 's32[2]{0}', space=sflag, size = 0x8, scoped, tag = 'scoped memory for tpu_custom_call.1']
    #allocation8 [shape = 'u8[65536]{0}', space=vmem, size = 0x10000, scoped, tag = 'input window, operand 1, single buffered']
    #allocation9 [shape = 's32[1]{0}', space=sflag, size = 0x4, scoped, tag = 'scoped memory for tpu_custom_call.1']
    #allocation10 [shape = 'u8[512]{0}', space=smem, size = 0x200, scoped, tag = 'input window, operand 5, single buffered']
    #allocation11 [shape = 'u8[65536]{0}', space=vmem, size = 0x10000, scoped, tag = 'output window, operand 0']
    %11 = vsyncpa [#allocation5], 0
    %s12 = scalar_lea.sflag [#allocation5], 1
    %13 = vsyncpa %s12, 0
    %14 = vsyncpa [#allocation9], 0
    %15 = vsyncpa [#allocation7], 0
    %16 = vsyncpa [#allocation6], 0
    %s17 = scalar_lea.sflag [#allocation6], 1
    %18 = vsyncpa %s17, 0
    loop: start=0, step=1, limit=4
    $region2: #{tpu_custom_call.1} parent=1 // loop_pre_header
      _
    $region3: #{tpu_custom_call.1} parent=1 // loop_header
      %s20 = sphi 0, %s24
      %p21 = scmp.ge.s32.totalorder %s20, 4
      %s30 = sphi 0, %s32
      %s33 = sphi 0, %s30
      %s34 = sphi 0, %s33
      %s50 = sphi 0, %s34
      %s54 = sphi 0, %s54
      %s56 = sphi 0, %s54
      %s57 = sphi 0, %s56
      %s71 = sphi 0, %s57
      %s75 = sphi 0, %s75
      %s77 = sphi 0, %s75
      %s78 = sphi 0, %s77
      %s92 = sphi 0, %s78
      %s96 = sphi 0, %s96
      %s98 = sphi 0, %s96
      %s99 = sphi 0, %s98
      %s113 = sphi 0, %s99
      %s117 = sphi 0, %s117
      %s119 = sphi 0, %s117
      %s120 = sphi 0, %s119
      %s134 = sphi 0, %s120
      %s138 = sphi 0, %s138
      %s140 = sphi 0, %s138
      %s141 = sphi 0, %s140
      %s155 = sphi 0, %s141
      %s161 = sphi 0, %s163
      %s164 = sphi 0, %s161
      %s165 = sphi 0, %s164
      %s181 = sphi 0, %s165
    $region4: #{tpu_custom_call.1} parent=1 // loop_header_branch
      %23 = sbr.rel (%p21) target = $region8
    $region5: #{tpu_custom_call.1} parent=1 // loop_body
      %s25 = ssub.s32 %s20, 1
      %s26 = ssub.s32 %s20, 2
      %s27 = sadd.s32 %s20, 1
      %s28 = ssub.s32 %s20, %s27
      %p29 = scmp.eq.s32.totalorder %s28, 0
      %s31 = sadd.s32 %s30, 1
      %s32 = scalar_select %p29, %s30, %s31
      %p35 = pneg %p29
      %p36 = scmp.eq.s32.totalorder %s20, 1
      %p37 = por %p35, %p36
      %p38 = scmp.ne.s32.totalorder %s30, %s33
      %p39 = scmp.eq.s32.totalorder %s20, 0
      %p40 = por %p38, %p39
      %p41 = scmp.ne.s32.totalorder %s30, %s33
      %p42 = scmp.eq.s32.totalorder %s25, 1
      %p43 = por %p41, %p42
      %p44 = scmp.ne.s32.totalorder %s33, %s34
      %p45 = scmp.eq.s32.totalorder %s25, 0
      %p46 = por %p44, %p45
      %p47 = scmp.ne.s32.totalorder %s33, %s34
      %p48 = scmp.eq.s32.totalorder %s26, 1
      %p49 = por %p47, %p48
      %p51 = scmp.ne.s32.totalorder %s34, %s50
      %p52 = scmp.eq.s32.totalorder %s26, 0
      %p53 = por %p51, %p52
      %s55 = sadd.s32 %s54, 1
      %p58 = scmp.eq.s32.totalorder %s20, 1
      %p59 = scmp.ne.s32.totalorder %s54, %s56
      %p60 = scmp.eq.s32.totalorder %s20, 0
      %p61 = por %p59, %p60
      %p62 = scmp.ne.s32.totalorder %s54, %s56
      %p63 = scmp.eq.s32.totalorder %s25, 1
      %p64 = por %p62, %p63
      %p65 = scmp.ne.s32.totalorder %s56, %s57
      %p66 = scmp.eq.s32.totalorder %s25, 0
      %p67 = por %p65, %p66
      %p68 = scmp.ne.s32.totalorder %s56, %s57
      %p69 = scmp.eq.s32.totalorder %s26, 1
      %p70 = por %p68, %p69
      %p72 = scmp.ne.s32.totalorder %s57, %s71
      %p73 = scmp.eq.s32.totalorder %s26, 0
      %p74 = por %p72, %p73
      %s76 = sadd.s32 %s75, 1
      %p79 = scmp.eq.s32.totalorder %s20, 1
      %p80 = scmp.ne.s32.totalorder %s75, %s77
      %p81 = scmp.eq.s32.totalorder %s20, 0
      %p82 = por %p80, %p81
      %p83 = scmp.ne.s32.totalorder %s75, %s77
      %p84 = scmp.eq.s32.totalorder %s25, 1
      %p85 = por %p83, %p84
      %p86 = scmp.ne.s32.totalorder %s77, %s78
      %p87 = scmp.eq.s32.totalorder %s25, 0
      %p88 = por %p86, %p87
      %p89 = scmp.ne.s32.totalorder %s77, %s78
      %p90 = scmp.eq.s32.totalorder %s26, 1
      %p91 = por %p89, %p90
      %p93 = scmp.ne.s32.totalorder %s78, %s92
      %p94 = scmp.eq.s32.totalorder %s26, 0
      %p95 = por %p93, %p94
      %s97 = sadd.s32 %s96, 1
      %p100 = scmp.eq.s32.totalorder %s20, 1
      %p101 = scmp.ne.s32.totalorder %s96, %s98
      %p102 = scmp.eq.s32.totalorder %s20, 0
      %p103 = por %p101, %p102
      %p104 = scmp.ne.s32.totalorder %s96, %s98
      %p105 = scmp.eq.s32.totalorder %s25, 1
      %p106 = por %p104, %p105
      %p107 = scmp.ne.s32.totalorder %s98, %s99
      %p108 = scmp.eq.s32.totalorder %s25, 0
      %p109 = por %p107, %p108
      %p110 = scmp.ne.s32.totalorder %s98, %s99
      %p111 = scmp.eq.s32.totalorder %s26, 1
      %p112 = por %p110, %p111
      %p114 = scmp.ne.s32.totalorder %s99, %s113
      %p115 = scmp.eq.s32.totalorder %s26, 0
      %p116 = por %p114, %p115
      %s118 = sadd.s32 %s117, 1
      %p121 = scmp.eq.s32.totalorder %s20, 1
      %p122 = scmp.ne.s32.totalorder %s117, %s119
      %p123 = scmp.eq.s32.totalorder %s20, 0
      %p124 = por %p122, %p123
      %p125 = scmp.ne.s32.totalorder %s117, %s119
      %p126 = scmp.eq.s32.totalorder %s25, 1
      %p127 = por %p125, %p126
      %p128 = scmp.ne.s32.totalorder %s119, %s120
      %p129 = scmp.eq.s32.totalorder %s25, 0
      %p130 = por %p128, %p129
      %p131 = scmp.ne.s32.totalorder %s119, %s120
      %p132 = scmp.eq.s32.totalorder %s26, 1
      %p133 = por %p131, %p132
      %p135 = scmp.ne.s32.totalorder %s120, %s134
      %p136 = scmp.eq.s32.totalorder %s26, 0
      %p137 = por %p135, %p136
      %s139 = sadd.s32 %s138, 1
      %p142 = scmp.eq.s32.totalorder %s20, 1
      %p143 = scmp.ne.s32.totalorder %s138, %s140
      %p144 = scmp.eq.s32.totalorder %s20, 0
      %p145 = por %p143, %p144
      %p146 = scmp.ne.s32.totalorder %s138, %s140
      %p147 = scmp.eq.s32.totalorder %s25, 1
      %p148 = por %p146, %p147
      %p149 = scmp.ne.s32.totalorder %s140, %s141
      %p150 = scmp.eq.s32.totalorder %s25, 0
      %p151 = por %p149, %p150
      %p152 = scmp.ne.s32.totalorder %s140, %s141
      %p153 = scmp.eq.s32.totalorder %s26, 1
      %p154 = por %p152, %p153
      %p156 = scmp.ne.s32.totalorder %s141, %s155
      %p157 = scmp.eq.s32.totalorder %s26, 0
      %p158 = por %p156, %p157
      %s159 = ssub.s32 %s20, %s27
      %p160 = scmp.eq.s32.totalorder %s159, 0
      %s162 = sadd.s32 %s161, 1
      %s163 = scalar_select %p160, %s161, %s162
      %p166 = pneg %p160
      %p167 = scmp.eq.s32.totalorder %s20, 1
      %p168 = por %p166, %p167
      %p169 = scmp.ne.s32.totalorder %s161, %s164
      %p170 = scmp.eq.s32.totalorder %s20, 0
      %p171 = por %p169, %p170
      %p172 = scmp.ne.s32.totalorder %s161, %s164
      %p173 = scmp.eq.s32.totalorder %s25, 1
      %p174 = por %p172, %p173
      %p175 = scmp.ne.s32.totalorder %s164, %s165
      %p176 = scmp.eq.s32.totalorder %s25, 0
      %p177 = por %p175, %p176
      %p178 = scmp.ne.s32.totalorder %s164, %s165
      %p179 = scmp.eq.s32.totalorder %s26, 1
      %p180 = por %p178, %p179
      %p182 = scmp.ne.s32.totalorder %s165, %s181
      %p183 = scmp.eq.s32.totalorder %s26, 0
      %p184 = por %p182, %p183
      %p185 = scmp.le.s32.totalorder 1, %s20
      %p186 = scmp.lt.s32.totalorder %s20, 3
      %p187 = pnand %p185, %p186
      %p188 = pneg %p187
      // Predicated region
      $region9: #{tpu_custom_call.1} parent=5 // pred_check
        _
      $region10: #{tpu_custom_call.1} parent=5 // pred_check_branch
        %190 = sbr.rel (%p187) target = $region12
      $region11: #{tpu_custom_call.1} parent=5 // pred_region
        %s191 = ssub.s32 %s20, 1
        // Predicated region
        $region13: #{tpu_custom_call.1} parent=11 // pred_check
          %p192 = pneg %p67
        $region14: #{tpu_custom_call.1} parent=11 // pred_check_branch
          %194 = sbr.rel (%p192) target = $region16
        $region15: #{tpu_custom_call.1} parent=11 // pred_region
          %s196 = ssub.s32 2048, 2048
          %197 = vsyncadd [#allocation9], %s196
          %s198 = sshll.u32 [#allocation8], 4
          %s199 = int_to_ptr.vmem [resolvable:$true] %s198
          %204 = dma.hbm_to_vmem [thread:$0]  %s1, 2048, %s199, [#allocation9], 64, 64, 4
        $region16: #{tpu_custom_call.1} parent=11 // pred_fallthru
          _
        // Predicated region
        $region17: #{tpu_custom_call.1} parent=11 // pred_check
          %p205 = pneg %p88
        $region18: #{tpu_custom_call.1} parent=11 // pred_check_branch
          %207 = sbr.rel (%p205) target = $region20
        $region19: #{tpu_custom_call.1} parent=11 // pred_region
          _
        $region20: #{tpu_custom_call.1} parent=11 // pred_fallthru
          _
        // Predicated region
        $region21: #{tpu_custom_call.1} parent=11 // pred_check
          %p208 = pneg %p109
        $region22: #{tpu_custom_call.1} parent=11 // pred_check_branch
          %210 = sbr.rel (%p208) target = $region24
        $region23: #{tpu_custom_call.1} parent=11 // pred_region
          _
        $region24: #{tpu_custom_call.1} parent=11 // pred_fallthru
          _
        // Predicated region
        $region25: #{tpu_custom_call.1} parent=11 // pred_check
          %p211 = pneg %p130
        $region26: #{tpu_custom_call.1} parent=11 // pred_check_branch
          %213 = sbr.rel (%p211) target = $region28
        $region27: #{tpu_custom_call.1} parent=11 // pred_region
          _
        $region28: #{tpu_custom_call.1} parent=11 // pred_fallthru
          _
        // Predicated region
        $region29: #{tpu_custom_call.1} parent=11 // pred_check
          %p214 = pneg %p151
        $region30: #{tpu_custom_call.1} parent=11 // pred_check_branch
          %216 = sbr.rel (%p214) target = $region32
        $region31: #{tpu_custom_call.1} parent=11 // pred_region
          %s218 = ssub.s32 16, 16
          %219 = vsyncadd [#allocation7], %s218
          %s221 = sshll.u32 %s5, 4
          %s222 = int_to_ptr.vmem [resolvable:$true] %s221
          %224 = dma.vmem_to_smem %s222, 16, [#allocation10], [#allocation7]
        $region32: #{tpu_custom_call.1} parent=11 // pred_fallthru
          _
      $region12: #{tpu_custom_call.1} parent=5 // pred_fallthru
        _
      %p225 = scmp.lt.s32.totalorder %s20, 2
      // Predicated region
      $region33: #{tpu_custom_call.1} parent=5 // pred_check
        %p226 = pneg %p225
      $region34: #{tpu_custom_call.1} parent=5 // pred_check_branch
        %228 = sbr.rel (%p226) target = $region36
      $region35: #{tpu_custom_call.1} parent=5 // pred_region
        // Predicated region
        $region37: #{tpu_custom_call.1} parent=35 // pred_check
          %p229 = pneg %p40
        $region38: #{tpu_custom_call.1} parent=35 // pred_check_branch
          %231 = sbr.rel (%p229) target = $region40
        $region39: #{tpu_custom_call.1} parent=35 // pred_region
          %s232 = sand.u32 %s30, 1
          %s233 = scalar_lea.sflag [#allocation5], %s232
          %s234 = sand.u32 %s30, 1
          %s235 = smul.addr %s234, 64
          %s236 = scalar_lea.vmem [#allocation4], %s235
          %s237 = smul.u32 2, %s20
          %s239 = ssub.s32 1024, 1024
          %240 = vsyncadd %s233, %s239
          %s241 = smul.addr %s237, 4
          %s242 = smul.addr %s241, 128
          %s243 = scalar_lea.hbm %s0, %s242
          %s244 = sshll.u32 %s236, 4
          %s245 = int_to_ptr.vmem [resolvable:$true] %s244
          %250 = dma.hbm_to_vmem [thread:$0]  %s243, 1024, %s245, %s233, 128, 128, 8
        $region40: #{tpu_custom_call.1} parent=35 // pred_fallthru
          _
      $region36: #{tpu_custom_call.1} parent=5 // pred_fallthru
        _
      %p251 = scmp.le.s32.totalorder 1, %s20
      %p252 = scmp.lt.s32.totalorder %s20, 3
      %p253 = pnand %p251, %p252
      %p254 = pneg %p253
      // Predicated region
      $region41: #{tpu_custom_call.1} parent=5 // pred_check
        _
      $region42: #{tpu_custom_call.1} parent=5 // pred_check_branch
        %256 = sbr.rel (%p253) target = $region44
      $region43: #{tpu_custom_call.1} parent=5 // pred_region
        %s257 = ssub.s32 %s20, 1
        %s258 = sand.u32 %s33, 1
        %s259 = scalar_lea.sflag [#allocation5], %s258
        %s260 = sand.u32 %s33, 1
        %s261 = smul.addr %s260, 64
        %s262 = scalar_lea.vmem [#allocation4], %s261
        // Predicated region
        $region45: #{tpu_custom_call.1} parent=43 // pred_check
          %p263 = pneg %p46
        $region46: #{tpu_custom_call.1} parent=43 // pred_check_branch
          %265 = sbr.rel (%p263) target = $region48
        $region47: #{tpu_custom_call.1} parent=43 // pred_region
          %266 = dma.done %s259, 1024
        $region48: #{tpu_custom_call.1} parent=43 // pred_fallthru
          _
        // Predicated region
        $region49: #{tpu_custom_call.1} parent=43 // pred_check
          %p267 = pneg %p67
        $region50: #{tpu_custom_call.1} parent=43 // pred_check_branch
          %269 = sbr.rel (%p267) target = $region52
        $region51: #{tpu_custom_call.1} parent=43 // pred_region
          %270 = dma.done [#allocation9], 2048
        $region52: #{tpu_custom_call.1} parent=43 // pred_fallthru
          _
        // Predicated region
        $region53: #{tpu_custom_call.1} parent=43 // pred_check
          %p271 = pneg %p151
        $region54: #{tpu_custom_call.1} parent=43 // pred_check_branch
          %273 = sbr.rel (%p271) target = $region56
        $region55: #{tpu_custom_call.1} parent=43 // pred_region
          %274 = dma.done [#allocation7], 16
        $region56: #{tpu_custom_call.1} parent=43 // pred_fallthru
          _
        %275 = sfence
        %s276 = sand.u32 %s33, 1
        %s277 = scalar_lea.sflag [#allocation5], %s276
        %s278 = sand.u32 %s33, 1
        %s279 = smul.addr %s278, 64
        %s280 = scalar_lea.vmem [#allocation4], %s279
        %p281 = pneg %p46
        %p282 = pneg %p43
        %p283 = pneg %p67
        %p284 = pneg %p64
        %p285 = pneg %p88
        %p286 = pneg %p85
        %p287 = pneg %p109
        %p288 = pneg %p106
        %p289 = pneg %p130
        %p290 = pneg %p127
        %p291 = pneg %p151
        %p292 = pneg %p148
        %p293 = pneg %p177
        %p294 = pneg %p174
        %s295 = sand.u32 %s164, 1
        %s296 = scalar_lea.sflag [#allocation6], %s295
        %s297 = sand.u32 %s164, 1
        %s298 = smul.addr %s297, 64
        %s299 = scalar_lea.vmem [#allocation11], %s298
        %s300 = smul.u32 2, %s25
        %s301 = smul.u32 2, %s25
        %v303 = vlaneseq
        %v304 = vshrl.u32 %v303, 7
        %v305 = vadd.s32 %v304, 8
        %v306 = vadd.s32 %v304, 16
        %v307 = vadd.s32 %v304, 24
        %v308 = vadd.s32 %v304, 32
        %v309 = vadd.s32 %v304, 40
        %v310 = vadd.s32 %v304, 48
        %v311 = vadd.s32 %v304, 56
        %v312 = vlaneseq
        %v313 = vand.u32 %v312, 127
        %vm314 = vcmp.ge.s32.totalorder %v304, %v313
        %vm315 = vcmp.ge.s32.totalorder %v305, %v313
        %vm316 = vcmp.ge.s32.totalorder %v306, %v313
        %vm317 = vcmp.ge.s32.totalorder %v307, %v313
        %vm318 = vcmp.ge.s32.totalorder %v308, %v313
        %vm319 = vcmp.ge.s32.totalorder %v309, %v313
        %vm320 = vcmp.ge.s32.totalorder %v310, %v313
        %vm321 = vcmp.ge.s32.totalorder %v311, %v313
        %v322 = vsel %vm314, 1, 0
        %v323 = vsel %vm315, 1, 0
        %v324 = vsel %vm316, 1, 0
        %v325 = vsel %vm317, 1, 0
        %v326 = vsel %vm318, 1, 0
        %v327 = vsel %vm319, 1, 0
        %v328 = vsel %vm320, 1, 0
        %v329 = vsel %vm321, 1, 0
        %v330 = vcvt.s32.f32 %v322
        %v331 = vcvt.s32.f32 %v323
        %v332 = vcvt.s32.f32 %v324
        %v333 = vcvt.s32.f32 %v325
        %v334 = vcvt.s32.f32 %v326
        %v335 = vcvt.s32.f32 %v327
        %v336 = vcvt.s32.f32 %v328
        %v337 = vcvt.s32.f32 %v329
        %vm338 = vcmp.eq.s32.totalorder %v304, %v313
        %vm339 = vcmp.eq.s32.totalorder %v305, %v313
        %vm340 = vcmp.eq.s32.totalorder %v306, %v313
        %vm341 = vcmp.eq.s32.totalorder %v307, %v313
        %v342 = vsel %vm338, 1, 0
        %v343 = vsel %vm339, 1, 0
        %v344 = vsel %vm340, 1, 0
        %v345 = vsel %vm341, 1, 0
        %v346 = vcvt.s32.f32 %v342
        %v347 = vcvt.s32.f32 %v343
        %v348 = vcvt.s32.f32 %v344
        %v349 = vcvt.s32.f32 %v345
        %v350 = vld [vmem:[%s4] sm:$0xf]
        %v351 = vld [vmem:[%s262] sm:$0xff]
        %v352 = vld [vmem:[%s262 + $0x8] sm:$0xff]
        %v353 = vld [vmem:[%s262 + $0x10] sm:$0xff]
        %v354 = vld [vmem:[%s262 + $0x18] sm:$0xff]
        %v355 = vpack.c.bf16 %v352, %v351
        %v356 = vpack.c.bf16 %v354, %v353
        %s357 = scalar_lea.vmem %s262, 32 [#allocation4]
        %v358 = vld [vmem:[%s357] sm:$0xff]
        %v359 = vld [vmem:[%s357 + $0x8] sm:$0xff]
        %v360 = vld [vmem:[%s357 + $0x10] sm:$0xff]
        %v361 = vld [vmem:[%s357 + $0x18] sm:$0xff]
        %v362 = vpack.c.bf16 %v359, %v358
        %v363 = vpack.c.bf16 %v361, %v360
        %v364 = vld [vmem:[#allocation8] sm:$0xf]
        %v365 = vld [vmem:[#allocation8 + $0x4] sm:$0xf]
        %v366 = vld [vmem:[#allocation8 + $0x8] sm:$0xf]
        %v367 = vld [vmem:[#allocation8 + $0xc] sm:$0xf]
        %v368 = vld [vmem:[#allocation8 + $0x10] sm:$0xf]
        %v369 = vld [vmem:[#allocation8 + $0x14] sm:$0xf]
        %v370 = vld [vmem:[#allocation8 + $0x18] sm:$0xf]
        %v371 = vld [vmem:[#allocation8 + $0x1c] sm:$0xf]
        %s372 = scalar_lea.vmem [#allocation8], 32
        %v373 = vld [vmem:[%s372] sm:$0xf]
        %v374 = vld [vmem:[%s372 + $0x4] sm:$0xf]
        %v375 = vld [vmem:[%s372 + $0x8] sm:$0xf]
        %v376 = vld [vmem:[%s372 + $0xc] sm:$0xf]
        %v377 = vld [vmem:[%s372 + $0x10] sm:$0xf]
        %v378 = vld [vmem:[%s372 + $0x14] sm:$0xf]
        %v379 = vld [vmem:[%s372 + $0x18] sm:$0xf]
        %v380 = vld [vmem:[%s372 + $0x1c] sm:$0xf]
        %v381 = vld [vmem:[%s2] sm:$0xf]
        %v382 = vld [vmem:[%s2 + $0x4] sm:$0xf]
        %v383 = vld [vmem:[%s2 + $0x8] sm:$0xf]
        %v384 = vld [vmem:[%s2 + $0xc] sm:$0xf]
        %v393 = vunpack.c.l.b16 %v364
        %v394 = vunpack.c.l.b16 %v365
        %v395 = vunpack.c.l.b16 %v366
        %v396 = vunpack.c.l.b16 %v367
        %v397 = vunpack.c.l.b16 %v368
        %v398 = vunpack.c.l.b16 %v369
        %v399 = vunpack.c.l.b16 %v370
        %v400 = vunpack.c.l.b16 %v371
        %v401 = vpack.c.b16 %v394, %v393
        %v402 = vpack.c.b16 %v396, %v395
        %v403 = vpack.c.b16 %v398, %v397
        %v404 = vpack.c.b16 %v400, %v399
        %vm405 = vcmask 523264
        %v407 = vsel %vm405, %v401, 0
        %v410 = vsel %vm405, %v402, 0
        %v413 = vsel %vm405, %v403, 0
        %v416 = vsel %vm405, %v404, 0
        %v419 = vsel %vm405, %v355, 0
        %v422 = vsel %vm405, %v356, 0
        %424 = vmatprep.subr.bf16.mxu0 0
        %425 = vmatpush1.bf16.xpose.msra.mxu0 %v419
        %426 = vmatprep.subr.bf16.mxu0 0
        %427 = vmatpush1.bf16.xpose.msra.mxu0 %v422
        %428 = vmatprep.subr.bf16.mxu0 0
        %429 = vmatpush1.bf16.xpose.msra.mxu0 0
        %430 = vmatprep.subr.bf16.mxu0 0
        %431 = vmatpush1.bf16.xpose.msra.mxu0 0
        %432 = vmatprep.subr.bf16.mxu0 0
        %433 = vmatpush1.bf16.xpose.msra.mxu0 0
        %434 = vmatprep.subr.bf16.mxu0 0
        %435 = vmatpush1.bf16.xpose.msra.mxu0 0
        %436 = vmatprep.subr.bf16.mxu0 0
        %437 = vmatpush1.bf16.xpose.msra.mxu0 0
        %438 = vmatprep.subr.bf16.mxu0 0
        %439 = vmatpush1.bf16.xpose.msra.mxu0 0
        %440 = vmatprep.subr.bf16.mxu0 0
        %441 = vmatpush1.bf16.xpose.msra.mxu0 0
        %442 = vmatprep.subr.bf16.mxu0 0
        %443 = vmatpush1.bf16.xpose.msra.mxu0 0
        %444 = vmatprep.subr.bf16.mxu0 0
        %445 = vmatpush1.bf16.xpose.msra.mxu0 0
        %446 = vmatprep.subr.bf16.mxu0 0
        %447 = vmatpush1.bf16.xpose.msra.mxu0 0
        %448 = vmatprep.subr.bf16.mxu0 0
        %449 = vmatpush1.bf16.xpose.msra.mxu0 0
        %450 = vmatprep.subr.bf16.mxu0 0
        %451 = vmatpush1.bf16.xpose.msra.mxu0 0
        %452 = vmatprep.subr.bf16.mxu0 0
        %453 = vmatpush1.bf16.xpose.msra.mxu0 0
        %454 = vmatprep.subr.bf16.mxu0 0
        %455 = vmatpush1.bf16.xpose.msra.mxu0 0
        %456 = vmatprep.mubr.bf16.mxu0 0
        %457 = vmatmul.mubr.bf16.gmra.mrb[0].mxu0 %v407
        %v458 = vpop.f32.mrb[0].mxu0
        %v459 = vadd.f32 0.0, %v458
        %v460 = vpop.f32.mrb[0].mxu0
        %v461 = vpop.f32.mrb[0].mxu0
        %v462 = vadd.f32 0.0, %v461
        %v463 = vpop.f32.mrb[0].mxu0
        %464 = vmatprep.mubr.bf16.mxu0 0
        %465 = vmatmul.mubr.bf16.gmra.mrb[0].mxu0 %v410
        %v466 = vpop.f32.mrb[0].mxu0
        %v467 = vadd.f32 0.0, %v466
        %v468 = vpop.f32.mrb[0].mxu0
        %v469 = vpop.f32.mrb[0].mxu0
        %v470 = vadd.f32 0.0, %v469
        %v471 = vpop.f32.mrb[0].mxu0
        %472 = vmatprep.mubr.bf16.mxu0 0
        %473 = vmatmul.mubr.bf16.gmra.mrb[0].mxu0 %v413
        %v474 = vpop.f32.mrb[0].mxu0
        %v475 = vadd.f32 0.0, %v474
        %v476 = vpop.f32.mrb[0].mxu0
        %v477 = vpop.f32.mrb[0].mxu0
        %v478 = vadd.f32 0.0, %v477
        %v479 = vpop.f32.mrb[0].mxu0
        %480 = vmatprep.mubr.bf16.mxu0 0
        %481 = vmatmul.mubr.bf16.gmra.mrb[0].mxu0 %v416
        %v482 = vpop.f32.mrb[0].mxu0
        %v483 = vadd.f32 0.0, %v482
        %v484 = vpop.f32.mrb[0].mxu0
        %v485 = vpop.f32.mrb[0].mxu0
        %v486 = vadd.f32 0.0, %v485
        %v487 = vpop.f32.mrb[0].mxu0
        %488 = vdwg.mxu0
        %v489 = vpack.c.bf16 %v462, %v459
        %v490 = vpack.c.bf16 %v470, %v467
        %v491 = vpack.c.bf16 %v478, %v475
        %v492 = vpack.c.bf16 %v486, %v483
        %vm493 = vcmask 261120
        %494 = vst.msk [vmem:[#allocation2] sm:$0xff] %vm493, %v489
        %495 = vst.msk [vmem:[#allocation2 + $0x8] sm:$0xff] %vm493, %v490
        %496 = vst.msk [vmem:[#allocation2 + $0x10] sm:$0xff] %vm493, %v491
        %497 = vst.msk [vmem:[#allocation2 + $0x18] sm:$0xff] %vm493, %v492
        %v499 = vsel %vm405, %v362, 0
        %v502 = vsel %vm405, %v363, 0
        %504 = vmatprep.subr.bf16.mxu0 0
        %505 = vmatpush1.bf16.xpose.msra.mxu0 %v499
        %506 = vmatprep.subr.bf16.mxu0 0
        %507 = vmatpush1.bf16.xpose.msra.mxu0 %v502
        %508 = vmatprep.subr.bf16.mxu0 0
        %509 = vmatpush1.bf16.xpose.msra.mxu0 0
        %510 = vmatprep.subr.bf16.mxu0 0
        %511 = vmatpush1.bf16.xpose.msra.mxu0 0
        %512 = vmatprep.subr.bf16.mxu0 0
        %513 = vmatpush1.bf16.xpose.msra.mxu0 0
        %514 = vmatprep.subr.bf16.mxu0 0
        %515 = vmatpush1.bf16.xpose.msra.mxu0 0
        %516 = vmatprep.subr.bf16.mxu0 0
        %517 = vmatpush1.bf16.xpose.msra.mxu0 0
        %518 = vmatprep.subr.bf16.mxu0 0
        %519 = vmatpush1.bf16.xpose.msra.mxu0 0
        %520 = vmatprep.subr.bf16.mxu0 0
        %521 = vmatpush1.bf16.xpose.msra.mxu0 0
        %522 = vmatprep.subr.bf16.mxu0 0
        %523 = vmatpush1.bf16.xpose.msra.mxu0 0
        %524 = vmatprep.subr.bf16.mxu0 0
        %525 = vmatpush1.bf16.xpose.msra.mxu0 0
        %526 = vmatprep.subr.bf16.mxu0 0
        %527 = vmatpush1.bf16.xpose.msra.mxu0 0
        %528 = vmatprep.subr.bf16.mxu0 0
        %529 = vmatpush1.bf16.xpose.msra.mxu0 0
        %530 = vmatprep.subr.bf16.mxu0 0
        %531 = vmatpush1.bf16.xpose.msra.mxu0 0
        %532 = vmatprep.subr.bf16.mxu0 0
        %533 = vmatpush1.bf16.xpose.msra.mxu0 0
        %534 = vmatprep.subr.bf16.mxu0 0
        %535 = vmatpush1.bf16.xpose.msra.mxu0 0
        %536 = vmatprep.mubr.bf16.mxu0 0
        %537 = vmatmul.mubr.bf16.gmra.mrb[0].mxu0 %v407
        %v538 = vpop.f32.mrb[0].mxu0
        %v539 = vadd.f32 0.0, %v538
        %v540 = vpop.f32.mrb[0].mxu0
        %v541 = vpop.f32.mrb[0].mxu0
        %v542 = vadd.f32 0.0, %v541
        %v543 = vpop.f32.mrb[0].mxu0
        %544 = vmatprep.mubr.bf16.mxu0 0
        %545 = vmatmul.mubr.bf16.gmra.mrb[0].mxu0 %v410
        %v546 = vpop.f32.mrb[0].mxu0
        %v547 = vadd.f32 0.0, %v546
        %v548 = vpop.f32.mrb[0].mxu0
        %v549 = vpop.f32.mrb[0].mxu0
        %v550 = vadd.f32 0.0, %v549
        %v551 = vpop.f32.mrb[0].mxu0
        %552 = vmatprep.mubr.bf16.mxu0 0
        %553 = vmatmul.mubr.bf16.gmra.mrb[0].mxu0 %v413
        %v554 = vpop.f32.mrb[0].mxu0
        %v555 = vadd.f32 0.0, %v554
        %v556 = vpop.f32.mrb[0].mxu0
        %v557 = vpop.f32.mrb[0].mxu0
        %v558 = vadd.f32 0.0, %v557
        %v559 = vpop.f32.mrb[0].mxu0
        %560 = vmatprep.mubr.bf16.mxu0 0
        %561 = vmatmul.mubr.bf16.gmra.mrb[0].mxu0 %v416
        %v562 = vpop.f32.mrb[0].mxu0
        %v563 = vadd.f32 0.0, %v562
        %v564 = vpop.f32.mrb[0].mxu0
        %v565 = vpop.f32.mrb[0].mxu0
        %v566 = vadd.f32 0.0, %v565
        %v567 = vpop.f32.mrb[0].mxu0
        %568 = vdwg.mxu0
        %v569 = vpack.c.bf16 %v542, %v539
        %v570 = vpack.c.bf16 %v550, %v547
        %v571 = vpack.c.bf16 %v558, %v555
        %v572 = vpack.c.bf16 %v566, %v563
        %573 = vst.msk [vmem:[#allocation2 + $0x20] sm:$0xff] %vm493, %v569
        %574 = vst.msk [vmem:[#allocation2 + $0x28] sm:$0xff] %vm493, %v570
        %575 = vst.msk [vmem:[#allocation2 + $0x30] sm:$0xff] %vm493, %v571
        %576 = vst.msk [vmem:[#allocation2 + $0x38] sm:$0xff] %vm493, %v572
        %v577 = vld [vmem:[#allocation2] sm:$0xff]
        %v578 = vld [vmem:[#allocation2 + $0x8] sm:$0xff]
        %v579 = vld [vmem:[#allocation2 + $0x10] sm:$0xff]
        %v580 = vld [vmem:[#allocation2 + $0x18] sm:$0xff]
        %v581 = vld [vmem:[#allocation2 + $0x20] sm:$0xff]
        %v582 = vld [vmem:[#allocation2 + $0x28] sm:$0xff]
        %v583 = vld [vmem:[#allocation2 + $0x30] sm:$0xff]
        %v584 = vld [vmem:[#allocation2 + $0x38] sm:$0xff]
        %v589 = vunpack.c.l.b16 %v381
        %v590 = vunpack.c.l.b16 %v382
        %v591 = vunpack.c.l.b16 %v383
        %v592 = vunpack.c.l.b16 %v384
        %v593 = vpack.c.b16 %v590, %v589
        %v594 = vpack.c.b16 %v592, %v591
        %v598 = vsel %vm493, %v577, 0
        %v601 = vsel %vm493, %v578, 0
        %v604 = vsel %vm493, %v579, 0
        %v607 = vsel %vm493, %v580, 0
        %v610 = vsel %vm493, %v581, 0
        %v613 = vsel %vm493, %v582, 0
        %v616 = vsel %vm493, %v583, 0
        %v619 = vsel %vm493, %v584, 0
        %621 = vmatprep.subr.bf16.mxu0 0
        %622 = vmatpush1.bf16.msra.mxu0 %v593
        %623 = vmatprep.subr.bf16.mxu0 0
        %624 = vmatpush1.bf16.msra.mxu0 %v594
        %625 = vmatprep.subr.bf16.mxu0 0
        %626 = vmatpush1.bf16.msra.mxu0 0
        %627 = vmatprep.subr.bf16.mxu0 0
        %628 = vmatpush1.bf16.msra.mxu0 0
        %629 = vmatprep.subr.bf16.mxu0 0
        %630 = vmatpush1.bf16.msra.mxu0 0
        %631 = vmatprep.subr.bf16.mxu0 0
        %632 = vmatpush1.bf16.msra.mxu0 0
        %633 = vmatprep.subr.bf16.mxu0 0
        %634 = vmatpush1.bf16.msra.mxu0 0
        %635 = vmatprep.subr.bf16.mxu0 0
        %636 = vmatpush1.bf16.msra.mxu0 0
        %637 = vmatprep.subr.bf16.mxu0 0
        %638 = vmatpush1.bf16.msra.mxu0 0
        %639 = vmatprep.subr.bf16.mxu0 0
        %640 = vmatpush1.bf16.msra.mxu0 0
        %641 = vmatprep.subr.bf16.mxu0 0
        %642 = vmatpush1.bf16.msra.mxu0 0
        %643 = vmatprep.subr.bf16.mxu0 0
        %644 = vmatpush1.bf16.msra.mxu0 0
        %645 = vmatprep.subr.bf16.mxu0 0
        %646 = vmatpush1.bf16.msra.mxu0 0
        %647 = vmatprep.subr.bf16.mxu0 0
        %648 = vmatpush1.bf16.msra.mxu0 0
        %649 = vmatprep.subr.bf16.mxu0 0
        %650 = vmatpush1.bf16.msra.mxu0 0
        %651 = vmatprep.subr.bf16.mxu0 0
        %652 = vmatpush1.bf16.msra.mxu0 0
        %653 = vmatprep.mubr.bf16.mxu0 0
        %654 = vmatmul.mubr.bf16.gmra.mrb[0].mxu0 %v598
        %v655 = vpop.f32.mrb[0].mxu0
        %v656 = vadd.f32 0.0, %v655
        %v657 = vpop.f32.mrb[0].mxu0
        %v658 = vpop.f32.mrb[0].mxu0
        %v659 = vadd.f32 0.0, %v658
        %v660 = vpop.f32.mrb[0].mxu0
        %661 = vmatprep.mubr.bf16.mxu0 0
        %662 = vmatmul.mubr.bf16.gmra.mrb[0].mxu0 %v601
        %v663 = vpop.f32.mrb[0].mxu0
        %v664 = vadd.f32 0.0, %v663
        %v665 = vpop.f32.mrb[0].mxu0
        %v666 = vpop.f32.mrb[0].mxu0
        %v667 = vadd.f32 0.0, %v666
        %v668 = vpop.f32.mrb[0].mxu0
        %669 = vmatprep.mubr.bf16.mxu0 0
        %670 = vmatmul.mubr.bf16.gmra.mrb[0].mxu0 %v604
        %v671 = vpop.f32.mrb[0].mxu0
        %v672 = vadd.f32 0.0, %v671
        %v673 = vpop.f32.mrb[0].mxu0
        %v674 = vpop.f32.mrb[0].mxu0
        %v675 = vadd.f32 0.0, %v674
        %v676 = vpop.f32.mrb[0].mxu0
        %677 = vmatprep.mubr.bf16.mxu0 0
        %678 = vmatmul.mubr.bf16.gmra.mrb[0].mxu0 %v607
        %v679 = vpop.f32.mrb[0].mxu0
        %v680 = vadd.f32 0.0, %v679
        %v681 = vpop.f32.mrb[0].mxu0
        %v682 = vpop.f32.mrb[0].mxu0
        %v683 = vadd.f32 0.0, %v682
        %v684 = vpop.f32.mrb[0].mxu0
        %685 = vmatprep.mubr.bf16.mxu0 0
        %686 = vmatmul.mubr.bf16.gmra.mrb[0].mxu0 %v610
        %v687 = vpop.f32.mrb[0].mxu0
        %v688 = vadd.f32 0.0, %v687
        %v689 = vpop.f32.mrb[0].mxu0
        %v690 = vpop.f32.mrb[0].mxu0
        %v691 = vadd.f32 0.0, %v690
        %v692 = vpop.f32.mrb[0].mxu0
        %693 = vmatprep.mubr.bf16.mxu0 0
        %694 = vmatmul.mubr.bf16.gmra.mrb[0].mxu0 %v613
        %v695 = vpop.f32.mrb[0].mxu0
        %v696 = vadd.f32 0.0, %v695
        %v697 = vpop.f32.mrb[0].mxu0
        %v698 = vpop.f32.mrb[0].mxu0
        %v699 = vadd.f32 0.0, %v698
        %v700 = vpop.f32.mrb[0].mxu0
        %701 = vmatprep.mubr.bf16.mxu0 0
        %702 = vmatmul.mubr.bf16.gmra.mrb[0].mxu0 %v616
        %v703 = vpop.f32.mrb[0].mxu0
        %v704 = vadd.f32 0.0, %v703
        %v705 = vpop.f32.mrb[0].mxu0
        %v706 = vpop.f32.mrb[0].mxu0
        %v707 = vadd.f32 0.0, %v706
        %v708 = vpop.f32.mrb[0].mxu0
        %709 = vmatprep.mubr.bf16.mxu0 0
        %710 = vmatmul.mubr.bf16.gmra.mrb[0].mxu0 %v619
        %v711 = vpop.f32.mrb[0].mxu0
        %v712 = vadd.f32 0.0, %v711
        %v713 = vpop.f32.mrb[0].mxu0
        %v714 = vpop.f32.mrb[0].mxu0
        %v715 = vadd.f32 0.0, %v714
        %v716 = vpop.f32.mrb[0].mxu0
        %717 = vdwg.mxu0
        %v718 = vsub.f32 0.0, %v656
        %v719 = vsub.f32 0.0, %v659
        %v720 = vsub.f32 0.0, %v664
        %v721 = vsub.f32 0.0, %v667
        %v722 = vsub.f32 0.0, %v672
        %v723 = vsub.f32 0.0, %v675
        %v724 = vsub.f32 0.0, %v680
        %v725 = vsub.f32 0.0, %v683
        %v726 = vsub.f32 0.0, %v688
        %v727 = vsub.f32 0.0, %v691
        %v728 = vsub.f32 0.0, %v696
        %v729 = vsub.f32 0.0, %v699
        %v730 = vsub.f32 0.0, %v704
        %v731 = vsub.f32 0.0, %v707
        %v732 = vsub.f32 0.0, %v712
        %v733 = vsub.f32 0.0, %v715
        %v734 = vmul.f32 %v718, 1.442695
        %v735 = vpow.pop %v734
        %v736 = vmul.f32 %v719, 1.442695
        %v737 = vpow.pop %v736
        %v738 = vmul.f32 %v720, 1.442695
        %v739 = vpow.pop %v738
        %v740 = vmul.f32 %v721, 1.442695
        %v741 = vpow.pop %v740
        %v742 = vmul.f32 %v722, 1.442695
        %v743 = vpow.pop %v742
        %v744 = vmul.f32 %v723, 1.442695
        %v745 = vpow.pop %v744
        %v746 = vmul.f32 %v724, 1.442695
        %v747 = vpow.pop %v746
        %v748 = vmul.f32 %v725, 1.442695
        %v749 = vpow.pop %v748
        %v750 = vmul.f32 %v726, 1.442695
        %v751 = vpow.pop %v750
        %v752 = vmul.f32 %v727, 1.442695
        %v753 = vpow.pop %v752
        %v754 = vmul.f32 %v728, 1.442695
        %v755 = vpow.pop %v754
        %v756 = vmul.f32 %v729, 1.442695
        %v757 = vpow.pop %v756
        %v758 = vmul.f32 %v730, 1.442695
        %v759 = vpow.pop %v758
        %v760 = vmul.f32 %v731, 1.442695
        %v761 = vpow.pop %v760
        %v762 = vmul.f32 %v732, 1.442695
        %v763 = vpow.pop %v762
        %v764 = vmul.f32 %v733, 1.442695
        %v765 = vpow.pop %v764
        %v766 = vadd.f32 %v735, 1.0
        %v767 = vadd.f32 %v737, 1.0
        %v768 = vadd.f32 %v739, 1.0
        %v769 = vadd.f32 %v741, 1.0
        %v770 = vadd.f32 %v743, 1.0
        %v771 = vadd.f32 %v745, 1.0
        %v772 = vadd.f32 %v747, 1.0
        %v773 = vadd.f32 %v749, 1.0
        %v774 = vadd.f32 %v751, 1.0
        %v775 = vadd.f32 %v753, 1.0
        %v776 = vadd.f32 %v755, 1.0
        %v777 = vadd.f32 %v757, 1.0
        %v778 = vadd.f32 %v759, 1.0
        %v779 = vadd.f32 %v761, 1.0
        %v780 = vadd.f32 %v763, 1.0
        %v781 = vadd.f32 %v765, 1.0
        %v782 = vrcp.pop %v766
        %v783 = vmul.f32 1.0, %v782
        %v784 = vrcp.pop %v767
        %v785 = vmul.f32 1.0, %v784
        %v786 = vrcp.pop %v768
        %v787 = vmul.f32 1.0, %v786
        %v788 = vrcp.pop %v769
        %v789 = vmul.f32 1.0, %v788
        %v790 = vrcp.pop %v770
        %v791 = vmul.f32 1.0, %v790
        %v792 = vrcp.pop %v771
        %v793 = vmul.f32 1.0, %v792
        %v794 = vrcp.pop %v772
        %v795 = vmul.f32 1.0, %v794
        %v796 = vrcp.pop %v773
        %v797 = vmul.f32 1.0, %v796
        %v798 = vrcp.pop %v774
        %v799 = vmul.f32 1.0, %v798
        %v800 = vrcp.pop %v775
        %v801 = vmul.f32 1.0, %v800
        %v802 = vrcp.pop %v776
        %v803 = vmul.f32 1.0, %v802
        %v804 = vrcp.pop %v777
        %v805 = vmul.f32 1.0, %v804
        %v806 = vrcp.pop %v778
        %v807 = vmul.f32 1.0, %v806
        %v808 = vrcp.pop %v779
        %v809 = vmul.f32 1.0, %v808
        %v810 = vrcp.pop %v780
        %v811 = vmul.f32 1.0, %v810
        %v812 = vrcp.pop %v781
        %v813 = vmul.f32 1.0, %v812
        %v814 = vmul.f32 %v656, %v783
        %v815 = vmul.f32 %v659, %v785
        %v816 = vmul.f32 %v664, %v787
        %v817 = vmul.f32 %v667, %v789
        %v818 = vmul.f32 %v672, %v791
        %v819 = vmul.f32 %v675, %v793
        %v820 = vmul.f32 %v680, %v795
        %v821 = vmul.f32 %v683, %v797
        %v822 = vmul.f32 %v688, %v799
        %v823 = vmul.f32 %v691, %v801
        %v824 = vmul.f32 %v696, %v803
        %v825 = vmul.f32 %v699, %v805
        %v826 = vmul.f32 %v704, %v807
        %v827 = vmul.f32 %v707, %v809
        %v828 = vmul.f32 %v712, %v811
        %v829 = vmul.f32 %v715, %v813
        %v830 = vlaneseq
        %v831 = vshrl.u32 %v830, 7
        %v832 = vsub.s32 2, %v831
        %v833 = vrot.slane %v350, %v832
        %835 = vrot.lane.b32.xlu0 %v833, 80
        %v836 = vpop.permute.xlu0 %835
        %v838 = vadd.f32 %v656, %v836
        %v839 = vadd.f32 %v659, %v836
        %v840 = vadd.f32 %v664, %v836
        %v841 = vadd.f32 %v667, %v836
        %v842 = vadd.f32 %v672, %v836
        %v843 = vadd.f32 %v675, %v836
        %v844 = vadd.f32 %v680, %v836
        %v845 = vadd.f32 %v683, %v836
        %v846 = vadd.f32 %v688, %v836
        %v847 = vadd.f32 %v691, %v836
        %v848 = vadd.f32 %v696, %v836
        %v849 = vadd.f32 %v699, %v836
        %v850 = vadd.f32 %v704, %v836
        %v851 = vadd.f32 %v707, %v836
        %v852 = vadd.f32 %v712, %v836
        %v853 = vadd.f32 %v715, %v836
        %v854 = vmax.f32 %v838, 0.0
        %v855 = vmax.f32 %v839, 0.0
        %v856 = vmax.f32 %v840, 0.0
        %v857 = vmax.f32 %v841, 0.0
        %v858 = vmax.f32 %v842, 0.0
        %v859 = vmax.f32 %v843, 0.0
        %v860 = vmax.f32 %v844, 0.0
        %v861 = vmax.f32 %v845, 0.0
        %v862 = vmax.f32 %v846, 0.0
        %v863 = vmax.f32 %v847, 0.0
        %v864 = vmax.f32 %v848, 0.0
        %v865 = vmax.f32 %v849, 0.0
        %v866 = vmax.f32 %v850, 0.0
        %v867 = vmax.f32 %v851, 0.0
        %v868 = vmax.f32 %v852, 0.0
        %v869 = vmax.f32 %v853, 0.0
        %v870 = vand.u32 2147483647, %v838
        %v871 = vand.u32 2147483647, %v839
        %v872 = vand.u32 2147483647, %v840
        %v873 = vand.u32 2147483647, %v841
        %v874 = vand.u32 2147483647, %v842
        %v875 = vand.u32 2147483647, %v843
        %v876 = vand.u32 2147483647, %v844
        %v877 = vand.u32 2147483647, %v845
        %v878 = vand.u32 2147483647, %v846
        %v879 = vand.u32 2147483647, %v847
        %v880 = vand.u32 2147483647, %v848
        %v881 = vand.u32 2147483647, %v849
        %v882 = vand.u32 2147483647, %v850
        %v883 = vand.u32 2147483647, %v851
        %v884 = vand.u32 2147483647, %v852
        %v885 = vand.u32 2147483647, %v853
        %v886 = vsub.f32 0.0, %v870
        %v887 = vsub.f32 0.0, %v871
        %v888 = vsub.f32 0.0, %v872
        %v889 = vsub.f32 0.0, %v873
        %v890 = vsub.f32 0.0, %v874
        %v891 = vsub.f32 0.0, %v875
        %v892 = vsub.f32 0.0, %v876
        %v893 = vsub.f32 0.0, %v877
        %v894 = vsub.f32 0.0, %v878
        %v895 = vsub.f32 0.0, %v879
        %v896 = vsub.f32 0.0, %v880
        %v897 = vsub.f32 0.0, %v881
        %v898 = vsub.f32 0.0, %v882
        %v899 = vsub.f32 0.0, %v883
        %v900 = vsub.f32 0.0, %v884
        %v901 = vsub.f32 0.0, %v885
        %v902 = vmul.f32 %v886, 1.442695
        %v903 = vpow.pop %v902
        %v904 = vmul.f32 %v887, 1.442695
        %v905 = vpow.pop %v904
        %v906 = vmul.f32 %v888, 1.442695
        %v907 = vpow.pop %v906
        %v908 = vmul.f32 %v889, 1.442695
        %v909 = vpow.pop %v908
        %v910 = vmul.f32 %v890, 1.442695
        %v911 = vpow.pop %v910
        %v912 = vmul.f32 %v891, 1.442695
        %v913 = vpow.pop %v912
        %v914 = vmul.f32 %v892, 1.442695
        %v915 = vpow.pop %v914
        %v916 = vmul.f32 %v893, 1.442695
        %v917 = vpow.pop %v916
        %v918 = vmul.f32 %v894, 1.442695
        %v919 = vpow.pop %v918
        %v920 = vmul.f32 %v895, 1.442695
        %v921 = vpow.pop %v920
        %v922 = vmul.f32 %v896, 1.442695
        %v923 = vpow.pop %v922
        %v924 = vmul.f32 %v897, 1.442695
        %v925 = vpow.pop %v924
        %v926 = vmul.f32 %v898, 1.442695
        %v927 = vpow.pop %v926
        %v928 = vmul.f32 %v899, 1.442695
        %v929 = vpow.pop %v928
        %v930 = vmul.f32 %v900, 1.442695
        %v931 = vpow.pop %v930
        %v932 = vmul.f32 %v901, 1.442695
        %v933 = vpow.pop %v932
        %v934 = vadd.f32 %v903, 1.0
        %v935 = vadd.f32 %v905, 1.0
        %v936 = vadd.f32 %v907, 1.0
        %v937 = vadd.f32 %v909, 1.0
        %v938 = vadd.f32 %v911, 1.0
        %v939 = vadd.f32 %v913, 1.0
        %v940 = vadd.f32 %v915, 1.0
        %v941 = vadd.f32 %v917, 1.0
        %v942 = vadd.f32 %v919, 1.0
        %v943 = vadd.f32 %v921, 1.0
        %v944 = vadd.f32 %v923, 1.0
        %v945 = vadd.f32 %v925, 1.0
        %v946 = vadd.f32 %v927, 1.0
        %v947 = vadd.f32 %v929, 1.0
        %v948 = vadd.f32 %v931, 1.0
        %v949 = vadd.f32 %v933, 1.0
        %v950 = vlog2.pop %v934
        %v951 = vmul.f32 %v950, 0.6931472
        %v952 = vlog2.pop %v935
        %v953 = vmul.f32 %v952, 0.6931472
        %v954 = vlog2.pop %v936
        %v955 = vmul.f32 %v954, 0.6931472
        %v956 = vlog2.pop %v937
        %v957 = vmul.f32 %v956, 0.6931472
        %v958 = vlog2.pop %v938
        %v959 = vmul.f32 %v958, 0.6931472
        %v960 = vlog2.pop %v939
        %v961 = vmul.f32 %v960, 0.6931472
        %v962 = vlog2.pop %v940
        %v963 = vmul.f32 %v962, 0.6931472
        %v964 = vlog2.pop %v941
        %v965 = vmul.f32 %v964, 0.6931472
        %v966 = vlog2.pop %v942
        %v967 = vmul.f32 %v966, 0.6931472
        %v968 = vlog2.pop %v943
        %v969 = vmul.f32 %v968, 0.6931472
        %v970 = vlog2.pop %v944
        %v971 = vmul.f32 %v970, 0.6931472
        %v972 = vlog2.pop %v945
        %v973 = vmul.f32 %v972, 0.6931472
        %v974 = vlog2.pop %v946
        %v975 = vmul.f32 %v974, 0.6931472
        %v976 = vlog2.pop %v947
        %v977 = vmul.f32 %v976, 0.6931472
        %v978 = vlog2.pop %v948
        %v979 = vmul.f32 %v978, 0.6931472
        %v980 = vlog2.pop %v949
        %v981 = vmul.f32 %v980, 0.6931472
        %v982 = vadd.f32 %v854, %v951
        %v983 = vadd.f32 %v855, %v953
        %v984 = vadd.f32 %v856, %v955
        %v985 = vadd.f32 %v857, %v957
        %v986 = vadd.f32 %v858, %v959
        %v987 = vadd.f32 %v859, %v961
        %v988 = vadd.f32 %v860, %v963
        %v989 = vadd.f32 %v861, %v965
        %v990 = vadd.f32 %v862, %v967
        %v991 = vadd.f32 %v863, %v969
        %v992 = vadd.f32 %v864, %v971
        %v993 = vadd.f32 %v865, %v973
        %v994 = vadd.f32 %v866, %v975
        %v995 = vadd.f32 %v867, %v977
        %v996 = vadd.f32 %v868, %v979
        %v997 = vadd.f32 %v869, %v981
        %v998 = vpack.c.bf16 %v815, %v814
        %v999 = vpack.c.bf16 %v817, %v816
        %v1000 = vpack.c.bf16 %v819, %v818
        %v1001 = vpack.c.bf16 %v821, %v820
        %1006 = vrot.lane.b32.xlu0 %v998, 56
        %v1007 = vpop.permute.xlu0 %1006
        %1008 = vrot.lane.b32.xlu0 %v999, 56
        %v1009 = vpop.permute.xlu0 %1008
        %1010 = vrot.lane.b32.xlu0 %v1000, 56
        %v1011 = vpop.permute.xlu0 %1010
        %1012 = vrot.lane.b32.xlu0 %v1001, 56
        %v1013 = vpop.permute.xlu0 %1012
        %1014 = vrot.lane.b32.xlu0 %v998, 64
        %v1015 = vpop.permute.xlu0 %1014
        %1016 = vrot.lane.b32.xlu0 %v999, 64
        %v1017 = vpop.permute.xlu0 %1016
        %1018 = vrot.lane.b32.xlu0 %v1000, 64
        %v1019 = vpop.permute.xlu0 %1018
        %1020 = vrot.lane.b32.xlu0 %v1001, 64
        %v1021 = vpop.permute.xlu0 %1020
        %vm1022 = vcmask 31744
        %v1024 = vsel %vm1022, %v1007, 0
        %v1027 = vsel %vm1022, %v1009, 0
        %v1030 = vsel %vm1022, %v1011, 0
        %v1033 = vsel %vm1022, %v1013, 0
        %v1036 = vsel %vm1022, %v1015, 0
        %v1039 = vsel %vm1022, %v1017, 0
        %v1042 = vsel %vm1022, %v1019, 0
        %v1045 = vsel %vm1022, %v1021, 0
        %1047 = vmatprep.subr.bf16.mxu0 0
        %1048 = vmatpush1.bf16.xpose.msra.mxu0 %v1036
        %1049 = vmatprep.subr.bf16.mxu0 0
        %1050 = vmatpush1.bf16.xpose.msra.mxu0 %v1039
        %1051 = vmatprep.subr.bf16.mxu0 0
        %1052 = vmatpush1.bf16.xpose.msra.mxu0 %v1042
        %1053 = vmatprep.subr.bf16.mxu0 0
        %1054 = vmatpush1.bf16.xpose.msra.mxu0 %v1045
        %1055 = vmatprep.subr.bf16.mxu0 0
        %1056 = vmatpush1.bf16.xpose.msra.mxu0 0
        %1057 = vmatprep.subr.bf16.mxu0 0
        %1058 = vmatpush1.bf16.xpose.msra.mxu0 0
        %1059 = vmatprep.subr.bf16.mxu0 0
        %1060 = vmatpush1.bf16.xpose.msra.mxu0 0
        %1061 = vmatprep.subr.bf16.mxu0 0
        %1062 = vmatpush1.bf16.xpose.msra.mxu0 0
        %1063 = vmatprep.subr.bf16.mxu0 0
        %1064 = vmatpush1.bf16.xpose.msra.mxu0 0
        %1065 = vmatprep.subr.bf16.mxu0 0
        %1066 = vmatpush1.bf16.xpose.msra.mxu0 0
        %1067 = vmatprep.subr.bf16.mxu0 0
        %1068 = vmatpush1.bf16.xpose.msra.mxu0 0
        %1069 = vmatprep.subr.bf16.mxu0 0
        %1070 = vmatpush1.bf16.xpose.msra.mxu0 0
        %1071 = vmatprep.subr.bf16.mxu0 0
        %1072 = vmatpush1.bf16.xpose.msra.mxu0 0
        %1073 = vmatprep.subr.bf16.mxu0 0
        %1074 = vmatpush1.bf16.xpose.msra.mxu0 0
        %1075 = vmatprep.subr.bf16.mxu0 0
        %1076 = vmatpush1.bf16.xpose.msra.mxu0 0
        %1077 = vmatprep.subr.bf16.mxu0 0
        %1078 = vmatpush1.bf16.xpose.msra.mxu0 0
        %1079 = vmatprep.mubr.bf16.mxu0 0
        %1080 = vmatmul.mubr.bf16.gmra.mrb[0].mxu0 %v1024
        %v1081 = vpop.f32.mrb[0].mxu0
        %v1082 = vadd.f32 0.0, %v1081
        %v1083 = vpop.f32.mrb[0].mxu0
        %v1084 = vpop.f32.mrb[0].mxu0
        %v1085 = vadd.f32 0.0, %v1084
        %v1086 = vpop.f32.mrb[0].mxu0
        %1087 = vmatprep.mubr.bf16.mxu0 0
        %1088 = vmatmul.mubr.bf16.gmra.mrb[0].mxu0 %v1027
        %v1089 = vpop.f32.mrb[0].mxu0
        %v1090 = vadd.f32 0.0, %v1089
        %v1091 = vpop.f32.mrb[0].mxu0
        %v1092 = vpop.f32.mrb[0].mxu0
        %v1093 = vadd.f32 0.0, %v1092
        %v1094 = vpop.f32.mrb[0].mxu0
        %1095 = vmatprep.mubr.bf16.mxu0 0
        %1096 = vmatmul.mubr.bf16.gmra.mrb[0].mxu0 %v1030
        %v1097 = vpop.f32.mrb[0].mxu0
        %v1098 = vadd.f32 0.0, %v1097
        %v1099 = vpop.f32.mrb[0].mxu0
        %v1100 = vpop.f32.mrb[0].mxu0
        %v1101 = vadd.f32 0.0, %v1100
        %v1102 = vpop.f32.mrb[0].mxu0
        %1103 = vmatprep.mubr.bf16.mxu0 0
        %1104 = vmatmul.mubr.bf16.gmra.mrb[0].mxu0 %v1033
        %v1105 = vpop.f32.mrb[0].mxu0
        %v1106 = vadd.f32 0.0, %v1105
        %v1107 = vpop.f32.mrb[0].mxu0
        %v1108 = vpop.f32.mrb[0].mxu0
        %v1109 = vadd.f32 0.0, %v1108
        %v1110 = vpop.f32.mrb[0].mxu0
        %1111 = vdwg.mxu0
        %v1112 = vmul.f32 %v1082, %v330
        %v1113 = vmul.f32 %v1085, %v331
        %v1114 = vmul.f32 %v1090, %v332
        %v1115 = vmul.f32 %v1093, %v333
        %v1116 = vmul.f32 %v1098, %v334
        %v1117 = vmul.f32 %v1101, %v335
        %v1118 = vmul.f32 %v1106, %v336
        %v1119 = vmul.f32 %v1109, %v337
        %1128 = vrot.lane.b32.xlu0 %v982, 48
        %v1129 = vpop.permute.xlu0 %1128
        %1130 = vrot.lane.b32.xlu0 %v983, 48
        %v1131 = vpop.permute.xlu0 %1130
        %1132 = vrot.lane.b32.xlu0 %v984, 48
        %v1133 = vpop.permute.xlu0 %1132
        %1134 = vrot.lane.b32.xlu0 %v985, 48
        %v1135 = vpop.permute.xlu0 %1134
        %1136 = vrot.lane.b32.xlu0 %v986, 48
        %v1137 = vpop.permute.xlu0 %1136
        %1138 = vrot.lane.b32.xlu0 %v987, 48
        %v1139 = vpop.permute.xlu0 %1138
        %1140 = vrot.lane.b32.xlu0 %v988, 48
        %v1141 = vpop.permute.xlu0 %1140
        %1142 = vrot.lane.b32.xlu0 %v989, 48
        %v1143 = vpop.permute.xlu0 %1142
        %v1153 = vsel %vm405, %v330, 0
        %v1156 = vsel %vm405, %v331, 0
        %v1159 = vsel %vm405, %v332, 0
        %v1162 = vsel %vm405, %v333, 0
        %v1165 = vsel %vm405, %v334, 0
        %v1168 = vsel %vm405, %v335, 0
        %v1171 = vsel %vm405, %v336, 0
        %v1174 = vsel %vm405, %v337, 0
        %1176 = vmatprep.subr.mxu0 0.0
        %1177 = vmatpush1.msra.mxu0 %v1129
        %1178 = vmatprep.subr.mxu0 0.0
        %1179 = vmatpush1.msra.mxu0 %v1131
        %1180 = vmatprep.subr.mxu0 0.0
        %1181 = vmatpush1.msra.mxu0 %v1133
        %1182 = vmatprep.subr.mxu0 0.0
        %1183 = vmatpush1.msra.mxu0 %v1135
        %1184 = vmatprep.subr.mxu0 0.0
        %1185 = vmatpush1.msra.mxu0 %v1137
        %1186 = vmatprep.subr.mxu0 0.0
        %1187 = vmatpush1.msra.mxu0 %v1139
        %1188 = vmatprep.subr.mxu0 0.0
        %1189 = vmatpush1.msra.mxu0 %v1141
        %1190 = vmatprep.subr.mxu0 0.0
        %1191 = vmatpush1.msra.mxu0 %v1143
        %1192 = vmatprep.subr.mxu0 0.0
        %1193 = vmatpush1.msra.mxu0 0.0
        %1194 = vmatprep.subr.mxu0 0.0
        %1195 = vmatpush1.msra.mxu0 0.0
        %1196 = vmatprep.subr.mxu0 0.0
        %1197 = vmatpush1.msra.mxu0 0.0
        %1198 = vmatprep.subr.mxu0 0.0
        %1199 = vmatpush1.msra.mxu0 0.0
        %1200 = vmatprep.subr.mxu0 0.0
        %1201 = vmatpush1.msra.mxu0 0.0
        %1202 = vmatprep.subr.mxu0 0.0
        %1203 = vmatpush1.msra.mxu0 0.0
        %1204 = vmatprep.subr.mxu0 0.0
        %1205 = vmatpush1.msra.mxu0 0.0
        %1206 = vmatprep.subr.mxu0 0.0
        %1207 = vmatpush1.msra.mxu0 0.0
        %1208 = vmatprep.subr.mxu0 0.0
        %1209 = vmatpush1.msra.mxu0 0.0
        %1210 = vmatprep.subr.mxu0 0.0
        %1211 = vmatpush1.msra.mxu0 0.0
        %1212 = vmatprep.subr.mxu0 0.0
        %1213 = vmatpush1.msra.mxu0 0.0
        %1214 = vmatprep.subr.mxu0 0.0
        %1215 = vmatpush1.msra.mxu0 0.0
        %1216 = vmatprep.subr.mxu0 0.0
        %1217 = vmatpush1.msra.mxu0 0.0
        %1218 = vmatprep.subr.mxu0 0.0
        %1219 = vmatpush1.msra.mxu0 0.0
        %1220 = vmatprep.subr.mxu0 0.0
        %1221 = vmatpush1.msra.mxu0 0.0
        %1222 = vmatprep.subr.mxu0 0.0
        %1223 = vmatpush1.msra.mxu0 0.0
        %1224 = vmatprep.subr.mxu0 0.0
        %1225 = vmatpush1.msra.mxu0 0.0
        %1226 = vmatprep.subr.mxu0 0.0
        %1227 = vmatpush1.msra.mxu0 0.0
        %1228 = vmatprep.subr.mxu0 0.0
        %1229 = vmatpush1.msra.mxu0 0.0
        %1230 = vmatprep.subr.mxu0 0.0
        %1231 = vmatpush1.msra.mxu0 0.0
        %1232 = vmatprep.subr.mxu0 0.0
        %1233 = vmatpush1.msra.mxu0 0.0
        %1234 = vmatprep.subr.mxu0 0.0
        %1235 = vmatpush1.msra.mxu0 0.0
        %1236 = vmatprep.subr.mxu0 0.0
        %1237 = vmatpush1.msra.mxu0 0.0
        %1238 = vmatprep.subr.mxu0 0.0
        %1239 = vmatpush1.msra.mxu0 0.0
        %1240 = vmatprep.mubr.f32.mxu0 0.0
        %1241 = vmatmul.mubr.f32.gmra.mrb[0].mxu0 %v1153
        %v1242 = vpop.f32.mrb[0].mxu0
        %v1243 = vadd.f32 0.0, %v1242
        %v1244 = vpop.f32.mrb[0].mxu0
        %1245 = vmatprep.mubr.f32.mxu0 0.0
        %1246 = vmatmul.mubr.f32.gmra.mrb[0].mxu0 %v1156
        %v1247 = vpop.f32.mrb[0].mxu0
        %v1248 = vadd.f32 0.0, %v1247
        %v1249 = vpop.f32.mrb[0].mxu0
        %1250 = vmatprep.mubr.f32.mxu0 0.0
        %1251 = vmatmul.mubr.f32.gmra.mrb[0].mxu0 %v1159
        %v1252 = vpop.f32.mrb[0].mxu0
        %v1253 = vadd.f32 0.0, %v1252
        %v1254 = vpop.f32.mrb[0].mxu0
        %1255 = vmatprep.mubr.f32.mxu0 0.0
        %1256 = vmatmul.mubr.f32.gmra.mrb[0].mxu0 %v1162
        %v1257 = vpop.f32.mrb[0].mxu0
        %v1258 = vadd.f32 0.0, %v1257
        %v1259 = vpop.f32.mrb[0].mxu0
        %1260 = vmatprep.mubr.f32.mxu0 0.0
        %1261 = vmatmul.mubr.f32.gmra.mrb[0].mxu0 %v1165
        %v1262 = vpop.f32.mrb[0].mxu0
        %v1263 = vadd.f32 0.0, %v1262
        %v1264 = vpop.f32.mrb[0].mxu0
        %1265 = vmatprep.mubr.f32.mxu0 0.0
        %1266 = vmatmul.mubr.f32.gmra.mrb[0].mxu0 %v1168
        %v1267 = vpop.f32.mrb[0].mxu0
        %v1268 = vadd.f32 0.0, %v1267
        %v1269 = vpop.f32.mrb[0].mxu0
        %1270 = vmatprep.mubr.f32.mxu0 0.0
        %1271 = vmatmul.mubr.f32.gmra.mrb[0].mxu0 %v1171
        %v1272 = vpop.f32.mrb[0].mxu0
        %v1273 = vadd.f32 0.0, %v1272
        %v1274 = vpop.f32.mrb[0].mxu0
        %1275 = vmatprep.mubr.f32.mxu0 0.0
        %1276 = vmatmul.mubr.f32.gmra.mrb[0].mxu0 %v1174
        %v1277 = vpop.f32.mrb[0].mxu0
        %v1278 = vadd.f32 0.0, %v1277
        %v1279 = vpop.f32.mrb[0].mxu0
        %1280 = vdwg.mxu0
        %s1281 = sld [smem:[#allocation10]]
        %s1282 = sld [smem:[#allocation10 + $0x2]]
        %vm1283 = vcmask 7168
        %v1285 = vsel %vm1283, 1.0, 0
        %v1288 = vsel %vm1283, %v1243, 0
        %v1291 = vsel %vm1283, %v1248, 0
        %v1294 = vsel %vm1283, %v1253, 0
        %v1297 = vsel %vm1283, %v1258, 0
        %v1300 = vsel %vm1283, %v1263, 0
        %v1303 = vsel %vm1283, %v1268, 0
        %v1306 = vsel %vm1283, %v1273, 0
        %v1309 = vsel %vm1283, %v1278, 0
        %1311 = vmatprep.subr.mxu0 0.0
        %1312 = vmatpush1.xpose.msra.mxu0 %v1288
        %1313 = vmatprep.subr.mxu0 0.0
        %1314 = vmatpush1.xpose.msra.mxu0 %v1291
        %1315 = vmatprep.subr.mxu0 0.0
        %1316 = vmatpush1.xpose.msra.mxu0 %v1294
        %1317 = vmatprep.subr.mxu0 0.0
        %1318 = vmatpush1.xpose.msra.mxu0 %v1297
        %1319 = vmatprep.subr.mxu0 0.0
        %1320 = vmatpush1.xpose.msra.mxu0 %v1300
        %1321 = vmatprep.subr.mxu0 0.0
        %1322 = vmatpush1.xpose.msra.mxu0 %v1303
        %1323 = vmatprep.subr.mxu0 0.0
        %1324 = vmatpush1.xpose.msra.mxu0 %v1306
        %1325 = vmatprep.subr.mxu0 0.0
        %1326 = vmatpush1.xpose.msra.mxu0 %v1309
        %1327 = vmatprep.subr.mxu0 0.0
        %1328 = vmatpush1.xpose.msra.mxu0 0.0
        %1329 = vmatprep.subr.mxu0 0.0
        %1330 = vmatpush1.xpose.msra.mxu0 0.0
        %1331 = vmatprep.subr.mxu0 0.0
        %1332 = vmatpush1.xpose.msra.mxu0 0.0
        %1333 = vmatprep.subr.mxu0 0.0
        %1334 = vmatpush1.xpose.msra.mxu0 0.0
        %1335 = vmatprep.subr.mxu0 0.0
        %1336 = vmatpush1.xpose.msra.mxu0 0.0
        %1337 = vmatprep.subr.mxu0 0.0
        %1338 = vmatpush1.xpose.msra.mxu0 0.0
        %1339 = vmatprep.subr.mxu0 0.0
        %1340 = vmatpush1.xpose.msra.mxu0 0.0
        %1341 = vmatprep.subr.mxu0 0.0
        %1342 = vmatpush1.xpose.msra.mxu0 0.0
        %1343 = vmatprep.subr.mxu0 0.0
        %1344 = vmatpush1.xpose.msra.mxu0 0.0
        %1345 = vmatprep.subr.mxu0 0.0
        %1346 = vmatpush1.xpose.msra.mxu0 0.0
        %1347 = vmatprep.subr.mxu0 0.0
        %1348 = vmatpush1.xpose.msra.mxu0 0.0
        %1349 = vmatprep.subr.mxu0 0.0
        %1350 = vmatpush1.xpose.msra.mxu0 0.0
        %1351 = vmatprep.subr.mxu0 0.0
        %1352 = vmatpush1.xpose.msra.mxu0 0.0
        %1353 = vmatprep.subr.mxu0 0.0
        %1354 = vmatpush1.xpose.msra.mxu0 0.0
        %1355 = vmatprep.subr.mxu0 0.0
        %1356 = vmatpush1.xpose.msra.mxu0 0.0
        %1357 = vmatprep.subr.mxu0 0.0
        %1358 = vmatpush1.xpose.msra.mxu0 0.0
        %1359 = vmatprep.subr.mxu0 0.0
        %1360 = vmatpush1.xpose.msra.mxu0 0.0
        %1361 = vmatprep.subr.mxu0 0.0
        %1362 = vmatpush1.xpose.msra.mxu0 0.0
        %1363 = vmatprep.subr.mxu0 0.0
        %1364 = vmatpush1.xpose.msra.mxu0 0.0
        %1365 = vmatprep.subr.mxu0 0.0
        %1366 = vmatpush1.xpose.msra.mxu0 0.0
        %1367 = vmatprep.subr.mxu0 0.0
        %1368 = vmatpush1.xpose.msra.mxu0 0.0
        %1369 = vmatprep.subr.mxu0 0.0
        %1370 = vmatpush1.xpose.msra.mxu0 0.0
        %1371 = vmatprep.subr.mxu0 0.0
        %1372 = vmatpush1.xpose.msra.mxu0 0.0
        %1373 = vmatprep.subr.mxu0 0.0
        %1374 = vmatpush1.xpose.msra.mxu0 0.0
        %1375 = vmatprep.mubr.f32.mxu0 0.0
        %1376 = vmatmul.mubr.f32.gmra.mrb[0].mxu0 %v1285
        %v1377 = vpop.f32.mrb[0].mxu0
        %v1378 = vadd.f32 0.0, %v1377
        %v1379 = vpop.f32.mrb[0].mxu0
        %1380 = vmatprep.mubr.f32.mxu0 0.0
        %1381 = vmatmul.mubr.f32.gmra.mrb[0].mxu0 %v1285
        %v1382 = vpop.f32.mrb[0].mxu0
        %v1383 = vadd.f32 0.0, %v1382
        %v1384 = vpop.f32.mrb[0].mxu0
        %1385 = vmatprep.mubr.f32.mxu0 0.0
        %1386 = vmatmul.mubr.f32.gmra.mrb[0].mxu0 %v1285
        %v1387 = vpop.f32.mrb[0].mxu0
        %v1388 = vadd.f32 0.0, %v1387
        %v1389 = vpop.f32.mrb[0].mxu0
        %1390 = vmatprep.mubr.f32.mxu0 0.0
        %1391 = vmatmul.mubr.f32.gmra.mrb[0].mxu0 %v1285
        %v1392 = vpop.f32.mrb[0].mxu0
        %v1393 = vadd.f32 0.0, %v1392
        %v1394 = vpop.f32.mrb[0].mxu0
        %1395 = vmatprep.mubr.f32.mxu0 0.0
        %1396 = vmatmul.mubr.f32.gmra.mrb[0].mxu0 %v1285
        %v1397 = vpop.f32.mrb[0].mxu0
        %v1398 = vadd.f32 0.0, %v1397
        %v1399 = vpop.f32.mrb[0].mxu0
        %1400 = vmatprep.mubr.f32.mxu0 0.0
        %1401 = vmatmul.mubr.f32.gmra.mrb[0].mxu0 %v1285
        %v1402 = vpop.f32.mrb[0].mxu0
        %v1403 = vadd.f32 0.0, %v1402
        %v1404 = vpop.f32.mrb[0].mxu0
        %1405 = vmatprep.mubr.f32.mxu0 0.0
        %1406 = vmatmul.mubr.f32.gmra.mrb[0].mxu0 %v1285
        %v1407 = vpop.f32.mrb[0].mxu0
        %v1408 = vadd.f32 0.0, %v1407
        %v1409 = vpop.f32.mrb[0].mxu0
        %1410 = vmatprep.mubr.f32.mxu0 0.0
        %1411 = vmatmul.mubr.f32.gmra.mrb[0].mxu0 %v1285
        %v1412 = vpop.f32.mrb[0].mxu0
        %v1413 = vadd.f32 0.0, %v1412
        %v1414 = vpop.f32.mrb[0].mxu0
        %1415 = vdwg.mxu0
        %1416 = vset.pattern.permute.xlu0 0
        %1417 = vperm.xlu0 %1416, %v1243
        %v1418 = vpop.permute.xlu0 %1417
        %1420 = vset.pattern.permute.xlu0 0
        %1421 = vperm.xlu0 %1420, %v1248
        %v1422 = vpop.permute.xlu0 %1421
        %1424 = vset.pattern.permute.xlu0 0
        %1425 = vperm.xlu0 %1424, %v1253
        %v1426 = vpop.permute.xlu0 %1425
        %1428 = vset.pattern.permute.xlu0 0
        %1429 = vperm.xlu0 %1428, %v1258
        %v1430 = vpop.permute.xlu0 %1429
        %1432 = vset.pattern.permute.xlu0 0
        %1433 = vperm.xlu0 %1432, %v1263
        %v1434 = vpop.permute.xlu0 %1433
        %1436 = vset.pattern.permute.xlu0 0
        %1437 = vperm.xlu0 %1436, %v1268
        %v1438 = vpop.permute.xlu0 %1437
        %1440 = vset.pattern.permute.xlu0 0
        %1441 = vperm.xlu0 %1440, %v1273
        %v1442 = vpop.permute.xlu0 %1441
        %1444 = vset.pattern.permute.xlu0 0
        %1445 = vperm.xlu0 %1444, %v1278
        %v1446 = vpop.permute.xlu0 %1445
        %v1448 = vsub.f32 %v1418, %v1378
        %v1449 = vsub.f32 %v1422, %v1383
        %v1450 = vsub.f32 %v1426, %v1388
        %v1451 = vsub.f32 %v1430, %v1393
        %v1452 = vsub.f32 %v1434, %v1398
        %v1453 = vsub.f32 %v1438, %v1403
        %v1454 = vsub.f32 %v1442, %v1408
        %v1455 = vsub.f32 %v1446, %v1413
        %v1456 = vstv %s1281
        %v1457 = vmul.f32 %v1456, %v1448
        %v1458 = vmul.f32 %v1456, %v1449
        %v1459 = vmul.f32 %v1456, %v1450
        %v1460 = vmul.f32 %v1456, %v1451
        %v1461 = vmul.f32 %v1456, %v1452
        %v1462 = vmul.f32 %v1456, %v1453
        %v1463 = vmul.f32 %v1456, %v1454
        %v1464 = vmul.f32 %v1456, %v1455
        %v1465 = vmin.f32 %v1457, 0.0
        %v1466 = vmin.f32 %v1458, 0.0
        %v1467 = vmin.f32 %v1459, 0.0
        %v1468 = vmin.f32 %v1460, 0.0
        %v1469 = vmin.f32 %v1461, 0.0
        %v1470 = vmin.f32 %v1462, 0.0
        %v1471 = vmin.f32 %v1463, 0.0
        %v1472 = vmin.f32 %v1464, 0.0
        %v1473 = vmul.f32 %v1465, 1.442695
        %v1474 = vpow.pop %v1473
        %v1475 = vmul.f32 %v1466, 1.442695
        %v1476 = vpow.pop %v1475
        %v1477 = vmul.f32 %v1467, 1.442695
        %v1478 = vpow.pop %v1477
        %v1479 = vmul.f32 %v1468, 1.442695
        %v1480 = vpow.pop %v1479
        %v1481 = vmul.f32 %v1469, 1.442695
        %v1482 = vpow.pop %v1481
        %v1483 = vmul.f32 %v1470, 1.442695
        %v1484 = vpow.pop %v1483
        %v1485 = vmul.f32 %v1471, 1.442695
        %v1486 = vpow.pop %v1485
        %v1487 = vmul.f32 %v1472, 1.442695
        %v1488 = vpow.pop %v1487
        %v1489 = vmul.f32 %v1112, %v1474
        %v1490 = vmul.f32 %v1113, %v1476
        %v1491 = vmul.f32 %v1114, %v1478
        %v1492 = vmul.f32 %v1115, %v1480
        %v1493 = vmul.f32 %v1116, %v1482
        %v1494 = vmul.f32 %v1117, %v1484
        %v1495 = vmul.f32 %v1118, %v1486
        %v1496 = vmul.f32 %v1119, %v1488
        %v1497 = vpack.c.bf16 %v1490, %v1489
        %v1498 = vpack.c.bf16 %v1492, %v1491
        %v1499 = vpack.c.bf16 %v1494, %v1493
        %v1500 = vpack.c.bf16 %v1496, %v1495
        %1501 = vset.pattern.permute.xlu0 80
        %1502 = vperm.xlu0 %1501, %v982
        %v1503 = vpop.permute.xlu0 %1502
        %1505 = vset.pattern.permute.xlu0 80
        %1506 = vperm.xlu0 %1505, %v983
        %v1507 = vpop.permute.xlu0 %1506
        %1509 = vset.pattern.permute.xlu0 80
        %1510 = vperm.xlu0 %1509, %v984
        %v1511 = vpop.permute.xlu0 %1510
        %1513 = vset.pattern.permute.xlu0 80
        %1514 = vperm.xlu0 %1513, %v985
        %v1515 = vpop.permute.xlu0 %1514
        %1517 = vset.pattern.permute.xlu0 80
        %1518 = vperm.xlu0 %1517, %v986
        %v1519 = vpop.permute.xlu0 %1518
        %1521 = vset.pattern.permute.xlu0 80
        %1522 = vperm.xlu0 %1521, %v987
        %v1523 = vpop.permute.xlu0 %1522
        %1525 = vset.pattern.permute.xlu0 80
        %1526 = vperm.xlu0 %1525, %v988
        %v1527 = vpop.permute.xlu0 %1526
        %1529 = vset.pattern.permute.xlu0 80
        %1530 = vperm.xlu0 %1529, %v989
        %v1531 = vpop.permute.xlu0 %1530
        %v1533 = vmul.f32 %v814, %v1503
        %v1534 = vmul.f32 %v815, %v1507
        %v1535 = vmul.f32 %v816, %v1511
        %v1536 = vmul.f32 %v817, %v1515
        %v1537 = vmul.f32 %v818, %v1519
        %v1538 = vmul.f32 %v819, %v1523
        %v1539 = vmul.f32 %v820, %v1527
        %v1540 = vmul.f32 %v821, %v1531
        %v1541 = vpack.c.bf16 %v1534, %v1533
        %v1542 = vpack.c.bf16 %v1536, %v1535
        %v1543 = vpack.c.bf16 %v1538, %v1537
        %v1544 = vpack.c.bf16 %v1540, %v1539
        %v1545 = vstv %s1282
        %v1546 = vmul.f32 %v1545, %v814
        %v1547 = vmul.f32 %v1545, %v815
        %v1548 = vmul.f32 %v1545, %v816
        %v1549 = vmul.f32 %v1545, %v817
        %v1550 = vmul.f32 %v1545, %v818
        %v1551 = vmul.f32 %v1545, %v819
        %v1552 = vmul.f32 %v1545, %v820
        %v1553 = vmul.f32 %v1545, %v821
        %1558 = vrot.lane.b32.xlu0 %v1541, 96
        %v1559 = vpop.permute.xlu0 %1558
        %1560 = vrot.lane.b32.xlu0 %v1542, 96
        %v1561 = vpop.permute.xlu0 %1560
        %1562 = vrot.lane.b32.xlu0 %v1543, 96
        %v1563 = vpop.permute.xlu0 %1562
        %1564 = vrot.lane.b32.xlu0 %v1544, 96
        %v1565 = vpop.permute.xlu0 %1564
        %1578 = vrot.lane.b32.xlu0 %v1546, 96
        %v1579 = vpop.permute.xlu0 %1578
        %1580 = vrot.lane.b32.xlu0 %v1547, 96
        %v1581 = vpop.permute.xlu0 %1580
        %1582 = vrot.lane.b32.xlu0 %v1548, 96
        %v1583 = vpop.permute.xlu0 %1582
        %1584 = vrot.lane.b32.xlu0 %v1549, 96
        %v1585 = vpop.permute.xlu0 %1584
        %1586 = vrot.lane.b32.xlu0 %v1550, 96
        %v1587 = vpop.permute.xlu0 %1586
        %1588 = vrot.lane.b32.xlu0 %v1551, 96
        %v1589 = vpop.permute.xlu0 %1588
        %1590 = vrot.lane.b32.xlu0 %v1552, 96
        %v1591 = vpop.permute.xlu0 %1590
        %1592 = vrot.lane.b32.xlu0 %v1553, 96
        %v1593 = vpop.permute.xlu0 %1592
        %v1603 = vsel %vm405, %v1497, 0
        %v1606 = vsel %vm405, %v1498, 0
        %v1609 = vsel %vm405, %v1499, 0
        %v1612 = vsel %vm405, %v1500, 0
        %1614 = vmatprep.subr.bf16.mxu0 0
        %1615 = vmatpush1.bf16.msra.mxu0 %v1559
        %1616 = vmatprep.subr.bf16.mxu0 0
        %1617 = vmatpush1.bf16.msra.mxu0 %v1561
        %1618 = vmatprep.subr.bf16.mxu0 0
        %1619 = vmatpush1.bf16.msra.mxu0 %v1563
        %1620 = vmatprep.subr.bf16.mxu0 0
        %1621 = vmatpush1.bf16.msra.mxu0 %v1565
        %1622 = vmatprep.subr.bf16.mxu0 0
        %1623 = vmatpush1.bf16.msra.mxu0 0
        %1624 = vmatprep.subr.bf16.mxu0 0
        %1625 = vmatpush1.bf16.msra.mxu0 0
        %1626 = vmatprep.subr.bf16.mxu0 0
        %1627 = vmatpush1.bf16.msra.mxu0 0
        %1628 = vmatprep.subr.bf16.mxu0 0
        %1629 = vmatpush1.bf16.msra.mxu0 0
        %1630 = vmatprep.subr.bf16.mxu0 0
        %1631 = vmatpush1.bf16.msra.mxu0 0
        %1632 = vmatprep.subr.bf16.mxu0 0
        %1633 = vmatpush1.bf16.msra.mxu0 0
        %1634 = vmatprep.subr.bf16.mxu0 0
        %1635 = vmatpush1.bf16.msra.mxu0 0
        %1636 = vmatprep.subr.bf16.mxu0 0
        %1637 = vmatpush1.bf16.msra.mxu0 0
        %1638 = vmatprep.subr.bf16.mxu0 0
        %1639 = vmatpush1.bf16.msra.mxu0 0
        %1640 = vmatprep.subr.bf16.mxu0 0
        %1641 = vmatpush1.bf16.msra.mxu0 0
        %1642 = vmatprep.subr.bf16.mxu0 0
        %1643 = vmatpush1.bf16.msra.mxu0 0
        %1644 = vmatprep.subr.bf16.mxu0 0
        %1645 = vmatpush1.bf16.msra.mxu0 0
        %1646 = vmatprep.mubr.bf16.mxu0 0
        %1647 = vmatmul.mubr.bf16.gmra.mrb[0].mxu0 %v1603
        %v1648 = vpop.f32.mrb[0].mxu0
        %v1649 = vadd.f32 %v1579, %v1648
        %v1650 = vpop.f32.mrb[0].mxu0
        %v1651 = vpop.f32.mrb[0].mxu0
        %v1652 = vadd.f32 %v1581, %v1651
        %v1653 = vpop.f32.mrb[0].mxu0
        %1654 = vmatprep.mubr.bf16.mxu0 0
        %1655 = vmatmul.mubr.bf16.gmra.mrb[0].mxu0 %v1606
        %v1656 = vpop.f32.mrb[0].mxu0
        %v1657 = vadd.f32 %v1583, %v1656
        %v1658 = vpop.f32.mrb[0].mxu0
        %v1659 = vpop.f32.mrb[0].mxu0
        %v1660 = vadd.f32 %v1585, %v1659
        %v1661 = vpop.f32.mrb[0].mxu0
        %1662 = vmatprep.mubr.bf16.mxu0 0
        %1663 = vmatmul.mubr.bf16.gmra.mrb[0].mxu0 %v1609
        %v1664 = vpop.f32.mrb[0].mxu0
        %v1665 = vadd.f32 %v1587, %v1664
        %v1666 = vpop.f32.mrb[0].mxu0
        %v1667 = vpop.f32.mrb[0].mxu0
        %v1668 = vadd.f32 %v1589, %v1667
        %v1669 = vpop.f32.mrb[0].mxu0
        %1670 = vmatprep.mubr.bf16.mxu0 0
        %1671 = vmatmul.mubr.bf16.gmra.mrb[0].mxu0 %v1612
        %v1672 = vpop.f32.mrb[0].mxu0
        %v1673 = vadd.f32 %v1591, %v1672
        %v1674 = vpop.f32.mrb[0].mxu0
        %v1675 = vpop.f32.mrb[0].mxu0
        %v1676 = vadd.f32 %v1593, %v1675
        %v1677 = vpop.f32.mrb[0].mxu0
        %1678 = vdwg.mxu0
        %v1679 = vmul.f32 %v1649, %v814
        %v1680 = vmul.f32 %v1652, %v815
        %v1681 = vmul.f32 %v1657, %v816
        %v1682 = vmul.f32 %v1660, %v817
        %v1683 = vmul.f32 %v1665, %v818
        %v1684 = vmul.f32 %v1668, %v819
        %v1685 = vmul.f32 %v1673, %v820
        %v1686 = vmul.f32 %v1676, %v821
        %v1687 = vpack.c.bf16 %v1680, %v1679
        %v1688 = vpack.c.bf16 %v1682, %v1681
        %v1689 = vpack.c.bf16 %v1684, %v1683
        %v1690 = vpack.c.bf16 %v1686, %v1685
        %v1699 = vunpack.c.l.b16 %v373
        %v1700 = vunpack.c.l.b16 %v374
        %v1701 = vunpack.c.l.b16 %v375
        %v1702 = vunpack.c.l.b16 %v376
        %v1703 = vunpack.c.l.b16 %v377
        %v1704 = vunpack.c.l.b16 %v378
        %v1705 = vunpack.c.l.b16 %v379
        %v1706 = vunpack.c.l.b16 %v380
        %v1707 = vpack.c.b16 %v1700, %v1699
        %v1708 = vpack.c.b16 %v1702, %v1701
        %v1709 = vpack.c.b16 %v1704, %v1703
        %v1710 = vpack.c.b16 %v1706, %v1705
        %v1712 = vsel %vm405, %v1707, 0
        %v1715 = vsel %vm405, %v1708, 0
        %v1718 = vsel %vm405, %v1709, 0
        %v1721 = vsel %vm405, %v1710, 0
        %1723 = vmatprep.subr.bf16.mxu0 0
        %1724 = vmatpush1.bf16.msra.mxu0 %v1687
        %1725 = vmatprep.subr.bf16.mxu0 0
        %1726 = vmatpush1.bf16.msra.mxu0 %v1688
        %1727 = vmatprep.subr.bf16.mxu0 0
        %1728 = vmatpush1.bf16.msra.mxu0 %v1689
        %1729 = vmatprep.subr.bf16.mxu0 0
        %1730 = vmatpush1.bf16.msra.mxu0 %v1690
        %1731 = vmatprep.subr.bf16.mxu0 0
        %1732 = vmatpush1.bf16.msra.mxu0 0
        %1733 = vmatprep.subr.bf16.mxu0 0
        %1734 = vmatpush1.bf16.msra.mxu0 0
        %1735 = vmatprep.subr.bf16.mxu0 0
        %1736 = vmatpush1.bf16.msra.mxu0 0
        %1737 = vmatprep.subr.bf16.mxu0 0
        %1738 = vmatpush1.bf16.msra.mxu0 0
        %1739 = vmatprep.subr.bf16.mxu0 0
        %1740 = vmatpush1.bf16.msra.mxu0 0
        %1741 = vmatprep.subr.bf16.mxu0 0
        %1742 = vmatpush1.bf16.msra.mxu0 0
        %1743 = vmatprep.subr.bf16.mxu0 0
        %1744 = vmatpush1.bf16.msra.mxu0 0
        %1745 = vmatprep.subr.bf16.mxu0 0
        %1746 = vmatpush1.bf16.msra.mxu0 0
        %1747 = vmatprep.subr.bf16.mxu0 0
        %1748 = vmatpush1.bf16.msra.mxu0 0
        %1749 = vmatprep.subr.bf16.mxu0 0
        %1750 = vmatpush1.bf16.msra.mxu0 0
        %1751 = vmatprep.subr.bf16.mxu0 0
        %1752 = vmatpush1.bf16.msra.mxu0 0
        %1753 = vmatprep.subr.bf16.mxu0 0
        %1754 = vmatpush1.bf16.msra.mxu0 0
        %1755 = vmatprep.mubr.bf16.mxu0 0
        %1756 = vmatmul.mubr.bf16.gmra.mrb[0].mxu0 %v1712
        %v1757 = vpop.f32.mrb[0].mxu0
        %v1758 = vadd.f32 0.0, %v1757
        %v1759 = vpop.f32.mrb[0].mxu0
        %v1760 = vpop.f32.mrb[0].mxu0
        %v1761 = vadd.f32 0.0, %v1760
        %v1762 = vpop.f32.mrb[0].mxu0
        %1763 = vmatprep.mubr.bf16.mxu0 0
        %1764 = vmatmul.mubr.bf16.gmra.mrb[0].mxu0 %v1715
        %v1765 = vpop.f32.mrb[0].mxu0
        %v1766 = vadd.f32 0.0, %v1765
        %v1767 = vpop.f32.mrb[0].mxu0
        %v1768 = vpop.f32.mrb[0].mxu0
        %v1769 = vadd.f32 0.0, %v1768
        %v1770 = vpop.f32.mrb[0].mxu0
        %1771 = vmatprep.mubr.bf16.mxu0 0
        %1772 = vmatmul.mubr.bf16.gmra.mrb[0].mxu0 %v1718
        %v1773 = vpop.f32.mrb[0].mxu0
        %v1774 = vadd.f32 0.0, %v1773
        %v1775 = vpop.f32.mrb[0].mxu0
        %v1776 = vpop.f32.mrb[0].mxu0
        %v1777 = vadd.f32 0.0, %v1776
        %v1778 = vpop.f32.mrb[0].mxu0
        %1779 = vmatprep.mubr.bf16.mxu0 0
        %1780 = vmatmul.mubr.bf16.gmra.mrb[0].mxu0 %v1721
        %v1781 = vpop.f32.mrb[0].mxu0
        %v1782 = vadd.f32 0.0, %v1781
        %v1783 = vpop.f32.mrb[0].mxu0
        %v1784 = vpop.f32.mrb[0].mxu0
        %v1785 = vadd.f32 0.0, %v1784
        %v1786 = vpop.f32.mrb[0].mxu0
        %1787 = vdwg.mxu0
        %vm1788 = vcmask 130048
        %1789 = vst.msk [vmem:[#allocation3] sm:$0xff] %vm1788, %v1758
        %1790 = vst.msk [vmem:[#allocation3 + $0x8] sm:$0xff] %vm1788, %v1761
        %1791 = vst.msk [vmem:[#allocation3 + $0x10] sm:$0xff] %vm1788, %v1766
        %1792 = vst.msk [vmem:[#allocation3 + $0x18] sm:$0xff] %vm1788, %v1769
        %1793 = vst.msk [vmem:[#allocation3 + $0x20] sm:$0xff] %vm1788, %v1774
        %1794 = vst.msk [vmem:[#allocation3 + $0x28] sm:$0xff] %vm1788, %v1777
        %1795 = vst.msk [vmem:[#allocation3 + $0x30] sm:$0xff] %vm1788, %v1782
        %1796 = vst.msk [vmem:[#allocation3 + $0x38] sm:$0xff] %vm1788, %v1785
        %s1797 = sld [smem:[#allocation10 + $0x1]]
        %s1798 = sld [smem:[#allocation10 + $0x3]]
        %1799 = vrot.lane.b32.xlu0 %v1243, 127
        %v1800 = vpop.permute.xlu0 %1799
        %1801 = vrot.lane.b32.xlu0 %v1248, 127
        %v1802 = vpop.permute.xlu0 %1801
        %1803 = vrot.lane.b32.xlu0 %v1253, 127
        %v1804 = vpop.permute.xlu0 %1803
        %1805 = vrot.lane.b32.xlu0 %v1258, 127
        %v1806 = vpop.permute.xlu0 %1805
        %1807 = vrot.lane.b32.xlu0 %v1263, 127
        %v1808 = vpop.permute.xlu0 %1807
        %1809 = vrot.lane.b32.xlu0 %v1268, 127
        %v1810 = vpop.permute.xlu0 %1809
        %1811 = vrot.lane.b32.xlu0 %v1273, 127
        %v1812 = vpop.permute.xlu0 %1811
        %1813 = vrot.lane.b32.xlu0 %v1278, 127
        %v1814 = vpop.permute.xlu0 %1813
        %v1815 = vsel %vm1283, %v1800, 0
        %v1817 = vsel %vm1283, %v1802, 0
        %v1819 = vsel %vm1283, %v1804, 0
        %v1821 = vsel %vm1283, %v1806, 0
        %v1823 = vsel %vm1283, %v1808, 0
        %v1825 = vsel %vm1283, %v1810, 0
        %v1827 = vsel %vm1283, %v1812, 0
        %v1829 = vsel %vm1283, %v1814, 0
        %1831 = vmatprep.subr.mxu0 0.0
        %1832 = vmatpush1.xpose.msra.mxu0 %v1815
        %1833 = vmatprep.subr.mxu0 0.0
        %1834 = vmatpush1.xpose.msra.mxu0 %v1817
        %1835 = vmatprep.subr.mxu0 0.0
        %1836 = vmatpush1.xpose.msra.mxu0 %v1819
        %1837 = vmatprep.subr.mxu0 0.0
        %1838 = vmatpush1.xpose.msra.mxu0 %v1821
        %1839 = vmatprep.subr.mxu0 0.0
        %1840 = vmatpush1.xpose.msra.mxu0 %v1823
        %1841 = vmatprep.subr.mxu0 0.0
        %1842 = vmatpush1.xpose.msra.mxu0 %v1825
        %1843 = vmatprep.subr.mxu0 0.0
        %1844 = vmatpush1.xpose.msra.mxu0 %v1827
        %1845 = vmatprep.subr.mxu0 0.0
        %1846 = vmatpush1.xpose.msra.mxu0 %v1829
        %1847 = vmatprep.subr.mxu0 0.0
        %1848 = vmatpush1.xpose.msra.mxu0 0.0
        %1849 = vmatprep.subr.mxu0 0.0
        %1850 = vmatpush1.xpose.msra.mxu0 0.0
        %1851 = vmatprep.subr.mxu0 0.0
        %1852 = vmatpush1.xpose.msra.mxu0 0.0
        %1853 = vmatprep.subr.mxu0 0.0
        %1854 = vmatpush1.xpose.msra.mxu0 0.0
        %1855 = vmatprep.subr.mxu0 0.0
        %1856 = vmatpush1.xpose.msra.mxu0 0.0
        %1857 = vmatprep.subr.mxu0 0.0
        %1858 = vmatpush1.xpose.msra.mxu0 0.0
        %1859 = vmatprep.subr.mxu0 0.0
        %1860 = vmatpush1.xpose.msra.mxu0 0.0
        %1861 = vmatprep.subr.mxu0 0.0
        %1862 = vmatpush1.xpose.msra.mxu0 0.0
        %1863 = vmatprep.subr.mxu0 0.0
        %1864 = vmatpush1.xpose.msra.mxu0 0.0
        %1865 = vmatprep.subr.mxu0 0.0
        %1866 = vmatpush1.xpose.msra.mxu0 0.0
        %1867 = vmatprep.subr.mxu0 0.0
        %1868 = vmatpush1.xpose.msra.mxu0 0.0
        %1869 = vmatprep.subr.mxu0 0.0
        %1870 = vmatpush1.xpose.msra.mxu0 0.0
        %1871 = vmatprep.subr.mxu0 0.0
        %1872 = vmatpush1.xpose.msra.mxu0 0.0
        %1873 = vmatprep.subr.mxu0 0.0
        %1874 = vmatpush1.xpose.msra.mxu0 0.0
        %1875 = vmatprep.subr.mxu0 0.0
        %1876 = vmatpush1.xpose.msra.mxu0 0.0
        %1877 = vmatprep.subr.mxu0 0.0
        %1878 = vmatpush1.xpose.msra.mxu0 0.0
        %1879 = vmatprep.subr.mxu0 0.0
        %1880 = vmatpush1.xpose.msra.mxu0 0.0
        %1881 = vmatprep.subr.mxu0 0.0
        %1882 = vmatpush1.xpose.msra.mxu0 0.0
        %1883 = vmatprep.subr.mxu0 0.0
        %1884 = vmatpush1.xpose.msra.mxu0 0.0
        %1885 = vmatprep.subr.mxu0 0.0
        %1886 = vmatpush1.xpose.msra.mxu0 0.0
        %1887 = vmatprep.subr.mxu0 0.0
        %1888 = vmatpush1.xpose.msra.mxu0 0.0
        %1889 = vmatprep.subr.mxu0 0.0
        %1890 = vmatpush1.xpose.msra.mxu0 0.0
        %1891 = vmatprep.subr.mxu0 0.0
        %1892 = vmatpush1.xpose.msra.mxu0 0.0
        %1893 = vmatprep.subr.mxu0 0.0
        %1894 = vmatpush1.xpose.msra.mxu0 0.0
        %1895 = vmatprep.mubr.f32.mxu0 0.0
        %1896 = vmatmul.mubr.f32.gmra.mrb[0].mxu0 %v1285
        %v1897 = vpop.f32.mrb[0].mxu0
        %v1898 = vadd.f32 0.0, %v1897
        %v1899 = vpop.f32.mrb[0].mxu0
        %1900 = vmatprep.mubr.f32.mxu0 0.0
        %1901 = vmatmul.mubr.f32.gmra.mrb[0].mxu0 %v1285
        %v1902 = vpop.f32.mrb[0].mxu0
        %v1903 = vadd.f32 0.0, %v1902
        %v1904 = vpop.f32.mrb[0].mxu0
        %1905 = vmatprep.mubr.f32.mxu0 0.0
        %1906 = vmatmul.mubr.f32.gmra.mrb[0].mxu0 %v1285
        %v1907 = vpop.f32.mrb[0].mxu0
        %v1908 = vadd.f32 0.0, %v1907
        %v1909 = vpop.f32.mrb[0].mxu0
        %1910 = vmatprep.mubr.f32.mxu0 0.0
        %1911 = vmatmul.mubr.f32.gmra.mrb[0].mxu0 %v1285
        %v1912 = vpop.f32.mrb[0].mxu0
        %v1913 = vadd.f32 0.0, %v1912
        %v1914 = vpop.f32.mrb[0].mxu0
        %1915 = vmatprep.mubr.f32.mxu0 0.0
        %1916 = vmatmul.mubr.f32.gmra.mrb[0].mxu0 %v1285
        %v1917 = vpop.f32.mrb[0].mxu0
        %v1918 = vadd.f32 0.0, %v1917
        %v1919 = vpop.f32.mrb[0].mxu0
        %1920 = vmatprep.mubr.f32.mxu0 0.0
        %1921 = vmatmul.mubr.f32.gmra.mrb[0].mxu0 %v1285
        %v1922 = vpop.f32.mrb[0].mxu0
        %v1923 = vadd.f32 0.0, %v1922
        %v1924 = vpop.f32.mrb[0].mxu0
        %1925 = vmatprep.mubr.f32.mxu0 0.0
        %1926 = vmatmul.mubr.f32.gmra.mrb[0].mxu0 %v1285
        %v1927 = vpop.f32.mrb[0].mxu0
        %v1928 = vadd.f32 0.0, %v1927
        %v1929 = vpop.f32.mrb[0].mxu0
        %1930 = vmatprep.mubr.f32.mxu0 0.0
        %1931 = vmatmul.mubr.f32.gmra.mrb[0].mxu0 %v1285
        %v1932 = vpop.f32.mrb[0].mxu0
        %v1933 = vadd.f32 0.0, %v1932
        %v1934 = vpop.f32.mrb[0].mxu0
        %1935 = vdwg.mxu0
        %1936 = vset.pattern.permute.xlu0 1
        %1937 = vperm.xlu0 %1936, %v1243
        %v1938 = vpop.permute.xlu0 %1937
        %1940 = vset.pattern.permute.xlu0 1
        %1941 = vperm.xlu0 %1940, %v1248
        %v1942 = vpop.permute.xlu0 %1941
        %1944 = vset.pattern.permute.xlu0 1
        %1945 = vperm.xlu0 %1944, %v1253
        %v1946 = vpop.permute.xlu0 %1945
        %1948 = vset.pattern.permute.xlu0 1
        %1949 = vperm.xlu0 %1948, %v1258
        %v1950 = vpop.permute.xlu0 %1949
        %1952 = vset.pattern.permute.xlu0 1
        %1953 = vperm.xlu0 %1952, %v1263
        %v1954 = vpop.permute.xlu0 %1953
        %1956 = vset.pattern.permute.xlu0 1
        %1957 = vperm.xlu0 %1956, %v1268
        %v1958 = vpop.permute.xlu0 %1957
        %1960 = vset.pattern.permute.xlu0 1
        %1961 = vperm.xlu0 %1960, %v1273
        %v1962 = vpop.permute.xlu0 %1961
        %1964 = vset.pattern.permute.xlu0 1
        %1965 = vperm.xlu0 %1964, %v1278
        %v1966 = vpop.permute.xlu0 %1965
        %v1968 = vsub.f32 %v1938, %v1898
        %v1969 = vsub.f32 %v1942, %v1903
        %v1970 = vsub.f32 %v1946, %v1908
        %v1971 = vsub.f32 %v1950, %v1913
        %v1972 = vsub.f32 %v1954, %v1918
        %v1973 = vsub.f32 %v1958, %v1923
        %v1974 = vsub.f32 %v1962, %v1928
        %v1975 = vsub.f32 %v1966, %v1933
        %v1976 = vstv %s1797
        %v1977 = vmul.f32 %v1976, %v1968
        %v1978 = vmul.f32 %v1976, %v1969
        %v1979 = vmul.f32 %v1976, %v1970
        %v1980 = vmul.f32 %v1976, %v1971
        %v1981 = vmul.f32 %v1976, %v1972
        %v1982 = vmul.f32 %v1976, %v1973
        %v1983 = vmul.f32 %v1976, %v1974
        %v1984 = vmul.f32 %v1976, %v1975
        %v1985 = vmin.f32 %v1977, 0.0
        %v1986 = vmin.f32 %v1978, 0.0
        %v1987 = vmin.f32 %v1979, 0.0
        %v1988 = vmin.f32 %v1980, 0.0
        %v1989 = vmin.f32 %v1981, 0.0
        %v1990 = vmin.f32 %v1982, 0.0
        %v1991 = vmin.f32 %v1983, 0.0
        %v1992 = vmin.f32 %v1984, 0.0
        %v1993 = vmul.f32 %v1985, 1.442695
        %v1994 = vpow.pop %v1993
        %v1995 = vmul.f32 %v1986, 1.442695
        %v1996 = vpow.pop %v1995
        %v1997 = vmul.f32 %v1987, 1.442695
        %v1998 = vpow.pop %v1997
        %v1999 = vmul.f32 %v1988, 1.442695
        %v2000 = vpow.pop %v1999
        %v2001 = vmul.f32 %v1989, 1.442695
        %v2002 = vpow.pop %v2001
        %v2003 = vmul.f32 %v1990, 1.442695
        %v2004 = vpow.pop %v2003
        %v2005 = vmul.f32 %v1991, 1.442695
        %v2006 = vpow.pop %v2005
        %v2007 = vmul.f32 %v1992, 1.442695
        %v2008 = vpow.pop %v2007
        %v2009 = vmul.f32 %v1112, %v1994
        %v2010 = vmul.f32 %v1113, %v1996
        %v2011 = vmul.f32 %v1114, %v1998
        %v2012 = vmul.f32 %v1115, %v2000
        %v2013 = vmul.f32 %v1116, %v2002
        %v2014 = vmul.f32 %v1117, %v2004
        %v2015 = vmul.f32 %v1118, %v2006
        %v2016 = vmul.f32 %v1119, %v2008
        %v2017 = vpack.c.bf16 %v2010, %v2009
        %v2018 = vpack.c.bf16 %v2012, %v2011
        %v2019 = vpack.c.bf16 %v2014, %v2013
        %v2020 = vpack.c.bf16 %v2016, %v2015
        %2021 = vset.pattern.permute.xlu0 81
        %2022 = vperm.xlu0 %2021, %v982
        %v2023 = vpop.permute.xlu0 %2022
        %2025 = vset.pattern.permute.xlu0 81
        %2026 = vperm.xlu0 %2025, %v983
        %v2027 = vpop.permute.xlu0 %2026
        %2029 = vset.pattern.permute.xlu0 81
        %2030 = vperm.xlu0 %2029, %v984
        %v2031 = vpop.permute.xlu0 %2030
        %2033 = vset.pattern.permute.xlu0 81
        %2034 = vperm.xlu0 %2033, %v985
        %v2035 = vpop.permute.xlu0 %2034
        %2037 = vset.pattern.permute.xlu0 81
        %2038 = vperm.xlu0 %2037, %v986
        %v2039 = vpop.permute.xlu0 %2038
        %2041 = vset.pattern.permute.xlu0 81
        %2042 = vperm.xlu0 %2041, %v987
        %v2043 = vpop.permute.xlu0 %2042
        %2045 = vset.pattern.permute.xlu0 81
        %2046 = vperm.xlu0 %2045, %v988
        %v2047 = vpop.permute.xlu0 %2046
        %2049 = vset.pattern.permute.xlu0 81
        %2050 = vperm.xlu0 %2049, %v989
        %v2051 = vpop.permute.xlu0 %2050
        %v2053 = vmul.f32 %v814, %v2023
        %v2054 = vmul.f32 %v815, %v2027
        %v2055 = vmul.f32 %v816, %v2031
        %v2056 = vmul.f32 %v817, %v2035
        %v2057 = vmul.f32 %v818, %v2039
        %v2058 = vmul.f32 %v819, %v2043
        %v2059 = vmul.f32 %v820, %v2047
        %v2060 = vmul.f32 %v821, %v2051
        %v2061 = vpack.c.bf16 %v2054, %v2053
        %v2062 = vpack.c.bf16 %v2056, %v2055
        %v2063 = vpack.c.bf16 %v2058, %v2057
        %v2064 = vpack.c.bf16 %v2060, %v2059
        %v2065 = vstv %s1798
        %v2066 = vmul.f32 %v2065, %v814
        %v2067 = vmul.f32 %v2065, %v815
        %v2068 = vmul.f32 %v2065, %v816
        %v2069 = vmul.f32 %v2065, %v817
        %v2070 = vmul.f32 %v2065, %v818
        %v2071 = vmul.f32 %v2065, %v819
        %v2072 = vmul.f32 %v2065, %v820
        %v2073 = vmul.f32 %v2065, %v821
        %2078 = vrot.lane.b32.xlu0 %v2061, 80
        %v2079 = vpop.permute.xlu0 %2078
        %2080 = vrot.lane.b32.xlu0 %v2062, 80
        %v2081 = vpop.permute.xlu0 %2080
        %2082 = vrot.lane.b32.xlu0 %v2063, 80
        %v2083 = vpop.permute.xlu0 %2082
        %2084 = vrot.lane.b32.xlu0 %v2064, 80
        %v2085 = vpop.permute.xlu0 %2084
        %2098 = vrot.lane.b32.xlu0 %v2066, 80
        %v2099 = vpop.permute.xlu0 %2098
        %2100 = vrot.lane.b32.xlu0 %v2067, 80
        %v2101 = vpop.permute.xlu0 %2100
        %2102 = vrot.lane.b32.xlu0 %v2068, 80
        %v2103 = vpop.permute.xlu0 %2102
        %2104 = vrot.lane.b32.xlu0 %v2069, 80
        %v2105 = vpop.permute.xlu0 %2104
        %2106 = vrot.lane.b32.xlu0 %v2070, 80
        %v2107 = vpop.permute.xlu0 %2106
        %2108 = vrot.lane.b32.xlu0 %v2071, 80
        %v2109 = vpop.permute.xlu0 %2108
        %2110 = vrot.lane.b32.xlu0 %v2072, 80
        %v2111 = vpop.permute.xlu0 %2110
        %2112 = vrot.lane.b32.xlu0 %v2073, 80
        %v2113 = vpop.permute.xlu0 %2112
        %v2123 = vsel %vm405, %v2017, 0
        %v2126 = vsel %vm405, %v2018, 0
        %v2129 = vsel %vm405, %v2019, 0
        %v2132 = vsel %vm405, %v2020, 0
        %2134 = vmatprep.subr.bf16.mxu0 0
        %2135 = vmatpush1.bf16.msra.mxu0 %v2079
        %2136 = vmatprep.subr.bf16.mxu0 0
        %2137 = vmatpush1.bf16.msra.mxu0 %v2081
        %2138 = vmatprep.subr.bf16.mxu0 0
        %2139 = vmatpush1.bf16.msra.mxu0 %v2083
        %2140 = vmatprep.subr.bf16.mxu0 0
        %2141 = vmatpush1.bf16.msra.mxu0 %v2085
        %2142 = vmatprep.subr.bf16.mxu0 0
        %2143 = vmatpush1.bf16.msra.mxu0 0
        %2144 = vmatprep.subr.bf16.mxu0 0
        %2145 = vmatpush1.bf16.msra.mxu0 0
        %2146 = vmatprep.subr.bf16.mxu0 0
        %2147 = vmatpush1.bf16.msra.mxu0 0
        %2148 = vmatprep.subr.bf16.mxu0 0
        %2149 = vmatpush1.bf16.msra.mxu0 0
        %2150 = vmatprep.subr.bf16.mxu0 0
        %2151 = vmatpush1.bf16.msra.mxu0 0
        %2152 = vmatprep.subr.bf16.mxu0 0
        %2153 = vmatpush1.bf16.msra.mxu0 0
        %2154 = vmatprep.subr.bf16.mxu0 0
        %2155 = vmatpush1.bf16.msra.mxu0 0
        %2156 = vmatprep.subr.bf16.mxu0 0
        %2157 = vmatpush1.bf16.msra.mxu0 0
        %2158 = vmatprep.subr.bf16.mxu0 0
        %2159 = vmatpush1.bf16.msra.mxu0 0
        %2160 = vmatprep.subr.bf16.mxu0 0
        %2161 = vmatpush1.bf16.msra.mxu0 0
        %2162 = vmatprep.subr.bf16.mxu0 0
        %2163 = vmatpush1.bf16.msra.mxu0 0
        %2164 = vmatprep.subr.bf16.mxu0 0
        %2165 = vmatpush1.bf16.msra.mxu0 0
        %2166 = vmatprep.mubr.bf16.mxu0 0
        %2167 = vmatmul.mubr.bf16.gmra.mrb[0].mxu0 %v2123
        %v2168 = vpop.f32.mrb[0].mxu0
        %v2169 = vadd.f32 %v2099, %v2168
        %v2170 = vpop.f32.mrb[0].mxu0
        %v2171 = vpop.f32.mrb[0].mxu0
        %v2172 = vadd.f32 %v2101, %v2171
        %v2173 = vpop.f32.mrb[0].mxu0
        %2174 = vmatprep.mubr.bf16.mxu0 0
        %2175 = vmatmul.mubr.bf16.gmra.mrb[0].mxu0 %v2126
        %v2176 = vpop.f32.mrb[0].mxu0
        %v2177 = vadd.f32 %v2103, %v2176
        %v2178 = vpop.f32.mrb[0].mxu0
        %v2179 = vpop.f32.mrb[0].mxu0
        %v2180 = vadd.f32 %v2105, %v2179
        %v2181 = vpop.f32.mrb[0].mxu0
        %2182 = vmatprep.mubr.bf16.mxu0 0
        %2183 = vmatmul.mubr.bf16.gmra.mrb[0].mxu0 %v2129
        %v2184 = vpop.f32.mrb[0].mxu0
        %v2185 = vadd.f32 %v2107, %v2184
        %v2186 = vpop.f32.mrb[0].mxu0
        %v2187 = vpop.f32.mrb[0].mxu0
        %v2188 = vadd.f32 %v2109, %v2187
        %v2189 = vpop.f32.mrb[0].mxu0
        %2190 = vmatprep.mubr.bf16.mxu0 0
        %2191 = vmatmul.mubr.bf16.gmra.mrb[0].mxu0 %v2132
        %v2192 = vpop.f32.mrb[0].mxu0
        %v2193 = vadd.f32 %v2111, %v2192
        %v2194 = vpop.f32.mrb[0].mxu0
        %v2195 = vpop.f32.mrb[0].mxu0
        %v2196 = vadd.f32 %v2113, %v2195
        %v2197 = vpop.f32.mrb[0].mxu0
        %2198 = vdwg.mxu0
        %2207 = vrot.lane.b32.xlu0 %v814, 112
        %v2208 = vpop.permute.xlu0 %2207
        %2209 = vrot.lane.b32.xlu0 %v815, 112
        %v2210 = vpop.permute.xlu0 %2209
        %2211 = vrot.lane.b32.xlu0 %v816, 112
        %v2212 = vpop.permute.xlu0 %2211
        %2213 = vrot.lane.b32.xlu0 %v817, 112
        %v2214 = vpop.permute.xlu0 %2213
        %2215 = vrot.lane.b32.xlu0 %v818, 112
        %v2216 = vpop.permute.xlu0 %2215
        %2217 = vrot.lane.b32.xlu0 %v819, 112
        %v2218 = vpop.permute.xlu0 %2217
        %2219 = vrot.lane.b32.xlu0 %v820, 112
        %v2220 = vpop.permute.xlu0 %2219
        %2221 = vrot.lane.b32.xlu0 %v821, 112
        %v2222 = vpop.permute.xlu0 %2221
        %v2231 = vmul.f32 %v2169, %v2208
        %v2232 = vmul.f32 %v2172, %v2210
        %v2233 = vmul.f32 %v2177, %v2212
        %v2234 = vmul.f32 %v2180, %v2214
        %v2235 = vmul.f32 %v2185, %v2216
        %v2236 = vmul.f32 %v2188, %v2218
        %v2237 = vmul.f32 %v2193, %v2220
        %v2238 = vmul.f32 %v2196, %v2222
        %v2239 = vpack.c.bf16 %v2232, %v2231
        %v2240 = vpack.c.bf16 %v2234, %v2233
        %v2241 = vpack.c.bf16 %v2236, %v2235
        %v2242 = vpack.c.bf16 %v2238, %v2237
        %2243 = vmatprep.subr.bf16.mxu0 0
        %2244 = vmatpush1.bf16.msra.mxu0 %v2239
        %2245 = vmatprep.subr.bf16.mxu0 0
        %2246 = vmatpush1.bf16.msra.mxu0 %v2240
        %2247 = vmatprep.subr.bf16.mxu0 0
        %2248 = vmatpush1.bf16.msra.mxu0 %v2241
        %2249 = vmatprep.subr.bf16.mxu0 0
        %2250 = vmatpush1.bf16.msra.mxu0 %v2242
        %2251 = vmatprep.subr.bf16.mxu0 0
        %2252 = vmatpush1.bf16.msra.mxu0 0
        %2253 = vmatprep.subr.bf16.mxu0 0
        %2254 = vmatpush1.bf16.msra.mxu0 0
        %2255 = vmatprep.subr.bf16.mxu0 0
        %2256 = vmatpush1.bf16.msra.mxu0 0
        %2257 = vmatprep.subr.bf16.mxu0 0
        %2258 = vmatpush1.bf16.msra.mxu0 0
        %2259 = vmatprep.subr.bf16.mxu0 0
        %2260 = vmatpush1.bf16.msra.mxu0 0
        %2261 = vmatprep.subr.bf16.mxu0 0
        %2262 = vmatpush1.bf16.msra.mxu0 0
        %2263 = vmatprep.subr.bf16.mxu0 0
        %2264 = vmatpush1.bf16.msra.mxu0 0
        %2265 = vmatprep.subr.bf16.mxu0 0
        %2266 = vmatpush1.bf16.msra.mxu0 0
        %2267 = vmatprep.subr.bf16.mxu0 0
        %2268 = vmatpush1.bf16.msra.mxu0 0
        %2269 = vmatprep.subr.bf16.mxu0 0
        %2270 = vmatpush1.bf16.msra.mxu0 0
        %2271 = vmatprep.subr.bf16.mxu0 0
        %2272 = vmatpush1.bf16.msra.mxu0 0
        %2273 = vmatprep.subr.bf16.mxu0 0
        %2274 = vmatpush1.bf16.msra.mxu0 0
        %2275 = vmatprep.mubr.bf16.mxu0 0
        %2276 = vmatmul.mubr.bf16.gmra.mrb[0].mxu0 %v1712
        %v2277 = vpop.f32.mrb[0].mxu0
        %v2278 = vadd.f32 0.0, %v2277
        %v2279 = vpop.f32.mrb[0].mxu0
        %v2280 = vpop.f32.mrb[0].mxu0
        %v2281 = vadd.f32 0.0, %v2280
        %v2282 = vpop.f32.mrb[0].mxu0
        %2283 = vmatprep.mubr.bf16.mxu0 0
        %2284 = vmatmul.mubr.bf16.gmra.mrb[0].mxu0 %v1715
        %v2285 = vpop.f32.mrb[0].mxu0
        %v2286 = vadd.f32 0.0, %v2285
        %v2287 = vpop.f32.mrb[0].mxu0
        %v2288 = vpop.f32.mrb[0].mxu0
        %v2289 = vadd.f32 0.0, %v2288
        %v2290 = vpop.f32.mrb[0].mxu0
        %2291 = vmatprep.mubr.bf16.mxu0 0
        %2292 = vmatmul.mubr.bf16.gmra.mrb[0].mxu0 %v1718
        %v2293 = vpop.f32.mrb[0].mxu0
        %v2294 = vadd.f32 0.0, %v2293
        %v2295 = vpop.f32.mrb[0].mxu0
        %v2296 = vpop.f32.mrb[0].mxu0
        %v2297 = vadd.f32 0.0, %v2296
        %v2298 = vpop.f32.mrb[0].mxu0
        %2299 = vmatprep.mubr.bf16.mxu0 0
        %2300 = vmatmul.mubr.bf16.gmra.mrb[0].mxu0 %v1721
        %v2301 = vpop.f32.mrb[0].mxu0
        %v2302 = vadd.f32 0.0, %v2301
        %v2303 = vpop.f32.mrb[0].mxu0
        %v2304 = vpop.f32.mrb[0].mxu0
        %v2305 = vadd.f32 0.0, %v2304
        %v2306 = vpop.f32.mrb[0].mxu0
        %2307 = vdwg.mxu0
        %2316 = vrot.lane.b32.xlu0 %v2278, 16
        %v2317 = vpop.permute.xlu0 %2316
        %2318 = vrot.lane.b32.xlu0 %v2281, 16
        %v2319 = vpop.permute.xlu0 %2318
        %2320 = vrot.lane.b32.xlu0 %v2286, 16
        %v2321 = vpop.permute.xlu0 %2320
        %2322 = vrot.lane.b32.xlu0 %v2289, 16
        %v2323 = vpop.permute.xlu0 %2322
        %2324 = vrot.lane.b32.xlu0 %v2294, 16
        %v2325 = vpop.permute.xlu0 %2324
        %2326 = vrot.lane.b32.xlu0 %v2297, 16
        %v2327 = vpop.permute.xlu0 %2326
        %2328 = vrot.lane.b32.xlu0 %v2302, 16
        %v2329 = vpop.permute.xlu0 %2328
        %2330 = vrot.lane.b32.xlu0 %v2305, 16
        %v2331 = vpop.permute.xlu0 %2330
        %vm2340 = vcmask 261248
        %2341 = vst.msk [vmem:[#allocation3] sm:$0xff] %vm2340, %v2317
        %2342 = vst.msk [vmem:[#allocation3 + $0x8] sm:$0xff] %vm2340, %v2319
        %2343 = vst.msk [vmem:[#allocation3 + $0x10] sm:$0xff] %vm2340, %v2321
        %2344 = vst.msk [vmem:[#allocation3 + $0x18] sm:$0xff] %vm2340, %v2323
        %2345 = vst.msk [vmem:[#allocation3 + $0x20] sm:$0xff] %vm2340, %v2325
        %2346 = vst.msk [vmem:[#allocation3 + $0x28] sm:$0xff] %vm2340, %v2327
        %2347 = vst.msk [vmem:[#allocation3 + $0x30] sm:$0xff] %vm2340, %v2329
        %2348 = vst.msk [vmem:[#allocation3 + $0x38] sm:$0xff] %vm2340, %v2331
        %v2349 = vpack.c.bf16 %v823, %v822
        %v2350 = vpack.c.bf16 %v825, %v824
        %v2351 = vpack.c.bf16 %v827, %v826
        %v2352 = vpack.c.bf16 %v829, %v828
        %2357 = vrot.lane.b32.xlu0 %v2349, 56
        %v2358 = vpop.permute.xlu0 %2357
        %2359 = vrot.lane.b32.xlu0 %v2350, 56
        %v2360 = vpop.permute.xlu0 %2359
        %2361 = vrot.lane.b32.xlu0 %v2351, 56
        %v2362 = vpop.permute.xlu0 %2361
        %2363 = vrot.lane.b32.xlu0 %v2352, 56
        %v2364 = vpop.permute.xlu0 %2363
        %2365 = vrot.lane.b32.xlu0 %v2349, 64
        %v2366 = vpop.permute.xlu0 %2365
        %2367 = vrot.lane.b32.xlu0 %v2350, 64
        %v2368 = vpop.permute.xlu0 %2367
        %2369 = vrot.lane.b32.xlu0 %v2351, 64
        %v2370 = vpop.permute.xlu0 %2369
        %2371 = vrot.lane.b32.xlu0 %v2352, 64
        %v2372 = vpop.permute.xlu0 %2371
        %v2374 = vsel %vm1022, %v2358, 0
        %v2377 = vsel %vm1022, %v2360, 0
        %v2380 = vsel %vm1022, %v2362, 0
        %v2383 = vsel %vm1022, %v2364, 0
        %v2386 = vsel %vm1022, %v2366, 0
        %v2389 = vsel %vm1022, %v2368, 0
        %v2392 = vsel %vm1022, %v2370, 0
        %v2395 = vsel %vm1022, %v2372, 0
        %2397 = vmatprep.subr.bf16.mxu0 0
        %2398 = vmatpush1.bf16.xpose.msra.mxu0 %v2386
        %2399 = vmatprep.subr.bf16.mxu0 0
        %2400 = vmatpush1.bf16.xpose.msra.mxu0 %v2389
        %2401 = vmatprep.subr.bf16.mxu0 0
        %2402 = vmatpush1.bf16.xpose.msra.mxu0 %v2392
        %2403 = vmatprep.subr.bf16.mxu0 0
        %2404 = vmatpush1.bf16.xpose.msra.mxu0 %v2395
        %2405 = vmatprep.subr.bf16.mxu0 0
        %2406 = vmatpush1.bf16.xpose.msra.mxu0 0
        %2407 = vmatprep.subr.bf16.mxu0 0
        %2408 = vmatpush1.bf16.xpose.msra.mxu0 0
        %2409 = vmatprep.subr.bf16.mxu0 0
        %2410 = vmatpush1.bf16.xpose.msra.mxu0 0
        %2411 = vmatprep.subr.bf16.mxu0 0
        %2412 = vmatpush1.bf16.xpose.msra.mxu0 0
        %2413 = vmatprep.subr.bf16.mxu0 0
        %2414 = vmatpush1.bf16.xpose.msra.mxu0 0
        %2415 = vmatprep.subr.bf16.mxu0 0
        %2416 = vmatpush1.bf16.xpose.msra.mxu0 0
        %2417 = vmatprep.subr.bf16.mxu0 0
        %2418 = vmatpush1.bf16.xpose.msra.mxu0 0
        %2419 = vmatprep.subr.bf16.mxu0 0
        %2420 = vmatpush1.bf16.xpose.msra.mxu0 0
        %2421 = vmatprep.subr.bf16.mxu0 0
        %2422 = vmatpush1.bf16.xpose.msra.mxu0 0
        %2423 = vmatprep.subr.bf16.mxu0 0
        %2424 = vmatpush1.bf16.xpose.msra.mxu0 0
        %2425 = vmatprep.subr.bf16.mxu0 0
        %2426 = vmatpush1.bf16.xpose.msra.mxu0 0
        %2427 = vmatprep.subr.bf16.mxu0 0
        %2428 = vmatpush1.bf16.xpose.msra.mxu0 0
        %2429 = vmatprep.mubr.bf16.mxu0 0
        %2430 = vmatmul.mubr.bf16.gmra.mrb[0].mxu0 %v2374
        %v2431 = vpop.f32.mrb[0].mxu0
        %v2432 = vadd.f32 0.0, %v2431
        %v2433 = vpop.f32.mrb[0].mxu0
        %v2434 = vpop.f32.mrb[0].mxu0
        %v2435 = vadd.f32 0.0, %v2434
        %v2436 = vpop.f32.mrb[0].mxu0
        %2437 = vmatprep.mubr.bf16.mxu0 0
        %2438 = vmatmul.mubr.bf16.gmra.mrb[0].mxu0 %v2377
        %v2439 = vpop.f32.mrb[0].mxu0
        %v2440 = vadd.f32 0.0, %v2439
        %v2441 = vpop.f32.mrb[0].mxu0
        %v2442 = vpop.f32.mrb[0].mxu0
        %v2443 = vadd.f32 0.0, %v2442
        %v2444 = vpop.f32.mrb[0].mxu0
        %2445 = vmatprep.mubr.bf16.mxu0 0
        %2446 = vmatmul.mubr.bf16.gmra.mrb[0].mxu0 %v2380
        %v2447 = vpop.f32.mrb[0].mxu0
        %v2448 = vadd.f32 0.0, %v2447
        %v2449 = vpop.f32.mrb[0].mxu0
        %v2450 = vpop.f32.mrb[0].mxu0
        %v2451 = vadd.f32 0.0, %v2450
        %v2452 = vpop.f32.mrb[0].mxu0
        %2453 = vmatprep.mubr.bf16.mxu0 0
        %2454 = vmatmul.mubr.bf16.gmra.mrb[0].mxu0 %v2383
        %v2455 = vpop.f32.mrb[0].mxu0
        %v2456 = vadd.f32 0.0, %v2455
        %v2457 = vpop.f32.mrb[0].mxu0
        %v2458 = vpop.f32.mrb[0].mxu0
        %v2459 = vadd.f32 0.0, %v2458
        %v2460 = vpop.f32.mrb[0].mxu0
        %2461 = vdwg.mxu0
        %v2462 = vmul.f32 %v2432, %v330
        %v2463 = vmul.f32 %v2435, %v331
        %v2464 = vmul.f32 %v2440, %v332
        %v2465 = vmul.f32 %v2443, %v333
        %v2466 = vmul.f32 %v2448, %v334
        %v2467 = vmul.f32 %v2451, %v335
        %v2468 = vmul.f32 %v2456, %v336
        %v2469 = vmul.f32 %v2459, %v337
        %2478 = vrot.lane.b32.xlu0 %v990, 48
        %v2479 = vpop.permute.xlu0 %2478
        %2480 = vrot.lane.b32.xlu0 %v991, 48
        %v2481 = vpop.permute.xlu0 %2480
        %2482 = vrot.lane.b32.xlu0 %v992, 48
        %v2483 = vpop.permute.xlu0 %2482
        %2484 = vrot.lane.b32.xlu0 %v993, 48
        %v2485 = vpop.permute.xlu0 %2484
        %2486 = vrot.lane.b32.xlu0 %v994, 48
        %v2487 = vpop.permute.xlu0 %2486
        %2488 = vrot.lane.b32.xlu0 %v995, 48
        %v2489 = vpop.permute.xlu0 %2488
        %2490 = vrot.lane.b32.xlu0 %v996, 48
        %v2491 = vpop.permute.xlu0 %2490
        %2492 = vrot.lane.b32.xlu0 %v997, 48
        %v2493 = vpop.permute.xlu0 %2492
        %2502 = vmatprep.subr.mxu0 0.0
        %2503 = vmatpush1.msra.mxu0 %v2479
        %2504 = vmatprep.subr.mxu0 0.0
        %2505 = vmatpush1.msra.mxu0 %v2481
        %2506 = vmatprep.subr.mxu0 0.0
        %2507 = vmatpush1.msra.mxu0 %v2483
        %2508 = vmatprep.subr.mxu0 0.0
        %2509 = vmatpush1.msra.mxu0 %v2485
        %2510 = vmatprep.subr.mxu0 0.0
        %2511 = vmatpush1.msra.mxu0 %v2487
        %2512 = vmatprep.subr.mxu0 0.0
        %2513 = vmatpush1.msra.mxu0 %v2489
        %2514 = vmatprep.subr.mxu0 0.0
        %2515 = vmatpush1.msra.mxu0 %v2491
        %2516 = vmatprep.subr.mxu0 0.0
        %2517 = vmatpush1.msra.mxu0 %v2493
        %2518 = vmatprep.subr.mxu0 0.0
        %2519 = vmatpush1.msra.mxu0 0.0
        %2520 = vmatprep.subr.mxu0 0.0
        %2521 = vmatpush1.msra.mxu0 0.0
        %2522 = vmatprep.subr.mxu0 0.0
        %2523 = vmatpush1.msra.mxu0 0.0
        %2524 = vmatprep.subr.mxu0 0.0
        %2525 = vmatpush1.msra.mxu0 0.0
        %2526 = vmatprep.subr.mxu0 0.0
        %2527 = vmatpush1.msra.mxu0 0.0
        %2528 = vmatprep.subr.mxu0 0.0
        %2529 = vmatpush1.msra.mxu0 0.0
        %2530 = vmatprep.subr.mxu0 0.0
        %2531 = vmatpush1.msra.mxu0 0.0
        %2532 = vmatprep.subr.mxu0 0.0
        %2533 = vmatpush1.msra.mxu0 0.0
        %2534 = vmatprep.subr.mxu0 0.0
        %2535 = vmatpush1.msra.mxu0 0.0
        %2536 = vmatprep.subr.mxu0 0.0
        %2537 = vmatpush1.msra.mxu0 0.0
        %2538 = vmatprep.subr.mxu0 0.0
        %2539 = vmatpush1.msra.mxu0 0.0
        %2540 = vmatprep.subr.mxu0 0.0
        %2541 = vmatpush1.msra.mxu0 0.0
        %2542 = vmatprep.subr.mxu0 0.0
        %2543 = vmatpush1.msra.mxu0 0.0
        %2544 = vmatprep.subr.mxu0 0.0
        %2545 = vmatpush1.msra.mxu0 0.0
        %2546 = vmatprep.subr.mxu0 0.0
        %2547 = vmatpush1.msra.mxu0 0.0
        %2548 = vmatprep.subr.mxu0 0.0
        %2549 = vmatpush1.msra.mxu0 0.0
        %2550 = vmatprep.subr.mxu0 0.0
        %2551 = vmatpush1.msra.mxu0 0.0
        %2552 = vmatprep.subr.mxu0 0.0
        %2553 = vmatpush1.msra.mxu0 0.0
        %2554 = vmatprep.subr.mxu0 0.0
        %2555 = vmatpush1.msra.mxu0 0.0
        %2556 = vmatprep.subr.mxu0 0.0
        %2557 = vmatpush1.msra.mxu0 0.0
        %2558 = vmatprep.subr.mxu0 0.0
        %2559 = vmatpush1.msra.mxu0 0.0
        %2560 = vmatprep.subr.mxu0 0.0
        %2561 = vmatpush1.msra.mxu0 0.0
        %2562 = vmatprep.subr.mxu0 0.0
        %2563 = vmatpush1.msra.mxu0 0.0
        %2564 = vmatprep.subr.mxu0 0.0
        %2565 = vmatpush1.msra.mxu0 0.0
        %2566 = vmatprep.mubr.f32.mxu0 0.0
        %2567 = vmatmul.mubr.f32.gmra.mrb[0].mxu0 %v1153
        %v2568 = vpop.f32.mrb[0].mxu0
        %v2569 = vadd.f32 0.0, %v2568
        %v2570 = vpop.f32.mrb[0].mxu0
        %2571 = vmatprep.mubr.f32.mxu0 0.0
        %2572 = vmatmul.mubr.f32.gmra.mrb[0].mxu0 %v1156
        %v2573 = vpop.f32.mrb[0].mxu0
        %v2574 = vadd.f32 0.0, %v2573
        %v2575 = vpop.f32.mrb[0].mxu0
        %2576 = vmatprep.mubr.f32.mxu0 0.0
        %2577 = vmatmul.mubr.f32.gmra.mrb[0].mxu0 %v1159
        %v2578 = vpop.f32.mrb[0].mxu0
        %v2579 = vadd.f32 0.0, %v2578
        %v2580 = vpop.f32.mrb[0].mxu0
        %2581 = vmatprep.mubr.f32.mxu0 0.0
        %2582 = vmatmul.mubr.f32.gmra.mrb[0].mxu0 %v1162
        %v2583 = vpop.f32.mrb[0].mxu0
        %v2584 = vadd.f32 0.0, %v2583
        %v2585 = vpop.f32.mrb[0].mxu0
        %2586 = vmatprep.mubr.f32.mxu0 0.0
        %2587 = vmatmul.mubr.f32.gmra.mrb[0].mxu0 %v1165
        %v2588 = vpop.f32.mrb[0].mxu0
        %v2589 = vadd.f32 0.0, %v2588
        %v2590 = vpop.f32.mrb[0].mxu0
        %2591 = vmatprep.mubr.f32.mxu0 0.0
        %2592 = vmatmul.mubr.f32.gmra.mrb[0].mxu0 %v1168
        %v2593 = vpop.f32.mrb[0].mxu0
        %v2594 = vadd.f32 0.0, %v2593
        %v2595 = vpop.f32.mrb[0].mxu0
        %2596 = vmatprep.mubr.f32.mxu0 0.0
        %2597 = vmatmul.mubr.f32.gmra.mrb[0].mxu0 %v1171
        %v2598 = vpop.f32.mrb[0].mxu0
        %v2599 = vadd.f32 0.0, %v2598
        %v2600 = vpop.f32.mrb[0].mxu0
        %2601 = vmatprep.mubr.f32.mxu0 0.0
        %2602 = vmatmul.mubr.f32.gmra.mrb[0].mxu0 %v1174
        %v2603 = vpop.f32.mrb[0].mxu0
        %v2604 = vadd.f32 0.0, %v2603
        %v2605 = vpop.f32.mrb[0].mxu0
        %2606 = vdwg.mxu0
        %s2607 = sld [smem:[#allocation10]]
        %s2608 = sld [smem:[#allocation10 + $0x2]]
        %v2610 = vsel %vm1283, %v2569, 0
        %v2613 = vsel %vm1283, %v2574, 0
        %v2616 = vsel %vm1283, %v2579, 0
        %v2619 = vsel %vm1283, %v2584, 0
        %v2622 = vsel %vm1283, %v2589, 0
        %v2625 = vsel %vm1283, %v2594, 0
        %v2628 = vsel %vm1283, %v2599, 0
        %v2631 = vsel %vm1283, %v2604, 0
        %2633 = vmatprep.subr.mxu0 0.0
        %2634 = vmatpush1.xpose.msra.mxu0 %v2610
        %2635 = vmatprep.subr.mxu0 0.0
        %2636 = vmatpush1.xpose.msra.mxu0 %v2613
        %2637 = vmatprep.subr.mxu0 0.0
        %2638 = vmatpush1.xpose.msra.mxu0 %v2616
        %2639 = vmatprep.subr.mxu0 0.0
        %2640 = vmatpush1.xpose.msra.mxu0 %v2619
        %2641 = vmatprep.subr.mxu0 0.0
        %2642 = vmatpush1.xpose.msra.mxu0 %v2622
        %2643 = vmatprep.subr.mxu0 0.0
        %2644 = vmatpush1.xpose.msra.mxu0 %v2625
        %2645 = vmatprep.subr.mxu0 0.0
        %2646 = vmatpush1.xpose.msra.mxu0 %v2628
        %2647 = vmatprep.subr.mxu0 0.0
        %2648 = vmatpush1.xpose.msra.mxu0 %v2631
        %2649 = vmatprep.subr.mxu0 0.0
        %2650 = vmatpush1.xpose.msra.mxu0 0.0
        %2651 = vmatprep.subr.mxu0 0.0
        %2652 = vmatpush1.xpose.msra.mxu0 0.0
        %2653 = vmatprep.subr.mxu0 0.0
        %2654 = vmatpush1.xpose.msra.mxu0 0.0
        %2655 = vmatprep.subr.mxu0 0.0
        %2656 = vmatpush1.xpose.msra.mxu0 0.0
        %2657 = vmatprep.subr.mxu0 0.0
        %2658 = vmatpush1.xpose.msra.mxu0 0.0
        %2659 = vmatprep.subr.mxu0 0.0
        %2660 = vmatpush1.xpose.msra.mxu0 0.0
        %2661 = vmatprep.subr.mxu0 0.0
        %2662 = vmatpush1.xpose.msra.mxu0 0.0
        %2663 = vmatprep.subr.mxu0 0.0
        %2664 = vmatpush1.xpose.msra.mxu0 0.0
        %2665 = vmatprep.subr.mxu0 0.0
        %2666 = vmatpush1.xpose.msra.mxu0 0.0
        %2667 = vmatprep.subr.mxu0 0.0
        %2668 = vmatpush1.xpose.msra.mxu0 0.0
        %2669 = vmatprep.subr.mxu0 0.0
        %2670 = vmatpush1.xpose.msra.mxu0 0.0
        %2671 = vmatprep.subr.mxu0 0.0
        %2672 = vmatpush1.xpose.msra.mxu0 0.0
        %2673 = vmatprep.subr.mxu0 0.0
        %2674 = vmatpush1.xpose.msra.mxu0 0.0
        %2675 = vmatprep.subr.mxu0 0.0
        %2676 = vmatpush1.xpose.msra.mxu0 0.0
        %2677 = vmatprep.subr.mxu0 0.0
        %2678 = vmatpush1.xpose.msra.mxu0 0.0
        %2679 = vmatprep.subr.mxu0 0.0
        %2680 = vmatpush1.xpose.msra.mxu0 0.0
        %2681 = vmatprep.subr.mxu0 0.0
        %2682 = vmatpush1.xpose.msra.mxu0 0.0
        %2683 = vmatprep.subr.mxu0 0.0
        %2684 = vmatpush1.xpose.msra.mxu0 0.0
        %2685 = vmatprep.subr.mxu0 0.0
        %2686 = vmatpush1.xpose.msra.mxu0 0.0
        %2687 = vmatprep.subr.mxu0 0.0
        %2688 = vmatpush1.xpose.msra.mxu0 0.0
        %2689 = vmatprep.subr.mxu0 0.0
        %2690 = vmatpush1.xpose.msra.mxu0 0.0
        %2691 = vmatprep.subr.mxu0 0.0
        %2692 = vmatpush1.xpose.msra.mxu0 0.0
        %2693 = vmatprep.subr.mxu0 0.0
        %2694 = vmatpush1.xpose.msra.mxu0 0.0
        %2695 = vmatprep.subr.mxu0 0.0
        %2696 = vmatpush1.xpose.msra.mxu0 0.0
        %2697 = vmatprep.mubr.f32.mxu0 0.0
        %2698 = vmatmul.mubr.f32.gmra.mrb[0].mxu0 %v1285
        %v2699 = vpop.f32.mrb[0].mxu0
        %v2700 = vadd.f32 0.0, %v2699
        %v2701 = vpop.f32.mrb[0].mxu0
        %2702 = vmatprep.mubr.f32.mxu0 0.0
        %2703 = vmatmul.mubr.f32.gmra.mrb[0].mxu0 %v1285
        %v2704 = vpop.f32.mrb[0].mxu0
        %v2705 = vadd.f32 0.0, %v2704
        %v2706 = vpop.f32.mrb[0].mxu0
        %2707 = vmatprep.mubr.f32.mxu0 0.0
        %2708 = vmatmul.mubr.f32.gmra.mrb[0].mxu0 %v1285
        %v2709 = vpop.f32.mrb[0].mxu0
        %v2710 = vadd.f32 0.0, %v2709
        %v2711 = vpop.f32.mrb[0].mxu0
        %2712 = vmatprep.mubr.f32.mxu0 0.0
        %2713 = vmatmul.mubr.f32.gmra.mrb[0].mxu0 %v1285
        %v2714 = vpop.f32.mrb[0].mxu0
        %v2715 = vadd.f32 0.0, %v2714
        %v2716 = vpop.f32.mrb[0].mxu0
        %2717 = vmatprep.mubr.f32.mxu0 0.0
        %2718 = vmatmul.mubr.f32.gmra.mrb[0].mxu0 %v1285
        %v2719 = vpop.f32.mrb[0].mxu0
        %v2720 = vadd.f32 0.0, %v2719
        %v2721 = vpop.f32.mrb[0].mxu0
        %2722 = vmatprep.mubr.f32.mxu0 0.0
        %2723 = vmatmul.mubr.f32.gmra.mrb[0].mxu0 %v1285
        %v2724 = vpop.f32.mrb[0].mxu0
        %v2725 = vadd.f32 0.0, %v2724
        %v2726 = vpop.f32.mrb[0].mxu0
        %2727 = vmatprep.mubr.f32.mxu0 0.0
        %2728 = vmatmul.mubr.f32.gmra.mrb[0].mxu0 %v1285
        %v2729 = vpop.f32.mrb[0].mxu0
        %v2730 = vadd.f32 0.0, %v2729
        %v2731 = vpop.f32.mrb[0].mxu0
        %2732 = vmatprep.mubr.f32.mxu0 0.0
        %2733 = vmatmul.mubr.f32.gmra.mrb[0].mxu0 %v1285
        %v2734 = vpop.f32.mrb[0].mxu0
        %v2735 = vadd.f32 0.0, %v2734
        %v2736 = vpop.f32.mrb[0].mxu0
        %2737 = vdwg.mxu0
        %2738 = vset.pattern.permute.xlu0 0
        %2739 = vperm.xlu0 %2738, %v2569
        %v2740 = vpop.permute.xlu0 %2739
        %2742 = vset.pattern.permute.xlu0 0
        %2743 = vperm.xlu0 %2742, %v2574
        %v2744 = vpop.permute.xlu0 %2743
        %2746 = vset.pattern.permute.xlu0 0
        %2747 = vperm.xlu0 %2746, %v2579
        %v2748 = vpop.permute.xlu0 %2747
        %2750 = vset.pattern.permute.xlu0 0
        %2751 = vperm.xlu0 %2750, %v2584
        %v2752 = vpop.permute.xlu0 %2751
        %2754 = vset.pattern.permute.xlu0 0
        %2755 = vperm.xlu0 %2754, %v2589
        %v2756 = vpop.permute.xlu0 %2755
        %2758 = vset.pattern.permute.xlu0 0
        %2759 = vperm.xlu0 %2758, %v2594
        %v2760 = vpop.permute.xlu0 %2759
        %2762 = vset.pattern.permute.xlu0 0
        %2763 = vperm.xlu0 %2762, %v2599
        %v2764 = vpop.permute.xlu0 %2763
        %2766 = vset.pattern.permute.xlu0 0
        %2767 = vperm.xlu0 %2766, %v2604
        %v2768 = vpop.permute.xlu0 %2767
        %v2770 = vsub.f32 %v2740, %v2700
        %v2771 = vsub.f32 %v2744, %v2705
        %v2772 = vsub.f32 %v2748, %v2710
        %v2773 = vsub.f32 %v2752, %v2715
        %v2774 = vsub.f32 %v2756, %v2720
        %v2775 = vsub.f32 %v2760, %v2725
        %v2776 = vsub.f32 %v2764, %v2730
        %v2777 = vsub.f32 %v2768, %v2735
        %v2778 = vstv %s2607
        %v2779 = vmul.f32 %v2778, %v2770
        %v2780 = vmul.f32 %v2778, %v2771
        %v2781 = vmul.f32 %v2778, %v2772
        %v2782 = vmul.f32 %v2778, %v2773
        %v2783 = vmul.f32 %v2778, %v2774
        %v2784 = vmul.f32 %v2778, %v2775
        %v2785 = vmul.f32 %v2778, %v2776
        %v2786 = vmul.f32 %v2778, %v2777
        %v2787 = vmin.f32 %v2779, 0.0
        %v2788 = vmin.f32 %v2780, 0.0
        %v2789 = vmin.f32 %v2781, 0.0
        %v2790 = vmin.f32 %v2782, 0.0
        %v2791 = vmin.f32 %v2783, 0.0
        %v2792 = vmin.f32 %v2784, 0.0
        %v2793 = vmin.f32 %v2785, 0.0
        %v2794 = vmin.f32 %v2786, 0.0
        %v2795 = vmul.f32 %v2787, 1.442695
        %v2796 = vpow.pop %v2795
        %v2797 = vmul.f32 %v2788, 1.442695
        %v2798 = vpow.pop %v2797
        %v2799 = vmul.f32 %v2789, 1.442695
        %v2800 = vpow.pop %v2799
        %v2801 = vmul.f32 %v2790, 1.442695
        %v2802 = vpow.pop %v2801
        %v2803 = vmul.f32 %v2791, 1.442695
        %v2804 = vpow.pop %v2803
        %v2805 = vmul.f32 %v2792, 1.442695
        %v2806 = vpow.pop %v2805
        %v2807 = vmul.f32 %v2793, 1.442695
        %v2808 = vpow.pop %v2807
        %v2809 = vmul.f32 %v2794, 1.442695
        %v2810 = vpow.pop %v2809
        %v2811 = vmul.f32 %v2462, %v2796
        %v2812 = vmul.f32 %v2463, %v2798
        %v2813 = vmul.f32 %v2464, %v2800
        %v2814 = vmul.f32 %v2465, %v2802
        %v2815 = vmul.f32 %v2466, %v2804
        %v2816 = vmul.f32 %v2467, %v2806
        %v2817 = vmul.f32 %v2468, %v2808
        %v2818 = vmul.f32 %v2469, %v2810
        %v2819 = vpack.c.bf16 %v2812, %v2811
        %v2820 = vpack.c.bf16 %v2814, %v2813
        %v2821 = vpack.c.bf16 %v2816, %v2815
        %v2822 = vpack.c.bf16 %v2818, %v2817
        %2823 = vset.pattern.permute.xlu0 80
        %2824 = vperm.xlu0 %2823, %v990
        %v2825 = vpop.permute.xlu0 %2824
        %2827 = vset.pattern.permute.xlu0 80
        %2828 = vperm.xlu0 %2827, %v991
        %v2829 = vpop.permute.xlu0 %2828
        %2831 = vset.pattern.permute.xlu0 80
        %2832 = vperm.xlu0 %2831, %v992
        %v2833 = vpop.permute.xlu0 %2832
        %2835 = vset.pattern.permute.xlu0 80
        %2836 = vperm.xlu0 %2835, %v993
        %v2837 = vpop.permute.xlu0 %2836
        %2839 = vset.pattern.permute.xlu0 80
        %2840 = vperm.xlu0 %2839, %v994
        %v2841 = vpop.permute.xlu0 %2840
        %2843 = vset.pattern.permute.xlu0 80
        %2844 = vperm.xlu0 %2843, %v995
        %v2845 = vpop.permute.xlu0 %2844
        %2847 = vset.pattern.permute.xlu0 80
        %2848 = vperm.xlu0 %2847, %v996
        %v2849 = vpop.permute.xlu0 %2848
        %2851 = vset.pattern.permute.xlu0 80
        %2852 = vperm.xlu0 %2851, %v997
        %v2853 = vpop.permute.xlu0 %2852
        %v2855 = vmul.f32 %v822, %v2825
        %v2856 = vmul.f32 %v823, %v2829
        %v2857 = vmul.f32 %v824, %v2833
        %v2858 = vmul.f32 %v825, %v2837
        %v2859 = vmul.f32 %v826, %v2841
        %v2860 = vmul.f32 %v827, %v2845
        %v2861 = vmul.f32 %v828, %v2849
        %v2862 = vmul.f32 %v829, %v2853
        %v2863 = vpack.c.bf16 %v2856, %v2855
        %v2864 = vpack.c.bf16 %v2858, %v2857
        %v2865 = vpack.c.bf16 %v2860, %v2859
        %v2866 = vpack.c.bf16 %v2862, %v2861
        %v2867 = vstv %s2608
        %v2868 = vmul.f32 %v2867, %v822
        %v2869 = vmul.f32 %v2867, %v823
        %v2870 = vmul.f32 %v2867, %v824
        %v2871 = vmul.f32 %v2867, %v825
        %v2872 = vmul.f32 %v2867, %v826
        %v2873 = vmul.f32 %v2867, %v827
        %v2874 = vmul.f32 %v2867, %v828
        %v2875 = vmul.f32 %v2867, %v829
        %2880 = vrot.lane.b32.xlu0 %v2863, 96
        %v2881 = vpop.permute.xlu0 %2880
        %2882 = vrot.lane.b32.xlu0 %v2864, 96
        %v2883 = vpop.permute.xlu0 %2882
        %2884 = vrot.lane.b32.xlu0 %v2865, 96
        %v2885 = vpop.permute.xlu0 %2884
        %2886 = vrot.lane.b32.xlu0 %v2866, 96
        %v2887 = vpop.permute.xlu0 %2886
        %2900 = vrot.lane.b32.xlu0 %v2868, 96
        %v2901 = vpop.permute.xlu0 %2900
        %2902 = vrot.lane.b32.xlu0 %v2869, 96
        %v2903 = vpop.permute.xlu0 %2902
        %2904 = vrot.lane.b32.xlu0 %v2870, 96
        %v2905 = vpop.permute.xlu0 %2904
        %2906 = vrot.lane.b32.xlu0 %v2871, 96
        %v2907 = vpop.permute.xlu0 %2906
        %2908 = vrot.lane.b32.xlu0 %v2872, 96
        %v2909 = vpop.permute.xlu0 %2908
        %2910 = vrot.lane.b32.xlu0 %v2873, 96
        %v2911 = vpop.permute.xlu0 %2910
        %2912 = vrot.lane.b32.xlu0 %v2874, 96
        %v2913 = vpop.permute.xlu0 %2912
        %2914 = vrot.lane.b32.xlu0 %v2875, 96
        %v2915 = vpop.permute.xlu0 %2914
        %v2925 = vsel %vm405, %v2819, 0
        %v2928 = vsel %vm405, %v2820, 0
        %v2931 = vsel %vm405, %v2821, 0
        %v2934 = vsel %vm405, %v2822, 0
        %2936 = vmatprep.subr.bf16.mxu0 0
        %2937 = vmatpush1.bf16.msra.mxu0 %v2881
        %2938 = vmatprep.subr.bf16.mxu0 0
        %2939 = vmatpush1.bf16.msra.mxu0 %v2883
        %2940 = vmatprep.subr.bf16.mxu0 0
        %2941 = vmatpush1.bf16.msra.mxu0 %v2885
        %2942 = vmatprep.subr.bf16.mxu0 0
        %2943 = vmatpush1.bf16.msra.mxu0 %v2887
        %2944 = vmatprep.subr.bf16.mxu0 0
        %2945 = vmatpush1.bf16.msra.mxu0 0
        %2946 = vmatprep.subr.bf16.mxu0 0
        %2947 = vmatpush1.bf16.msra.mxu0 0
        %2948 = vmatprep.subr.bf16.mxu0 0
        %2949 = vmatpush1.bf16.msra.mxu0 0
        %2950 = vmatprep.subr.bf16.mxu0 0
        %2951 = vmatpush1.bf16.msra.mxu0 0
        %2952 = vmatprep.subr.bf16.mxu0 0
        %2953 = vmatpush1.bf16.msra.mxu0 0
        %2954 = vmatprep.subr.bf16.mxu0 0
        %2955 = vmatpush1.bf16.msra.mxu0 0
        %2956 = vmatprep.subr.bf16.mxu0 0
        %2957 = vmatpush1.bf16.msra.mxu0 0
        %2958 = vmatprep.subr.bf16.mxu0 0
        %2959 = vmatpush1.bf16.msra.mxu0 0
        %2960 = vmatprep.subr.bf16.mxu0 0
        %2961 = vmatpush1.bf16.msra.mxu0 0
        %2962 = vmatprep.subr.bf16.mxu0 0
        %2963 = vmatpush1.bf16.msra.mxu0 0
        %2964 = vmatprep.subr.bf16.mxu0 0
        %2965 = vmatpush1.bf16.msra.mxu0 0
        %2966 = vmatprep.subr.bf16.mxu0 0
        %2967 = vmatpush1.bf16.msra.mxu0 0
        %2968 = vmatprep.mubr.bf16.mxu0 0
        %2969 = vmatmul.mubr.bf16.gmra.mrb[0].mxu0 %v2925
        %v2970 = vpop.f32.mrb[0].mxu0
        %v2971 = vadd.f32 %v2901, %v2970
        %v2972 = vpop.f32.mrb[0].mxu0
        %v2973 = vpop.f32.mrb[0].mxu0
        %v2974 = vadd.f32 %v2903, %v2973
        %v2975 = vpop.f32.mrb[0].mxu0
        %2976 = vmatprep.mubr.bf16.mxu0 0
        %2977 = vmatmul.mubr.bf16.gmra.mrb[0].mxu0 %v2928
        %v2978 = vpop.f32.mrb[0].mxu0
        %v2979 = vadd.f32 %v2905, %v2978
        %v2980 = vpop.f32.mrb[0].mxu0
        %v2981 = vpop.f32.mrb[0].mxu0
        %v2982 = vadd.f32 %v2907, %v2981
        %v2983 = vpop.f32.mrb[0].mxu0
        %2984 = vmatprep.mubr.bf16.mxu0 0
        %2985 = vmatmul.mubr.bf16.gmra.mrb[0].mxu0 %v2931
        %v2986 = vpop.f32.mrb[0].mxu0
        %v2987 = vadd.f32 %v2909, %v2986
        %v2988 = vpop.f32.mrb[0].mxu0
        %v2989 = vpop.f32.mrb[0].mxu0
        %v2990 = vadd.f32 %v2911, %v2989
        %v2991 = vpop.f32.mrb[0].mxu0
        %2992 = vmatprep.mubr.bf16.mxu0 0
        %2993 = vmatmul.mubr.bf16.gmra.mrb[0].mxu0 %v2934
        %v2994 = vpop.f32.mrb[0].mxu0
        %v2995 = vadd.f32 %v2913, %v2994
        %v2996 = vpop.f32.mrb[0].mxu0
        %v2997 = vpop.f32.mrb[0].mxu0
        %v2998 = vadd.f32 %v2915, %v2997
        %v2999 = vpop.f32.mrb[0].mxu0
        %3000 = vdwg.mxu0
        %v3001 = vmul.f32 %v2971, %v822
        %v3002 = vmul.f32 %v2974, %v823
        %v3003 = vmul.f32 %v2979, %v824
        %v3004 = vmul.f32 %v2982, %v825
        %v3005 = vmul.f32 %v2987, %v826
        %v3006 = vmul.f32 %v2990, %v827
        %v3007 = vmul.f32 %v2995, %v828
        %v3008 = vmul.f32 %v2998, %v829
        %v3009 = vpack.c.bf16 %v3002, %v3001
        %v3010 = vpack.c.bf16 %v3004, %v3003
        %v3011 = vpack.c.bf16 %v3006, %v3005
        %v3012 = vpack.c.bf16 %v3008, %v3007
        %3013 = vmatprep.subr.bf16.mxu0 0
        %3014 = vmatpush1.bf16.msra.mxu0 %v3009
        %3015 = vmatprep.subr.bf16.mxu0 0
        %3016 = vmatpush1.bf16.msra.mxu0 %v3010
        %3017 = vmatprep.subr.bf16.mxu0 0
        %3018 = vmatpush1.bf16.msra.mxu0 %v3011
        %3019 = vmatprep.subr.bf16.mxu0 0
        %3020 = vmatpush1.bf16.msra.mxu0 %v3012
        %3021 = vmatprep.subr.bf16.mxu0 0
        %3022 = vmatpush1.bf16.msra.mxu0 0
        %3023 = vmatprep.subr.bf16.mxu0 0
        %3024 = vmatpush1.bf16.msra.mxu0 0
        %3025 = vmatprep.subr.bf16.mxu0 0
        %3026 = vmatpush1.bf16.msra.mxu0 0
        %3027 = vmatprep.subr.bf16.mxu0 0
        %3028 = vmatpush1.bf16.msra.mxu0 0
        %3029 = vmatprep.subr.bf16.mxu0 0
        %3030 = vmatpush1.bf16.msra.mxu0 0
        %3031 = vmatprep.subr.bf16.mxu0 0
        %3032 = vmatpush1.bf16.msra.mxu0 0
        %3033 = vmatprep.subr.bf16.mxu0 0
        %3034 = vmatpush1.bf16.msra.mxu0 0
        %3035 = vmatprep.subr.bf16.mxu0 0
        %3036 = vmatpush1.bf16.msra.mxu0 0
        %3037 = vmatprep.subr.bf16.mxu0 0
        %3038 = vmatpush1.bf16.msra.mxu0 0
        %3039 = vmatprep.subr.bf16.mxu0 0
        %3040 = vmatpush1.bf16.msra.mxu0 0
        %3041 = vmatprep.subr.bf16.mxu0 0
        %3042 = vmatpush1.bf16.msra.mxu0 0
        %3043 = vmatprep.subr.bf16.mxu0 0
        %3044 = vmatpush1.bf16.msra.mxu0 0
        %3045 = vmatprep.mubr.bf16.mxu0 0
        %3046 = vmatmul.mubr.bf16.gmra.mrb[0].mxu0 %v1712
        %v3047 = vpop.f32.mrb[0].mxu0
        %v3048 = vadd.f32 0.0, %v3047
        %v3049 = vpop.f32.mrb[0].mxu0
        %v3050 = vpop.f32.mrb[0].mxu0
        %v3051 = vadd.f32 0.0, %v3050
        %v3052 = vpop.f32.mrb[0].mxu0
        %3053 = vmatprep.mubr.bf16.mxu0 0
        %3054 = vmatmul.mubr.bf16.gmra.mrb[0].mxu0 %v1715
        %v3055 = vpop.f32.mrb[0].mxu0
        %v3056 = vadd.f32 0.0, %v3055
        %v3057 = vpop.f32.mrb[0].mxu0
        %v3058 = vpop.f32.mrb[0].mxu0
        %v3059 = vadd.f32 0.0, %v3058
        %v3060 = vpop.f32.mrb[0].mxu0
        %3061 = vmatprep.mubr.bf16.mxu0 0
        %3062 = vmatmul.mubr.bf16.gmra.mrb[0].mxu0 %v1718
        %v3063 = vpop.f32.mrb[0].mxu0
        %v3064 = vadd.f32 0.0, %v3063
        %v3065 = vpop.f32.mrb[0].mxu0
        %v3066 = vpop.f32.mrb[0].mxu0
        %v3067 = vadd.f32 0.0, %v3066
        %v3068 = vpop.f32.mrb[0].mxu0
        %3069 = vmatprep.mubr.bf16.mxu0 0
        %3070 = vmatmul.mubr.bf16.gmra.mrb[0].mxu0 %v1721
        %v3071 = vpop.f32.mrb[0].mxu0
        %v3072 = vadd.f32 0.0, %v3071
        %v3073 = vpop.f32.mrb[0].mxu0
        %v3074 = vpop.f32.mrb[0].mxu0
        %v3075 = vadd.f32 0.0, %v3074
        %v3076 = vpop.f32.mrb[0].mxu0
        %3077 = vdwg.mxu0
        %3078 = vst.msk [vmem:[#allocation3 + $0x40] sm:$0xff] %vm1788, %v3048
        %3079 = vst.msk [vmem:[#allocation3 + $0x48] sm:$0xff] %vm1788, %v3051
        %3080 = vst.msk [vmem:[#allocation3 + $0x50] sm:$0xff] %vm1788, %v3056
        %3081 = vst.msk [vmem:[#allocation3 + $0x58] sm:$0xff] %vm1788, %v3059
        %3082 = vst.msk [vmem:[#allocation3 + $0x60] sm:$0xff] %vm1788, %v3064
        %3083 = vst.msk [vmem:[#allocation3 + $0x68] sm:$0xff] %vm1788, %v3067
        %3084 = vst.msk [vmem:[#allocation3 + $0x70] sm:$0xff] %vm1788, %v3072
        %3085 = vst.msk [vmem:[#allocation3 + $0x78] sm:$0xff] %vm1788, %v3075
        %s3086 = sld [smem:[#allocation10 + $0x1]]
        %s3087 = sld [smem:[#allocation10 + $0x3]]
        %3088 = vrot.lane.b32.xlu0 %v2569, 127
        %v3089 = vpop.permute.xlu0 %3088
        %3090 = vrot.lane.b32.xlu0 %v2574, 127
        %v3091 = vpop.permute.xlu0 %3090
        %3092 = vrot.lane.b32.xlu0 %v2579, 127
        %v3093 = vpop.permute.xlu0 %3092
        %3094 = vrot.lane.b32.xlu0 %v2584, 127
        %v3095 = vpop.permute.xlu0 %3094
        %3096 = vrot.lane.b32.xlu0 %v2589, 127
        %v3097 = vpop.permute.xlu0 %3096
        %3098 = vrot.lane.b32.xlu0 %v2594, 127
        %v3099 = vpop.permute.xlu0 %3098
        %3100 = vrot.lane.b32.xlu0 %v2599, 127
        %v3101 = vpop.permute.xlu0 %3100
        %3102 = vrot.lane.b32.xlu0 %v2604, 127
        %v3103 = vpop.permute.xlu0 %3102
        %v3104 = vsel %vm1283, %v3089, 0
        %v3106 = vsel %vm1283, %v3091, 0
        %v3108 = vsel %vm1283, %v3093, 0
        %v3110 = vsel %vm1283, %v3095, 0
        %v3112 = vsel %vm1283, %v3097, 0
        %v3114 = vsel %vm1283, %v3099, 0
        %v3116 = vsel %vm1283, %v3101, 0
        %v3118 = vsel %vm1283, %v3103, 0
        %3120 = vmatprep.subr.mxu0 0.0
        %3121 = vmatpush1.xpose.msra.mxu0 %v3104
        %3122 = vmatprep.subr.mxu0 0.0
        %3123 = vmatpush1.xpose.msra.mxu0 %v3106
        %3124 = vmatprep.subr.mxu0 0.0
        %3125 = vmatpush1.xpose.msra.mxu0 %v3108
        %3126 = vmatprep.subr.mxu0 0.0
        %3127 = vmatpush1.xpose.msra.mxu0 %v3110
        %3128 = vmatprep.subr.mxu0 0.0
        %3129 = vmatpush1.xpose.msra.mxu0 %v3112
        %3130 = vmatprep.subr.mxu0 0.0
        %3131 = vmatpush1.xpose.msra.mxu0 %v3114
        %3132 = vmatprep.subr.mxu0 0.0
        %3133 = vmatpush1.xpose.msra.mxu0 %v3116
        %3134 = vmatprep.subr.mxu0 0.0
        %3135 = vmatpush1.xpose.msra.mxu0 %v3118
        %3136 = vmatprep.subr.mxu0 0.0
        %3137 = vmatpush1.xpose.msra.mxu0 0.0
        %3138 = vmatprep.subr.mxu0 0.0
        %3139 = vmatpush1.xpose.msra.mxu0 0.0
        %3140 = vmatprep.subr.mxu0 0.0
        %3141 = vmatpush1.xpose.msra.mxu0 0.0
        %3142 = vmatprep.subr.mxu0 0.0
        %3143 = vmatpush1.xpose.msra.mxu0 0.0
        %3144 = vmatprep.subr.mxu0 0.0
        %3145 = vmatpush1.xpose.msra.mxu0 0.0
        %3146 = vmatprep.subr.mxu0 0.0
        %3147 = vmatpush1.xpose.msra.mxu0 0.0
        %3148 = vmatprep.subr.mxu0 0.0
        %3149 = vmatpush1.xpose.msra.mxu0 0.0
        %3150 = vmatprep.subr.mxu0 0.0
        %3151 = vmatpush1.xpose.msra.mxu0 0.0
        %3152 = vmatprep.subr.mxu0 0.0
        %3153 = vmatpush1.xpose.msra.mxu0 0.0
        %3154 = vmatprep.subr.mxu0 0.0
        %3155 = vmatpush1.xpose.msra.mxu0 0.0
        %3156 = vmatprep.subr.mxu0 0.0
        %3157 = vmatpush1.xpose.msra.mxu0 0.0
        %3158 = vmatprep.subr.mxu0 0.0
        %3159 = vmatpush1.xpose.msra.mxu0 0.0
        %3160 = vmatprep.subr.mxu0 0.0
        %3161 = vmatpush1.xpose.msra.mxu0 0.0
        %3162 = vmatprep.subr.mxu0 0.0
        %3163 = vmatpush1.xpose.msra.mxu0 0.0
        %3164 = vmatprep.subr.mxu0 0.0
        %3165 = vmatpush1.xpose.msra.mxu0 0.0
        %3166 = vmatprep.subr.mxu0 0.0
        %3167 = vmatpush1.xpose.msra.mxu0 0.0
        %3168 = vmatprep.subr.mxu0 0.0
        %3169 = vmatpush1.xpose.msra.mxu0 0.0
        %3170 = vmatprep.subr.mxu0 0.0
        %3171 = vmatpush1.xpose.msra.mxu0 0.0
        %3172 = vmatprep.subr.mxu0 0.0
        %3173 = vmatpush1.xpose.msra.mxu0 0.0
        %3174 = vmatprep.subr.mxu0 0.0
        %3175 = vmatpush1.xpose.msra.mxu0 0.0
        %3176 = vmatprep.subr.mxu0 0.0
        %3177 = vmatpush1.xpose.msra.mxu0 0.0
        %3178 = vmatprep.subr.mxu0 0.0
        %3179 = vmatpush1.xpose.msra.mxu0 0.0
        %3180 = vmatprep.subr.mxu0 0.0
        %3181 = vmatpush1.xpose.msra.mxu0 0.0
        %3182 = vmatprep.subr.mxu0 0.0
        %3183 = vmatpush1.xpose.msra.mxu0 0.0
        %3184 = vmatprep.mubr.f32.mxu0 0.0
        %3185 = vmatmul.mubr.f32.gmra.mrb[0].mxu0 %v1285
        %v3186 = vpop.f32.mrb[0].mxu0
        %v3187 = vadd.f32 0.0, %v3186
        %v3188 = vpop.f32.mrb[0].mxu0
        %3189 = vmatprep.mubr.f32.mxu0 0.0
        %3190 = vmatmul.mubr.f32.gmra.mrb[0].mxu0 %v1285
        %v3191 = vpop.f32.mrb[0].mxu0
        %v3192 = vadd.f32 0.0, %v3191
        %v3193 = vpop.f32.mrb[0].mxu0
        %3194 = vmatprep.mubr.f32.mxu0 0.0
        %3195 = vmatmul.mubr.f32.gmra.mrb[0].mxu0 %v1285
        %v3196 = vpop.f32.mrb[0].mxu0
        %v3197 = vadd.f32 0.0, %v3196
        %v3198 = vpop.f32.mrb[0].mxu0
        %3199 = vmatprep.mubr.f32.mxu0 0.0
        %3200 = vmatmul.mubr.f32.gmra.mrb[0].mxu0 %v1285
        %v3201 = vpop.f32.mrb[0].mxu0
        %v3202 = vadd.f32 0.0, %v3201
        %v3203 = vpop.f32.mrb[0].mxu0
        %3204 = vmatprep.mubr.f32.mxu0 0.0
        %3205 = vmatmul.mubr.f32.gmra.mrb[0].mxu0 %v1285
        %v3206 = vpop.f32.mrb[0].mxu0
        %v3207 = vadd.f32 0.0, %v3206
        %v3208 = vpop.f32.mrb[0].mxu0
        %3209 = vmatprep.mubr.f32.mxu0 0.0
        %3210 = vmatmul.mubr.f32.gmra.mrb[0].mxu0 %v1285
        %v3211 = vpop.f32.mrb[0].mxu0
        %v3212 = vadd.f32 0.0, %v3211
        %v3213 = vpop.f32.mrb[0].mxu0
        %3214 = vmatprep.mubr.f32.mxu0 0.0
        %3215 = vmatmul.mubr.f32.gmra.mrb[0].mxu0 %v1285
        %v3216 = vpop.f32.mrb[0].mxu0
        %v3217 = vadd.f32 0.0, %v3216
        %v3218 = vpop.f32.mrb[0].mxu0
        %3219 = vmatprep.mubr.f32.mxu0 0.0
        %3220 = vmatmul.mubr.f32.gmra.mrb[0].mxu0 %v1285
        %v3221 = vpop.f32.mrb[0].mxu0
        %v3222 = vadd.f32 0.0, %v3221
        %v3223 = vpop.f32.mrb[0].mxu0
        %3224 = vdwg.mxu0
        %3225 = vset.pattern.permute.xlu0 1
        %3226 = vperm.xlu0 %3225, %v2569
        %v3227 = vpop.permute.xlu0 %3226
        %3229 = vset.pattern.permute.xlu0 1
        %3230 = vperm.xlu0 %3229, %v2574
        %v3231 = vpop.permute.xlu0 %3230
        %3233 = vset.pattern.permute.xlu0 1
        %3234 = vperm.xlu0 %3233, %v2579
        %v3235 = vpop.permute.xlu0 %3234
        %3237 = vset.pattern.permute.xlu0 1
        %3238 = vperm.xlu0 %3237, %v2584
        %v3239 = vpop.permute.xlu0 %3238
        %3241 = vset.pattern.permute.xlu0 1
        %3242 = vperm.xlu0 %3241, %v2589
        %v3243 = vpop.permute.xlu0 %3242
        %3245 = vset.pattern.permute.xlu0 1
        %3246 = vperm.xlu0 %3245, %v2594
        %v3247 = vpop.permute.xlu0 %3246
        %3249 = vset.pattern.permute.xlu0 1
        %3250 = vperm.xlu0 %3249, %v2599
        %v3251 = vpop.permute.xlu0 %3250
        %3253 = vset.pattern.permute.xlu0 1
        %3254 = vperm.xlu0 %3253, %v2604
        %v3255 = vpop.permute.xlu0 %3254
        %v3257 = vsub.f32 %v3227, %v3187
        %v3258 = vsub.f32 %v3231, %v3192
        %v3259 = vsub.f32 %v3235, %v3197
        %v3260 = vsub.f32 %v3239, %v3202
        %v3261 = vsub.f32 %v3243, %v3207
        %v3262 = vsub.f32 %v3247, %v3212
        %v3263 = vsub.f32 %v3251, %v3217
        %v3264 = vsub.f32 %v3255, %v3222
        %v3265 = vstv %s3086
        %v3266 = vmul.f32 %v3265, %v3257
        %v3267 = vmul.f32 %v3265, %v3258
        %v3268 = vmul.f32 %v3265, %v3259
        %v3269 = vmul.f32 %v3265, %v3260
        %v3270 = vmul.f32 %v3265, %v3261
        %v3271 = vmul.f32 %v3265, %v3262
        %v3272 = vmul.f32 %v3265, %v3263
        %v3273 = vmul.f32 %v3265, %v3264
        %v3274 = vmin.f32 %v3266, 0.0
        %v3275 = vmin.f32 %v3267, 0.0
        %v3276 = vmin.f32 %v3268, 0.0
        %v3277 = vmin.f32 %v3269, 0.0
        %v3278 = vmin.f32 %v3270, 0.0
        %v3279 = vmin.f32 %v3271, 0.0
        %v3280 = vmin.f32 %v3272, 0.0
        %v3281 = vmin.f32 %v3273, 0.0
        %v3282 = vmul.f32 %v3274, 1.442695
        %v3283 = vpow.pop %v3282
        %v3284 = vmul.f32 %v3275, 1.442695
        %v3285 = vpow.pop %v3284
        %v3286 = vmul.f32 %v3276, 1.442695
        %v3287 = vpow.pop %v3286
        %v3288 = vmul.f32 %v3277, 1.442695
        %v3289 = vpow.pop %v3288
        %v3290 = vmul.f32 %v3278, 1.442695
        %v3291 = vpow.pop %v3290
        %v3292 = vmul.f32 %v3279, 1.442695
        %v3293 = vpow.pop %v3292
        %v3294 = vmul.f32 %v3280, 1.442695
        %v3295 = vpow.pop %v3294
        %v3296 = vmul.f32 %v3281, 1.442695
        %v3297 = vpow.pop %v3296
        %v3298 = vmul.f32 %v2462, %v3283
        %v3299 = vmul.f32 %v2463, %v3285
        %v3300 = vmul.f32 %v2464, %v3287
        %v3301 = vmul.f32 %v2465, %v3289
        %v3302 = vmul.f32 %v2466, %v3291
        %v3303 = vmul.f32 %v2467, %v3293
        %v3304 = vmul.f32 %v2468, %v3295
        %v3305 = vmul.f32 %v2469, %v3297
        %v3306 = vpack.c.bf16 %v3299, %v3298
        %v3307 = vpack.c.bf16 %v3301, %v3300
        %v3308 = vpack.c.bf16 %v3303, %v3302
        %v3309 = vpack.c.bf16 %v3305, %v3304
        %3310 = vset.pattern.permute.xlu0 81
        %3311 = vperm.xlu0 %3310, %v990
        %v3312 = vpop.permute.xlu0 %3311
        %3314 = vset.pattern.permute.xlu0 81
        %3315 = vperm.xlu0 %3314, %v991
        %v3316 = vpop.permute.xlu0 %3315
        %3318 = vset.pattern.permute.xlu0 81
        %3319 = vperm.xlu0 %3318, %v992
        %v3320 = vpop.permute.xlu0 %3319
        %3322 = vset.pattern.permute.xlu0 81
        %3323 = vperm.xlu0 %3322, %v993
        %v3324 = vpop.permute.xlu0 %3323
        %3326 = vset.pattern.permute.xlu0 81
        %3327 = vperm.xlu0 %3326, %v994
        %v3328 = vpop.permute.xlu0 %3327
        %3330 = vset.pattern.permute.xlu0 81
        %3331 = vperm.xlu0 %3330, %v995
        %v3332 = vpop.permute.xlu0 %3331
        %3334 = vset.pattern.permute.xlu0 81
        %3335 = vperm.xlu0 %3334, %v996
        %v3336 = vpop.permute.xlu0 %3335
        %3338 = vset.pattern.permute.xlu0 81
        %3339 = vperm.xlu0 %3338, %v997
        %v3340 = vpop.permute.xlu0 %3339
        %v3342 = vmul.f32 %v822, %v3312
        %v3343 = vmul.f32 %v823, %v3316
        %v3344 = vmul.f32 %v824, %v3320
        %v3345 = vmul.f32 %v825, %v3324
        %v3346 = vmul.f32 %v826, %v3328
        %v3347 = vmul.f32 %v827, %v3332
        %v3348 = vmul.f32 %v828, %v3336
        %v3349 = vmul.f32 %v829, %v3340
        %v3350 = vpack.c.bf16 %v3343, %v3342
        %v3351 = vpack.c.bf16 %v3345, %v3344
        %v3352 = vpack.c.bf16 %v3347, %v3346
        %v3353 = vpack.c.bf16 %v3349, %v3348
        %v3354 = vstv %s3087
        %v3355 = vmul.f32 %v3354, %v822
        %v3356 = vmul.f32 %v3354, %v823
        %v3357 = vmul.f32 %v3354, %v824
        %v3358 = vmul.f32 %v3354, %v825
        %v3359 = vmul.f32 %v3354, %v826
        %v3360 = vmul.f32 %v3354, %v827
        %v3361 = vmul.f32 %v3354, %v828
        %v3362 = vmul.f32 %v3354, %v829
        %3367 = vrot.lane.b32.xlu0 %v3350, 80
        %v3368 = vpop.permute.xlu0 %3367
        %3369 = vrot.lane.b32.xlu0 %v3351, 80
        %v3370 = vpop.permute.xlu0 %3369
        %3371 = vrot.lane.b32.xlu0 %v3352, 80
        %v3372 = vpop.permute.xlu0 %3371
        %3373 = vrot.lane.b32.xlu0 %v3353, 80
        %v3374 = vpop.permute.xlu0 %3373
        %3387 = vrot.lane.b32.xlu0 %v3355, 80
        %v3388 = vpop.permute.xlu0 %3387
        %3389 = vrot.lane.b32.xlu0 %v3356, 80
        %v3390 = vpop.permute.xlu0 %3389
        %3391 = vrot.lane.b32.xlu0 %v3357, 80
        %v3392 = vpop.permute.xlu0 %3391
        %3393 = vrot.lane.b32.xlu0 %v3358, 80
        %v3394 = vpop.permute.xlu0 %3393
        %3395 = vrot.lane.b32.xlu0 %v3359, 80
        %v3396 = vpop.permute.xlu0 %3395
        %3397 = vrot.lane.b32.xlu0 %v3360, 80
        %v3398 = vpop.permute.xlu0 %3397
        %3399 = vrot.lane.b32.xlu0 %v3361, 80
        %v3400 = vpop.permute.xlu0 %3399
        %3401 = vrot.lane.b32.xlu0 %v3362, 80
        %v3402 = vpop.permute.xlu0 %3401
        %v3412 = vsel %vm405, %v3306, 0
        %v3415 = vsel %vm405, %v3307, 0
        %v3418 = vsel %vm405, %v3308, 0
        %v3421 = vsel %vm405, %v3309, 0
        %3423 = vmatprep.subr.bf16.mxu0 0
        %3424 = vmatpush1.bf16.msra.mxu0 %v3368
        %3425 = vmatprep.subr.bf16.mxu0 0
        %3426 = vmatpush1.bf16.msra.mxu0 %v3370
        %3427 = vmatprep.subr.bf16.mxu0 0
        %3428 = vmatpush1.bf16.msra.mxu0 %v3372
        %3429 = vmatprep.subr.bf16.mxu0 0
        %3430 = vmatpush1.bf16.msra.mxu0 %v3374
        %3431 = vmatprep.subr.bf16.mxu0 0
        %3432 = vmatpush1.bf16.msra.mxu0 0
        %3433 = vmatprep.subr.bf16.mxu0 0
        %3434 = vmatpush1.bf16.msra.mxu0 0
        %3435 = vmatprep.subr.bf16.mxu0 0
        %3436 = vmatpush1.bf16.msra.mxu0 0
        %3437 = vmatprep.subr.bf16.mxu0 0
        %3438 = vmatpush1.bf16.msra.mxu0 0
        %3439 = vmatprep.subr.bf16.mxu0 0
        %3440 = vmatpush1.bf16.msra.mxu0 0
        %3441 = vmatprep.subr.bf16.mxu0 0
        %3442 = vmatpush1.bf16.msra.mxu0 0
        %3443 = vmatprep.subr.bf16.mxu0 0
        %3444 = vmatpush1.bf16.msra.mxu0 0
        %3445 = vmatprep.subr.bf16.mxu0 0
        %3446 = vmatpush1.bf16.msra.mxu0 0
        %3447 = vmatprep.subr.bf16.mxu0 0
        %3448 = vmatpush1.bf16.msra.mxu0 0
        %3449 = vmatprep.subr.bf16.mxu0 0
        %3450 = vmatpush1.bf16.msra.mxu0 0
        %3451 = vmatprep.subr.bf16.mxu0 0
        %3452 = vmatpush1.bf16.msra.mxu0 0
        %3453 = vmatprep.subr.bf16.mxu0 0
        %3454 = vmatpush1.bf16.msra.mxu0 0
        %3455 = vmatprep.mubr.bf16.mxu0 0
        %3456 = vmatmul.mubr.bf16.gmra.mrb[0].mxu0 %v3412
        %v3457 = vpop.f32.mrb[0].mxu0
        %v3458 = vadd.f32 %v3388, %v3457
        %v3459 = vpop.f32.mrb[0].mxu0
        %v3460 = vpop.f32.mrb[0].mxu0
        %v3461 = vadd.f32 %v3390, %v3460
        %v3462 = vpop.f32.mrb[0].mxu0
        %3463 = vmatprep.mubr.bf16.mxu0 0
        %3464 = vmatmul.mubr.bf16.gmra.mrb[0].mxu0 %v3415
        %v3465 = vpop.f32.mrb[0].mxu0
        %v3466 = vadd.f32 %v3392, %v3465
        %v3467 = vpop.f32.mrb[0].mxu0
        %v3468 = vpop.f32.mrb[0].mxu0
        %v3469 = vadd.f32 %v3394, %v3468
        %v3470 = vpop.f32.mrb[0].mxu0
        %3471 = vmatprep.mubr.bf16.mxu0 0
        %3472 = vmatmul.mubr.bf16.gmra.mrb[0].mxu0 %v3418
        %v3473 = vpop.f32.mrb[0].mxu0
        %v3474 = vadd.f32 %v3396, %v3473
        %v3475 = vpop.f32.mrb[0].mxu0
        %v3476 = vpop.f32.mrb[0].mxu0
        %v3477 = vadd.f32 %v3398, %v3476
        %v3478 = vpop.f32.mrb[0].mxu0
        %3479 = vmatprep.mubr.bf16.mxu0 0
        %3480 = vmatmul.mubr.bf16.gmra.mrb[0].mxu0 %v3421
        %v3481 = vpop.f32.mrb[0].mxu0
        %v3482 = vadd.f32 %v3400, %v3481
        %v3483 = vpop.f32.mrb[0].mxu0
        %v3484 = vpop.f32.mrb[0].mxu0
        %v3485 = vadd.f32 %v3402, %v3484
        %v3486 = vpop.f32.mrb[0].mxu0
        %3487 = vdwg.mxu0
        %3496 = vrot.lane.b32.xlu0 %v822, 112
        %v3497 = vpop.permute.xlu0 %3496
        %3498 = vrot.lane.b32.xlu0 %v823, 112
        %v3499 = vpop.permute.xlu0 %3498
        %3500 = vrot.lane.b32.xlu0 %v824, 112
        %v3501 = vpop.permute.xlu0 %3500
        %3502 = vrot.lane.b32.xlu0 %v825, 112
        %v3503 = vpop.permute.xlu0 %3502
        %3504 = vrot.lane.b32.xlu0 %v826, 112
        %v3505 = vpop.permute.xlu0 %3504
        %3506 = vrot.lane.b32.xlu0 %v827, 112
        %v3507 = vpop.permute.xlu0 %3506
        %3508 = vrot.lane.b32.xlu0 %v828, 112
        %v3509 = vpop.permute.xlu0 %3508
        %3510 = vrot.lane.b32.xlu0 %v829, 112
        %v3511 = vpop.permute.xlu0 %3510
        %v3520 = vmul.f32 %v3458, %v3497
        %v3521 = vmul.f32 %v3461, %v3499
        %v3522 = vmul.f32 %v3466, %v3501
        %v3523 = vmul.f32 %v3469, %v3503
        %v3524 = vmul.f32 %v3474, %v3505
        %v3525 = vmul.f32 %v3477, %v3507
        %v3526 = vmul.f32 %v3482, %v3509
        %v3527 = vmul.f32 %v3485, %v3511
        %v3528 = vpack.c.bf16 %v3521, %v3520
        %v3529 = vpack.c.bf16 %v3523, %v3522
        %v3530 = vpack.c.bf16 %v3525, %v3524
        %v3531 = vpack.c.bf16 %v3527, %v3526
        %3532 = vmatprep.subr.bf16.mxu0 0
        %3533 = vmatpush1.bf16.msra.mxu0 %v3528
        %3534 = vmatprep.subr.bf16.mxu0 0
        %3535 = vmatpush1.bf16.msra.mxu0 %v3529
        %3536 = vmatprep.subr.bf16.mxu0 0
        %3537 = vmatpush1.bf16.msra.mxu0 %v3530
        %3538 = vmatprep.subr.bf16.mxu0 0
        %3539 = vmatpush1.bf16.msra.mxu0 %v3531
        %3540 = vmatprep.subr.bf16.mxu0 0
        %3541 = vmatpush1.bf16.msra.mxu0 0
        %3542 = vmatprep.subr.bf16.mxu0 0
        %3543 = vmatpush1.bf16.msra.mxu0 0
        %3544 = vmatprep.subr.bf16.mxu0 0
        %3545 = vmatpush1.bf16.msra.mxu0 0
        %3546 = vmatprep.subr.bf16.mxu0 0
        %3547 = vmatpush1.bf16.msra.mxu0 0
        %3548 = vmatprep.subr.bf16.mxu0 0
        %3549 = vmatpush1.bf16.msra.mxu0 0
        %3550 = vmatprep.subr.bf16.mxu0 0
        %3551 = vmatpush1.bf16.msra.mxu0 0
        %3552 = vmatprep.subr.bf16.mxu0 0
        %3553 = vmatpush1.bf16.msra.mxu0 0
        %3554 = vmatprep.subr.bf16.mxu0 0
        %3555 = vmatpush1.bf16.msra.mxu0 0
        %3556 = vmatprep.subr.bf16.mxu0 0
        %3557 = vmatpush1.bf16.msra.mxu0 0
        %3558 = vmatprep.subr.bf16.mxu0 0
        %3559 = vmatpush1.bf16.msra.mxu0 0
        %3560 = vmatprep.subr.bf16.mxu0 0
        %3561 = vmatpush1.bf16.msra.mxu0 0
        %3562 = vmatprep.subr.bf16.mxu0 0
        %3563 = vmatpush1.bf16.msra.mxu0 0
        %3564 = vmatprep.mubr.bf16.mxu0 0
        %3565 = vmatmul.mubr.bf16.gmra.mrb[0].mxu0 %v1712
        %v3566 = vpop.f32.mrb[0].mxu0
        %v3567 = vadd.f32 0.0, %v3566
        %v3568 = vpop.f32.mrb[0].mxu0
        %v3569 = vpop.f32.mrb[0].mxu0
        %v3570 = vadd.f32 0.0, %v3569
        %v3571 = vpop.f32.mrb[0].mxu0
        %3572 = vmatprep.mubr.bf16.mxu0 0
        %3573 = vmatmul.mubr.bf16.gmra.mrb[0].mxu0 %v1715
        %v3574 = vpop.f32.mrb[0].mxu0
        %v3575 = vadd.f32 0.0, %v3574
        %v3576 = vpop.f32.mrb[0].mxu0
        %v3577 = vpop.f32.mrb[0].mxu0
        %v3578 = vadd.f32 0.0, %v3577
        %v3579 = vpop.f32.mrb[0].mxu0
        %3580 = vmatprep.mubr.bf16.mxu0 0
        %3581 = vmatmul.mubr.bf16.gmra.mrb[0].mxu0 %v1718
        %v3582 = vpop.f32.mrb[0].mxu0
        %v3583 = vadd.f32 0.0, %v3582
        %v3584 = vpop.f32.mrb[0].mxu0
        %v3585 = vpop.f32.mrb[0].mxu0
        %v3586 = vadd.f32 0.0, %v3585
        %v3587 = vpop.f32.mrb[0].mxu0
        %3588 = vmatprep.mubr.bf16.mxu0 0
        %3589 = vmatmul.mubr.bf16.gmra.mrb[0].mxu0 %v1721
        %v3590 = vpop.f32.mrb[0].mxu0
        %v3591 = vadd.f32 0.0, %v3590
        %v3592 = vpop.f32.mrb[0].mxu0
        %v3593 = vpop.f32.mrb[0].mxu0
        %v3594 = vadd.f32 0.0, %v3593
        %v3595 = vpop.f32.mrb[0].mxu0
        %3596 = vdwg.mxu0
        %3605 = vrot.lane.b32.xlu0 %v3567, 16
        %v3606 = vpop.permute.xlu0 %3605
        %3607 = vrot.lane.b32.xlu0 %v3570, 16
        %v3608 = vpop.permute.xlu0 %3607
        %3609 = vrot.lane.b32.xlu0 %v3575, 16
        %v3610 = vpop.permute.xlu0 %3609
        %3611 = vrot.lane.b32.xlu0 %v3578, 16
        %v3612 = vpop.permute.xlu0 %3611
        %3613 = vrot.lane.b32.xlu0 %v3583, 16
        %v3614 = vpop.permute.xlu0 %3613
        %3615 = vrot.lane.b32.xlu0 %v3586, 16
        %v3616 = vpop.permute.xlu0 %3615
        %3617 = vrot.lane.b32.xlu0 %v3591, 16
        %v3618 = vpop.permute.xlu0 %3617
        %3619 = vrot.lane.b32.xlu0 %v3594, 16
        %v3620 = vpop.permute.xlu0 %3619
        %3629 = vst.msk [vmem:[#allocation3 + $0x40] sm:$0xff] %vm2340, %v3606
        %3630 = vst.msk [vmem:[#allocation3 + $0x48] sm:$0xff] %vm2340, %v3608
        %3631 = vst.msk [vmem:[#allocation3 + $0x50] sm:$0xff] %vm2340, %v3610
        %3632 = vst.msk [vmem:[#allocation3 + $0x58] sm:$0xff] %vm2340, %v3612
        %3633 = vst.msk [vmem:[#allocation3 + $0x60] sm:$0xff] %vm2340, %v3614
        %3634 = vst.msk [vmem:[#allocation3 + $0x68] sm:$0xff] %vm2340, %v3616
        %3635 = vst.msk [vmem:[#allocation3 + $0x70] sm:$0xff] %vm2340, %v3618
        %3636 = vst.msk [vmem:[#allocation3 + $0x78] sm:$0xff] %vm2340, %v3620
        %s3637 = scalar_lea.vmem [#allocation8], 64
        %v3638 = vld [vmem:[%s3637] sm:$0xf]
        %v3639 = vld [vmem:[%s3637 + $0x4] sm:$0xf]
        %v3640 = vld [vmem:[%s3637 + $0x8] sm:$0xf]
        %v3641 = vld [vmem:[%s3637 + $0xc] sm:$0xf]
        %v3642 = vld [vmem:[%s3637 + $0x10] sm:$0xf]
        %v3643 = vld [vmem:[%s3637 + $0x14] sm:$0xf]
        %v3644 = vld [vmem:[%s3637 + $0x18] sm:$0xf]
        %v3645 = vld [vmem:[%s3637 + $0x1c] sm:$0xf]
        %s3646 = scalar_lea.vmem [#allocation8], 96
        %v3647 = vld [vmem:[%s3646] sm:$0xf]
        %v3648 = vld [vmem:[%s3646 + $0x4] sm:$0xf]
        %v3649 = vld [vmem:[%s3646 + $0x8] sm:$0xf]
        %v3650 = vld [vmem:[%s3646 + $0xc] sm:$0xf]
        %v3651 = vld [vmem:[%s3646 + $0x10] sm:$0xf]
        %v3652 = vld [vmem:[%s3646 + $0x14] sm:$0xf]
        %v3653 = vld [vmem:[%s3646 + $0x18] sm:$0xf]
        %v3654 = vld [vmem:[%s3646 + $0x1c] sm:$0xf]
        %s3655 = scalar_lea.vmem %s2, 16
        %v3656 = vld [vmem:[%s3655] sm:$0xf]
        %v3657 = vld [vmem:[%s3655 + $0x4] sm:$0xf]
        %v3658 = vld [vmem:[%s3655 + $0x8] sm:$0xf]
        %v3659 = vld [vmem:[%s3655 + $0xc] sm:$0xf]
        %v3668 = vunpack.c.l.b16 %v3638
        %v3669 = vunpack.c.l.b16 %v3639
        %v3670 = vunpack.c.l.b16 %v3640
        %v3671 = vunpack.c.l.b16 %v3641
        %v3672 = vunpack.c.l.b16 %v3642
        %v3673 = vunpack.c.l.b16 %v3643
        %v3674 = vunpack.c.l.b16 %v3644
        %v3675 = vunpack.c.l.b16 %v3645
        %v3676 = vpack.c.b16 %v3669, %v3668
        %v3677 = vpack.c.b16 %v3671, %v3670
        %v3678 = vpack.c.b16 %v3673, %v3672
        %v3679 = vpack.c.b16 %v3675, %v3674
        %v3681 = vsel %vm405, %v3676, 0
        %v3684 = vsel %vm405, %v3677, 0
        %v3687 = vsel %vm405, %v3678, 0
        %v3690 = vsel %vm405, %v3679, 0
        %3692 = vmatprep.subr.bf16.mxu0 0
        %3693 = vmatpush1.bf16.xpose.msra.mxu0 %v419
        %3694 = vmatprep.subr.bf16.mxu0 0
        %3695 = vmatpush1.bf16.xpose.msra.mxu0 %v422
        %3696 = vmatprep.subr.bf16.mxu0 0
        %3697 = vmatpush1.bf16.xpose.msra.mxu0 0
        %3698 = vmatprep.subr.bf16.mxu0 0
        %3699 = vmatpush1.bf16.xpose.msra.mxu0 0
        %3700 = vmatprep.subr.bf16.mxu0 0
        %3701 = vmatpush1.bf16.xpose.msra.mxu0 0
        %3702 = vmatprep.subr.bf16.mxu0 0
        %3703 = vmatpush1.bf16.xpose.msra.mxu0 0
        %3704 = vmatprep.subr.bf16.mxu0 0
        %3705 = vmatpush1.bf16.xpose.msra.mxu0 0
        %3706 = vmatprep.subr.bf16.mxu0 0
        %3707 = vmatpush1.bf16.xpose.msra.mxu0 0
        %3708 = vmatprep.subr.bf16.mxu0 0
        %3709 = vmatpush1.bf16.xpose.msra.mxu0 0
        %3710 = vmatprep.subr.bf16.mxu0 0
        %3711 = vmatpush1.bf16.xpose.msra.mxu0 0
        %3712 = vmatprep.subr.bf16.mxu0 0
        %3713 = vmatpush1.bf16.xpose.msra.mxu0 0
        %3714 = vmatprep.subr.bf16.mxu0 0
        %3715 = vmatpush1.bf16.xpose.msra.mxu0 0
        %3716 = vmatprep.subr.bf16.mxu0 0
        %3717 = vmatpush1.bf16.xpose.msra.mxu0 0
        %3718 = vmatprep.subr.bf16.mxu0 0
        %3719 = vmatpush1.bf16.xpose.msra.mxu0 0
        %3720 = vmatprep.subr.bf16.mxu0 0
        %3721 = vmatpush1.bf16.xpose.msra.mxu0 0
        %3722 = vmatprep.subr.bf16.mxu0 0
        %3723 = vmatpush1.bf16.xpose.msra.mxu0 0
        %3724 = vmatprep.mubr.bf16.mxu0 0
        %3725 = vmatmul.mubr.bf16.gmra.mrb[0].mxu0 %v3681
        %v3726 = vpop.f32.mrb[0].mxu0
        %v3727 = vadd.f32 0.0, %v3726
        %v3728 = vpop.f32.mrb[0].mxu0
        %v3729 = vpop.f32.mrb[0].mxu0
        %v3730 = vadd.f32 0.0, %v3729
        %v3731 = vpop.f32.mrb[0].mxu0
        %3732 = vmatprep.mubr.bf16.mxu0 0
        %3733 = vmatmul.mubr.bf16.gmra.mrb[0].mxu0 %v3684
        %v3734 = vpop.f32.mrb[0].mxu0
        %v3735 = vadd.f32 0.0, %v3734
        %v3736 = vpop.f32.mrb[0].mxu0
        %v3737 = vpop.f32.mrb[0].mxu0
        %v3738 = vadd.f32 0.0, %v3737
        %v3739 = vpop.f32.mrb[0].mxu0
        %3740 = vmatprep.mubr.bf16.mxu0 0
        %3741 = vmatmul.mubr.bf16.gmra.mrb[0].mxu0 %v3687
        %v3742 = vpop.f32.mrb[0].mxu0
        %v3743 = vadd.f32 0.0, %v3742
        %v3744 = vpop.f32.mrb[0].mxu0
        %v3745 = vpop.f32.mrb[0].mxu0
        %v3746 = vadd.f32 0.0, %v3745
        %v3747 = vpop.f32.mrb[0].mxu0
        %3748 = vmatprep.mubr.bf16.mxu0 0
        %3749 = vmatmul.mubr.bf16.gmra.mrb[0].mxu0 %v3690
        %v3750 = vpop.f32.mrb[0].mxu0
        %v3751 = vadd.f32 0.0, %v3750
        %v3752 = vpop.f32.mrb[0].mxu0
        %v3753 = vpop.f32.mrb[0].mxu0
        %v3754 = vadd.f32 0.0, %v3753
        %v3755 = vpop.f32.mrb[0].mxu0
        %3756 = vdwg.mxu0
        %v3757 = vpack.c.bf16 %v3730, %v3727
        %v3758 = vpack.c.bf16 %v3738, %v3735
        %v3759 = vpack.c.bf16 %v3746, %v3743
        %v3760 = vpack.c.bf16 %v3754, %v3751
        %3761 = vst.msk [vmem:[#allocation2] sm:$0xff] %vm493, %v3757
        %3762 = vst.msk [vmem:[#allocation2 + $0x8] sm:$0xff] %vm493, %v3758
        %3763 = vst.msk [vmem:[#allocation2 + $0x10] sm:$0xff] %vm493, %v3759
        %3764 = vst.msk [vmem:[#allocation2 + $0x18] sm:$0xff] %vm493, %v3760
        %3765 = vmatprep.subr.bf16.mxu0 0
        %3766 = vmatpush1.bf16.xpose.msra.mxu0 %v499
        %3767 = vmatprep.subr.bf16.mxu0 0
        %3768 = vmatpush1.bf16.xpose.msra.mxu0 %v502
        %3769 = vmatprep.subr.bf16.mxu0 0
        %3770 = vmatpush1.bf16.xpose.msra.mxu0 0
        %3771 = vmatprep.subr.bf16.mxu0 0
        %3772 = vmatpush1.bf16.xpose.msra.mxu0 0
        %3773 = vmatprep.subr.bf16.mxu0 0
        %3774 = vmatpush1.bf16.xpose.msra.mxu0 0
        %3775 = vmatprep.subr.bf16.mxu0 0
        %3776 = vmatpush1.bf16.xpose.msra.mxu0 0
        %3777 = vmatprep.subr.bf16.mxu0 0
        %3778 = vmatpush1.bf16.xpose.msra.mxu0 0
        %3779 = vmatprep.subr.bf16.mxu0 0
        %3780 = vmatpush1.bf16.xpose.msra.mxu0 0
        %3781 = vmatprep.subr.bf16.mxu0 0
        %3782 = vmatpush1.bf16.xpose.msra.mxu0 0
        %3783 = vmatprep.subr.bf16.mxu0 0
        %3784 = vmatpush1.bf16.xpose.msra.mxu0 0
        %3785 = vmatprep.subr.bf16.mxu0 0
        %3786 = vmatpush1.bf16.xpose.msra.mxu0 0
        %3787 = vmatprep.subr.bf16.mxu0 0
        %3788 = vmatpush1.bf16.xpose.msra.mxu0 0
        %3789 = vmatprep.subr.bf16.mxu0 0
        %3790 = vmatpush1.bf16.xpose.msra.mxu0 0
        %3791 = vmatprep.subr.bf16.mxu0 0
        %3792 = vmatpush1.bf16.xpose.msra.mxu0 0
        %3793 = vmatprep.subr.bf16.mxu0 0
        %3794 = vmatpush1.bf16.xpose.msra.mxu0 0
        %3795 = vmatprep.subr.bf16.mxu0 0
        %3796 = vmatpush1.bf16.xpose.msra.mxu0 0
        %3797 = vmatprep.mubr.bf16.mxu0 0
        %3798 = vmatmul.mubr.bf16.gmra.mrb[0].mxu0 %v3681
        %v3799 = vpop.f32.mrb[0].mxu0
        %v3800 = vadd.f32 0.0, %v3799
        %v3801 = vpop.f32.mrb[0].mxu0
        %v3802 = vpop.f32.mrb[0].mxu0
        %v3803 = vadd.f32 0.0, %v3802
        %v3804 = vpop.f32.mrb[0].mxu0
        %3805 = vmatprep.mubr.bf16.mxu0 0
        %3806 = vmatmul.mubr.bf16.gmra.mrb[0].mxu0 %v3684
        %v3807 = vpop.f32.mrb[0].mxu0
        %v3808 = vadd.f32 0.0, %v3807
        %v3809 = vpop.f32.mrb[0].mxu0
        %v3810 = vpop.f32.mrb[0].mxu0
        %v3811 = vadd.f32 0.0, %v3810
        %v3812 = vpop.f32.mrb[0].mxu0
        %3813 = vmatprep.mubr.bf16.mxu0 0
        %3814 = vmatmul.mubr.bf16.gmra.mrb[0].mxu0 %v3687
        %v3815 = vpop.f32.mrb[0].mxu0
        %v3816 = vadd.f32 0.0, %v3815
        %v3817 = vpop.f32.mrb[0].mxu0
        %v3818 = vpop.f32.mrb[0].mxu0
        %v3819 = vadd.f32 0.0, %v3818
        %v3820 = vpop.f32.mrb[0].mxu0
        %3821 = vmatprep.mubr.bf16.mxu0 0
        %3822 = vmatmul.mubr.bf16.gmra.mrb[0].mxu0 %v3690
        %v3823 = vpop.f32.mrb[0].mxu0
        %v3824 = vadd.f32 0.0, %v3823
        %v3825 = vpop.f32.mrb[0].mxu0
        %v3826 = vpop.f32.mrb[0].mxu0
        %v3827 = vadd.f32 0.0, %v3826
        %v3828 = vpop.f32.mrb[0].mxu0
        %3829 = vdwg.mxu0
        %v3830 = vpack.c.bf16 %v3803, %v3800
        %v3831 = vpack.c.bf16 %v3811, %v3808
        %v3832 = vpack.c.bf16 %v3819, %v3816
        %v3833 = vpack.c.bf16 %v3827, %v3824
        %3834 = vst.msk [vmem:[#allocation2 + $0x20] sm:$0xff] %vm493, %v3830
        %3835 = vst.msk [vmem:[#allocation2 + $0x28] sm:$0xff] %vm493, %v3831
        %3836 = vst.msk [vmem:[#allocation2 + $0x30] sm:$0xff] %vm493, %v3832
        %3837 = vst.msk [vmem:[#allocation2 + $0x38] sm:$0xff] %vm493, %v3833
        %v3838 = vld [vmem:[#allocation2] sm:$0xff]
        %v3839 = vld [vmem:[#allocation2 + $0x8] sm:$0xff]
        %v3840 = vld [vmem:[#allocation2 + $0x10] sm:$0xff]
        %v3841 = vld [vmem:[#allocation2 + $0x18] sm:$0xff]
        %v3842 = vld [vmem:[#allocation2 + $0x20] sm:$0xff]
        %v3843 = vld [vmem:[#allocation2 + $0x28] sm:$0xff]
        %v3844 = vld [vmem:[#allocation2 + $0x30] sm:$0xff]
        %v3845 = vld [vmem:[#allocation2 + $0x38] sm:$0xff]
        %v3850 = vunpack.c.l.b16 %v3656
        %v3851 = vunpack.c.l.b16 %v3657
        %v3852 = vunpack.c.l.b16 %v3658
        %v3853 = vunpack.c.l.b16 %v3659
        %v3854 = vpack.c.b16 %v3851, %v3850
        %v3855 = vpack.c.b16 %v3853, %v3852
        %v3859 = vsel %vm493, %v3838, 0
        %v3862 = vsel %vm493, %v3839, 0
        %v3865 = vsel %vm493, %v3840, 0
        %v3868 = vsel %vm493, %v3841, 0
        %v3871 = vsel %vm493, %v3842, 0
        %v3874 = vsel %vm493, %v3843, 0
        %v3877 = vsel %vm493, %v3844, 0
        %v3880 = vsel %vm493, %v3845, 0
        %3882 = vmatprep.subr.bf16.mxu0 0
        %3883 = vmatpush1.bf16.msra.mxu0 %v3854
        %3884 = vmatprep.subr.bf16.mxu0 0
        %3885 = vmatpush1.bf16.msra.mxu0 %v3855
        %3886 = vmatprep.subr.bf16.mxu0 0
        %3887 = vmatpush1.bf16.msra.mxu0 0
        %3888 = vmatprep.subr.bf16.mxu0 0
        %3889 = vmatpush1.bf16.msra.mxu0 0
        %3890 = vmatprep.subr.bf16.mxu0 0
        %3891 = vmatpush1.bf16.msra.mxu0 0
        %3892 = vmatprep.subr.bf16.mxu0 0
        %3893 = vmatpush1.bf16.msra.mxu0 0
        %3894 = vmatprep.subr.bf16.mxu0 0
        %3895 = vmatpush1.bf16.msra.mxu0 0
        %3896 = vmatprep.subr.bf16.mxu0 0
        %3897 = vmatpush1.bf16.msra.mxu0 0
        %3898 = vmatprep.subr.bf16.mxu0 0
        %3899 = vmatpush1.bf16.msra.mxu0 0
        %3900 = vmatprep.subr.bf16.mxu0 0
        %3901 = vmatpush1.bf16.msra.mxu0 0
        %3902 = vmatprep.subr.bf16.mxu0 0
        %3903 = vmatpush1.bf16.msra.mxu0 0
        %3904 = vmatprep.subr.bf16.mxu0 0
        %3905 = vmatpush1.bf16.msra.mxu0 0
        %3906 = vmatprep.subr.bf16.mxu0 0
        %3907 = vmatpush1.bf16.msra.mxu0 0
        %3908 = vmatprep.subr.bf16.mxu0 0
        %3909 = vmatpush1.bf16.msra.mxu0 0
        %3910 = vmatprep.subr.bf16.mxu0 0
        %3911 = vmatpush1.bf16.msra.mxu0 0
        %3912 = vmatprep.subr.bf16.mxu0 0
        %3913 = vmatpush1.bf16.msra.mxu0 0
        %3914 = vmatprep.mubr.bf16.mxu0 0
        %3915 = vmatmul.mubr.bf16.gmra.mrb[0].mxu0 %v3859
        %v3916 = vpop.f32.mrb[0].mxu0
        %v3917 = vadd.f32 0.0, %v3916
        %v3918 = vpop.f32.mrb[0].mxu0
        %v3919 = vpop.f32.mrb[0].mxu0
        %v3920 = vadd.f32 0.0, %v3919
        %v3921 = vpop.f32.mrb[0].mxu0
        %3922 = vmatprep.mubr.bf16.mxu0 0
        %3923 = vmatmul.mubr.bf16.gmra.mrb[0].mxu0 %v3862
        %v3924 = vpop.f32.mrb[0].mxu0
        %v3925 = vadd.f32 0.0, %v3924
        %v3926 = vpop.f32.mrb[0].mxu0
        %v3927 = vpop.f32.mrb[0].mxu0
        %v3928 = vadd.f32 0.0, %v3927
        %v3929 = vpop.f32.mrb[0].mxu0
        %3930 = vmatprep.mubr.bf16.mxu0 0
        %3931 = vmatmul.mubr.bf16.gmra.mrb[0].mxu0 %v3865
        %v3932 = vpop.f32.mrb[0].mxu0
        %v3933 = vadd.f32 0.0, %v3932
        %v3934 = vpop.f32.mrb[0].mxu0
        %v3935 = vpop.f32.mrb[0].mxu0
        %v3936 = vadd.f32 0.0, %v3935
        %v3937 = vpop.f32.mrb[0].mxu0
        %3938 = vmatprep.mubr.bf16.mxu0 0
        %3939 = vmatmul.mubr.bf16.gmra.mrb[0].mxu0 %v3868
        %v3940 = vpop.f32.mrb[0].mxu0
        %v3941 = vadd.f32 0.0, %v3940
        %v3942 = vpop.f32.mrb[0].mxu0
        %v3943 = vpop.f32.mrb[0].mxu0
        %v3944 = vadd.f32 0.0, %v3943
        %v3945 = vpop.f32.mrb[0].mxu0
        %3946 = vmatprep.mubr.bf16.mxu0 0
        %3947 = vmatmul.mubr.bf16.gmra.mrb[0].mxu0 %v3871
        %v3948 = vpop.f32.mrb[0].mxu0
        %v3949 = vadd.f32 0.0, %v3948
        %v3950 = vpop.f32.mrb[0].mxu0
        %v3951 = vpop.f32.mrb[0].mxu0
        %v3952 = vadd.f32 0.0, %v3951
        %v3953 = vpop.f32.mrb[0].mxu0
        %3954 = vmatprep.mubr.bf16.mxu0 0
        %3955 = vmatmul.mubr.bf16.gmra.mrb[0].mxu0 %v3874
        %v3956 = vpop.f32.mrb[0].mxu0
        %v3957 = vadd.f32 0.0, %v3956
        %v3958 = vpop.f32.mrb[0].mxu0
        %v3959 = vpop.f32.mrb[0].mxu0
        %v3960 = vadd.f32 0.0, %v3959
        %v3961 = vpop.f32.mrb[0].mxu0
        %3962 = vmatprep.mubr.bf16.mxu0 0
        %3963 = vmatmul.mubr.bf16.gmra.mrb[0].mxu0 %v3877
        %v3964 = vpop.f32.mrb[0].mxu0
        %v3965 = vadd.f32 0.0, %v3964
        %v3966 = vpop.f32.mrb[0].mxu0
        %v3967 = vpop.f32.mrb[0].mxu0
        %v3968 = vadd.f32 0.0, %v3967
        %v3969 = vpop.f32.mrb[0].mxu0
        %3970 = vmatprep.mubr.bf16.mxu0 0
        %3971 = vmatmul.mubr.bf16.gmra.mrb[0].mxu0 %v3880
        %v3972 = vpop.f32.mrb[0].mxu0
        %v3973 = vadd.f32 0.0, %v3972
        %v3974 = vpop.f32.mrb[0].mxu0
        %v3975 = vpop.f32.mrb[0].mxu0
        %v3976 = vadd.f32 0.0, %v3975
        %v3977 = vpop.f32.mrb[0].mxu0
        %3978 = vdwg.mxu0
        %v3979 = vsub.f32 0.0, %v3917
        %v3980 = vsub.f32 0.0, %v3920
        %v3981 = vsub.f32 0.0, %v3925
        %v3982 = vsub.f32 0.0, %v3928
        %v3983 = vsub.f32 0.0, %v3933
        %v3984 = vsub.f32 0.0, %v3936
        %v3985 = vsub.f32 0.0, %v3941
        %v3986 = vsub.f32 0.0, %v3944
        %v3987 = vsub.f32 0.0, %v3949
        %v3988 = vsub.f32 0.0, %v3952
        %v3989 = vsub.f32 0.0, %v3957
        %v3990 = vsub.f32 0.0, %v3960
        %v3991 = vsub.f32 0.0, %v3965
        %v3992 = vsub.f32 0.0, %v3968
        %v3993 = vsub.f32 0.0, %v3973
        %v3994 = vsub.f32 0.0, %v3976
        %v3995 = vmul.f32 %v3979, 1.442695
        %v3996 = vpow.pop %v3995
        %v3997 = vmul.f32 %v3980, 1.442695
        %v3998 = vpow.pop %v3997
        %v3999 = vmul.f32 %v3981, 1.442695
        %v4000 = vpow.pop %v3999
        %v4001 = vmul.f32 %v3982, 1.442695
        %v4002 = vpow.pop %v4001
        %v4003 = vmul.f32 %v3983, 1.442695
        %v4004 = vpow.pop %v4003
        %v4005 = vmul.f32 %v3984, 1.442695
        %v4006 = vpow.pop %v4005
        %v4007 = vmul.f32 %v3985, 1.442695
        %v4008 = vpow.pop %v4007
        %v4009 = vmul.f32 %v3986, 1.442695
        %v4010 = vpow.pop %v4009
        %v4011 = vmul.f32 %v3987, 1.442695
        %v4012 = vpow.pop %v4011
        %v4013 = vmul.f32 %v3988, 1.442695
        %v4014 = vpow.pop %v4013
        %v4015 = vmul.f32 %v3989, 1.442695
        %v4016 = vpow.pop %v4015
        %v4017 = vmul.f32 %v3990, 1.442695
        %v4018 = vpow.pop %v4017
        %v4019 = vmul.f32 %v3991, 1.442695
        %v4020 = vpow.pop %v4019
        %v4021 = vmul.f32 %v3992, 1.442695
        %v4022 = vpow.pop %v4021
        %v4023 = vmul.f32 %v3993, 1.442695
        %v4024 = vpow.pop %v4023
        %v4025 = vmul.f32 %v3994, 1.442695
        %v4026 = vpow.pop %v4025
        %v4027 = vadd.f32 %v3996, 1.0
        %v4028 = vadd.f32 %v3998, 1.0
        %v4029 = vadd.f32 %v4000, 1.0
        %v4030 = vadd.f32 %v4002, 1.0
        %v4031 = vadd.f32 %v4004, 1.0
        %v4032 = vadd.f32 %v4006, 1.0
        %v4033 = vadd.f32 %v4008, 1.0
        %v4034 = vadd.f32 %v4010, 1.0
        %v4035 = vadd.f32 %v4012, 1.0
        %v4036 = vadd.f32 %v4014, 1.0
        %v4037 = vadd.f32 %v4016, 1.0
        %v4038 = vadd.f32 %v4018, 1.0
        %v4039 = vadd.f32 %v4020, 1.0
        %v4040 = vadd.f32 %v4022, 1.0
        %v4041 = vadd.f32 %v4024, 1.0
        %v4042 = vadd.f32 %v4026, 1.0
        %v4043 = vrcp.pop %v4027
        %v4044 = vmul.f32 1.0, %v4043
        %v4045 = vrcp.pop %v4028
        %v4046 = vmul.f32 1.0, %v4045
        %v4047 = vrcp.pop %v4029
        %v4048 = vmul.f32 1.0, %v4047
        %v4049 = vrcp.pop %v4030
        %v4050 = vmul.f32 1.0, %v4049
        %v4051 = vrcp.pop %v4031
        %v4052 = vmul.f32 1.0, %v4051
        %v4053 = vrcp.pop %v4032
        %v4054 = vmul.f32 1.0, %v4053
        %v4055 = vrcp.pop %v4033
        %v4056 = vmul.f32 1.0, %v4055
        %v4057 = vrcp.pop %v4034
        %v4058 = vmul.f32 1.0, %v4057
        %v4059 = vrcp.pop %v4035
        %v4060 = vmul.f32 1.0, %v4059
        %v4061 = vrcp.pop %v4036
        %v4062 = vmul.f32 1.0, %v4061
        %v4063 = vrcp.pop %v4037
        %v4064 = vmul.f32 1.0, %v4063
        %v4065 = vrcp.pop %v4038
        %v4066 = vmul.f32 1.0, %v4065
        %v4067 = vrcp.pop %v4039
        %v4068 = vmul.f32 1.0, %v4067
        %v4069 = vrcp.pop %v4040
        %v4070 = vmul.f32 1.0, %v4069
        %v4071 = vrcp.pop %v4041
        %v4072 = vmul.f32 1.0, %v4071
        %v4073 = vrcp.pop %v4042
        %v4074 = vmul.f32 1.0, %v4073
        %v4075 = vmul.f32 %v3917, %v4044
        %v4076 = vmul.f32 %v3920, %v4046
        %v4077 = vmul.f32 %v3925, %v4048
        %v4078 = vmul.f32 %v3928, %v4050
        %v4079 = vmul.f32 %v3933, %v4052
        %v4080 = vmul.f32 %v3936, %v4054
        %v4081 = vmul.f32 %v3941, %v4056
        %v4082 = vmul.f32 %v3944, %v4058
        %v4083 = vmul.f32 %v3949, %v4060
        %v4084 = vmul.f32 %v3952, %v4062
        %v4085 = vmul.f32 %v3957, %v4064
        %v4086 = vmul.f32 %v3960, %v4066
        %v4087 = vmul.f32 %v3965, %v4068
        %v4088 = vmul.f32 %v3968, %v4070
        %v4089 = vmul.f32 %v3973, %v4072
        %v4090 = vmul.f32 %v3976, %v4074
        %v4091 = vlaneseq
        %v4092 = vshrl.u32 %v4091, 7
        %v4093 = vsub.s32 3, %v4092
        %v4094 = vrot.slane %v350, %v4093
        %4096 = vrot.lane.b32.xlu0 %v4094, 80
        %v4097 = vpop.permute.xlu0 %4096
        %v4099 = vadd.f32 %v3917, %v4097
        %v4100 = vadd.f32 %v3920, %v4097
        %v4101 = vadd.f32 %v3925, %v4097
        %v4102 = vadd.f32 %v3928, %v4097
        %v4103 = vadd.f32 %v3933, %v4097
        %v4104 = vadd.f32 %v3936, %v4097
        %v4105 = vadd.f32 %v3941, %v4097
        %v4106 = vadd.f32 %v3944, %v4097
        %v4107 = vadd.f32 %v3949, %v4097
        %v4108 = vadd.f32 %v3952, %v4097
        %v4109 = vadd.f32 %v3957, %v4097
        %v4110 = vadd.f32 %v3960, %v4097
        %v4111 = vadd.f32 %v3965, %v4097
        %v4112 = vadd.f32 %v3968, %v4097
        %v4113 = vadd.f32 %v3973, %v4097
        %v4114 = vadd.f32 %v3976, %v4097
        %v4115 = vmax.f32 %v4099, 0.0
        %v4116 = vmax.f32 %v4100, 0.0
        %v4117 = vmax.f32 %v4101, 0.0
        %v4118 = vmax.f32 %v4102, 0.0
        %v4119 = vmax.f32 %v4103, 0.0
        %v4120 = vmax.f32 %v4104, 0.0
        %v4121 = vmax.f32 %v4105, 0.0
        %v4122 = vmax.f32 %v4106, 0.0
        %v4123 = vmax.f32 %v4107, 0.0
        %v4124 = vmax.f32 %v4108, 0.0
        %v4125 = vmax.f32 %v4109, 0.0
        %v4126 = vmax.f32 %v4110, 0.0
        %v4127 = vmax.f32 %v4111, 0.0
        %v4128 = vmax.f32 %v4112, 0.0
        %v4129 = vmax.f32 %v4113, 0.0
        %v4130 = vmax.f32 %v4114, 0.0
        %v4131 = vand.u32 2147483647, %v4099
        %v4132 = vand.u32 2147483647, %v4100
        %v4133 = vand.u32 2147483647, %v4101
        %v4134 = vand.u32 2147483647, %v4102
        %v4135 = vand.u32 2147483647, %v4103
        %v4136 = vand.u32 2147483647, %v4104
        %v4137 = vand.u32 2147483647, %v4105
        %v4138 = vand.u32 2147483647, %v4106
        %v4139 = vand.u32 2147483647, %v4107
        %v4140 = vand.u32 2147483647, %v4108
        %v4141 = vand.u32 2147483647, %v4109
        %v4142 = vand.u32 2147483647, %v4110
        %v4143 = vand.u32 2147483647, %v4111
        %v4144 = vand.u32 2147483647, %v4112
        %v4145 = vand.u32 2147483647, %v4113
        %v4146 = vand.u32 2147483647, %v4114
        %v4147 = vsub.f32 0.0, %v4131
        %v4148 = vsub.f32 0.0, %v4132
        %v4149 = vsub.f32 0.0, %v4133
        %v4150 = vsub.f32 0.0, %v4134
        %v4151 = vsub.f32 0.0, %v4135
        %v4152 = vsub.f32 0.0, %v4136
        %v4153 = vsub.f32 0.0, %v4137
        %v4154 = vsub.f32 0.0, %v4138
        %v4155 = vsub.f32 0.0, %v4139
        %v4156 = vsub.f32 0.0, %v4140
        %v4157 = vsub.f32 0.0, %v4141
        %v4158 = vsub.f32 0.0, %v4142
        %v4159 = vsub.f32 0.0, %v4143
        %v4160 = vsub.f32 0.0, %v4144
        %v4161 = vsub.f32 0.0, %v4145
        %v4162 = vsub.f32 0.0, %v4146
        %v4163 = vmul.f32 %v4147, 1.442695
        %v4164 = vpow.pop %v4163
        %v4165 = vmul.f32 %v4148, 1.442695
        %v4166 = vpow.pop %v4165
        %v4167 = vmul.f32 %v4149, 1.442695
        %v4168 = vpow.pop %v4167
        %v4169 = vmul.f32 %v4150, 1.442695
        %v4170 = vpow.pop %v4169
        %v4171 = vmul.f32 %v4151, 1.442695
        %v4172 = vpow.pop %v4171
        %v4173 = vmul.f32 %v4152, 1.442695
        %v4174 = vpow.pop %v4173
        %v4175 = vmul.f32 %v4153, 1.442695
        %v4176 = vpow.pop %v4175
        %v4177 = vmul.f32 %v4154, 1.442695
        %v4178 = vpow.pop %v4177
        %v4179 = vmul.f32 %v4155, 1.442695
        %v4180 = vpow.pop %v4179
        %v4181 = vmul.f32 %v4156, 1.442695
        %v4182 = vpow.pop %v4181
        %v4183 = vmul.f32 %v4157, 1.442695
        %v4184 = vpow.pop %v4183
        %v4185 = vmul.f32 %v4158, 1.442695
        %v4186 = vpow.pop %v4185
        %v4187 = vmul.f32 %v4159, 1.442695
        %v4188 = vpow.pop %v4187
        %v4189 = vmul.f32 %v4160, 1.442695
        %v4190 = vpow.pop %v4189
        %v4191 = vmul.f32 %v4161, 1.442695
        %v4192 = vpow.pop %v4191
        %v4193 = vmul.f32 %v4162, 1.442695
        %v4194 = vpow.pop %v4193
        %v4195 = vadd.f32 %v4164, 1.0
        %v4196 = vadd.f32 %v4166, 1.0
        %v4197 = vadd.f32 %v4168, 1.0
        %v4198 = vadd.f32 %v4170, 1.0
        %v4199 = vadd.f32 %v4172, 1.0
        %v4200 = vadd.f32 %v4174, 1.0
        %v4201 = vadd.f32 %v4176, 1.0
        %v4202 = vadd.f32 %v4178, 1.0
        %v4203 = vadd.f32 %v4180, 1.0
        %v4204 = vadd.f32 %v4182, 1.0
        %v4205 = vadd.f32 %v4184, 1.0
        %v4206 = vadd.f32 %v4186, 1.0
        %v4207 = vadd.f32 %v4188, 1.0
        %v4208 = vadd.f32 %v4190, 1.0
        %v4209 = vadd.f32 %v4192, 1.0
        %v4210 = vadd.f32 %v4194, 1.0
        %v4211 = vlog2.pop %v4195
        %v4212 = vmul.f32 %v4211, 0.6931472
        %v4213 = vlog2.pop %v4196
        %v4214 = vmul.f32 %v4213, 0.6931472
        %v4215 = vlog2.pop %v4197
        %v4216 = vmul.f32 %v4215, 0.6931472
        %v4217 = vlog2.pop %v4198
        %v4218 = vmul.f32 %v4217, 0.6931472
        %v4219 = vlog2.pop %v4199
        %v4220 = vmul.f32 %v4219, 0.6931472
        %v4221 = vlog2.pop %v4200
        %v4222 = vmul.f32 %v4221, 0.6931472
        %v4223 = vlog2.pop %v4201
        %v4224 = vmul.f32 %v4223, 0.6931472
        %v4225 = vlog2.pop %v4202
        %v4226 = vmul.f32 %v4225, 0.6931472
        %v4227 = vlog2.pop %v4203
        %v4228 = vmul.f32 %v4227, 0.6931472
        %v4229 = vlog2.pop %v4204
        %v4230 = vmul.f32 %v4229, 0.6931472
        %v4231 = vlog2.pop %v4205
        %v4232 = vmul.f32 %v4231, 0.6931472
        %v4233 = vlog2.pop %v4206
        %v4234 = vmul.f32 %v4233, 0.6931472
        %v4235 = vlog2.pop %v4207
        %v4236 = vmul.f32 %v4235, 0.6931472
        %v4237 = vlog2.pop %v4208
        %v4238 = vmul.f32 %v4237, 0.6931472
        %v4239 = vlog2.pop %v4209
        %v4240 = vmul.f32 %v4239, 0.6931472
        %v4241 = vlog2.pop %v4210
        %v4242 = vmul.f32 %v4241, 0.6931472
        %v4243 = vadd.f32 %v4115, %v4212
        %v4244 = vadd.f32 %v4116, %v4214
        %v4245 = vadd.f32 %v4117, %v4216
        %v4246 = vadd.f32 %v4118, %v4218
        %v4247 = vadd.f32 %v4119, %v4220
        %v4248 = vadd.f32 %v4120, %v4222
        %v4249 = vadd.f32 %v4121, %v4224
        %v4250 = vadd.f32 %v4122, %v4226
        %v4251 = vadd.f32 %v4123, %v4228
        %v4252 = vadd.f32 %v4124, %v4230
        %v4253 = vadd.f32 %v4125, %v4232
        %v4254 = vadd.f32 %v4126, %v4234
        %v4255 = vadd.f32 %v4127, %v4236
        %v4256 = vadd.f32 %v4128, %v4238
        %v4257 = vadd.f32 %v4129, %v4240
        %v4258 = vadd.f32 %v4130, %v4242
        %v4259 = vpack.c.bf16 %v4076, %v4075
        %v4260 = vpack.c.bf16 %v4078, %v4077
        %v4261 = vpack.c.bf16 %v4080, %v4079
        %v4262 = vpack.c.bf16 %v4082, %v4081
        %4267 = vrot.lane.b32.xlu0 %v4259, 56
        %v4268 = vpop.permute.xlu0 %4267
        %4269 = vrot.lane.b32.xlu0 %v4260, 56
        %v4270 = vpop.permute.xlu0 %4269
        %4271 = vrot.lane.b32.xlu0 %v4261, 56
        %v4272 = vpop.permute.xlu0 %4271
        %4273 = vrot.lane.b32.xlu0 %v4262, 56
        %v4274 = vpop.permute.xlu0 %4273
        %4275 = vrot.lane.b32.xlu0 %v4259, 64
        %v4276 = vpop.permute.xlu0 %4275
        %4277 = vrot.lane.b32.xlu0 %v4260, 64
        %v4278 = vpop.permute.xlu0 %4277
        %4279 = vrot.lane.b32.xlu0 %v4261, 64
        %v4280 = vpop.permute.xlu0 %4279
        %4281 = vrot.lane.b32.xlu0 %v4262, 64
        %v4282 = vpop.permute.xlu0 %4281
        %v4284 = vsel %vm1022, %v4268, 0
        %v4287 = vsel %vm1022, %v4270, 0
        %v4290 = vsel %vm1022, %v4272, 0
        %v4293 = vsel %vm1022, %v4274, 0
        %v4296 = vsel %vm1022, %v4276, 0
        %v4299 = vsel %vm1022, %v4278, 0
        %v4302 = vsel %vm1022, %v4280, 0
        %v4305 = vsel %vm1022, %v4282, 0
        %4307 = vmatprep.subr.bf16.mxu0 0
        %4308 = vmatpush1.bf16.xpose.msra.mxu0 %v4296
        %4309 = vmatprep.subr.bf16.mxu0 0
        %4310 = vmatpush1.bf16.xpose.msra.mxu0 %v4299
        %4311 = vmatprep.subr.bf16.mxu0 0
        %4312 = vmatpush1.bf16.xpose.msra.mxu0 %v4302
        %4313 = vmatprep.subr.bf16.mxu0 0
        %4314 = vmatpush1.bf16.xpose.msra.mxu0 %v4305
        %4315 = vmatprep.subr.bf16.mxu0 0
        %4316 = vmatpush1.bf16.xpose.msra.mxu0 0
        %4317 = vmatprep.subr.bf16.mxu0 0
        %4318 = vmatpush1.bf16.xpose.msra.mxu0 0
        %4319 = vmatprep.subr.bf16.mxu0 0
        %4320 = vmatpush1.bf16.xpose.msra.mxu0 0
        %4321 = vmatprep.subr.bf16.mxu0 0
        %4322 = vmatpush1.bf16.xpose.msra.mxu0 0
        %4323 = vmatprep.subr.bf16.mxu0 0
        %4324 = vmatpush1.bf16.xpose.msra.mxu0 0
        %4325 = vmatprep.subr.bf16.mxu0 0
        %4326 = vmatpush1.bf16.xpose.msra.mxu0 0
        %4327 = vmatprep.subr.bf16.mxu0 0
        %4328 = vmatpush1.bf16.xpose.msra.mxu0 0
        %4329 = vmatprep.subr.bf16.mxu0 0
        %4330 = vmatpush1.bf16.xpose.msra.mxu0 0
        %4331 = vmatprep.subr.bf16.mxu0 0
        %4332 = vmatpush1.bf16.xpose.msra.mxu0 0
        %4333 = vmatprep.subr.bf16.mxu0 0
        %4334 = vmatpush1.bf16.xpose.msra.mxu0 0
        %4335 = vmatprep.subr.bf16.mxu0 0
        %4336 = vmatpush1.bf16.xpose.msra.mxu0 0
        %4337 = vmatprep.subr.bf16.mxu0 0
        %4338 = vmatpush1.bf16.xpose.msra.mxu0 0
        %4339 = vmatprep.mubr.bf16.mxu0 0
        %4340 = vmatmul.mubr.bf16.gmra.mrb[0].mxu0 %v4284
        %v4341 = vpop.f32.mrb[0].mxu0
        %v4342 = vadd.f32 0.0, %v4341
        %v4343 = vpop.f32.mrb[0].mxu0
        %v4344 = vpop.f32.mrb[0].mxu0
        %v4345 = vadd.f32 0.0, %v4344
        %v4346 = vpop.f32.mrb[0].mxu0
        %4347 = vmatprep.mubr.bf16.mxu0 0
        %4348 = vmatmul.mubr.bf16.gmra.mrb[0].mxu0 %v4287
        %v4349 = vpop.f32.mrb[0].mxu0
        %v4350 = vadd.f32 0.0, %v4349
        %v4351 = vpop.f32.mrb[0].mxu0
        %v4352 = vpop.f32.mrb[0].mxu0
        %v4353 = vadd.f32 0.0, %v4352
        %v4354 = vpop.f32.mrb[0].mxu0
        %4355 = vmatprep.mubr.bf16.mxu0 0
        %4356 = vmatmul.mubr.bf16.gmra.mrb[0].mxu0 %v4290
        %v4357 = vpop.f32.mrb[0].mxu0
        %v4358 = vadd.f32 0.0, %v4357
        %v4359 = vpop.f32.mrb[0].mxu0
        %v4360 = vpop.f32.mrb[0].mxu0
        %v4361 = vadd.f32 0.0, %v4360
        %v4362 = vpop.f32.mrb[0].mxu0
        %4363 = vmatprep.mubr.bf16.mxu0 0
        %4364 = vmatmul.mubr.bf16.gmra.mrb[0].mxu0 %v4293
        %v4365 = vpop.f32.mrb[0].mxu0
        %v4366 = vadd.f32 0.0, %v4365
        %v4367 = vpop.f32.mrb[0].mxu0
        %v4368 = vpop.f32.mrb[0].mxu0
        %v4369 = vadd.f32 0.0, %v4368
        %v4370 = vpop.f32.mrb[0].mxu0
        %4371 = vdwg.mxu0
        %v4372 = vmul.f32 %v4342, %v330
        %v4373 = vmul.f32 %v4345, %v331
        %v4374 = vmul.f32 %v4350, %v332
        %v4375 = vmul.f32 %v4353, %v333
        %v4376 = vmul.f32 %v4358, %v334
        %v4377 = vmul.f32 %v4361, %v335
        %v4378 = vmul.f32 %v4366, %v336
        %v4379 = vmul.f32 %v4369, %v337
        %4388 = vrot.lane.b32.xlu0 %v4243, 48
        %v4389 = vpop.permute.xlu0 %4388
        %4390 = vrot.lane.b32.xlu0 %v4244, 48
        %v4391 = vpop.permute.xlu0 %4390
        %4392 = vrot.lane.b32.xlu0 %v4245, 48
        %v4393 = vpop.permute.xlu0 %4392
        %4394 = vrot.lane.b32.xlu0 %v4246, 48
        %v4395 = vpop.permute.xlu0 %4394
        %4396 = vrot.lane.b32.xlu0 %v4247, 48
        %v4397 = vpop.permute.xlu0 %4396
        %4398 = vrot.lane.b32.xlu0 %v4248, 48
        %v4399 = vpop.permute.xlu0 %4398
        %4400 = vrot.lane.b32.xlu0 %v4249, 48
        %v4401 = vpop.permute.xlu0 %4400
        %4402 = vrot.lane.b32.xlu0 %v4250, 48
        %v4403 = vpop.permute.xlu0 %4402
        %4412 = vmatprep.subr.mxu0 0.0
        %4413 = vmatpush1.msra.mxu0 %v4389
        %4414 = vmatprep.subr.mxu0 0.0
        %4415 = vmatpush1.msra.mxu0 %v4391
        %4416 = vmatprep.subr.mxu0 0.0
        %4417 = vmatpush1.msra.mxu0 %v4393
        %4418 = vmatprep.subr.mxu0 0.0
        %4419 = vmatpush1.msra.mxu0 %v4395
        %4420 = vmatprep.subr.mxu0 0.0
        %4421 = vmatpush1.msra.mxu0 %v4397
        %4422 = vmatprep.subr.mxu0 0.0
        %4423 = vmatpush1.msra.mxu0 %v4399
        %4424 = vmatprep.subr.mxu0 0.0
        %4425 = vmatpush1.msra.mxu0 %v4401
        %4426 = vmatprep.subr.mxu0 0.0
        %4427 = vmatpush1.msra.mxu0 %v4403
        %4428 = vmatprep.subr.mxu0 0.0
        %4429 = vmatpush1.msra.mxu0 0.0
        %4430 = vmatprep.subr.mxu0 0.0
        %4431 = vmatpush1.msra.mxu0 0.0
        %4432 = vmatprep.subr.mxu0 0.0
        %4433 = vmatpush1.msra.mxu0 0.0
        %4434 = vmatprep.subr.mxu0 0.0
        %4435 = vmatpush1.msra.mxu0 0.0
        %4436 = vmatprep.subr.mxu0 0.0
        %4437 = vmatpush1.msra.mxu0 0.0
        %4438 = vmatprep.subr.mxu0 0.0
        %4439 = vmatpush1.msra.mxu0 0.0
        %4440 = vmatprep.subr.mxu0 0.0
        %4441 = vmatpush1.msra.mxu0 0.0
        %4442 = vmatprep.subr.mxu0 0.0
        %4443 = vmatpush1.msra.mxu0 0.0
        %4444 = vmatprep.subr.mxu0 0.0
        %4445 = vmatpush1.msra.mxu0 0.0
        %4446 = vmatprep.subr.mxu0 0.0
        %4447 = vmatpush1.msra.mxu0 0.0
        %4448 = vmatprep.subr.mxu0 0.0
        %4449 = vmatpush1.msra.mxu0 0.0
        %4450 = vmatprep.subr.mxu0 0.0
        %4451 = vmatpush1.msra.mxu0 0.0
        %4452 = vmatprep.subr.mxu0 0.0
        %4453 = vmatpush1.msra.mxu0 0.0
        %4454 = vmatprep.subr.mxu0 0.0
        %4455 = vmatpush1.msra.mxu0 0.0
        %4456 = vmatprep.subr.mxu0 0.0
        %4457 = vmatpush1.msra.mxu0 0.0
        %4458 = vmatprep.subr.mxu0 0.0
        %4459 = vmatpush1.msra.mxu0 0.0
        %4460 = vmatprep.subr.mxu0 0.0
        %4461 = vmatpush1.msra.mxu0 0.0
        %4462 = vmatprep.subr.mxu0 0.0
        %4463 = vmatpush1.msra.mxu0 0.0
        %4464 = vmatprep.subr.mxu0 0.0
        %4465 = vmatpush1.msra.mxu0 0.0
        %4466 = vmatprep.subr.mxu0 0.0
        %4467 = vmatpush1.msra.mxu0 0.0
        %4468 = vmatprep.subr.mxu0 0.0
        %4469 = vmatpush1.msra.mxu0 0.0
        %4470 = vmatprep.subr.mxu0 0.0
        %4471 = vmatpush1.msra.mxu0 0.0
        %4472 = vmatprep.subr.mxu0 0.0
        %4473 = vmatpush1.msra.mxu0 0.0
        %4474 = vmatprep.subr.mxu0 0.0
        %4475 = vmatpush1.msra.mxu0 0.0
        %4476 = vmatprep.mubr.f32.mxu0 0.0
        %4477 = vmatmul.mubr.f32.gmra.mrb[0].mxu0 %v1153
        %v4478 = vpop.f32.mrb[0].mxu0
        %v4479 = vadd.f32 0.0, %v4478
        %v4480 = vpop.f32.mrb[0].mxu0
        %4481 = vmatprep.mubr.f32.mxu0 0.0
        %4482 = vmatmul.mubr.f32.gmra.mrb[0].mxu0 %v1156
        %v4483 = vpop.f32.mrb[0].mxu0
        %v4484 = vadd.f32 0.0, %v4483
        %v4485 = vpop.f32.mrb[0].mxu0
        %4486 = vmatprep.mubr.f32.mxu0 0.0
        %4487 = vmatmul.mubr.f32.gmra.mrb[0].mxu0 %v1159
        %v4488 = vpop.f32.mrb[0].mxu0
        %v4489 = vadd.f32 0.0, %v4488
        %v4490 = vpop.f32.mrb[0].mxu0
        %4491 = vmatprep.mubr.f32.mxu0 0.0
        %4492 = vmatmul.mubr.f32.gmra.mrb[0].mxu0 %v1162
        %v4493 = vpop.f32.mrb[0].mxu0
        %v4494 = vadd.f32 0.0, %v4493
        %v4495 = vpop.f32.mrb[0].mxu0
        %4496 = vmatprep.mubr.f32.mxu0 0.0
        %4497 = vmatmul.mubr.f32.gmra.mrb[0].mxu0 %v1165
        %v4498 = vpop.f32.mrb[0].mxu0
        %v4499 = vadd.f32 0.0, %v4498
        %v4500 = vpop.f32.mrb[0].mxu0
        %4501 = vmatprep.mubr.f32.mxu0 0.0
        %4502 = vmatmul.mubr.f32.gmra.mrb[0].mxu0 %v1168
        %v4503 = vpop.f32.mrb[0].mxu0
        %v4504 = vadd.f32 0.0, %v4503
        %v4505 = vpop.f32.mrb[0].mxu0
        %4506 = vmatprep.mubr.f32.mxu0 0.0
        %4507 = vmatmul.mubr.f32.gmra.mrb[0].mxu0 %v1171
        %v4508 = vpop.f32.mrb[0].mxu0
        %v4509 = vadd.f32 0.0, %v4508
        %v4510 = vpop.f32.mrb[0].mxu0
        %4511 = vmatprep.mubr.f32.mxu0 0.0
        %4512 = vmatmul.mubr.f32.gmra.mrb[0].mxu0 %v1174
        %v4513 = vpop.f32.mrb[0].mxu0
        %v4514 = vadd.f32 0.0, %v4513
        %v4515 = vpop.f32.mrb[0].mxu0
        %4516 = vdwg.mxu0
        %s4517 = sld [smem:[#allocation10 + $0x4]]
        %s4518 = sld [smem:[#allocation10 + $0x6]]
        %v4520 = vsel %vm1283, %v4479, 0
        %v4523 = vsel %vm1283, %v4484, 0
        %v4526 = vsel %vm1283, %v4489, 0
        %v4529 = vsel %vm1283, %v4494, 0
        %v4532 = vsel %vm1283, %v4499, 0
        %v4535 = vsel %vm1283, %v4504, 0
        %v4538 = vsel %vm1283, %v4509, 0
        %v4541 = vsel %vm1283, %v4514, 0
        %4543 = vmatprep.subr.mxu0 0.0
        %4544 = vmatpush1.xpose.msra.mxu0 %v4520
        %4545 = vmatprep.subr.mxu0 0.0
        %4546 = vmatpush1.xpose.msra.mxu0 %v4523
        %4547 = vmatprep.subr.mxu0 0.0
        %4548 = vmatpush1.xpose.msra.mxu0 %v4526
        %4549 = vmatprep.subr.mxu0 0.0
        %4550 = vmatpush1.xpose.msra.mxu0 %v4529
        %4551 = vmatprep.subr.mxu0 0.0
        %4552 = vmatpush1.xpose.msra.mxu0 %v4532
        %4553 = vmatprep.subr.mxu0 0.0
        %4554 = vmatpush1.xpose.msra.mxu0 %v4535
        %4555 = vmatprep.subr.mxu0 0.0
        %4556 = vmatpush1.xpose.msra.mxu0 %v4538
        %4557 = vmatprep.subr.mxu0 0.0
        %4558 = vmatpush1.xpose.msra.mxu0 %v4541
        %4559 = vmatprep.subr.mxu0 0.0
        %4560 = vmatpush1.xpose.msra.mxu0 0.0
        %4561 = vmatprep.subr.mxu0 0.0
        %4562 = vmatpush1.xpose.msra.mxu0 0.0
        %4563 = vmatprep.subr.mxu0 0.0
        %4564 = vmatpush1.xpose.msra.mxu0 0.0
        %4565 = vmatprep.subr.mxu0 0.0
        %4566 = vmatpush1.xpose.msra.mxu0 0.0
        %4567 = vmatprep.subr.mxu0 0.0
        %4568 = vmatpush1.xpose.msra.mxu0 0.0
        %4569 = vmatprep.subr.mxu0 0.0
        %4570 = vmatpush1.xpose.msra.mxu0 0.0
        %4571 = vmatprep.subr.mxu0 0.0
        %4572 = vmatpush1.xpose.msra.mxu0 0.0
        %4573 = vmatprep.subr.mxu0 0.0
        %4574 = vmatpush1.xpose.msra.mxu0 0.0
        %4575 = vmatprep.subr.mxu0 0.0
        %4576 = vmatpush1.xpose.msra.mxu0 0.0
        %4577 = vmatprep.subr.mxu0 0.0
        %4578 = vmatpush1.xpose.msra.mxu0 0.0
        %4579 = vmatprep.subr.mxu0 0.0
        %4580 = vmatpush1.xpose.msra.mxu0 0.0
        %4581 = vmatprep.subr.mxu0 0.0
        %4582 = vmatpush1.xpose.msra.mxu0 0.0
        %4583 = vmatprep.subr.mxu0 0.0
        %4584 = vmatpush1.xpose.msra.mxu0 0.0
        %4585 = vmatprep.subr.mxu0 0.0
        %4586 = vmatpush1.xpose.msra.mxu0 0.0
        %4587 = vmatprep.subr.mxu0 0.0
        %4588 = vmatpush1.xpose.msra.mxu0 0.0
        %4589 = vmatprep.subr.mxu0 0.0
        %4590 = vmatpush1.xpose.msra.mxu0 0.0
        %4591 = vmatprep.subr.mxu0 0.0
        %4592 = vmatpush1.xpose.msra.mxu0 0.0
        %4593 = vmatprep.subr.mxu0 0.0
        %4594 = vmatpush1.xpose.msra.mxu0 0.0
        %4595 = vmatprep.subr.mxu0 0.0
        %4596 = vmatpush1.xpose.msra.mxu0 0.0
        %4597 = vmatprep.subr.mxu0 0.0
        %4598 = vmatpush1.xpose.msra.mxu0 0.0
        %4599 = vmatprep.subr.mxu0 0.0
        %4600 = vmatpush1.xpose.msra.mxu0 0.0
        %4601 = vmatprep.subr.mxu0 0.0
        %4602 = vmatpush1.xpose.msra.mxu0 0.0
        %4603 = vmatprep.subr.mxu0 0.0
        %4604 = vmatpush1.xpose.msra.mxu0 0.0
        %4605 = vmatprep.subr.mxu0 0.0
        %4606 = vmatpush1.xpose.msra.mxu0 0.0
        %4607 = vmatprep.mubr.f32.mxu0 0.0
        %4608 = vmatmul.mubr.f32.gmra.mrb[0].mxu0 %v1285
        %v4609 = vpop.f32.mrb[0].mxu0
        %v4610 = vadd.f32 0.0, %v4609
        %v4611 = vpop.f32.mrb[0].mxu0
        %4612 = vmatprep.mubr.f32.mxu0 0.0
        %4613 = vmatmul.mubr.f32.gmra.mrb[0].mxu0 %v1285
        %v4614 = vpop.f32.mrb[0].mxu0
        %v4615 = vadd.f32 0.0, %v4614
        %v4616 = vpop.f32.mrb[0].mxu0
        %4617 = vmatprep.mubr.f32.mxu0 0.0
        %4618 = vmatmul.mubr.f32.gmra.mrb[0].mxu0 %v1285
        %v4619 = vpop.f32.mrb[0].mxu0
        %v4620 = vadd.f32 0.0, %v4619
        %v4621 = vpop.f32.mrb[0].mxu0
        %4622 = vmatprep.mubr.f32.mxu0 0.0
        %4623 = vmatmul.mubr.f32.gmra.mrb[0].mxu0 %v1285
        %v4624 = vpop.f32.mrb[0].mxu0
        %v4625 = vadd.f32 0.0, %v4624
        %v4626 = vpop.f32.mrb[0].mxu0
        %4627 = vmatprep.mubr.f32.mxu0 0.0
        %4628 = vmatmul.mubr.f32.gmra.mrb[0].mxu0 %v1285
        %v4629 = vpop.f32.mrb[0].mxu0
        %v4630 = vadd.f32 0.0, %v4629
        %v4631 = vpop.f32.mrb[0].mxu0
        %4632 = vmatprep.mubr.f32.mxu0 0.0
        %4633 = vmatmul.mubr.f32.gmra.mrb[0].mxu0 %v1285
        %v4634 = vpop.f32.mrb[0].mxu0
        %v4635 = vadd.f32 0.0, %v4634
        %v4636 = vpop.f32.mrb[0].mxu0
        %4637 = vmatprep.mubr.f32.mxu0 0.0
        %4638 = vmatmul.mubr.f32.gmra.mrb[0].mxu0 %v1285
        %v4639 = vpop.f32.mrb[0].mxu0
        %v4640 = vadd.f32 0.0, %v4639
        %v4641 = vpop.f32.mrb[0].mxu0
        %4642 = vmatprep.mubr.f32.mxu0 0.0
        %4643 = vmatmul.mubr.f32.gmra.mrb[0].mxu0 %v1285
        %v4644 = vpop.f32.mrb[0].mxu0
        %v4645 = vadd.f32 0.0, %v4644
        %v4646 = vpop.f32.mrb[0].mxu0
        %4647 = vdwg.mxu0
        %4648 = vset.pattern.permute.xlu0 0
        %4649 = vperm.xlu0 %4648, %v4479
        %v4650 = vpop.permute.xlu0 %4649
        %4652 = vset.pattern.permute.xlu0 0
        %4653 = vperm.xlu0 %4652, %v4484
        %v4654 = vpop.permute.xlu0 %4653
        %4656 = vset.pattern.permute.xlu0 0
        %4657 = vperm.xlu0 %4656, %v4489
        %v4658 = vpop.permute.xlu0 %4657
        %4660 = vset.pattern.permute.xlu0 0
        %4661 = vperm.xlu0 %4660, %v4494
        %v4662 = vpop.permute.xlu0 %4661
        %4664 = vset.pattern.permute.xlu0 0
        %4665 = vperm.xlu0 %4664, %v4499
        %v4666 = vpop.permute.xlu0 %4665
        %4668 = vset.pattern.permute.xlu0 0
        %4669 = vperm.xlu0 %4668, %v4504
        %v4670 = vpop.permute.xlu0 %4669
        %4672 = vset.pattern.permute.xlu0 0
        %4673 = vperm.xlu0 %4672, %v4509
        %v4674 = vpop.permute.xlu0 %4673
        %4676 = vset.pattern.permute.xlu0 0
        %4677 = vperm.xlu0 %4676, %v4514
        %v4678 = vpop.permute.xlu0 %4677
        %v4680 = vsub.f32 %v4650, %v4610
        %v4681 = vsub.f32 %v4654, %v4615
        %v4682 = vsub.f32 %v4658, %v4620
        %v4683 = vsub.f32 %v4662, %v4625
        %v4684 = vsub.f32 %v4666, %v4630
        %v4685 = vsub.f32 %v4670, %v4635
        %v4686 = vsub.f32 %v4674, %v4640
        %v4687 = vsub.f32 %v4678, %v4645
        %v4688 = vstv %s4517
        %v4689 = vmul.f32 %v4688, %v4680
        %v4690 = vmul.f32 %v4688, %v4681
        %v4691 = vmul.f32 %v4688, %v4682
        %v4692 = vmul.f32 %v4688, %v4683
        %v4693 = vmul.f32 %v4688, %v4684
        %v4694 = vmul.f32 %v4688, %v4685
        %v4695 = vmul.f32 %v4688, %v4686
        %v4696 = vmul.f32 %v4688, %v4687
        %v4697 = vmin.f32 %v4689, 0.0
        %v4698 = vmin.f32 %v4690, 0.0
        %v4699 = vmin.f32 %v4691, 0.0
        %v4700 = vmin.f32 %v4692, 0.0
        %v4701 = vmin.f32 %v4693, 0.0
        %v4702 = vmin.f32 %v4694, 0.0
        %v4703 = vmin.f32 %v4695, 0.0
        %v4704 = vmin.f32 %v4696, 0.0
        %v4705 = vmul.f32 %v4697, 1.442695
        %v4706 = vpow.pop %v4705
        %v4707 = vmul.f32 %v4698, 1.442695
        %v4708 = vpow.pop %v4707
        %v4709 = vmul.f32 %v4699, 1.442695
        %v4710 = vpow.pop %v4709
        %v4711 = vmul.f32 %v4700, 1.442695
        %v4712 = vpow.pop %v4711
        %v4713 = vmul.f32 %v4701, 1.442695
        %v4714 = vpow.pop %v4713
        %v4715 = vmul.f32 %v4702, 1.442695
        %v4716 = vpow.pop %v4715
        %v4717 = vmul.f32 %v4703, 1.442695
        %v4718 = vpow.pop %v4717
        %v4719 = vmul.f32 %v4704, 1.442695
        %v4720 = vpow.pop %v4719
        %v4721 = vmul.f32 %v4372, %v4706
        %v4722 = vmul.f32 %v4373, %v4708
        %v4723 = vmul.f32 %v4374, %v4710
        %v4724 = vmul.f32 %v4375, %v4712
        %v4725 = vmul.f32 %v4376, %v4714
        %v4726 = vmul.f32 %v4377, %v4716
        %v4727 = vmul.f32 %v4378, %v4718
        %v4728 = vmul.f32 %v4379, %v4720
        %v4729 = vpack.c.bf16 %v4722, %v4721
        %v4730 = vpack.c.bf16 %v4724, %v4723
        %v4731 = vpack.c.bf16 %v4726, %v4725
        %v4732 = vpack.c.bf16 %v4728, %v4727
        %4733 = vset.pattern.permute.xlu0 80
        %4734 = vperm.xlu0 %4733, %v4243
        %v4735 = vpop.permute.xlu0 %4734
        %4737 = vset.pattern.permute.xlu0 80
        %4738 = vperm.xlu0 %4737, %v4244
        %v4739 = vpop.permute.xlu0 %4738
        %4741 = vset.pattern.permute.xlu0 80
        %4742 = vperm.xlu0 %4741, %v4245
        %v4743 = vpop.permute.xlu0 %4742
        %4745 = vset.pattern.permute.xlu0 80
        %4746 = vperm.xlu0 %4745, %v4246
        %v4747 = vpop.permute.xlu0 %4746
        %4749 = vset.pattern.permute.xlu0 80
        %4750 = vperm.xlu0 %4749, %v4247
        %v4751 = vpop.permute.xlu0 %4750
        %4753 = vset.pattern.permute.xlu0 80
        %4754 = vperm.xlu0 %4753, %v4248
        %v4755 = vpop.permute.xlu0 %4754
        %4757 = vset.pattern.permute.xlu0 80
        %4758 = vperm.xlu0 %4757, %v4249
        %v4759 = vpop.permute.xlu0 %4758
        %4761 = vset.pattern.permute.xlu0 80
        %4762 = vperm.xlu0 %4761, %v4250
        %v4763 = vpop.permute.xlu0 %4762
        %v4765 = vmul.f32 %v4075, %v4735
        %v4766 = vmul.f32 %v4076, %v4739
        %v4767 = vmul.f32 %v4077, %v4743
        %v4768 = vmul.f32 %v4078, %v4747
        %v4769 = vmul.f32 %v4079, %v4751
        %v4770 = vmul.f32 %v4080, %v4755
        %v4771 = vmul.f32 %v4081, %v4759
        %v4772 = vmul.f32 %v4082, %v4763
        %v4773 = vpack.c.bf16 %v4766, %v4765
        %v4774 = vpack.c.bf16 %v4768, %v4767
        %v4775 = vpack.c.bf16 %v4770, %v4769
        %v4776 = vpack.c.bf16 %v4772, %v4771
        %v4777 = vstv %s4518
        %v4778 = vmul.f32 %v4777, %v4075
        %v4779 = vmul.f32 %v4777, %v4076
        %v4780 = vmul.f32 %v4777, %v4077
        %v4781 = vmul.f32 %v4777, %v4078
        %v4782 = vmul.f32 %v4777, %v4079
        %v4783 = vmul.f32 %v4777, %v4080
        %v4784 = vmul.f32 %v4777, %v4081
        %v4785 = vmul.f32 %v4777, %v4082
        %4790 = vrot.lane.b32.xlu0 %v4773, 96
        %v4791 = vpop.permute.xlu0 %4790
        %4792 = vrot.lane.b32.xlu0 %v4774, 96
        %v4793 = vpop.permute.xlu0 %4792
        %4794 = vrot.lane.b32.xlu0 %v4775, 96
        %v4795 = vpop.permute.xlu0 %4794
        %4796 = vrot.lane.b32.xlu0 %v4776, 96
        %v4797 = vpop.permute.xlu0 %4796
        %4810 = vrot.lane.b32.xlu0 %v4778, 96
        %v4811 = vpop.permute.xlu0 %4810
        %4812 = vrot.lane.b32.xlu0 %v4779, 96
        %v4813 = vpop.permute.xlu0 %4812
        %4814 = vrot.lane.b32.xlu0 %v4780, 96
        %v4815 = vpop.permute.xlu0 %4814
        %4816 = vrot.lane.b32.xlu0 %v4781, 96
        %v4817 = vpop.permute.xlu0 %4816
        %4818 = vrot.lane.b32.xlu0 %v4782, 96
        %v4819 = vpop.permute.xlu0 %4818
        %4820 = vrot.lane.b32.xlu0 %v4783, 96
        %v4821 = vpop.permute.xlu0 %4820
        %4822 = vrot.lane.b32.xlu0 %v4784, 96
        %v4823 = vpop.permute.xlu0 %4822
        %4824 = vrot.lane.b32.xlu0 %v4785, 96
        %v4825 = vpop.permute.xlu0 %4824
        %v4835 = vsel %vm405, %v4729, 0
        %v4838 = vsel %vm405, %v4730, 0
        %v4841 = vsel %vm405, %v4731, 0
        %v4844 = vsel %vm405, %v4732, 0
        %4846 = vmatprep.subr.bf16.mxu0 0
        %4847 = vmatpush1.bf16.msra.mxu0 %v4791
        %4848 = vmatprep.subr.bf16.mxu0 0
        %4849 = vmatpush1.bf16.msra.mxu0 %v4793
        %4850 = vmatprep.subr.bf16.mxu0 0
        %4851 = vmatpush1.bf16.msra.mxu0 %v4795
        %4852 = vmatprep.subr.bf16.mxu0 0
        %4853 = vmatpush1.bf16.msra.mxu0 %v4797
        %4854 = vmatprep.subr.bf16.mxu0 0
        %4855 = vmatpush1.bf16.msra.mxu0 0
        %4856 = vmatprep.subr.bf16.mxu0 0
        %4857 = vmatpush1.bf16.msra.mxu0 0
        %4858 = vmatprep.subr.bf16.mxu0 0
        %4859 = vmatpush1.bf16.msra.mxu0 0
        %4860 = vmatprep.subr.bf16.mxu0 0
        %4861 = vmatpush1.bf16.msra.mxu0 0
        %4862 = vmatprep.subr.bf16.mxu0 0
        %4863 = vmatpush1.bf16.msra.mxu0 0
        %4864 = vmatprep.subr.bf16.mxu0 0
        %4865 = vmatpush1.bf16.msra.mxu0 0
        %4866 = vmatprep.subr.bf16.mxu0 0
        %4867 = vmatpush1.bf16.msra.mxu0 0
        %4868 = vmatprep.subr.bf16.mxu0 0
        %4869 = vmatpush1.bf16.msra.mxu0 0
        %4870 = vmatprep.subr.bf16.mxu0 0
        %4871 = vmatpush1.bf16.msra.mxu0 0
        %4872 = vmatprep.subr.bf16.mxu0 0
        %4873 = vmatpush1.bf16.msra.mxu0 0
        %4874 = vmatprep.subr.bf16.mxu0 0
        %4875 = vmatpush1.bf16.msra.mxu0 0
        %4876 = vmatprep.subr.bf16.mxu0 0
        %4877 = vmatpush1.bf16.msra.mxu0 0
        %4878 = vmatprep.mubr.bf16.mxu0 0
        %4879 = vmatmul.mubr.bf16.gmra.mrb[0].mxu0 %v4835
        %v4880 = vpop.f32.mrb[0].mxu0
        %v4881 = vadd.f32 %v4811, %v4880
        %v4882 = vpop.f32.mrb[0].mxu0
        %v4883 = vpop.f32.mrb[0].mxu0
        %v4884 = vadd.f32 %v4813, %v4883
        %v4885 = vpop.f32.mrb[0].mxu0
        %4886 = vmatprep.mubr.bf16.mxu0 0
        %4887 = vmatmul.mubr.bf16.gmra.mrb[0].mxu0 %v4838
        %v4888 = vpop.f32.mrb[0].mxu0
        %v4889 = vadd.f32 %v4815, %v4888
        %v4890 = vpop.f32.mrb[0].mxu0
        %v4891 = vpop.f32.mrb[0].mxu0
        %v4892 = vadd.f32 %v4817, %v4891
        %v4893 = vpop.f32.mrb[0].mxu0
        %4894 = vmatprep.mubr.bf16.mxu0 0
        %4895 = vmatmul.mubr.bf16.gmra.mrb[0].mxu0 %v4841
        %v4896 = vpop.f32.mrb[0].mxu0
        %v4897 = vadd.f32 %v4819, %v4896
        %v4898 = vpop.f32.mrb[0].mxu0
        %v4899 = vpop.f32.mrb[0].mxu0
        %v4900 = vadd.f32 %v4821, %v4899
        %v4901 = vpop.f32.mrb[0].mxu0
        %4902 = vmatprep.mubr.bf16.mxu0 0
        %4903 = vmatmul.mubr.bf16.gmra.mrb[0].mxu0 %v4844
        %v4904 = vpop.f32.mrb[0].mxu0
        %v4905 = vadd.f32 %v4823, %v4904
        %v4906 = vpop.f32.mrb[0].mxu0
        %v4907 = vpop.f32.mrb[0].mxu0
        %v4908 = vadd.f32 %v4825, %v4907
        %v4909 = vpop.f32.mrb[0].mxu0
        %4910 = vdwg.mxu0
        %v4911 = vmul.f32 %v4881, %v4075
        %v4912 = vmul.f32 %v4884, %v4076
        %v4913 = vmul.f32 %v4889, %v4077
        %v4914 = vmul.f32 %v4892, %v4078
        %v4915 = vmul.f32 %v4897, %v4079
        %v4916 = vmul.f32 %v4900, %v4080
        %v4917 = vmul.f32 %v4905, %v4081
        %v4918 = vmul.f32 %v4908, %v4082
        %v4919 = vpack.c.bf16 %v4912, %v4911
        %v4920 = vpack.c.bf16 %v4914, %v4913
        %v4921 = vpack.c.bf16 %v4916, %v4915
        %v4922 = vpack.c.bf16 %v4918, %v4917
        %v4931 = vunpack.c.l.b16 %v3647
        %v4932 = vunpack.c.l.b16 %v3648
        %v4933 = vunpack.c.l.b16 %v3649
        %v4934 = vunpack.c.l.b16 %v3650
        %v4935 = vunpack.c.l.b16 %v3651
        %v4936 = vunpack.c.l.b16 %v3652
        %v4937 = vunpack.c.l.b16 %v3653
        %v4938 = vunpack.c.l.b16 %v3654
        %v4939 = vpack.c.b16 %v4932, %v4931
        %v4940 = vpack.c.b16 %v4934, %v4933
        %v4941 = vpack.c.b16 %v4936, %v4935
        %v4942 = vpack.c.b16 %v4938, %v4937
        %v4944 = vsel %vm405, %v4939, 0
        %v4947 = vsel %vm405, %v4940, 0
        %v4950 = vsel %vm405, %v4941, 0
        %v4953 = vsel %vm405, %v4942, 0
        %4955 = vmatprep.subr.bf16.mxu0 0
        %4956 = vmatpush1.bf16.msra.mxu0 %v4919
        %4957 = vmatprep.subr.bf16.mxu0 0
        %4958 = vmatpush1.bf16.msra.mxu0 %v4920
        %4959 = vmatprep.subr.bf16.mxu0 0
        %4960 = vmatpush1.bf16.msra.mxu0 %v4921
        %4961 = vmatprep.subr.bf16.mxu0 0
        %4962 = vmatpush1.bf16.msra.mxu0 %v4922
        %4963 = vmatprep.subr.bf16.mxu0 0
        %4964 = vmatpush1.bf16.msra.mxu0 0
        %4965 = vmatprep.subr.bf16.mxu0 0
        %4966 = vmatpush1.bf16.msra.mxu0 0
        %4967 = vmatprep.subr.bf16.mxu0 0
        %4968 = vmatpush1.bf16.msra.mxu0 0
        %4969 = vmatprep.subr.bf16.mxu0 0
        %4970 = vmatpush1.bf16.msra.mxu0 0
        %4971 = vmatprep.subr.bf16.mxu0 0
        %4972 = vmatpush1.bf16.msra.mxu0 0
        %4973 = vmatprep.subr.bf16.mxu0 0
        %4974 = vmatpush1.bf16.msra.mxu0 0
        %4975 = vmatprep.subr.bf16.mxu0 0
        %4976 = vmatpush1.bf16.msra.mxu0 0
        %4977 = vmatprep.subr.bf16.mxu0 0
        %4978 = vmatpush1.bf16.msra.mxu0 0
        %4979 = vmatprep.subr.bf16.mxu0 0
        %4980 = vmatpush1.bf16.msra.mxu0 0
        %4981 = vmatprep.subr.bf16.mxu0 0
        %4982 = vmatpush1.bf16.msra.mxu0 0
        %4983 = vmatprep.subr.bf16.mxu0 0
        %4984 = vmatpush1.bf16.msra.mxu0 0
        %4985 = vmatprep.subr.bf16.mxu0 0
        %4986 = vmatpush1.bf16.msra.mxu0 0
        %4987 = vmatprep.mubr.bf16.mxu0 0
        %4988 = vmatmul.mubr.bf16.gmra.mrb[0].mxu0 %v4944
        %v4989 = vpop.f32.mrb[0].mxu0
        %v4990 = vadd.f32 0.0, %v4989
        %v4991 = vpop.f32.mrb[0].mxu0
        %v4992 = vpop.f32.mrb[0].mxu0
        %v4993 = vadd.f32 0.0, %v4992
        %v4994 = vpop.f32.mrb[0].mxu0
        %4995 = vmatprep.mubr.bf16.mxu0 0
        %4996 = vmatmul.mubr.bf16.gmra.mrb[0].mxu0 %v4947
        %v4997 = vpop.f32.mrb[0].mxu0
        %v4998 = vadd.f32 0.0, %v4997
        %v4999 = vpop.f32.mrb[0].mxu0
        %v5000 = vpop.f32.mrb[0].mxu0
        %v5001 = vadd.f32 0.0, %v5000
        %v5002 = vpop.f32.mrb[0].mxu0
        %5003 = vmatprep.mubr.bf16.mxu0 0
        %5004 = vmatmul.mubr.bf16.gmra.mrb[0].mxu0 %v4950
        %v5005 = vpop.f32.mrb[0].mxu0
        %v5006 = vadd.f32 0.0, %v5005
        %v5007 = vpop.f32.mrb[0].mxu0
        %v5008 = vpop.f32.mrb[0].mxu0
        %v5009 = vadd.f32 0.0, %v5008
        %v5010 = vpop.f32.mrb[0].mxu0
        %5011 = vmatprep.mubr.bf16.mxu0 0
        %5012 = vmatmul.mubr.bf16.gmra.mrb[0].mxu0 %v4953
        %v5013 = vpop.f32.mrb[0].mxu0
        %v5014 = vadd.f32 0.0, %v5013
        %v5015 = vpop.f32.mrb[0].mxu0
        %v5016 = vpop.f32.mrb[0].mxu0
        %v5017 = vadd.f32 0.0, %v5016
        %v5018 = vpop.f32.mrb[0].mxu0
        %5019 = vdwg.mxu0
        %5028 = vrot.lane.b32.xlu0 %v4990, 32
        %v5029 = vpop.permute.xlu0 %5028
        %5030 = vrot.lane.b32.xlu0 %v4993, 32
        %v5031 = vpop.permute.xlu0 %5030
        %5032 = vrot.lane.b32.xlu0 %v4998, 32
        %v5033 = vpop.permute.xlu0 %5032
        %5034 = vrot.lane.b32.xlu0 %v5001, 32
        %v5035 = vpop.permute.xlu0 %5034
        %5036 = vrot.lane.b32.xlu0 %v5006, 32
        %v5037 = vpop.permute.xlu0 %5036
        %5038 = vrot.lane.b32.xlu0 %v5009, 32
        %v5039 = vpop.permute.xlu0 %5038
        %5040 = vrot.lane.b32.xlu0 %v5014, 32
        %v5041 = vpop.permute.xlu0 %5040
        %5042 = vrot.lane.b32.xlu0 %v5017, 32
        %v5043 = vpop.permute.xlu0 %5042
        %vm5052 = vcmask 392448
        %5053 = vst.msk [vmem:[#allocation3] sm:$0xff] %vm5052, %v5029
        %5054 = vst.msk [vmem:[#allocation3 + $0x8] sm:$0xff] %vm5052, %v5031
        %5055 = vst.msk [vmem:[#allocation3 + $0x10] sm:$0xff] %vm5052, %v5033
        %5056 = vst.msk [vmem:[#allocation3 + $0x18] sm:$0xff] %vm5052, %v5035
        %5057 = vst.msk [vmem:[#allocation3 + $0x20] sm:$0xff] %vm5052, %v5037
        %5058 = vst.msk [vmem:[#allocation3 + $0x28] sm:$0xff] %vm5052, %v5039
        %5059 = vst.msk [vmem:[#allocation3 + $0x30] sm:$0xff] %vm5052, %v5041
        %5060 = vst.msk [vmem:[#allocation3 + $0x38] sm:$0xff] %vm5052, %v5043
        %s5061 = sld [smem:[#allocation10 + $0x5]]
        %s5062 = sld [smem:[#allocation10 + $0x7]]
        %5063 = vrot.lane.b32.xlu0 %v4479, 127
        %v5064 = vpop.permute.xlu0 %5063
        %5065 = vrot.lane.b32.xlu0 %v4484, 127
        %v5066 = vpop.permute.xlu0 %5065
        %5067 = vrot.lane.b32.xlu0 %v4489, 127
        %v5068 = vpop.permute.xlu0 %5067
        %5069 = vrot.lane.b32.xlu0 %v4494, 127
        %v5070 = vpop.permute.xlu0 %5069
        %5071 = vrot.lane.b32.xlu0 %v4499, 127
        %v5072 = vpop.permute.xlu0 %5071
        %5073 = vrot.lane.b32.xlu0 %v4504, 127
        %v5074 = vpop.permute.xlu0 %5073
        %5075 = vrot.lane.b32.xlu0 %v4509, 127
        %v5076 = vpop.permute.xlu0 %5075
        %5077 = vrot.lane.b32.xlu0 %v4514, 127
        %v5078 = vpop.permute.xlu0 %5077
        %v5079 = vsel %vm1283, %v5064, 0
        %v5081 = vsel %vm1283, %v5066, 0
        %v5083 = vsel %vm1283, %v5068, 0
        %v5085 = vsel %vm1283, %v5070, 0
        %v5087 = vsel %vm1283, %v5072, 0
        %v5089 = vsel %vm1283, %v5074, 0
        %v5091 = vsel %vm1283, %v5076, 0
        %v5093 = vsel %vm1283, %v5078, 0
        %5095 = vmatprep.subr.mxu0 0.0
        %5096 = vmatpush1.xpose.msra.mxu0 %v5079
        %5097 = vmatprep.subr.mxu0 0.0
        %5098 = vmatpush1.xpose.msra.mxu0 %v5081
        %5099 = vmatprep.subr.mxu0 0.0
        %5100 = vmatpush1.xpose.msra.mxu0 %v5083
        %5101 = vmatprep.subr.mxu0 0.0
        %5102 = vmatpush1.xpose.msra.mxu0 %v5085
        %5103 = vmatprep.subr.mxu0 0.0
        %5104 = vmatpush1.xpose.msra.mxu0 %v5087
        %5105 = vmatprep.subr.mxu0 0.0
        %5106 = vmatpush1.xpose.msra.mxu0 %v5089
        %5107 = vmatprep.subr.mxu0 0.0
        %5108 = vmatpush1.xpose.msra.mxu0 %v5091
        %5109 = vmatprep.subr.mxu0 0.0
        %5110 = vmatpush1.xpose.msra.mxu0 %v5093
        %5111 = vmatprep.subr.mxu0 0.0
        %5112 = vmatpush1.xpose.msra.mxu0 0.0
        %5113 = vmatprep.subr.mxu0 0.0
        %5114 = vmatpush1.xpose.msra.mxu0 0.0
        %5115 = vmatprep.subr.mxu0 0.0
        %5116 = vmatpush1.xpose.msra.mxu0 0.0
        %5117 = vmatprep.subr.mxu0 0.0
        %5118 = vmatpush1.xpose.msra.mxu0 0.0
        %5119 = vmatprep.subr.mxu0 0.0
        %5120 = vmatpush1.xpose.msra.mxu0 0.0
        %5121 = vmatprep.subr.mxu0 0.0
        %5122 = vmatpush1.xpose.msra.mxu0 0.0
        %5123 = vmatprep.subr.mxu0 0.0
        %5124 = vmatpush1.xpose.msra.mxu0 0.0
        %5125 = vmatprep.subr.mxu0 0.0
        %5126 = vmatpush1.xpose.msra.mxu0 0.0
        %5127 = vmatprep.subr.mxu0 0.0
        %5128 = vmatpush1.xpose.msra.mxu0 0.0
        %5129 = vmatprep.subr.mxu0 0.0
        %5130 = vmatpush1.xpose.msra.mxu0 0.0
        %5131 = vmatprep.subr.mxu0 0.0
        %5132 = vmatpush1.xpose.msra.mxu0 0.0
        %5133 = vmatprep.subr.mxu0 0.0
        %5134 = vmatpush1.xpose.msra.mxu0 0.0
        %5135 = vmatprep.subr.mxu0 0.0
        %5136 = vmatpush1.xpose.msra.mxu0 0.0
        %5137 = vmatprep.subr.mxu0 0.0
        %5138 = vmatpush1.xpose.msra.mxu0 0.0
        %5139 = vmatprep.subr.mxu0 0.0
        %5140 = vmatpush1.xpose.msra.mxu0 0.0
        %5141 = vmatprep.subr.mxu0 0.0
        %5142 = vmatpush1.xpose.msra.mxu0 0.0
        %5143 = vmatprep.subr.mxu0 0.0
        %5144 = vmatpush1.xpose.msra.mxu0 0.0
        %5145 = vmatprep.subr.mxu0 0.0
        %5146 = vmatpush1.xpose.msra.mxu0 0.0
        %5147 = vmatprep.subr.mxu0 0.0
        %5148 = vmatpush1.xpose.msra.mxu0 0.0
        %5149 = vmatprep.subr.mxu0 0.0
        %5150 = vmatpush1.xpose.msra.mxu0 0.0
        %5151 = vmatprep.subr.mxu0 0.0
        %5152 = vmatpush1.xpose.msra.mxu0 0.0
        %5153 = vmatprep.subr.mxu0 0.0
        %5154 = vmatpush1.xpose.msra.mxu0 0.0
        %5155 = vmatprep.subr.mxu0 0.0
        %5156 = vmatpush1.xpose.msra.mxu0 0.0
        %5157 = vmatprep.subr.mxu0 0.0
        %5158 = vmatpush1.xpose.msra.mxu0 0.0
        %5159 = vmatprep.mubr.f32.mxu0 0.0
        %5160 = vmatmul.mubr.f32.gmra.mrb[0].mxu0 %v1285
        %v5161 = vpop.f32.mrb[0].mxu0
        %v5162 = vadd.f32 0.0, %v5161
        %v5163 = vpop.f32.mrb[0].mxu0
        %5164 = vmatprep.mubr.f32.mxu0 0.0
        %5165 = vmatmul.mubr.f32.gmra.mrb[0].mxu0 %v1285
        %v5166 = vpop.f32.mrb[0].mxu0
        %v5167 = vadd.f32 0.0, %v5166
        %v5168 = vpop.f32.mrb[0].mxu0
        %5169 = vmatprep.mubr.f32.mxu0 0.0
        %5170 = vmatmul.mubr.f32.gmra.mrb[0].mxu0 %v1285
        %v5171 = vpop.f32.mrb[0].mxu0
        %v5172 = vadd.f32 0.0, %v5171
        %v5173 = vpop.f32.mrb[0].mxu0
        %5174 = vmatprep.mubr.f32.mxu0 0.0
        %5175 = vmatmul.mubr.f32.gmra.mrb[0].mxu0 %v1285
        %v5176 = vpop.f32.mrb[0].mxu0
        %v5177 = vadd.f32 0.0, %v5176
        %v5178 = vpop.f32.mrb[0].mxu0
        %5179 = vmatprep.mubr.f32.mxu0 0.0
        %5180 = vmatmul.mubr.f32.gmra.mrb[0].mxu0 %v1285
        %v5181 = vpop.f32.mrb[0].mxu0
        %v5182 = vadd.f32 0.0, %v5181
        %v5183 = vpop.f32.mrb[0].mxu0
        %5184 = vmatprep.mubr.f32.mxu0 0.0
        %5185 = vmatmul.mubr.f32.gmra.mrb[0].mxu0 %v1285
        %v5186 = vpop.f32.mrb[0].mxu0
        %v5187 = vadd.f32 0.0, %v5186
        %v5188 = vpop.f32.mrb[0].mxu0
        %5189 = vmatprep.mubr.f32.mxu0 0.0
        %5190 = vmatmul.mubr.f32.gmra.mrb[0].mxu0 %v1285
        %v5191 = vpop.f32.mrb[0].mxu0
        %v5192 = vadd.f32 0.0, %v5191
        %v5193 = vpop.f32.mrb[0].mxu0
        %5194 = vmatprep.mubr.f32.mxu0 0.0
        %5195 = vmatmul.mubr.f32.gmra.mrb[0].mxu0 %v1285
        %v5196 = vpop.f32.mrb[0].mxu0
        %v5197 = vadd.f32 0.0, %v5196
        %v5198 = vpop.f32.mrb[0].mxu0
        %5199 = vdwg.mxu0
        %5200 = vset.pattern.permute.xlu0 1
        %5201 = vperm.xlu0 %5200, %v4479
        %v5202 = vpop.permute.xlu0 %5201
        %5204 = vset.pattern.permute.xlu0 1
        %5205 = vperm.xlu0 %5204, %v4484
        %v5206 = vpop.permute.xlu0 %5205
        %5208 = vset.pattern.permute.xlu0 1
        %5209 = vperm.xlu0 %5208, %v4489
        %v5210 = vpop.permute.xlu0 %5209
        %5212 = vset.pattern.permute.xlu0 1
        %5213 = vperm.xlu0 %5212, %v4494
        %v5214 = vpop.permute.xlu0 %5213
        %5216 = vset.pattern.permute.xlu0 1
        %5217 = vperm.xlu0 %5216, %v4499
        %v5218 = vpop.permute.xlu0 %5217
        %5220 = vset.pattern.permute.xlu0 1
        %5221 = vperm.xlu0 %5220, %v4504
        %v5222 = vpop.permute.xlu0 %5221
        %5224 = vset.pattern.permute.xlu0 1
        %5225 = vperm.xlu0 %5224, %v4509
        %v5226 = vpop.permute.xlu0 %5225
        %5228 = vset.pattern.permute.xlu0 1
        %5229 = vperm.xlu0 %5228, %v4514
        %v5230 = vpop.permute.xlu0 %5229
        %v5232 = vsub.f32 %v5202, %v5162
        %v5233 = vsub.f32 %v5206, %v5167
        %v5234 = vsub.f32 %v5210, %v5172
        %v5235 = vsub.f32 %v5214, %v5177
        %v5236 = vsub.f32 %v5218, %v5182
        %v5237 = vsub.f32 %v5222, %v5187
        %v5238 = vsub.f32 %v5226, %v5192
        %v5239 = vsub.f32 %v5230, %v5197
        %v5240 = vstv %s5061
        %v5241 = vmul.f32 %v5240, %v5232
        %v5242 = vmul.f32 %v5240, %v5233
        %v5243 = vmul.f32 %v5240, %v5234
        %v5244 = vmul.f32 %v5240, %v5235
        %v5245 = vmul.f32 %v5240, %v5236
        %v5246 = vmul.f32 %v5240, %v5237
        %v5247 = vmul.f32 %v5240, %v5238
        %v5248 = vmul.f32 %v5240, %v5239
        %v5249 = vmin.f32 %v5241, 0.0
        %v5250 = vmin.f32 %v5242, 0.0
        %v5251 = vmin.f32 %v5243, 0.0
        %v5252 = vmin.f32 %v5244, 0.0
        %v5253 = vmin.f32 %v5245, 0.0
        %v5254 = vmin.f32 %v5246, 0.0
        %v5255 = vmin.f32 %v5247, 0.0
        %v5256 = vmin.f32 %v5248, 0.0
        %v5257 = vmul.f32 %v5249, 1.442695
        %v5258 = vpow.pop %v5257
        %v5259 = vmul.f32 %v5250, 1.442695
        %v5260 = vpow.pop %v5259
        %v5261 = vmul.f32 %v5251, 1.442695
        %v5262 = vpow.pop %v5261
        %v5263 = vmul.f32 %v5252, 1.442695
        %v5264 = vpow.pop %v5263
        %v5265 = vmul.f32 %v5253, 1.442695
        %v5266 = vpow.pop %v5265
        %v5267 = vmul.f32 %v5254, 1.442695
        %v5268 = vpow.pop %v5267
        %v5269 = vmul.f32 %v5255, 1.442695
        %v5270 = vpow.pop %v5269
        %v5271 = vmul.f32 %v5256, 1.442695
        %v5272 = vpow.pop %v5271
        %v5273 = vmul.f32 %v4372, %v5258
        %v5274 = vmul.f32 %v4373, %v5260
        %v5275 = vmul.f32 %v4374, %v5262
        %v5276 = vmul.f32 %v4375, %v5264
        %v5277 = vmul.f32 %v4376, %v5266
        %v5278 = vmul.f32 %v4377, %v5268
        %v5279 = vmul.f32 %v4378, %v5270
        %v5280 = vmul.f32 %v4379, %v5272
        %v5281 = vpack.c.bf16 %v5274, %v5273
        %v5282 = vpack.c.bf16 %v5276, %v5275
        %v5283 = vpack.c.bf16 %v5278, %v5277
        %v5284 = vpack.c.bf16 %v5280, %v5279
        %5285 = vset.pattern.permute.xlu0 81
        %5286 = vperm.xlu0 %5285, %v4243
        %v5287 = vpop.permute.xlu0 %5286
        %5289 = vset.pattern.permute.xlu0 81
        %5290 = vperm.xlu0 %5289, %v4244
        %v5291 = vpop.permute.xlu0 %5290
        %5293 = vset.pattern.permute.xlu0 81
        %5294 = vperm.xlu0 %5293, %v4245
        %v5295 = vpop.permute.xlu0 %5294
        %5297 = vset.pattern.permute.xlu0 81
        %5298 = vperm.xlu0 %5297, %v4246
        %v5299 = vpop.permute.xlu0 %5298
        %5301 = vset.pattern.permute.xlu0 81
        %5302 = vperm.xlu0 %5301, %v4247
        %v5303 = vpop.permute.xlu0 %5302
        %5305 = vset.pattern.permute.xlu0 81
        %5306 = vperm.xlu0 %5305, %v4248
        %v5307 = vpop.permute.xlu0 %5306
        %5309 = vset.pattern.permute.xlu0 81
        %5310 = vperm.xlu0 %5309, %v4249
        %v5311 = vpop.permute.xlu0 %5310
        %5313 = vset.pattern.permute.xlu0 81
        %5314 = vperm.xlu0 %5313, %v4250
        %v5315 = vpop.permute.xlu0 %5314
        %v5317 = vmul.f32 %v4075, %v5287
        %v5318 = vmul.f32 %v4076, %v5291
        %v5319 = vmul.f32 %v4077, %v5295
        %v5320 = vmul.f32 %v4078, %v5299
        %v5321 = vmul.f32 %v4079, %v5303
        %v5322 = vmul.f32 %v4080, %v5307
        %v5323 = vmul.f32 %v4081, %v5311
        %v5324 = vmul.f32 %v4082, %v5315
        %v5325 = vpack.c.bf16 %v5318, %v5317
        %v5326 = vpack.c.bf16 %v5320, %v5319
        %v5327 = vpack.c.bf16 %v5322, %v5321
        %v5328 = vpack.c.bf16 %v5324, %v5323
        %v5329 = vstv %s5062
        %v5330 = vmul.f32 %v5329, %v4075
        %v5331 = vmul.f32 %v5329, %v4076
        %v5332 = vmul.f32 %v5329, %v4077
        %v5333 = vmul.f32 %v5329, %v4078
        %v5334 = vmul.f32 %v5329, %v4079
        %v5335 = vmul.f32 %v5329, %v4080
        %v5336 = vmul.f32 %v5329, %v4081
        %v5337 = vmul.f32 %v5329, %v4082
        %5342 = vrot.lane.b32.xlu0 %v5325, 80
        %v5343 = vpop.permute.xlu0 %5342
        %5344 = vrot.lane.b32.xlu0 %v5326, 80
        %v5345 = vpop.permute.xlu0 %5344
        %5346 = vrot.lane.b32.xlu0 %v5327, 80
        %v5347 = vpop.permute.xlu0 %5346
        %5348 = vrot.lane.b32.xlu0 %v5328, 80
        %v5349 = vpop.permute.xlu0 %5348
        %5362 = vrot.lane.b32.xlu0 %v5330, 80
        %v5363 = vpop.permute.xlu0 %5362
        %5364 = vrot.lane.b32.xlu0 %v5331, 80
        %v5365 = vpop.permute.xlu0 %5364
        %5366 = vrot.lane.b32.xlu0 %v5332, 80
        %v5367 = vpop.permute.xlu0 %5366
        %5368 = vrot.lane.b32.xlu0 %v5333, 80
        %v5369 = vpop.permute.xlu0 %5368
        %5370 = vrot.lane.b32.xlu0 %v5334, 80
        %v5371 = vpop.permute.xlu0 %5370
        %5372 = vrot.lane.b32.xlu0 %v5335, 80
        %v5373 = vpop.permute.xlu0 %5372
        %5374 = vrot.lane.b32.xlu0 %v5336, 80
        %v5375 = vpop.permute.xlu0 %5374
        %5376 = vrot.lane.b32.xlu0 %v5337, 80
        %v5377 = vpop.permute.xlu0 %5376
        %v5387 = vsel %vm405, %v5281, 0
        %v5390 = vsel %vm405, %v5282, 0
        %v5393 = vsel %vm405, %v5283, 0
        %v5396 = vsel %vm405, %v5284, 0
        %5398 = vmatprep.subr.bf16.mxu0 0
        %5399 = vmatpush1.bf16.msra.mxu0 %v5343
        %5400 = vmatprep.subr.bf16.mxu0 0
        %5401 = vmatpush1.bf16.msra.mxu0 %v5345
        %5402 = vmatprep.subr.bf16.mxu0 0
        %5403 = vmatpush1.bf16.msra.mxu0 %v5347
        %5404 = vmatprep.subr.bf16.mxu0 0
        %5405 = vmatpush1.bf16.msra.mxu0 %v5349
        %5406 = vmatprep.subr.bf16.mxu0 0
        %5407 = vmatpush1.bf16.msra.mxu0 0
        %5408 = vmatprep.subr.bf16.mxu0 0
        %5409 = vmatpush1.bf16.msra.mxu0 0
        %5410 = vmatprep.subr.bf16.mxu0 0
        %5411 = vmatpush1.bf16.msra.mxu0 0
        %5412 = vmatprep.subr.bf16.mxu0 0
        %5413 = vmatpush1.bf16.msra.mxu0 0
        %5414 = vmatprep.subr.bf16.mxu0 0
        %5415 = vmatpush1.bf16.msra.mxu0 0
        %5416 = vmatprep.subr.bf16.mxu0 0
        %5417 = vmatpush1.bf16.msra.mxu0 0
        %5418 = vmatprep.subr.bf16.mxu0 0
        %5419 = vmatpush1.bf16.msra.mxu0 0
        %5420 = vmatprep.subr.bf16.mxu0 0
        %5421 = vmatpush1.bf16.msra.mxu0 0
        %5422 = vmatprep.subr.bf16.mxu0 0
        %5423 = vmatpush1.bf16.msra.mxu0 0
        %5424 = vmatprep.subr.bf16.mxu0 0
        %5425 = vmatpush1.bf16.msra.mxu0 0
        %5426 = vmatprep.subr.bf16.mxu0 0
        %5427 = vmatpush1.bf16.msra.mxu0 0
        %5428 = vmatprep.subr.bf16.mxu0 0
        %5429 = vmatpush1.bf16.msra.mxu0 0
        %5430 = vmatprep.mubr.bf16.mxu0 0
        %5431 = vmatmul.mubr.bf16.gmra.mrb[0].mxu0 %v5387
        %v5432 = vpop.f32.mrb[0].mxu0
        %v5433 = vadd.f32 %v5363, %v5432
        %v5434 = vpop.f32.mrb[0].mxu0
        %v5435 = vpop.f32.mrb[0].mxu0
        %v5436 = vadd.f32 %v5365, %v5435
        %v5437 = vpop.f32.mrb[0].mxu0
        %5438 = vmatprep.mubr.bf16.mxu0 0
        %5439 = vmatmul.mubr.bf16.gmra.mrb[0].mxu0 %v5390
        %v5440 = vpop.f32.mrb[0].mxu0
        %v5441 = vadd.f32 %v5367, %v5440
        %v5442 = vpop.f32.mrb[0].mxu0
        %v5443 = vpop.f32.mrb[0].mxu0
        %v5444 = vadd.f32 %v5369, %v5443
        %v5445 = vpop.f32.mrb[0].mxu0
        %5446 = vmatprep.mubr.bf16.mxu0 0
        %5447 = vmatmul.mubr.bf16.gmra.mrb[0].mxu0 %v5393
        %v5448 = vpop.f32.mrb[0].mxu0
        %v5449 = vadd.f32 %v5371, %v5448
        %v5450 = vpop.f32.mrb[0].mxu0
        %v5451 = vpop.f32.mrb[0].mxu0
        %v5452 = vadd.f32 %v5373, %v5451
        %v5453 = vpop.f32.mrb[0].mxu0
        %5454 = vmatprep.mubr.bf16.mxu0 0
        %5455 = vmatmul.mubr.bf16.gmra.mrb[0].mxu0 %v5396
        %v5456 = vpop.f32.mrb[0].mxu0
        %v5457 = vadd.f32 %v5375, %v5456
        %v5458 = vpop.f32.mrb[0].mxu0
        %v5459 = vpop.f32.mrb[0].mxu0
        %v5460 = vadd.f32 %v5377, %v5459
        %v5461 = vpop.f32.mrb[0].mxu0
        %5462 = vdwg.mxu0
        %5471 = vrot.lane.b32.xlu0 %v4075, 112
        %v5472 = vpop.permute.xlu0 %5471
        %5473 = vrot.lane.b32.xlu0 %v4076, 112
        %v5474 = vpop.permute.xlu0 %5473
        %5475 = vrot.lane.b32.xlu0 %v4077, 112
        %v5476 = vpop.permute.xlu0 %5475
        %5477 = vrot.lane.b32.xlu0 %v4078, 112
        %v5478 = vpop.permute.xlu0 %5477
        %5479 = vrot.lane.b32.xlu0 %v4079, 112
        %v5480 = vpop.permute.xlu0 %5479
        %5481 = vrot.lane.b32.xlu0 %v4080, 112
        %v5482 = vpop.permute.xlu0 %5481
        %5483 = vrot.lane.b32.xlu0 %v4081, 112
        %v5484 = vpop.permute.xlu0 %5483
        %5485 = vrot.lane.b32.xlu0 %v4082, 112
        %v5486 = vpop.permute.xlu0 %5485
        %v5495 = vmul.f32 %v5433, %v5472
        %v5496 = vmul.f32 %v5436, %v5474
        %v5497 = vmul.f32 %v5441, %v5476
        %v5498 = vmul.f32 %v5444, %v5478
        %v5499 = vmul.f32 %v5449, %v5480
        %v5500 = vmul.f32 %v5452, %v5482
        %v5501 = vmul.f32 %v5457, %v5484
        %v5502 = vmul.f32 %v5460, %v5486
        %v5503 = vpack.c.bf16 %v5496, %v5495
        %v5504 = vpack.c.bf16 %v5498, %v5497
        %v5505 = vpack.c.bf16 %v5500, %v5499
        %v5506 = vpack.c.bf16 %v5502, %v5501
        %5507 = vmatprep.subr.bf16.mxu0 0
        %5508 = vmatpush1.bf16.msra.mxu0 %v5503
        %5509 = vmatprep.subr.bf16.mxu0 0
        %5510 = vmatpush1.bf16.msra.mxu0 %v5504
        %5511 = vmatprep.subr.bf16.mxu0 0
        %5512 = vmatpush1.bf16.msra.mxu0 %v5505
        %5513 = vmatprep.subr.bf16.mxu0 0
        %5514 = vmatpush1.bf16.msra.mxu0 %v5506
        %5515 = vmatprep.subr.bf16.mxu0 0
        %5516 = vmatpush1.bf16.msra.mxu0 0
        %5517 = vmatprep.subr.bf16.mxu0 0
        %5518 = vmatpush1.bf16.msra.mxu0 0
        %5519 = vmatprep.subr.bf16.mxu0 0
        %5520 = vmatpush1.bf16.msra.mxu0 0
        %5521 = vmatprep.subr.bf16.mxu0 0
        %5522 = vmatpush1.bf16.msra.mxu0 0
        %5523 = vmatprep.subr.bf16.mxu0 0
        %5524 = vmatpush1.bf16.msra.mxu0 0
        %5525 = vmatprep.subr.bf16.mxu0 0
        %5526 = vmatpush1.bf16.msra.mxu0 0
        %5527 = vmatprep.subr.bf16.mxu0 0
        %5528 = vmatpush1.bf16.msra.mxu0 0
        %5529 = vmatprep.subr.bf16.mxu0 0
        %5530 = vmatpush1.bf16.msra.mxu0 0
        %5531 = vmatprep.subr.bf16.mxu0 0
        %5532 = vmatpush1.bf16.msra.mxu0 0
        %5533 = vmatprep.subr.bf16.mxu0 0
        %5534 = vmatpush1.bf16.msra.mxu0 0
        %5535 = vmatprep.subr.bf16.mxu0 0
        %5536 = vmatpush1.bf16.msra.mxu0 0
        %5537 = vmatprep.subr.bf16.mxu0 0
        %5538 = vmatpush1.bf16.msra.mxu0 0
        %5539 = vmatprep.mubr.bf16.mxu0 0
        %5540 = vmatmul.mubr.bf16.gmra.mrb[0].mxu0 %v4944
        %v5541 = vpop.f32.mrb[0].mxu0
        %v5542 = vadd.f32 0.0, %v5541
        %v5543 = vpop.f32.mrb[0].mxu0
        %v5544 = vpop.f32.mrb[0].mxu0
        %v5545 = vadd.f32 0.0, %v5544
        %v5546 = vpop.f32.mrb[0].mxu0
        %5547 = vmatprep.mubr.bf16.mxu0 0
        %5548 = vmatmul.mubr.bf16.gmra.mrb[0].mxu0 %v4947
        %v5549 = vpop.f32.mrb[0].mxu0
        %v5550 = vadd.f32 0.0, %v5549
        %v5551 = vpop.f32.mrb[0].mxu0
        %v5552 = vpop.f32.mrb[0].mxu0
        %v5553 = vadd.f32 0.0, %v5552
        %v5554 = vpop.f32.mrb[0].mxu0
        %5555 = vmatprep.mubr.bf16.mxu0 0
        %5556 = vmatmul.mubr.bf16.gmra.mrb[0].mxu0 %v4950
        %v5557 = vpop.f32.mrb[0].mxu0
        %v5558 = vadd.f32 0.0, %v5557
        %v5559 = vpop.f32.mrb[0].mxu0
        %v5560 = vpop.f32.mrb[0].mxu0
        %v5561 = vadd.f32 0.0, %v5560
        %v5562 = vpop.f32.mrb[0].mxu0
        %5563 = vmatprep.mubr.bf16.mxu0 0
        %5564 = vmatmul.mubr.bf16.gmra.mrb[0].mxu0 %v4953
        %v5565 = vpop.f32.mrb[0].mxu0
        %v5566 = vadd.f32 0.0, %v5565
        %v5567 = vpop.f32.mrb[0].mxu0
        %v5568 = vpop.f32.mrb[0].mxu0
        %v5569 = vadd.f32 0.0, %v5568
        %v5570 = vpop.f32.mrb[0].mxu0
        %5571 = vdwg.mxu0
        %5580 = vrot.lane.b32.xlu0 %v5542, 48
        %v5581 = vpop.permute.xlu0 %5580
        %5582 = vrot.lane.b32.xlu0 %v5545, 48
        %v5583 = vpop.permute.xlu0 %5582
        %5584 = vrot.lane.b32.xlu0 %v5550, 48
        %v5585 = vpop.permute.xlu0 %5584
        %5586 = vrot.lane.b32.xlu0 %v5553, 48
        %v5587 = vpop.permute.xlu0 %5586
        %5588 = vrot.lane.b32.xlu0 %v5558, 48
        %v5589 = vpop.permute.xlu0 %5588
        %5590 = vrot.lane.b32.xlu0 %v5561, 48
        %v5591 = vpop.permute.xlu0 %5590
        %5592 = vrot.lane.b32.xlu0 %v5566, 48
        %v5593 = vpop.permute.xlu0 %5592
        %5594 = vrot.lane.b32.xlu0 %v5569, 48
        %v5595 = vpop.permute.xlu0 %5594
        %vm5604 = vcmask 523648
        %5605 = vst.msk [vmem:[#allocation3] sm:$0xff] %vm5604, %v5581
        %5606 = vst.msk [vmem:[#allocation3 + $0x8] sm:$0xff] %vm5604, %v5583
        %5607 = vst.msk [vmem:[#allocation3 + $0x10] sm:$0xff] %vm5604, %v5585
        %5608 = vst.msk [vmem:[#allocation3 + $0x18] sm:$0xff] %vm5604, %v5587
        %5609 = vst.msk [vmem:[#allocation3 + $0x20] sm:$0xff] %vm5604, %v5589
        %5610 = vst.msk [vmem:[#allocation3 + $0x28] sm:$0xff] %vm5604, %v5591
        %5611 = vst.msk [vmem:[#allocation3 + $0x30] sm:$0xff] %vm5604, %v5593
        %5612 = vst.msk [vmem:[#allocation3 + $0x38] sm:$0xff] %vm5604, %v5595
        %v5613 = vpack.c.bf16 %v4084, %v4083
        %v5614 = vpack.c.bf16 %v4086, %v4085
        %v5615 = vpack.c.bf16 %v4088, %v4087
        %v5616 = vpack.c.bf16 %v4090, %v4089
        %5621 = vrot.lane.b32.xlu0 %v5613, 56
        %v5622 = vpop.permute.xlu0 %5621
        %5623 = vrot.lane.b32.xlu0 %v5614, 56
        %v5624 = vpop.permute.xlu0 %5623
        %5625 = vrot.lane.b32.xlu0 %v5615, 56
        %v5626 = vpop.permute.xlu0 %5625
        %5627 = vrot.lane.b32.xlu0 %v5616, 56
        %v5628 = vpop.permute.xlu0 %5627
        %5629 = vrot.lane.b32.xlu0 %v5613, 64
        %v5630 = vpop.permute.xlu0 %5629
        %5631 = vrot.lane.b32.xlu0 %v5614, 64
        %v5632 = vpop.permute.xlu0 %5631
        %5633 = vrot.lane.b32.xlu0 %v5615, 64
        %v5634 = vpop.permute.xlu0 %5633
        %5635 = vrot.lane.b32.xlu0 %v5616, 64
        %v5636 = vpop.permute.xlu0 %5635
        %v5638 = vsel %vm1022, %v5622, 0
        %v5641 = vsel %vm1022, %v5624, 0
        %v5644 = vsel %vm1022, %v5626, 0
        %v5647 = vsel %vm1022, %v5628, 0
        %v5650 = vsel %vm1022, %v5630, 0
        %v5653 = vsel %vm1022, %v5632, 0
        %v5656 = vsel %vm1022, %v5634, 0
        %v5659 = vsel %vm1022, %v5636, 0
        %5661 = vmatprep.subr.bf16.mxu0 0
        %5662 = vmatpush1.bf16.xpose.msra.mxu0 %v5650
        %5663 = vmatprep.subr.bf16.mxu0 0
        %5664 = vmatpush1.bf16.xpose.msra.mxu0 %v5653
        %5665 = vmatprep.subr.bf16.mxu0 0
        %5666 = vmatpush1.bf16.xpose.msra.mxu0 %v5656
        %5667 = vmatprep.subr.bf16.mxu0 0
        %5668 = vmatpush1.bf16.xpose.msra.mxu0 %v5659
        %5669 = vmatprep.subr.bf16.mxu0 0
        %5670 = vmatpush1.bf16.xpose.msra.mxu0 0
        %5671 = vmatprep.subr.bf16.mxu0 0
        %5672 = vmatpush1.bf16.xpose.msra.mxu0 0
        %5673 = vmatprep.subr.bf16.mxu0 0
        %5674 = vmatpush1.bf16.xpose.msra.mxu0 0
        %5675 = vmatprep.subr.bf16.mxu0 0
        %5676 = vmatpush1.bf16.xpose.msra.mxu0 0
        %5677 = vmatprep.subr.bf16.mxu0 0
        %5678 = vmatpush1.bf16.xpose.msra.mxu0 0
        %5679 = vmatprep.subr.bf16.mxu0 0
        %5680 = vmatpush1.bf16.xpose.msra.mxu0 0
        %5681 = vmatprep.subr.bf16.mxu0 0
        %5682 = vmatpush1.bf16.xpose.msra.mxu0 0
        %5683 = vmatprep.subr.bf16.mxu0 0
        %5684 = vmatpush1.bf16.xpose.msra.mxu0 0
        %5685 = vmatprep.subr.bf16.mxu0 0
        %5686 = vmatpush1.bf16.xpose.msra.mxu0 0
        %5687 = vmatprep.subr.bf16.mxu0 0
        %5688 = vmatpush1.bf16.xpose.msra.mxu0 0
        %5689 = vmatprep.subr.bf16.mxu0 0
        %5690 = vmatpush1.bf16.xpose.msra.mxu0 0
        %5691 = vmatprep.subr.bf16.mxu0 0
        %5692 = vmatpush1.bf16.xpose.msra.mxu0 0
        %5693 = vmatprep.mubr.bf16.mxu0 0
        %5694 = vmatmul.mubr.bf16.gmra.mrb[0].mxu0 %v5638
        %v5695 = vpop.f32.mrb[0].mxu0
        %v5696 = vadd.f32 0.0, %v5695
        %v5697 = vpop.f32.mrb[0].mxu0
        %v5698 = vpop.f32.mrb[0].mxu0
        %v5699 = vadd.f32 0.0, %v5698
        %v5700 = vpop.f32.mrb[0].mxu0
        %5701 = vmatprep.mubr.bf16.mxu0 0
        %5702 = vmatmul.mubr.bf16.gmra.mrb[0].mxu0 %v5641
        %v5703 = vpop.f32.mrb[0].mxu0
        %v5704 = vadd.f32 0.0, %v5703
        %v5705 = vpop.f32.mrb[0].mxu0
        %v5706 = vpop.f32.mrb[0].mxu0
        %v5707 = vadd.f32 0.0, %v5706
        %v5708 = vpop.f32.mrb[0].mxu0
        %5709 = vmatprep.mubr.bf16.mxu0 0
        %5710 = vmatmul.mubr.bf16.gmra.mrb[0].mxu0 %v5644
        %v5711 = vpop.f32.mrb[0].mxu0
        %v5712 = vadd.f32 0.0, %v5711
        %v5713 = vpop.f32.mrb[0].mxu0
        %v5714 = vpop.f32.mrb[0].mxu0
        %v5715 = vadd.f32 0.0, %v5714
        %v5716 = vpop.f32.mrb[0].mxu0
        %5717 = vmatprep.mubr.bf16.mxu0 0
        %5718 = vmatmul.mubr.bf16.gmra.mrb[0].mxu0 %v5647
        %v5719 = vpop.f32.mrb[0].mxu0
        %v5720 = vadd.f32 0.0, %v5719
        %v5721 = vpop.f32.mrb[0].mxu0
        %v5722 = vpop.f32.mrb[0].mxu0
        %v5723 = vadd.f32 0.0, %v5722
        %v5724 = vpop.f32.mrb[0].mxu0
        %5725 = vdwg.mxu0
        %v5726 = vmul.f32 %v5696, %v330
        %v5727 = vmul.f32 %v5699, %v331
        %v5728 = vmul.f32 %v5704, %v332
        %v5729 = vmul.f32 %v5707, %v333
        %v5730 = vmul.f32 %v5712, %v334
        %v5731 = vmul.f32 %v5715, %v335
        %v5732 = vmul.f32 %v5720, %v336
        %v5733 = vmul.f32 %v5723, %v337
        %5742 = vrot.lane.b32.xlu0 %v4251, 48
        %v5743 = vpop.permute.xlu0 %5742
        %5744 = vrot.lane.b32.xlu0 %v4252, 48
        %v5745 = vpop.permute.xlu0 %5744
        %5746 = vrot.lane.b32.xlu0 %v4253, 48
        %v5747 = vpop.permute.xlu0 %5746
        %5748 = vrot.lane.b32.xlu0 %v4254, 48
        %v5749 = vpop.permute.xlu0 %5748
        %5750 = vrot.lane.b32.xlu0 %v4255, 48
        %v5751 = vpop.permute.xlu0 %5750
        %5752 = vrot.lane.b32.xlu0 %v4256, 48
        %v5753 = vpop.permute.xlu0 %5752
        %5754 = vrot.lane.b32.xlu0 %v4257, 48
        %v5755 = vpop.permute.xlu0 %5754
        %5756 = vrot.lane.b32.xlu0 %v4258, 48
        %v5757 = vpop.permute.xlu0 %5756
        %5766 = vmatprep.subr.mxu0 0.0
        %5767 = vmatpush1.msra.mxu0 %v5743
        %5768 = vmatprep.subr.mxu0 0.0
        %5769 = vmatpush1.msra.mxu0 %v5745
        %5770 = vmatprep.subr.mxu0 0.0
        %5771 = vmatpush1.msra.mxu0 %v5747
        %5772 = vmatprep.subr.mxu0 0.0
        %5773 = vmatpush1.msra.mxu0 %v5749
        %5774 = vmatprep.subr.mxu0 0.0
        %5775 = vmatpush1.msra.mxu0 %v5751
        %5776 = vmatprep.subr.mxu0 0.0
        %5777 = vmatpush1.msra.mxu0 %v5753
        %5778 = vmatprep.subr.mxu0 0.0
        %5779 = vmatpush1.msra.mxu0 %v5755
        %5780 = vmatprep.subr.mxu0 0.0
        %5781 = vmatpush1.msra.mxu0 %v5757
        %5782 = vmatprep.subr.mxu0 0.0
        %5783 = vmatpush1.msra.mxu0 0.0
        %5784 = vmatprep.subr.mxu0 0.0
        %5785 = vmatpush1.msra.mxu0 0.0
        %5786 = vmatprep.subr.mxu0 0.0
        %5787 = vmatpush1.msra.mxu0 0.0
        %5788 = vmatprep.subr.mxu0 0.0
        %5789 = vmatpush1.msra.mxu0 0.0
        %5790 = vmatprep.subr.mxu0 0.0
        %5791 = vmatpush1.msra.mxu0 0.0
        %5792 = vmatprep.subr.mxu0 0.0
        %5793 = vmatpush1.msra.mxu0 0.0
        %5794 = vmatprep.subr.mxu0 0.0
        %5795 = vmatpush1.msra.mxu0 0.0
        %5796 = vmatprep.subr.mxu0 0.0
        %5797 = vmatpush1.msra.mxu0 0.0
        %5798 = vmatprep.subr.mxu0 0.0
        %5799 = vmatpush1.msra.mxu0 0.0
        %5800 = vmatprep.subr.mxu0 0.0
        %5801 = vmatpush1.msra.mxu0 0.0
        %5802 = vmatprep.subr.mxu0 0.0
        %5803 = vmatpush1.msra.mxu0 0.0
        %5804 = vmatprep.subr.mxu0 0.0
        %5805 = vmatpush1.msra.mxu0 0.0
        %5806 = vmatprep.subr.mxu0 0.0
        %5807 = vmatpush1.msra.mxu0 0.0
        %5808 = vmatprep.subr.mxu0 0.0
        %5809 = vmatpush1.msra.mxu0 0.0
        %5810 = vmatprep.subr.mxu0 0.0
        %5811 = vmatpush1.msra.mxu0 0.0
        %5812 = vmatprep.subr.mxu0 0.0
        %5813 = vmatpush1.msra.mxu0 0.0
        %5814 = vmatprep.subr.mxu0 0.0
        %5815 = vmatpush1.msra.mxu0 0.0
        %5816 = vmatprep.subr.mxu0 0.0
        %5817 = vmatpush1.msra.mxu0 0.0
        %5818 = vmatprep.subr.mxu0 0.0
        %5819 = vmatpush1.msra.mxu0 0.0
        %5820 = vmatprep.subr.mxu0 0.0
        %5821 = vmatpush1.msra.mxu0 0.0
        %5822 = vmatprep.subr.mxu0 0.0
        %5823 = vmatpush1.msra.mxu0 0.0
        %5824 = vmatprep.subr.mxu0 0.0
        %5825 = vmatpush1.msra.mxu0 0.0
        %5826 = vmatprep.subr.mxu0 0.0
        %5827 = vmatpush1.msra.mxu0 0.0
        %5828 = vmatprep.subr.mxu0 0.0
        %5829 = vmatpush1.msra.mxu0 0.0
        %5830 = vmatprep.mubr.f32.mxu0 0.0
        %5831 = vmatmul.mubr.f32.gmra.mrb[0].mxu0 %v1153
        %v5832 = vpop.f32.mrb[0].mxu0
        %v5833 = vadd.f32 0.0, %v5832
        %v5834 = vpop.f32.mrb[0].mxu0
        %5835 = vmatprep.mubr.f32.mxu0 0.0
        %5836 = vmatmul.mubr.f32.gmra.mrb[0].mxu0 %v1156
        %v5837 = vpop.f32.mrb[0].mxu0
        %v5838 = vadd.f32 0.0, %v5837
        %v5839 = vpop.f32.mrb[0].mxu0
        %5840 = vmatprep.mubr.f32.mxu0 0.0
        %5841 = vmatmul.mubr.f32.gmra.mrb[0].mxu0 %v1159
        %v5842 = vpop.f32.mrb[0].mxu0
        %v5843 = vadd.f32 0.0, %v5842
        %v5844 = vpop.f32.mrb[0].mxu0
        %5845 = vmatprep.mubr.f32.mxu0 0.0
        %5846 = vmatmul.mubr.f32.gmra.mrb[0].mxu0 %v1162
        %v5847 = vpop.f32.mrb[0].mxu0
        %v5848 = vadd.f32 0.0, %v5847
        %v5849 = vpop.f32.mrb[0].mxu0
        %5850 = vmatprep.mubr.f32.mxu0 0.0
        %5851 = vmatmul.mubr.f32.gmra.mrb[0].mxu0 %v1165
        %v5852 = vpop.f32.mrb[0].mxu0
        %v5853 = vadd.f32 0.0, %v5852
        %v5854 = vpop.f32.mrb[0].mxu0
        %5855 = vmatprep.mubr.f32.mxu0 0.0
        %5856 = vmatmul.mubr.f32.gmra.mrb[0].mxu0 %v1168
        %v5857 = vpop.f32.mrb[0].mxu0
        %v5858 = vadd.f32 0.0, %v5857
        %v5859 = vpop.f32.mrb[0].mxu0
        %5860 = vmatprep.mubr.f32.mxu0 0.0
        %5861 = vmatmul.mubr.f32.gmra.mrb[0].mxu0 %v1171
        %v5862 = vpop.f32.mrb[0].mxu0
        %v5863 = vadd.f32 0.0, %v5862
        %v5864 = vpop.f32.mrb[0].mxu0
        %5865 = vmatprep.mubr.f32.mxu0 0.0
        %5866 = vmatmul.mubr.f32.gmra.mrb[0].mxu0 %v1174
        %v5867 = vpop.f32.mrb[0].mxu0
        %v5868 = vadd.f32 0.0, %v5867
        %v5869 = vpop.f32.mrb[0].mxu0
        %5870 = vdwg.mxu0
        %s5871 = sld [smem:[#allocation10 + $0x4]]
        %s5872 = sld [smem:[#allocation10 + $0x6]]
        %v5874 = vsel %vm1283, %v5833, 0
        %v5877 = vsel %vm1283, %v5838, 0
        %v5880 = vsel %vm1283, %v5843, 0
        %v5883 = vsel %vm1283, %v5848, 0
        %v5886 = vsel %vm1283, %v5853, 0
        %v5889 = vsel %vm1283, %v5858, 0
        %v5892 = vsel %vm1283, %v5863, 0
        %v5895 = vsel %vm1283, %v5868, 0
        %5897 = vmatprep.subr.mxu0 0.0
        %5898 = vmatpush1.xpose.msra.mxu0 %v5874
        %5899 = vmatprep.subr.mxu0 0.0
        %5900 = vmatpush1.xpose.msra.mxu0 %v5877
        %5901 = vmatprep.subr.mxu0 0.0
        %5902 = vmatpush1.xpose.msra.mxu0 %v5880
        %5903 = vmatprep.subr.mxu0 0.0
        %5904 = vmatpush1.xpose.msra.mxu0 %v5883
        %5905 = vmatprep.subr.mxu0 0.0
        %5906 = vmatpush1.xpose.msra.mxu0 %v5886
        %5907 = vmatprep.subr.mxu0 0.0
        %5908 = vmatpush1.xpose.msra.mxu0 %v5889
        %5909 = vmatprep.subr.mxu0 0.0
        %5910 = vmatpush1.xpose.msra.mxu0 %v5892
        %5911 = vmatprep.subr.mxu0 0.0
        %5912 = vmatpush1.xpose.msra.mxu0 %v5895
        %5913 = vmatprep.subr.mxu0 0.0
        %5914 = vmatpush1.xpose.msra.mxu0 0.0
        %5915 = vmatprep.subr.mxu0 0.0
        %5916 = vmatpush1.xpose.msra.mxu0 0.0
        %5917 = vmatprep.subr.mxu0 0.0
        %5918 = vmatpush1.xpose.msra.mxu0 0.0
        %5919 = vmatprep.subr.mxu0 0.0
        %5920 = vmatpush1.xpose.msra.mxu0 0.0
        %5921 = vmatprep.subr.mxu0 0.0
        %5922 = vmatpush1.xpose.msra.mxu0 0.0
        %5923 = vmatprep.subr.mxu0 0.0
        %5924 = vmatpush1.xpose.msra.mxu0 0.0
        %5925 = vmatprep.subr.mxu0 0.0
        %5926 = vmatpush1.xpose.msra.mxu0 0.0
        %5927 = vmatprep.subr.mxu0 0.0
        %5928 = vmatpush1.xpose.msra.mxu0 0.0
        %5929 = vmatprep.subr.mxu0 0.0
        %5930 = vmatpush1.xpose.msra.mxu0 0.0
        %5931 = vmatprep.subr.mxu0 0.0
        %5932 = vmatpush1.xpose.msra.mxu0 0.0
        %5933 = vmatprep.subr.mxu0 0.0
        %5934 = vmatpush1.xpose.msra.mxu0 0.0
        %5935 = vmatprep.subr.mxu0 0.0
        %5936 = vmatpush1.xpose.msra.mxu0 0.0
        %5937 = vmatprep.subr.mxu0 0.0
        %5938 = vmatpush1.xpose.msra.mxu0 0.0
        %5939 = vmatprep.subr.mxu0 0.0
        %5940 = vmatpush1.xpose.msra.mxu0 0.0
        %5941 = vmatprep.subr.mxu0 0.0
        %5942 = vmatpush1.xpose.msra.mxu0 0.0
        %5943 = vmatprep.subr.mxu0 0.0
        %5944 = vmatpush1.xpose.msra.mxu0 0.0
        %5945 = vmatprep.subr.mxu0 0.0
        %5946 = vmatpush1.xpose.msra.mxu0 0.0
        %5947 = vmatprep.subr.mxu0 0.0
        %5948 = vmatpush1.xpose.msra.mxu0 0.0
        %5949 = vmatprep.subr.mxu0 0.0
        %5950 = vmatpush1.xpose.msra.mxu0 0.0
        %5951 = vmatprep.subr.mxu0 0.0
        %5952 = vmatpush1.xpose.msra.mxu0 0.0
        %5953 = vmatprep.subr.mxu0 0.0
        %5954 = vmatpush1.xpose.msra.mxu0 0.0
        %5955 = vmatprep.subr.mxu0 0.0
        %5956 = vmatpush1.xpose.msra.mxu0 0.0
        %5957 = vmatprep.subr.mxu0 0.0
        %5958 = vmatpush1.xpose.msra.mxu0 0.0
        %5959 = vmatprep.subr.mxu0 0.0
        %5960 = vmatpush1.xpose.msra.mxu0 0.0
        %5961 = vmatprep.mubr.f32.mxu0 0.0
        %5962 = vmatmul.mubr.f32.gmra.mrb[0].mxu0 %v1285
        %v5963 = vpop.f32.mrb[0].mxu0
        %v5964 = vadd.f32 0.0, %v5963
        %v5965 = vpop.f32.mrb[0].mxu0
        %5966 = vmatprep.mubr.f32.mxu0 0.0
        %5967 = vmatmul.mubr.f32.gmra.mrb[0].mxu0 %v1285
        %v5968 = vpop.f32.mrb[0].mxu0
        %v5969 = vadd.f32 0.0, %v5968
        %v5970 = vpop.f32.mrb[0].mxu0
        %5971 = vmatprep.mubr.f32.mxu0 0.0
        %5972 = vmatmul.mubr.f32.gmra.mrb[0].mxu0 %v1285
        %v5973 = vpop.f32.mrb[0].mxu0
        %v5974 = vadd.f32 0.0, %v5973
        %v5975 = vpop.f32.mrb[0].mxu0
        %5976 = vmatprep.mubr.f32.mxu0 0.0
        %5977 = vmatmul.mubr.f32.gmra.mrb[0].mxu0 %v1285
        %v5978 = vpop.f32.mrb[0].mxu0
        %v5979 = vadd.f32 0.0, %v5978
        %v5980 = vpop.f32.mrb[0].mxu0
        %5981 = vmatprep.mubr.f32.mxu0 0.0
        %5982 = vmatmul.mubr.f32.gmra.mrb[0].mxu0 %v1285
        %v5983 = vpop.f32.mrb[0].mxu0
        %v5984 = vadd.f32 0.0, %v5983
        %v5985 = vpop.f32.mrb[0].mxu0
        %5986 = vmatprep.mubr.f32.mxu0 0.0
        %5987 = vmatmul.mubr.f32.gmra.mrb[0].mxu0 %v1285
        %v5988 = vpop.f32.mrb[0].mxu0
        %v5989 = vadd.f32 0.0, %v5988
        %v5990 = vpop.f32.mrb[0].mxu0
        %5991 = vmatprep.mubr.f32.mxu0 0.0
        %5992 = vmatmul.mubr.f32.gmra.mrb[0].mxu0 %v1285
        %v5993 = vpop.f32.mrb[0].mxu0
        %v5994 = vadd.f32 0.0, %v5993
        %v5995 = vpop.f32.mrb[0].mxu0
        %5996 = vmatprep.mubr.f32.mxu0 0.0
        %5997 = vmatmul.mubr.f32.gmra.mrb[0].mxu0 %v1285
        %v5998 = vpop.f32.mrb[0].mxu0
        %v5999 = vadd.f32 0.0, %v5998
        %v6000 = vpop.f32.mrb[0].mxu0
        %6001 = vdwg.mxu0
        %6002 = vset.pattern.permute.xlu0 0
        %6003 = vperm.xlu0 %6002, %v5833
        %v6004 = vpop.permute.xlu0 %6003
        %6006 = vset.pattern.permute.xlu0 0
        %6007 = vperm.xlu0 %6006, %v5838
        %v6008 = vpop.permute.xlu0 %6007
        %6010 = vset.pattern.permute.xlu0 0
        %6011 = vperm.xlu0 %6010, %v5843
        %v6012 = vpop.permute.xlu0 %6011
        %6014 = vset.pattern.permute.xlu0 0
        %6015 = vperm.xlu0 %6014, %v5848
        %v6016 = vpop.permute.xlu0 %6015
        %6018 = vset.pattern.permute.xlu0 0
        %6019 = vperm.xlu0 %6018, %v5853
        %v6020 = vpop.permute.xlu0 %6019
        %6022 = vset.pattern.permute.xlu0 0
        %6023 = vperm.xlu0 %6022, %v5858
        %v6024 = vpop.permute.xlu0 %6023
        %6026 = vset.pattern.permute.xlu0 0
        %6027 = vperm.xlu0 %6026, %v5863
        %v6028 = vpop.permute.xlu0 %6027
        %6030 = vset.pattern.permute.xlu0 0
        %6031 = vperm.xlu0 %6030, %v5868
        %v6032 = vpop.permute.xlu0 %6031
        %v6034 = vsub.f32 %v6004, %v5964
        %v6035 = vsub.f32 %v6008, %v5969
        %v6036 = vsub.f32 %v6012, %v5974
        %v6037 = vsub.f32 %v6016, %v5979
        %v6038 = vsub.f32 %v6020, %v5984
        %v6039 = vsub.f32 %v6024, %v5989
        %v6040 = vsub.f32 %v6028, %v5994
        %v6041 = vsub.f32 %v6032, %v5999
        %v6042 = vstv %s5871
        %v6043 = vmul.f32 %v6042, %v6034
        %v6044 = vmul.f32 %v6042, %v6035
        %v6045 = vmul.f32 %v6042, %v6036
        %v6046 = vmul.f32 %v6042, %v6037
        %v6047 = vmul.f32 %v6042, %v6038
        %v6048 = vmul.f32 %v6042, %v6039
        %v6049 = vmul.f32 %v6042, %v6040
        %v6050 = vmul.f32 %v6042, %v6041
        %v6051 = vmin.f32 %v6043, 0.0
        %v6052 = vmin.f32 %v6044, 0.0
        %v6053 = vmin.f32 %v6045, 0.0
        %v6054 = vmin.f32 %v6046, 0.0
        %v6055 = vmin.f32 %v6047, 0.0
        %v6056 = vmin.f32 %v6048, 0.0
        %v6057 = vmin.f32 %v6049, 0.0
        %v6058 = vmin.f32 %v6050, 0.0
        %v6059 = vmul.f32 %v6051, 1.442695
        %v6060 = vpow.pop %v6059
        %v6061 = vmul.f32 %v6052, 1.442695
        %v6062 = vpow.pop %v6061
        %v6063 = vmul.f32 %v6053, 1.442695
        %v6064 = vpow.pop %v6063
        %v6065 = vmul.f32 %v6054, 1.442695
        %v6066 = vpow.pop %v6065
        %v6067 = vmul.f32 %v6055, 1.442695
        %v6068 = vpow.pop %v6067
        %v6069 = vmul.f32 %v6056, 1.442695
        %v6070 = vpow.pop %v6069
        %v6071 = vmul.f32 %v6057, 1.442695
        %v6072 = vpow.pop %v6071
        %v6073 = vmul.f32 %v6058, 1.442695
        %v6074 = vpow.pop %v6073
        %v6075 = vmul.f32 %v5726, %v6060
        %v6076 = vmul.f32 %v5727, %v6062
        %v6077 = vmul.f32 %v5728, %v6064
        %v6078 = vmul.f32 %v5729, %v6066
        %v6079 = vmul.f32 %v5730, %v6068
        %v6080 = vmul.f32 %v5731, %v6070
        %v6081 = vmul.f32 %v5732, %v6072
        %v6082 = vmul.f32 %v5733, %v6074
        %v6083 = vpack.c.bf16 %v6076, %v6075
        %v6084 = vpack.c.bf16 %v6078, %v6077
        %v6085 = vpack.c.bf16 %v6080, %v6079
        %v6086 = vpack.c.bf16 %v6082, %v6081
        %6087 = vset.pattern.permute.xlu0 80
        %6088 = vperm.xlu0 %6087, %v4251
        %v6089 = vpop.permute.xlu0 %6088
        %6091 = vset.pattern.permute.xlu0 80
        %6092 = vperm.xlu0 %6091, %v4252
        %v6093 = vpop.permute.xlu0 %6092
        %6095 = vset.pattern.permute.xlu0 80
        %6096 = vperm.xlu0 %6095, %v4253
        %v6097 = vpop.permute.xlu0 %6096
        %6099 = vset.pattern.permute.xlu0 80
        %6100 = vperm.xlu0 %6099, %v4254
        %v6101 = vpop.permute.xlu0 %6100
        %6103 = vset.pattern.permute.xlu0 80
        %6104 = vperm.xlu0 %6103, %v4255
        %v6105 = vpop.permute.xlu0 %6104
        %6107 = vset.pattern.permute.xlu0 80
        %6108 = vperm.xlu0 %6107, %v4256
        %v6109 = vpop.permute.xlu0 %6108
        %6111 = vset.pattern.permute.xlu0 80
        %6112 = vperm.xlu0 %6111, %v4257
        %v6113 = vpop.permute.xlu0 %6112
        %6115 = vset.pattern.permute.xlu0 80
        %6116 = vperm.xlu0 %6115, %v4258
        %v6117 = vpop.permute.xlu0 %6116
        %v6119 = vmul.f32 %v4083, %v6089
        %v6120 = vmul.f32 %v4084, %v6093
        %v6121 = vmul.f32 %v4085, %v6097
        %v6122 = vmul.f32 %v4086, %v6101
        %v6123 = vmul.f32 %v4087, %v6105
        %v6124 = vmul.f32 %v4088, %v6109
        %v6125 = vmul.f32 %v4089, %v6113
        %v6126 = vmul.f32 %v4090, %v6117
        %v6127 = vpack.c.bf16 %v6120, %v6119
        %v6128 = vpack.c.bf16 %v6122, %v6121
        %v6129 = vpack.c.bf16 %v6124, %v6123
        %v6130 = vpack.c.bf16 %v6126, %v6125
        %v6131 = vstv %s5872
        %v6132 = vmul.f32 %v6131, %v4083
        %v6133 = vmul.f32 %v6131, %v4084
        %v6134 = vmul.f32 %v6131, %v4085
        %v6135 = vmul.f32 %v6131, %v4086
        %v6136 = vmul.f32 %v6131, %v4087
        %v6137 = vmul.f32 %v6131, %v4088
        %v6138 = vmul.f32 %v6131, %v4089
        %v6139 = vmul.f32 %v6131, %v4090
        %6144 = vrot.lane.b32.xlu0 %v6127, 96
        %v6145 = vpop.permute.xlu0 %6144
        %6146 = vrot.lane.b32.xlu0 %v6128, 96
        %v6147 = vpop.permute.xlu0 %6146
        %6148 = vrot.lane.b32.xlu0 %v6129, 96
        %v6149 = vpop.permute.xlu0 %6148
        %6150 = vrot.lane.b32.xlu0 %v6130, 96
        %v6151 = vpop.permute.xlu0 %6150
        %6164 = vrot.lane.b32.xlu0 %v6132, 96
        %v6165 = vpop.permute.xlu0 %6164
        %6166 = vrot.lane.b32.xlu0 %v6133, 96
        %v6167 = vpop.permute.xlu0 %6166
        %6168 = vrot.lane.b32.xlu0 %v6134, 96
        %v6169 = vpop.permute.xlu0 %6168
        %6170 = vrot.lane.b32.xlu0 %v6135, 96
        %v6171 = vpop.permute.xlu0 %6170
        %6172 = vrot.lane.b32.xlu0 %v6136, 96
        %v6173 = vpop.permute.xlu0 %6172
        %6174 = vrot.lane.b32.xlu0 %v6137, 96
        %v6175 = vpop.permute.xlu0 %6174
        %6176 = vrot.lane.b32.xlu0 %v6138, 96
        %v6177 = vpop.permute.xlu0 %6176
        %6178 = vrot.lane.b32.xlu0 %v6139, 96
        %v6179 = vpop.permute.xlu0 %6178
        %v6189 = vsel %vm405, %v6083, 0
        %v6192 = vsel %vm405, %v6084, 0
        %v6195 = vsel %vm405, %v6085, 0
        %v6198 = vsel %vm405, %v6086, 0
        %6200 = vmatprep.subr.bf16.mxu0 0
        %6201 = vmatpush1.bf16.msra.mxu0 %v6145
        %6202 = vmatprep.subr.bf16.mxu0 0
        %6203 = vmatpush1.bf16.msra.mxu0 %v6147
        %6204 = vmatprep.subr.bf16.mxu0 0
        %6205 = vmatpush1.bf16.msra.mxu0 %v6149
        %6206 = vmatprep.subr.bf16.mxu0 0
        %6207 = vmatpush1.bf16.msra.mxu0 %v6151
        %6208 = vmatprep.subr.bf16.mxu0 0
        %6209 = vmatpush1.bf16.msra.mxu0 0
        %6210 = vmatprep.subr.bf16.mxu0 0
        %6211 = vmatpush1.bf16.msra.mxu0 0
        %6212 = vmatprep.subr.bf16.mxu0 0
        %6213 = vmatpush1.bf16.msra.mxu0 0
        %6214 = vmatprep.subr.bf16.mxu0 0
        %6215 = vmatpush1.bf16.msra.mxu0 0
        %6216 = vmatprep.subr.bf16.mxu0 0
        %6217 = vmatpush1.bf16.msra.mxu0 0
        %6218 = vmatprep.subr.bf16.mxu0 0
        %6219 = vmatpush1.bf16.msra.mxu0 0
        %6220 = vmatprep.subr.bf16.mxu0 0
        %6221 = vmatpush1.bf16.msra.mxu0 0
        %6222 = vmatprep.subr.bf16.mxu0 0
        %6223 = vmatpush1.bf16.msra.mxu0 0
        %6224 = vmatprep.subr.bf16.mxu0 0
        %6225 = vmatpush1.bf16.msra.mxu0 0
        %6226 = vmatprep.subr.bf16.mxu0 0
        %6227 = vmatpush1.bf16.msra.mxu0 0
        %6228 = vmatprep.subr.bf16.mxu0 0
        %6229 = vmatpush1.bf16.msra.mxu0 0
        %6230 = vmatprep.subr.bf16.mxu0 0
        %6231 = vmatpush1.bf16.msra.mxu0 0
        %6232 = vmatprep.mubr.bf16.mxu0 0
        %6233 = vmatmul.mubr.bf16.gmra.mrb[0].mxu0 %v6189
        %v6234 = vpop.f32.mrb[0].mxu0
        %v6235 = vadd.f32 %v6165, %v6234
        %v6236 = vpop.f32.mrb[0].mxu0
        %v6237 = vpop.f32.mrb[0].mxu0
        %v6238 = vadd.f32 %v6167, %v6237
        %v6239 = vpop.f32.mrb[0].mxu0
        %6240 = vmatprep.mubr.bf16.mxu0 0
        %6241 = vmatmul.mubr.bf16.gmra.mrb[0].mxu0 %v6192
        %v6242 = vpop.f32.mrb[0].mxu0
        %v6243 = vadd.f32 %v6169, %v6242
        %v6244 = vpop.f32.mrb[0].mxu0
        %v6245 = vpop.f32.mrb[0].mxu0
        %v6246 = vadd.f32 %v6171, %v6245
        %v6247 = vpop.f32.mrb[0].mxu0
        %6248 = vmatprep.mubr.bf16.mxu0 0
        %6249 = vmatmul.mubr.bf16.gmra.mrb[0].mxu0 %v6195
        %v6250 = vpop.f32.mrb[0].mxu0
        %v6251 = vadd.f32 %v6173, %v6250
        %v6252 = vpop.f32.mrb[0].mxu0
        %v6253 = vpop.f32.mrb[0].mxu0
        %v6254 = vadd.f32 %v6175, %v6253
        %v6255 = vpop.f32.mrb[0].mxu0
        %6256 = vmatprep.mubr.bf16.mxu0 0
        %6257 = vmatmul.mubr.bf16.gmra.mrb[0].mxu0 %v6198
        %v6258 = vpop.f32.mrb[0].mxu0
        %v6259 = vadd.f32 %v6177, %v6258
        %v6260 = vpop.f32.mrb[0].mxu0
        %v6261 = vpop.f32.mrb[0].mxu0
        %v6262 = vadd.f32 %v6179, %v6261
        %v6263 = vpop.f32.mrb[0].mxu0
        %6264 = vdwg.mxu0
        %v6265 = vmul.f32 %v6235, %v4083
        %v6266 = vmul.f32 %v6238, %v4084
        %v6267 = vmul.f32 %v6243, %v4085
        %v6268 = vmul.f32 %v6246, %v4086
        %v6269 = vmul.f32 %v6251, %v4087
        %v6270 = vmul.f32 %v6254, %v4088
        %v6271 = vmul.f32 %v6259, %v4089
        %v6272 = vmul.f32 %v6262, %v4090
        %v6273 = vpack.c.bf16 %v6266, %v6265
        %v6274 = vpack.c.bf16 %v6268, %v6267
        %v6275 = vpack.c.bf16 %v6270, %v6269
        %v6276 = vpack.c.bf16 %v6272, %v6271
        %6277 = vmatprep.subr.bf16.mxu0 0
        %6278 = vmatpush1.bf16.msra.mxu0 %v6273
        %6279 = vmatprep.subr.bf16.mxu0 0
        %6280 = vmatpush1.bf16.msra.mxu0 %v6274
        %6281 = vmatprep.subr.bf16.mxu0 0
        %6282 = vmatpush1.bf16.msra.mxu0 %v6275
        %6283 = vmatprep.subr.bf16.mxu0 0
        %6284 = vmatpush1.bf16.msra.mxu0 %v6276
        %6285 = vmatprep.subr.bf16.mxu0 0
        %6286 = vmatpush1.bf16.msra.mxu0 0
        %6287 = vmatprep.subr.bf16.mxu0 0
        %6288 = vmatpush1.bf16.msra.mxu0 0
        %6289 = vmatprep.subr.bf16.mxu0 0
        %6290 = vmatpush1.bf16.msra.mxu0 0
        %6291 = vmatprep.subr.bf16.mxu0 0
        %6292 = vmatpush1.bf16.msra.mxu0 0
        %6293 = vmatprep.subr.bf16.mxu0 0
        %6294 = vmatpush1.bf16.msra.mxu0 0
        %6295 = vmatprep.subr.bf16.mxu0 0
        %6296 = vmatpush1.bf16.msra.mxu0 0
        %6297 = vmatprep.subr.bf16.mxu0 0
        %6298 = vmatpush1.bf16.msra.mxu0 0
        %6299 = vmatprep.subr.bf16.mxu0 0
        %6300 = vmatpush1.bf16.msra.mxu0 0
        %6301 = vmatprep.subr.bf16.mxu0 0
        %6302 = vmatpush1.bf16.msra.mxu0 0
        %6303 = vmatprep.subr.bf16.mxu0 0
        %6304 = vmatpush1.bf16.msra.mxu0 0
        %6305 = vmatprep.subr.bf16.mxu0 0
        %6306 = vmatpush1.bf16.msra.mxu0 0
        %6307 = vmatprep.subr.bf16.mxu0 0
        %6308 = vmatpush1.bf16.msra.mxu0 0
        %6309 = vmatprep.mubr.bf16.mxu0 0
        %6310 = vmatmul.mubr.bf16.gmra.mrb[0].mxu0 %v4944
        %v6311 = vpop.f32.mrb[0].mxu0
        %v6312 = vadd.f32 0.0, %v6311
        %v6313 = vpop.f32.mrb[0].mxu0
        %v6314 = vpop.f32.mrb[0].mxu0
        %v6315 = vadd.f32 0.0, %v6314
        %v6316 = vpop.f32.mrb[0].mxu0
        %6317 = vmatprep.mubr.bf16.mxu0 0
        %6318 = vmatmul.mubr.bf16.gmra.mrb[0].mxu0 %v4947
        %v6319 = vpop.f32.mrb[0].mxu0
        %v6320 = vadd.f32 0.0, %v6319
        %v6321 = vpop.f32.mrb[0].mxu0
        %v6322 = vpop.f32.mrb[0].mxu0
        %v6323 = vadd.f32 0.0, %v6322
        %v6324 = vpop.f32.mrb[0].mxu0
        %6325 = vmatprep.mubr.bf16.mxu0 0
        %6326 = vmatmul.mubr.bf16.gmra.mrb[0].mxu0 %v4950
        %v6327 = vpop.f32.mrb[0].mxu0
        %v6328 = vadd.f32 0.0, %v6327
        %v6329 = vpop.f32.mrb[0].mxu0
        %v6330 = vpop.f32.mrb[0].mxu0
        %v6331 = vadd.f32 0.0, %v6330
        %v6332 = vpop.f32.mrb[0].mxu0
        %6333 = vmatprep.mubr.bf16.mxu0 0
        %6334 = vmatmul.mubr.bf16.gmra.mrb[0].mxu0 %v4953
        %v6335 = vpop.f32.mrb[0].mxu0
        %v6336 = vadd.f32 0.0, %v6335
        %v6337 = vpop.f32.mrb[0].mxu0
        %v6338 = vpop.f32.mrb[0].mxu0
        %v6339 = vadd.f32 0.0, %v6338
        %v6340 = vpop.f32.mrb[0].mxu0
        %6341 = vdwg.mxu0
        %6350 = vrot.lane.b32.xlu0 %v6312, 32
        %v6351 = vpop.permute.xlu0 %6350
        %6352 = vrot.lane.b32.xlu0 %v6315, 32
        %v6353 = vpop.permute.xlu0 %6352
        %6354 = vrot.lane.b32.xlu0 %v6320, 32
        %v6355 = vpop.permute.xlu0 %6354
        %6356 = vrot.lane.b32.xlu0 %v6323, 32
        %v6357 = vpop.permute.xlu0 %6356
        %6358 = vrot.lane.b32.xlu0 %v6328, 32
        %v6359 = vpop.permute.xlu0 %6358
        %6360 = vrot.lane.b32.xlu0 %v6331, 32
        %v6361 = vpop.permute.xlu0 %6360
        %6362 = vrot.lane.b32.xlu0 %v6336, 32
        %v6363 = vpop.permute.xlu0 %6362
        %6364 = vrot.lane.b32.xlu0 %v6339, 32
        %v6365 = vpop.permute.xlu0 %6364
        %6374 = vst.msk [vmem:[#allocation3 + $0x40] sm:$0xff] %vm5052, %v6351
        %6375 = vst.msk [vmem:[#allocation3 + $0x48] sm:$0xff] %vm5052, %v6353
        %6376 = vst.msk [vmem:[#allocation3 + $0x50] sm:$0xff] %vm5052, %v6355
        %6377 = vst.msk [vmem:[#allocation3 + $0x58] sm:$0xff] %vm5052, %v6357
        %6378 = vst.msk [vmem:[#allocation3 + $0x60] sm:$0xff] %vm5052, %v6359
        %6379 = vst.msk [vmem:[#allocation3 + $0x68] sm:$0xff] %vm5052, %v6361
        %6380 = vst.msk [vmem:[#allocation3 + $0x70] sm:$0xff] %vm5052, %v6363
        %6381 = vst.msk [vmem:[#allocation3 + $0x78] sm:$0xff] %vm5052, %v6365
        %s6382 = sld [smem:[#allocation10 + $0x5]]
        %s6383 = sld [smem:[#allocation10 + $0x7]]
        %6384 = vrot.lane.b32.xlu0 %v5833, 127
        %v6385 = vpop.permute.xlu0 %6384
        %6386 = vrot.lane.b32.xlu0 %v5838, 127
        %v6387 = vpop.permute.xlu0 %6386
        %6388 = vrot.lane.b32.xlu0 %v5843, 127
        %v6389 = vpop.permute.xlu0 %6388
        %6390 = vrot.lane.b32.xlu0 %v5848, 127
        %v6391 = vpop.permute.xlu0 %6390
        %6392 = vrot.lane.b32.xlu0 %v5853, 127
        %v6393 = vpop.permute.xlu0 %6392
        %6394 = vrot.lane.b32.xlu0 %v5858, 127
        %v6395 = vpop.permute.xlu0 %6394
        %6396 = vrot.lane.b32.xlu0 %v5863, 127
        %v6397 = vpop.permute.xlu0 %6396
        %6398 = vrot.lane.b32.xlu0 %v5868, 127
        %v6399 = vpop.permute.xlu0 %6398
        %v6400 = vsel %vm1283, %v6385, 0
        %v6402 = vsel %vm1283, %v6387, 0
        %v6404 = vsel %vm1283, %v6389, 0
        %v6406 = vsel %vm1283, %v6391, 0
        %v6408 = vsel %vm1283, %v6393, 0
        %v6410 = vsel %vm1283, %v6395, 0
        %v6412 = vsel %vm1283, %v6397, 0
        %v6414 = vsel %vm1283, %v6399, 0
        %6416 = vmatprep.subr.mxu0 0.0
        %6417 = vmatpush1.xpose.msra.mxu0 %v6400
        %6418 = vmatprep.subr.mxu0 0.0
        %6419 = vmatpush1.xpose.msra.mxu0 %v6402
        %6420 = vmatprep.subr.mxu0 0.0
        %6421 = vmatpush1.xpose.msra.mxu0 %v6404
        %6422 = vmatprep.subr.mxu0 0.0
        %6423 = vmatpush1.xpose.msra.mxu0 %v6406
        %6424 = vmatprep.subr.mxu0 0.0
        %6425 = vmatpush1.xpose.msra.mxu0 %v6408
        %6426 = vmatprep.subr.mxu0 0.0
        %6427 = vmatpush1.xpose.msra.mxu0 %v6410
        %6428 = vmatprep.subr.mxu0 0.0
        %6429 = vmatpush1.xpose.msra.mxu0 %v6412
        %6430 = vmatprep.subr.mxu0 0.0
        %6431 = vmatpush1.xpose.msra.mxu0 %v6414
        %6432 = vmatprep.subr.mxu0 0.0
        %6433 = vmatpush1.xpose.msra.mxu0 0.0
        %6434 = vmatprep.subr.mxu0 0.0
        %6435 = vmatpush1.xpose.msra.mxu0 0.0
        %6436 = vmatprep.subr.mxu0 0.0
        %6437 = vmatpush1.xpose.msra.mxu0 0.0
        %6438 = vmatprep.subr.mxu0 0.0
        %6439 = vmatpush1.xpose.msra.mxu0 0.0
        %6440 = vmatprep.subr.mxu0 0.0
        %6441 = vmatpush1.xpose.msra.mxu0 0.0
        %6442 = vmatprep.subr.mxu0 0.0
        %6443 = vmatpush1.xpose.msra.mxu0 0.0
        %6444 = vmatprep.subr.mxu0 0.0
        %6445 = vmatpush1.xpose.msra.mxu0 0.0
        %6446 = vmatprep.subr.mxu0 0.0
        %6447 = vmatpush1.xpose.msra.mxu0 0.0
        %6448 = vmatprep.subr.mxu0 0.0
        %6449 = vmatpush1.xpose.msra.mxu0 0.0
        %6450 = vmatprep.subr.mxu0 0.0
        %6451 = vmatpush1.xpose.msra.mxu0 0.0
        %6452 = vmatprep.subr.mxu0 0.0
        %6453 = vmatpush1.xpose.msra.mxu0 0.0
        %6454 = vmatprep.subr.mxu0 0.0
        %6455 = vmatpush1.xpose.msra.mxu0 0.0
        %6456 = vmatprep.subr.mxu0 0.0
        %6457 = vmatpush1.xpose.msra.mxu0 0.0
        %6458 = vmatprep.subr.mxu0 0.0
        %6459 = vmatpush1.xpose.msra.mxu0 0.0
        %6460 = vmatprep.subr.mxu0 0.0
        %6461 = vmatpush1.xpose.msra.mxu0 0.0
        %6462 = vmatprep.subr.mxu0 0.0
        %6463 = vmatpush1.xpose.msra.mxu0 0.0
        %6464 = vmatprep.subr.mxu0 0.0
        %6465 = vmatpush1.xpose.msra.mxu0 0.0
        %6466 = vmatprep.subr.mxu0 0.0
        %6467 = vmatpush1.xpose.msra.mxu0 0.0
        %6468 = vmatprep.subr.mxu0 0.0
        %6469 = vmatpush1.xpose.msra.mxu0 0.0
        %6470 = vmatprep.subr.mxu0 0.0
        %6471 = vmatpush1.xpose.msra.mxu0 0.0
        %6472 = vmatprep.subr.mxu0 0.0
        %6473 = vmatpush1.xpose.msra.mxu0 0.0
        %6474 = vmatprep.subr.mxu0 0.0
        %6475 = vmatpush1.xpose.msra.mxu0 0.0
        %6476 = vmatprep.subr.mxu0 0.0
        %6477 = vmatpush1.xpose.msra.mxu0 0.0
        %6478 = vmatprep.subr.mxu0 0.0
        %6479 = vmatpush1.xpose.msra.mxu0 0.0
        %6480 = vmatprep.mubr.f32.mxu0 0.0
        %6481 = vmatmul.mubr.f32.gmra.mrb[0].mxu0 %v1285
        %v6482 = vpop.f32.mrb[0].mxu0
        %v6483 = vadd.f32 0.0, %v6482
        %v6484 = vpop.f32.mrb[0].mxu0
        %6485 = vmatprep.mubr.f32.mxu0 0.0
        %6486 = vmatmul.mubr.f32.gmra.mrb[0].mxu0 %v1285
        %v6487 = vpop.f32.mrb[0].mxu0
        %v6488 = vadd.f32 0.0, %v6487
        %v6489 = vpop.f32.mrb[0].mxu0
        %6490 = vmatprep.mubr.f32.mxu0 0.0
        %6491 = vmatmul.mubr.f32.gmra.mrb[0].mxu0 %v1285
        %v6492 = vpop.f32.mrb[0].mxu0
        %v6493 = vadd.f32 0.0, %v6492
        %v6494 = vpop.f32.mrb[0].mxu0
        %6495 = vmatprep.mubr.f32.mxu0 0.0
        %6496 = vmatmul.mubr.f32.gmra.mrb[0].mxu0 %v1285
        %v6497 = vpop.f32.mrb[0].mxu0
        %v6498 = vadd.f32 0.0, %v6497
        %v6499 = vpop.f32.mrb[0].mxu0
        %6500 = vmatprep.mubr.f32.mxu0 0.0
        %6501 = vmatmul.mubr.f32.gmra.mrb[0].mxu0 %v1285
        %v6502 = vpop.f32.mrb[0].mxu0
        %v6503 = vadd.f32 0.0, %v6502
        %v6504 = vpop.f32.mrb[0].mxu0
        %6505 = vmatprep.mubr.f32.mxu0 0.0
        %6506 = vmatmul.mubr.f32.gmra.mrb[0].mxu0 %v1285
        %v6507 = vpop.f32.mrb[0].mxu0
        %v6508 = vadd.f32 0.0, %v6507
        %v6509 = vpop.f32.mrb[0].mxu0
        %6510 = vmatprep.mubr.f32.mxu0 0.0
        %6511 = vmatmul.mubr.f32.gmra.mrb[0].mxu0 %v1285
        %v6512 = vpop.f32.mrb[0].mxu0
        %v6513 = vadd.f32 0.0, %v6512
        %v6514 = vpop.f32.mrb[0].mxu0
        %6515 = vmatprep.mubr.f32.mxu0 0.0
        %6516 = vmatmul.mubr.f32.gmra.mrb[0].mxu0 %v1285
        %v6517 = vpop.f32.mrb[0].mxu0
        %v6518 = vadd.f32 0.0, %v6517
        %v6519 = vpop.f32.mrb[0].mxu0
        %6520 = vdwg.mxu0
        %6521 = vset.pattern.permute.xlu0 1
        %6522 = vperm.xlu0 %6521, %v5833
        %v6523 = vpop.permute.xlu0 %6522
        %6525 = vset.pattern.permute.xlu0 1
        %6526 = vperm.xlu0 %6525, %v5838
        %v6527 = vpop.permute.xlu0 %6526
        %6529 = vset.pattern.permute.xlu0 1
        %6530 = vperm.xlu0 %6529, %v5843
        %v6531 = vpop.permute.xlu0 %6530
        %6533 = vset.pattern.permute.xlu0 1
        %6534 = vperm.xlu0 %6533, %v5848
        %v6535 = vpop.permute.xlu0 %6534
        %6537 = vset.pattern.permute.xlu0 1
        %6538 = vperm.xlu0 %6537, %v5853
        %v6539 = vpop.permute.xlu0 %6538
        %6541 = vset.pattern.permute.xlu0 1
        %6542 = vperm.xlu0 %6541, %v5858
        %v6543 = vpop.permute.xlu0 %6542
        %6545 = vset.pattern.permute.xlu0 1
        %6546 = vperm.xlu0 %6545, %v5863
        %v6547 = vpop.permute.xlu0 %6546
        %6549 = vset.pattern.permute.xlu0 1
        %6550 = vperm.xlu0 %6549, %v5868
        %v6551 = vpop.permute.xlu0 %6550
        %v6553 = vsub.f32 %v6523, %v6483
        %v6554 = vsub.f32 %v6527, %v6488
        %v6555 = vsub.f32 %v6531, %v6493
        %v6556 = vsub.f32 %v6535, %v6498
        %v6557 = vsub.f32 %v6539, %v6503
        %v6558 = vsub.f32 %v6543, %v6508
        %v6559 = vsub.f32 %v6547, %v6513
        %v6560 = vsub.f32 %v6551, %v6518
        %v6561 = vstv %s6382
        %v6562 = vmul.f32 %v6561, %v6553
        %v6563 = vmul.f32 %v6561, %v6554
        %v6564 = vmul.f32 %v6561, %v6555
        %v6565 = vmul.f32 %v6561, %v6556
        %v6566 = vmul.f32 %v6561, %v6557
        %v6567 = vmul.f32 %v6561, %v6558
        %v6568 = vmul.f32 %v6561, %v6559
        %v6569 = vmul.f32 %v6561, %v6560
        %v6570 = vmin.f32 %v6562, 0.0
        %v6571 = vmin.f32 %v6563, 0.0
        %v6572 = vmin.f32 %v6564, 0.0
        %v6573 = vmin.f32 %v6565, 0.0
        %v6574 = vmin.f32 %v6566, 0.0
        %v6575 = vmin.f32 %v6567, 0.0
        %v6576 = vmin.f32 %v6568, 0.0
        %v6577 = vmin.f32 %v6569, 0.0
        %v6578 = vmul.f32 %v6570, 1.442695
        %v6579 = vpow.pop %v6578
        %v6580 = vmul.f32 %v6571, 1.442695
        %v6581 = vpow.pop %v6580
        %v6582 = vmul.f32 %v6572, 1.442695
        %v6583 = vpow.pop %v6582
        %v6584 = vmul.f32 %v6573, 1.442695
        %v6585 = vpow.pop %v6584
        %v6586 = vmul.f32 %v6574, 1.442695
        %v6587 = vpow.pop %v6586
        %v6588 = vmul.f32 %v6575, 1.442695
        %v6589 = vpow.pop %v6588
        %v6590 = vmul.f32 %v6576, 1.442695
        %v6591 = vpow.pop %v6590
        %v6592 = vmul.f32 %v6577, 1.442695
        %v6593 = vpow.pop %v6592
        %v6594 = vmul.f32 %v5726, %v6579
        %v6595 = vmul.f32 %v5727, %v6581
        %v6596 = vmul.f32 %v5728, %v6583
        %v6597 = vmul.f32 %v5729, %v6585
        %v6598 = vmul.f32 %v5730, %v6587
        %v6599 = vmul.f32 %v5731, %v6589
        %v6600 = vmul.f32 %v5732, %v6591
        %v6601 = vmul.f32 %v5733, %v6593
        %v6602 = vpack.c.bf16 %v6595, %v6594
        %v6603 = vpack.c.bf16 %v6597, %v6596
        %v6604 = vpack.c.bf16 %v6599, %v6598
        %v6605 = vpack.c.bf16 %v6601, %v6600
        %6606 = vset.pattern.permute.xlu0 81
        %6607 = vperm.xlu0 %6606, %v4251
        %v6608 = vpop.permute.xlu0 %6607
        %6610 = vset.pattern.permute.xlu0 81
        %6611 = vperm.xlu0 %6610, %v4252
        %v6612 = vpop.permute.xlu0 %6611
        %6614 = vset.pattern.permute.xlu0 81
        %6615 = vperm.xlu0 %6614, %v4253
        %v6616 = vpop.permute.xlu0 %6615
        %6618 = vset.pattern.permute.xlu0 81
        %6619 = vperm.xlu0 %6618, %v4254
        %v6620 = vpop.permute.xlu0 %6619
        %6622 = vset.pattern.permute.xlu0 81
        %6623 = vperm.xlu0 %6622, %v4255
        %v6624 = vpop.permute.xlu0 %6623
        %6626 = vset.pattern.permute.xlu0 81
        %6627 = vperm.xlu0 %6626, %v4256
        %v6628 = vpop.permute.xlu0 %6627
        %6630 = vset.pattern.permute.xlu0 81
        %6631 = vperm.xlu0 %6630, %v4257
        %v6632 = vpop.permute.xlu0 %6631
        %6634 = vset.pattern.permute.xlu0 81
        %6635 = vperm.xlu0 %6634, %v4258
        %v6636 = vpop.permute.xlu0 %6635
        %v6638 = vmul.f32 %v4083, %v6608
        %v6639 = vmul.f32 %v4084, %v6612
        %v6640 = vmul.f32 %v4085, %v6616
        %v6641 = vmul.f32 %v4086, %v6620
        %v6642 = vmul.f32 %v4087, %v6624
        %v6643 = vmul.f32 %v4088, %v6628
        %v6644 = vmul.f32 %v4089, %v6632
        %v6645 = vmul.f32 %v4090, %v6636
        %v6646 = vpack.c.bf16 %v6639, %v6638
        %v6647 = vpack.c.bf16 %v6641, %v6640
        %v6648 = vpack.c.bf16 %v6643, %v6642
        %v6649 = vpack.c.bf16 %v6645, %v6644
        %v6650 = vstv %s6383
        %v6651 = vmul.f32 %v6650, %v4083
        %v6652 = vmul.f32 %v6650, %v4084
        %v6653 = vmul.f32 %v6650, %v4085
        %v6654 = vmul.f32 %v6650, %v4086
        %v6655 = vmul.f32 %v6650, %v4087
        %v6656 = vmul.f32 %v6650, %v4088
        %v6657 = vmul.f32 %v6650, %v4089
        %v6658 = vmul.f32 %v6650, %v4090
        %6663 = vrot.lane.b32.xlu0 %v6646, 80
        %v6664 = vpop.permute.xlu0 %6663
        %6665 = vrot.lane.b32.xlu0 %v6647, 80
        %v6666 = vpop.permute.xlu0 %6665
        %6667 = vrot.lane.b32.xlu0 %v6648, 80
        %v6668 = vpop.permute.xlu0 %6667
        %6669 = vrot.lane.b32.xlu0 %v6649, 80
        %v6670 = vpop.permute.xlu0 %6669
        %6683 = vrot.lane.b32.xlu0 %v6651, 80
        %v6684 = vpop.permute.xlu0 %6683
        %6685 = vrot.lane.b32.xlu0 %v6652, 80
        %v6686 = vpop.permute.xlu0 %6685
        %6687 = vrot.lane.b32.xlu0 %v6653, 80
        %v6688 = vpop.permute.xlu0 %6687
        %6689 = vrot.lane.b32.xlu0 %v6654, 80
        %v6690 = vpop.permute.xlu0 %6689
        %6691 = vrot.lane.b32.xlu0 %v6655, 80
        %v6692 = vpop.permute.xlu0 %6691
        %6693 = vrot.lane.b32.xlu0 %v6656, 80
        %v6694 = vpop.permute.xlu0 %6693
        %6695 = vrot.lane.b32.xlu0 %v6657, 80
        %v6696 = vpop.permute.xlu0 %6695
        %6697 = vrot.lane.b32.xlu0 %v6658, 80
        %v6698 = vpop.permute.xlu0 %6697
        %v6708 = vsel %vm405, %v6602, 0
        %v6711 = vsel %vm405, %v6603, 0
        %v6714 = vsel %vm405, %v6604, 0
        %v6717 = vsel %vm405, %v6605, 0
        %6719 = vmatprep.subr.bf16.mxu0 0
        %6720 = vmatpush1.bf16.msra.mxu0 %v6664
        %6721 = vmatprep.subr.bf16.mxu0 0
        %6722 = vmatpush1.bf16.msra.mxu0 %v6666
        %6723 = vmatprep.subr.bf16.mxu0 0
        %6724 = vmatpush1.bf16.msra.mxu0 %v6668
        %6725 = vmatprep.subr.bf16.mxu0 0
        %6726 = vmatpush1.bf16.msra.mxu0 %v6670
        %6727 = vmatprep.subr.bf16.mxu0 0
        %6728 = vmatpush1.bf16.msra.mxu0 0
        %6729 = vmatprep.subr.bf16.mxu0 0
        %6730 = vmatpush1.bf16.msra.mxu0 0
        %6731 = vmatprep.subr.bf16.mxu0 0
        %6732 = vmatpush1.bf16.msra.mxu0 0
        %6733 = vmatprep.subr.bf16.mxu0 0
        %6734 = vmatpush1.bf16.msra.mxu0 0
        %6735 = vmatprep.subr.bf16.mxu0 0
        %6736 = vmatpush1.bf16.msra.mxu0 0
        %6737 = vmatprep.subr.bf16.mxu0 0
        %6738 = vmatpush1.bf16.msra.mxu0 0
        %6739 = vmatprep.subr.bf16.mxu0 0
        %6740 = vmatpush1.bf16.msra.mxu0 0
        %6741 = vmatprep.subr.bf16.mxu0 0
        %6742 = vmatpush1.bf16.msra.mxu0 0
        %6743 = vmatprep.subr.bf16.mxu0 0
        %6744 = vmatpush1.bf16.msra.mxu0 0
        %6745 = vmatprep.subr.bf16.mxu0 0
        %6746 = vmatpush1.bf16.msra.mxu0 0
        %6747 = vmatprep.subr.bf16.mxu0 0
        %6748 = vmatpush1.bf16.msra.mxu0 0
        %6749 = vmatprep.subr.bf16.mxu0 0
        %6750 = vmatpush1.bf16.msra.mxu0 0
        %6751 = vmatprep.mubr.bf16.mxu0 0
        %6752 = vmatmul.mubr.bf16.gmra.mrb[0].mxu0 %v6708
        %v6753 = vpop.f32.mrb[0].mxu0
        %v6754 = vadd.f32 %v6684, %v6753
        %v6755 = vpop.f32.mrb[0].mxu0
        %v6756 = vpop.f32.mrb[0].mxu0
        %v6757 = vadd.f32 %v6686, %v6756
        %v6758 = vpop.f32.mrb[0].mxu0
        %6759 = vmatprep.mubr.bf16.mxu0 0
        %6760 = vmatmul.mubr.bf16.gmra.mrb[0].mxu0 %v6711
        %v6761 = vpop.f32.mrb[0].mxu0
        %v6762 = vadd.f32 %v6688, %v6761
        %v6763 = vpop.f32.mrb[0].mxu0
        %v6764 = vpop.f32.mrb[0].mxu0
        %v6765 = vadd.f32 %v6690, %v6764
        %v6766 = vpop.f32.mrb[0].mxu0
        %6767 = vmatprep.mubr.bf16.mxu0 0
        %6768 = vmatmul.mubr.bf16.gmra.mrb[0].mxu0 %v6714
        %v6769 = vpop.f32.mrb[0].mxu0
        %v6770 = vadd.f32 %v6692, %v6769
        %v6771 = vpop.f32.mrb[0].mxu0
        %v6772 = vpop.f32.mrb[0].mxu0
        %v6773 = vadd.f32 %v6694, %v6772
        %v6774 = vpop.f32.mrb[0].mxu0
        %6775 = vmatprep.mubr.bf16.mxu0 0
        %6776 = vmatmul.mubr.bf16.gmra.mrb[0].mxu0 %v6717
        %v6777 = vpop.f32.mrb[0].mxu0
        %v6778 = vadd.f32 %v6696, %v6777
        %v6779 = vpop.f32.mrb[0].mxu0
        %v6780 = vpop.f32.mrb[0].mxu0
        %v6781 = vadd.f32 %v6698, %v6780
        %v6782 = vpop.f32.mrb[0].mxu0
        %6783 = vdwg.mxu0
        %6792 = vrot.lane.b32.xlu0 %v4083, 112
        %v6793 = vpop.permute.xlu0 %6792
        %6794 = vrot.lane.b32.xlu0 %v4084, 112
        %v6795 = vpop.permute.xlu0 %6794
        %6796 = vrot.lane.b32.xlu0 %v4085, 112
        %v6797 = vpop.permute.xlu0 %6796
        %6798 = vrot.lane.b32.xlu0 %v4086, 112
        %v6799 = vpop.permute.xlu0 %6798
        %6800 = vrot.lane.b32.xlu0 %v4087, 112
        %v6801 = vpop.permute.xlu0 %6800
        %6802 = vrot.lane.b32.xlu0 %v4088, 112
        %v6803 = vpop.permute.xlu0 %6802
        %6804 = vrot.lane.b32.xlu0 %v4089, 112
        %v6805 = vpop.permute.xlu0 %6804
        %6806 = vrot.lane.b32.xlu0 %v4090, 112
        %v6807 = vpop.permute.xlu0 %6806
        %v6816 = vmul.f32 %v6754, %v6793
        %v6817 = vmul.f32 %v6757, %v6795
        %v6818 = vmul.f32 %v6762, %v6797
        %v6819 = vmul.f32 %v6765, %v6799
        %v6820 = vmul.f32 %v6770, %v6801
        %v6821 = vmul.f32 %v6773, %v6803
        %v6822 = vmul.f32 %v6778, %v6805
        %v6823 = vmul.f32 %v6781, %v6807
        %v6824 = vpack.c.bf16 %v6817, %v6816
        %v6825 = vpack.c.bf16 %v6819, %v6818
        %v6826 = vpack.c.bf16 %v6821, %v6820
        %v6827 = vpack.c.bf16 %v6823, %v6822
        %6828 = vmatprep.subr.bf16.mxu0 0
        %6829 = vmatpush1.bf16.msra.mxu0 %v6824
        %6830 = vmatprep.subr.bf16.mxu0 0
        %6831 = vmatpush1.bf16.msra.mxu0 %v6825
        %6832 = vmatprep.subr.bf16.mxu0 0
        %6833 = vmatpush1.bf16.msra.mxu0 %v6826
        %6834 = vmatprep.subr.bf16.mxu0 0
        %6835 = vmatpush1.bf16.msra.mxu0 %v6827
        %6836 = vmatprep.subr.bf16.mxu0 0
        %6837 = vmatpush1.bf16.msra.mxu0 0
        %6838 = vmatprep.subr.bf16.mxu0 0
        %6839 = vmatpush1.bf16.msra.mxu0 0
        %6840 = vmatprep.subr.bf16.mxu0 0
        %6841 = vmatpush1.bf16.msra.mxu0 0
        %6842 = vmatprep.subr.bf16.mxu0 0
        %6843 = vmatpush1.bf16.msra.mxu0 0
        %6844 = vmatprep.subr.bf16.mxu0 0
        %6845 = vmatpush1.bf16.msra.mxu0 0
        %6846 = vmatprep.subr.bf16.mxu0 0
        %6847 = vmatpush1.bf16.msra.mxu0 0
        %6848 = vmatprep.subr.bf16.mxu0 0
        %6849 = vmatpush1.bf16.msra.mxu0 0
        %6850 = vmatprep.subr.bf16.mxu0 0
        %6851 = vmatpush1.bf16.msra.mxu0 0
        %6852 = vmatprep.subr.bf16.mxu0 0
        %6853 = vmatpush1.bf16.msra.mxu0 0
        %6854 = vmatprep.subr.bf16.mxu0 0
        %6855 = vmatpush1.bf16.msra.mxu0 0
        %6856 = vmatprep.subr.bf16.mxu0 0
        %6857 = vmatpush1.bf16.msra.mxu0 0
        %6858 = vmatprep.subr.bf16.mxu0 0
        %6859 = vmatpush1.bf16.msra.mxu0 0
        %6860 = vmatprep.mubr.bf16.mxu0 0
        %6861 = vmatmul.mubr.bf16.gmra.mrb[0].mxu0 %v4944
        %v6862 = vpop.f32.mrb[0].mxu0
        %v6863 = vadd.f32 0.0, %v6862
        %v6864 = vpop.f32.mrb[0].mxu0
        %v6865 = vpop.f32.mrb[0].mxu0
        %v6866 = vadd.f32 0.0, %v6865
        %v6867 = vpop.f32.mrb[0].mxu0
        %6868 = vmatprep.mubr.bf16.mxu0 0
        %6869 = vmatmul.mubr.bf16.gmra.mrb[0].mxu0 %v4947
        %v6870 = vpop.f32.mrb[0].mxu0
        %v6871 = vadd.f32 0.0, %v6870
        %v6872 = vpop.f32.mrb[0].mxu0
        %v6873 = vpop.f32.mrb[0].mxu0
        %v6874 = vadd.f32 0.0, %v6873
        %v6875 = vpop.f32.mrb[0].mxu0
        %6876 = vmatprep.mubr.bf16.mxu0 0
        %6877 = vmatmul.mubr.bf16.gmra.mrb[0].mxu0 %v4950
        %v6878 = vpop.f32.mrb[0].mxu0
        %v6879 = vadd.f32 0.0, %v6878
        %v6880 = vpop.f32.mrb[0].mxu0
        %v6881 = vpop.f32.mrb[0].mxu0
        %v6882 = vadd.f32 0.0, %v6881
        %v6883 = vpop.f32.mrb[0].mxu0
        %6884 = vmatprep.mubr.bf16.mxu0 0
        %6885 = vmatmul.mubr.bf16.gmra.mrb[0].mxu0 %v4953
        %v6886 = vpop.f32.mrb[0].mxu0
        %v6887 = vadd.f32 0.0, %v6886
        %v6888 = vpop.f32.mrb[0].mxu0
        %v6889 = vpop.f32.mrb[0].mxu0
        %v6890 = vadd.f32 0.0, %v6889
        %v6891 = vpop.f32.mrb[0].mxu0
        %6892 = vdwg.mxu0
        %6901 = vrot.lane.b32.xlu0 %v6863, 48
        %v6902 = vpop.permute.xlu0 %6901
        %6903 = vrot.lane.b32.xlu0 %v6866, 48
        %v6904 = vpop.permute.xlu0 %6903
        %6905 = vrot.lane.b32.xlu0 %v6871, 48
        %v6906 = vpop.permute.xlu0 %6905
        %6907 = vrot.lane.b32.xlu0 %v6874, 48
        %v6908 = vpop.permute.xlu0 %6907
        %6909 = vrot.lane.b32.xlu0 %v6879, 48
        %v6910 = vpop.permute.xlu0 %6909
        %6911 = vrot.lane.b32.xlu0 %v6882, 48
        %v6912 = vpop.permute.xlu0 %6911
        %6913 = vrot.lane.b32.xlu0 %v6887, 48
        %v6914 = vpop.permute.xlu0 %6913
        %6915 = vrot.lane.b32.xlu0 %v6890, 48
        %v6916 = vpop.permute.xlu0 %6915
        %6925 = vst.msk [vmem:[#allocation3 + $0x40] sm:$0xff] %vm5604, %v6902
        %6926 = vst.msk [vmem:[#allocation3 + $0x48] sm:$0xff] %vm5604, %v6904
        %6927 = vst.msk [vmem:[#allocation3 + $0x50] sm:$0xff] %vm5604, %v6906
        %6928 = vst.msk [vmem:[#allocation3 + $0x58] sm:$0xff] %vm5604, %v6908
        %6929 = vst.msk [vmem:[#allocation3 + $0x60] sm:$0xff] %vm5604, %v6910
        %6930 = vst.msk [vmem:[#allocation3 + $0x68] sm:$0xff] %vm5604, %v6912
        %6931 = vst.msk [vmem:[#allocation3 + $0x70] sm:$0xff] %vm5604, %v6914
        %6932 = vst.msk [vmem:[#allocation3 + $0x78] sm:$0xff] %vm5604, %v6916
        %v6933 = vld [vmem:[#allocation3] sm:$0xff]
        %v6934 = vld [vmem:[#allocation3 + $0x8] sm:$0xff]
        %v6935 = vld [vmem:[#allocation3 + $0x10] sm:$0xff]
        %v6936 = vld [vmem:[#allocation3 + $0x18] sm:$0xff]
        %v6937 = vld [vmem:[#allocation3 + $0x20] sm:$0xff]
        %v6938 = vld [vmem:[#allocation3 + $0x28] sm:$0xff]
        %v6939 = vld [vmem:[#allocation3 + $0x30] sm:$0xff]
        %v6940 = vld [vmem:[#allocation3 + $0x38] sm:$0xff]
        %v6941 = vld [vmem:[#allocation3 + $0x40] sm:$0xff]
        %v6942 = vld [vmem:[#allocation3 + $0x48] sm:$0xff]
        %v6943 = vld [vmem:[#allocation3 + $0x50] sm:$0xff]
        %v6944 = vld [vmem:[#allocation3 + $0x58] sm:$0xff]
        %v6945 = vld [vmem:[#allocation3 + $0x60] sm:$0xff]
        %v6946 = vld [vmem:[#allocation3 + $0x68] sm:$0xff]
        %v6947 = vld [vmem:[#allocation3 + $0x70] sm:$0xff]
        %v6948 = vld [vmem:[#allocation3 + $0x78] sm:$0xff]
        %v6949 = vpack.c.bf16 %v6934, %v6933
        %v6950 = vpack.c.bf16 %v6936, %v6935
        %v6951 = vpack.c.bf16 %v6938, %v6937
        %v6952 = vpack.c.bf16 %v6940, %v6939
        %v6953 = vpack.c.bf16 %v6942, %v6941
        %v6954 = vpack.c.bf16 %v6944, %v6943
        %v6955 = vpack.c.bf16 %v6946, %v6945
        %v6956 = vpack.c.bf16 %v6948, %v6947
        %v6957 = vld [vmem:[%s3] sm:$0xf]
        %v6958 = vld [vmem:[%s3 + $0x4] sm:$0xf]
        %v6959 = vld [vmem:[%s3 + $0x8] sm:$0xf]
        %v6960 = vld [vmem:[%s3 + $0xc] sm:$0xf]
        %v6961 = vld [vmem:[%s3 + $0x10] sm:$0xf]
        %v6962 = vld [vmem:[%s3 + $0x14] sm:$0xf]
        %v6963 = vld [vmem:[%s3 + $0x18] sm:$0xf]
        %v6964 = vld [vmem:[%s3 + $0x1c] sm:$0xf]
        %v6973 = vunpack.c.l.b16 %v6957
        %v6974 = vunpack.c.l.b16 %v6958
        %v6975 = vunpack.c.l.b16 %v6959
        %v6976 = vunpack.c.l.b16 %v6960
        %v6977 = vunpack.c.l.b16 %v6961
        %v6978 = vunpack.c.l.b16 %v6962
        %v6979 = vunpack.c.l.b16 %v6963
        %v6980 = vunpack.c.l.b16 %v6964
        %v6981 = vpack.c.b16 %v6974, %v6973
        %v6982 = vpack.c.b16 %v6976, %v6975
        %v6983 = vpack.c.b16 %v6978, %v6977
        %v6984 = vpack.c.b16 %v6980, %v6979
        %v6990 = vsel %vm405, %v6949, 0
        %v6993 = vsel %vm405, %v6950, 0
        %v6996 = vsel %vm405, %v6951, 0
        %v6999 = vsel %vm405, %v6952, 0
        %v7002 = vsel %vm405, %v6953, 0
        %v7005 = vsel %vm405, %v6954, 0
        %v7008 = vsel %vm405, %v6955, 0
        %v7011 = vsel %vm405, %v6956, 0
        %7013 = vmatprep.subr.bf16.mxu0 0
        %7014 = vmatpush1.bf16.msra.mxu0 %v6981
        %7015 = vmatprep.subr.bf16.mxu0 0
        %7016 = vmatpush1.bf16.msra.mxu0 %v6982
        %7017 = vmatprep.subr.bf16.mxu0 0
        %7018 = vmatpush1.bf16.msra.mxu0 %v6983
        %7019 = vmatprep.subr.bf16.mxu0 0
        %7020 = vmatpush1.bf16.msra.mxu0 %v6984
        %7021 = vmatprep.subr.bf16.mxu0 0
        %7022 = vmatpush1.bf16.msra.mxu0 0
        %7023 = vmatprep.subr.bf16.mxu0 0
        %7024 = vmatpush1.bf16.msra.mxu0 0
        %7025 = vmatprep.subr.bf16.mxu0 0
        %7026 = vmatpush1.bf16.msra.mxu0 0
        %7027 = vmatprep.subr.bf16.mxu0 0
        %7028 = vmatpush1.bf16.msra.mxu0 0
        %7029 = vmatprep.subr.bf16.mxu0 0
        %7030 = vmatpush1.bf16.msra.mxu0 0
        %7031 = vmatprep.subr.bf16.mxu0 0
        %7032 = vmatpush1.bf16.msra.mxu0 0
        %7033 = vmatprep.subr.bf16.mxu0 0
        %7034 = vmatpush1.bf16.msra.mxu0 0
        %7035 = vmatprep.subr.bf16.mxu0 0
        %7036 = vmatpush1.bf16.msra.mxu0 0
        %7037 = vmatprep.subr.bf16.mxu0 0
        %7038 = vmatpush1.bf16.msra.mxu0 0
        %7039 = vmatprep.subr.bf16.mxu0 0
        %7040 = vmatpush1.bf16.msra.mxu0 0
        %7041 = vmatprep.subr.bf16.mxu0 0
        %7042 = vmatpush1.bf16.msra.mxu0 0
        %7043 = vmatprep.subr.bf16.mxu0 0
        %7044 = vmatpush1.bf16.msra.mxu0 0
        %7045 = vmatprep.mubr.bf16.mxu0 0
        %7046 = vmatmul.mubr.bf16.gmra.mrb[0].mxu0 %v6990
        %v7047 = vpop.f32.mrb[0].mxu0
        %v7048 = vadd.f32 0.0, %v7047
        %v7049 = vpop.f32.mrb[0].mxu0
        %v7050 = vpop.f32.mrb[0].mxu0
        %v7051 = vadd.f32 0.0, %v7050
        %v7052 = vpop.f32.mrb[0].mxu0
        %7053 = vmatprep.mubr.bf16.mxu0 0
        %7054 = vmatmul.mubr.bf16.gmra.mrb[0].mxu0 %v6993
        %v7055 = vpop.f32.mrb[0].mxu0
        %v7056 = vadd.f32 0.0, %v7055
        %v7057 = vpop.f32.mrb[0].mxu0
        %v7058 = vpop.f32.mrb[0].mxu0
        %v7059 = vadd.f32 0.0, %v7058
        %v7060 = vpop.f32.mrb[0].mxu0
        %7061 = vmatprep.mubr.bf16.mxu0 0
        %7062 = vmatmul.mubr.bf16.gmra.mrb[0].mxu0 %v6996
        %v7063 = vpop.f32.mrb[0].mxu0
        %v7064 = vadd.f32 0.0, %v7063
        %v7065 = vpop.f32.mrb[0].mxu0
        %v7066 = vpop.f32.mrb[0].mxu0
        %v7067 = vadd.f32 0.0, %v7066
        %v7068 = vpop.f32.mrb[0].mxu0
        %7069 = vmatprep.mubr.bf16.mxu0 0
        %7070 = vmatmul.mubr.bf16.gmra.mrb[0].mxu0 %v6999
        %v7071 = vpop.f32.mrb[0].mxu0
        %v7072 = vadd.f32 0.0, %v7071
        %v7073 = vpop.f32.mrb[0].mxu0
        %v7074 = vpop.f32.mrb[0].mxu0
        %v7075 = vadd.f32 0.0, %v7074
        %v7076 = vpop.f32.mrb[0].mxu0
        %7077 = vmatprep.mubr.bf16.mxu0 0
        %7078 = vmatmul.mubr.bf16.gmra.mrb[0].mxu0 %v7002
        %v7079 = vpop.f32.mrb[0].mxu0
        %v7080 = vadd.f32 0.0, %v7079
        %v7081 = vpop.f32.mrb[0].mxu0
        %v7082 = vpop.f32.mrb[0].mxu0
        %v7083 = vadd.f32 0.0, %v7082
        %v7084 = vpop.f32.mrb[0].mxu0
        %7085 = vmatprep.mubr.bf16.mxu0 0
        %7086 = vmatmul.mubr.bf16.gmra.mrb[0].mxu0 %v7005
        %v7087 = vpop.f32.mrb[0].mxu0
        %v7088 = vadd.f32 0.0, %v7087
        %v7089 = vpop.f32.mrb[0].mxu0
        %v7090 = vpop.f32.mrb[0].mxu0
        %v7091 = vadd.f32 0.0, %v7090
        %v7092 = vpop.f32.mrb[0].mxu0
        %7093 = vmatprep.mubr.bf16.mxu0 0
        %7094 = vmatmul.mubr.bf16.gmra.mrb[0].mxu0 %v7008
        %v7095 = vpop.f32.mrb[0].mxu0
        %v7096 = vadd.f32 0.0, %v7095
        %v7097 = vpop.f32.mrb[0].mxu0
        %v7098 = vpop.f32.mrb[0].mxu0
        %v7099 = vadd.f32 0.0, %v7098
        %v7100 = vpop.f32.mrb[0].mxu0
        %7101 = vmatprep.mubr.bf16.mxu0 0
        %7102 = vmatmul.mubr.bf16.gmra.mrb[0].mxu0 %v7011
        %v7103 = vpop.f32.mrb[0].mxu0
        %v7104 = vadd.f32 0.0, %v7103
        %v7105 = vpop.f32.mrb[0].mxu0
        %v7106 = vpop.f32.mrb[0].mxu0
        %v7107 = vadd.f32 0.0, %v7106
        %v7108 = vpop.f32.mrb[0].mxu0
        %7109 = vdwg.mxu0
        %v7110 = vsel %vm493, %v7048, 0.0
        %7111 = vadd.xlane.f32.xlu0 %v7110
        %v7112 = vpop.xlane.xlu0 %7111
        %v7113 = vsel %vm493, %v7051, 0.0
        %7114 = vadd.xlane.f32.xlu0 %v7113
        %v7115 = vpop.xlane.xlu0 %7114
        %v7116 = vsel %vm493, %v7056, 0.0
        %7117 = vadd.xlane.f32.xlu0 %v7116
        %v7118 = vpop.xlane.xlu0 %7117
        %v7119 = vsel %vm493, %v7059, 0.0
        %7120 = vadd.xlane.f32.xlu0 %v7119
        %v7121 = vpop.xlane.xlu0 %7120
        %v7122 = vsel %vm493, %v7064, 0.0
        %7123 = vadd.xlane.f32.xlu0 %v7122
        %v7124 = vpop.xlane.xlu0 %7123
        %v7125 = vsel %vm493, %v7067, 0.0
        %7126 = vadd.xlane.f32.xlu0 %v7125
        %v7127 = vpop.xlane.xlu0 %7126
        %v7128 = vsel %vm493, %v7072, 0.0
        %7129 = vadd.xlane.f32.xlu0 %v7128
        %v7130 = vpop.xlane.xlu0 %7129
        %v7131 = vsel %vm493, %v7075, 0.0
        %7132 = vadd.xlane.f32.xlu0 %v7131
        %v7133 = vpop.xlane.xlu0 %7132
        %v7134 = vsel %vm493, %v7080, 0.0
        %7135 = vadd.xlane.f32.xlu0 %v7134
        %v7136 = vpop.xlane.xlu0 %7135
        %v7137 = vsel %vm493, %v7083, 0.0
        %7138 = vadd.xlane.f32.xlu0 %v7137
        %v7139 = vpop.xlane.xlu0 %7138
        %v7140 = vsel %vm493, %v7088, 0.0
        %7141 = vadd.xlane.f32.xlu0 %v7140
        %v7142 = vpop.xlane.xlu0 %7141
        %v7143 = vsel %vm493, %v7091, 0.0
        %7144 = vadd.xlane.f32.xlu0 %v7143
        %v7145 = vpop.xlane.xlu0 %7144
        %v7146 = vsel %vm493, %v7096, 0.0
        %7147 = vadd.xlane.f32.xlu0 %v7146
        %v7148 = vpop.xlane.xlu0 %7147
        %v7149 = vsel %vm493, %v7099, 0.0
        %7150 = vadd.xlane.f32.xlu0 %v7149
        %v7151 = vpop.xlane.xlu0 %7150
        %v7152 = vsel %vm493, %v7104, 0.0
        %7153 = vadd.xlane.f32.xlu0 %v7152
        %v7154 = vpop.xlane.xlu0 %7153
        %v7155 = vsel %vm493, %v7107, 0.0
        %7156 = vadd.xlane.f32.xlu0 %v7155
        %v7157 = vpop.xlane.xlu0 %7156
        %v7158 = vrcp.pop 32.0
        %v7159 = vmul.f32 %v7112, %v7158
        %v7160 = vmul.f32 %v7115, %v7158
        %v7161 = vmul.f32 %v7118, %v7158
        %v7162 = vmul.f32 %v7121, %v7158
        %v7163 = vmul.f32 %v7124, %v7158
        %v7164 = vmul.f32 %v7127, %v7158
        %v7165 = vmul.f32 %v7130, %v7158
        %v7166 = vmul.f32 %v7133, %v7158
        %v7167 = vmul.f32 %v7136, %v7158
        %v7168 = vmul.f32 %v7139, %v7158
        %v7169 = vmul.f32 %v7142, %v7158
        %v7170 = vmul.f32 %v7145, %v7158
        %v7171 = vmul.f32 %v7148, %v7158
        %v7172 = vmul.f32 %v7151, %v7158
        %v7173 = vmul.f32 %v7154, %v7158
        %v7174 = vmul.f32 %v7157, %v7158
        %v7175 = vsub.f32 %v7048, %v7159
        %v7176 = vsub.f32 %v7051, %v7160
        %v7177 = vsub.f32 %v7056, %v7161
        %v7178 = vsub.f32 %v7059, %v7162
        %v7179 = vsub.f32 %v7064, %v7163
        %v7180 = vsub.f32 %v7067, %v7164
        %v7181 = vsub.f32 %v7072, %v7165
        %v7182 = vsub.f32 %v7075, %v7166
        %v7183 = vsub.f32 %v7080, %v7167
        %v7184 = vsub.f32 %v7083, %v7168
        %v7185 = vsub.f32 %v7088, %v7169
        %v7186 = vsub.f32 %v7091, %v7170
        %v7187 = vsub.f32 %v7096, %v7171
        %v7188 = vsub.f32 %v7099, %v7172
        %v7189 = vsub.f32 %v7104, %v7173
        %v7190 = vsub.f32 %v7107, %v7174
        %v7191 = vmul.f32 %v7175, %v7175
        %v7192 = vmul.f32 %v7176, %v7176
        %v7193 = vmul.f32 %v7177, %v7177
        %v7194 = vmul.f32 %v7178, %v7178
        %v7195 = vmul.f32 %v7179, %v7179
        %v7196 = vmul.f32 %v7180, %v7180
        %v7197 = vmul.f32 %v7181, %v7181
        %v7198 = vmul.f32 %v7182, %v7182
        %v7199 = vmul.f32 %v7183, %v7183
        %v7200 = vmul.f32 %v7184, %v7184
        %v7201 = vmul.f32 %v7185, %v7185
        %v7202 = vmul.f32 %v7186, %v7186
        %v7203 = vmul.f32 %v7187, %v7187
        %v7204 = vmul.f32 %v7188, %v7188
        %v7205 = vmul.f32 %v7189, %v7189
        %v7206 = vmul.f32 %v7190, %v7190
        %v7207 = vsel %vm493, %v7191, 0.0
        %7208 = vadd.xlane.f32.xlu0 %v7207
        %v7209 = vpop.xlane.xlu0 %7208
        %v7210 = vsel %vm493, %v7192, 0.0
        %7211 = vadd.xlane.f32.xlu0 %v7210
        %v7212 = vpop.xlane.xlu0 %7211
        %v7213 = vsel %vm493, %v7193, 0.0
        %7214 = vadd.xlane.f32.xlu0 %v7213
        %v7215 = vpop.xlane.xlu0 %7214
        %v7216 = vsel %vm493, %v7194, 0.0
        %7217 = vadd.xlane.f32.xlu0 %v7216
        %v7218 = vpop.xlane.xlu0 %7217
        %v7219 = vsel %vm493, %v7195, 0.0
        %7220 = vadd.xlane.f32.xlu0 %v7219
        %v7221 = vpop.xlane.xlu0 %7220
        %v7222 = vsel %vm493, %v7196, 0.0
        %7223 = vadd.xlane.f32.xlu0 %v7222
        %v7224 = vpop.xlane.xlu0 %7223
        %v7225 = vsel %vm493, %v7197, 0.0
        %7226 = vadd.xlane.f32.xlu0 %v7225
        %v7227 = vpop.xlane.xlu0 %7226
        %v7228 = vsel %vm493, %v7198, 0.0
        %7229 = vadd.xlane.f32.xlu0 %v7228
        %v7230 = vpop.xlane.xlu0 %7229
        %v7231 = vsel %vm493, %v7199, 0.0
        %7232 = vadd.xlane.f32.xlu0 %v7231
        %v7233 = vpop.xlane.xlu0 %7232
        %v7234 = vsel %vm493, %v7200, 0.0
        %7235 = vadd.xlane.f32.xlu0 %v7234
        %v7236 = vpop.xlane.xlu0 %7235
        %v7237 = vsel %vm493, %v7201, 0.0
        %7238 = vadd.xlane.f32.xlu0 %v7237
        %v7239 = vpop.xlane.xlu0 %7238
        %v7240 = vsel %vm493, %v7202, 0.0
        %7241 = vadd.xlane.f32.xlu0 %v7240
        %v7242 = vpop.xlane.xlu0 %7241
        %v7243 = vsel %vm493, %v7203, 0.0
        %7244 = vadd.xlane.f32.xlu0 %v7243
        %v7245 = vpop.xlane.xlu0 %7244
        %v7246 = vsel %vm493, %v7204, 0.0
        %7247 = vadd.xlane.f32.xlu0 %v7246
        %v7248 = vpop.xlane.xlu0 %7247
        %v7249 = vsel %vm493, %v7205, 0.0
        %7250 = vadd.xlane.f32.xlu0 %v7249
        %v7251 = vpop.xlane.xlu0 %7250
        %v7252 = vsel %vm493, %v7206, 0.0
        %7253 = vadd.xlane.f32.xlu0 %v7252
        %v7254 = vpop.xlane.xlu0 %7253
        %v7255 = vmul.f32 %v7209, %v7158
        %v7256 = vmul.f32 %v7212, %v7158
        %v7257 = vmul.f32 %v7215, %v7158
        %v7258 = vmul.f32 %v7218, %v7158
        %v7259 = vmul.f32 %v7221, %v7158
        %v7260 = vmul.f32 %v7224, %v7158
        %v7261 = vmul.f32 %v7227, %v7158
        %v7262 = vmul.f32 %v7230, %v7158
        %v7263 = vmul.f32 %v7233, %v7158
        %v7264 = vmul.f32 %v7236, %v7158
        %v7265 = vmul.f32 %v7239, %v7158
        %v7266 = vmul.f32 %v7242, %v7158
        %v7267 = vmul.f32 %v7245, %v7158
        %v7268 = vmul.f32 %v7248, %v7158
        %v7269 = vmul.f32 %v7251, %v7158
        %v7270 = vmul.f32 %v7254, %v7158
        %v7271 = vadd.f32 %v7255, 1e-06
        %v7272 = vadd.f32 %v7256, 1e-06
        %v7273 = vadd.f32 %v7257, 1e-06
        %v7274 = vadd.f32 %v7258, 1e-06
        %v7275 = vadd.f32 %v7259, 1e-06
        %v7276 = vadd.f32 %v7260, 1e-06
        %v7277 = vadd.f32 %v7261, 1e-06
        %v7278 = vadd.f32 %v7262, 1e-06
        %v7279 = vadd.f32 %v7263, 1e-06
        %v7280 = vadd.f32 %v7264, 1e-06
        %v7281 = vadd.f32 %v7265, 1e-06
        %v7282 = vadd.f32 %v7266, 1e-06
        %v7283 = vadd.f32 %v7267, 1e-06
        %v7284 = vadd.f32 %v7268, 1e-06
        %v7285 = vadd.f32 %v7269, 1e-06
        %v7286 = vadd.f32 %v7270, 1e-06
        %v7287 = vrsqrt.pop %v7271
        %v7288 = vrsqrt.pop %v7272
        %v7289 = vrsqrt.pop %v7273
        %v7290 = vrsqrt.pop %v7274
        %v7291 = vrsqrt.pop %v7275
        %v7292 = vrsqrt.pop %v7276
        %v7293 = vrsqrt.pop %v7277
        %v7294 = vrsqrt.pop %v7278
        %v7295 = vrsqrt.pop %v7279
        %v7296 = vrsqrt.pop %v7280
        %v7297 = vrsqrt.pop %v7281
        %v7298 = vrsqrt.pop %v7282
        %v7299 = vrsqrt.pop %v7283
        %v7300 = vrsqrt.pop %v7284
        %v7301 = vrsqrt.pop %v7285
        %v7302 = vrsqrt.pop %v7286
        %v7303 = vmul.f32 %v7175, %v7287
        %v7304 = vmul.f32 %v7176, %v7288
        %v7305 = vmul.f32 %v7177, %v7289
        %v7306 = vmul.f32 %v7178, %v7290
        %v7307 = vmul.f32 %v7179, %v7291
        %v7308 = vmul.f32 %v7180, %v7292
        %v7309 = vmul.f32 %v7181, %v7293
        %v7310 = vmul.f32 %v7182, %v7294
        %v7311 = vmul.f32 %v7183, %v7295
        %v7312 = vmul.f32 %v7184, %v7296
        %v7313 = vmul.f32 %v7185, %v7297
        %v7314 = vmul.f32 %v7186, %v7298
        %v7315 = vmul.f32 %v7187, %v7299
        %v7316 = vmul.f32 %v7188, %v7300
        %v7317 = vmul.f32 %v7189, %v7301
        %v7318 = vmul.f32 %v7190, %v7302
        %v7319 = vlaneseq
        %v7320 = vshrl.u32 %v7319, 7
        %v7321 = vsub.s32 0, %v7320
        %v7322 = vrot.slane %v350, %v7321
        %v7323 = vmul.f32 %v7303, %v7322
        %v7324 = vmul.f32 %v7304, %v7322
        %v7325 = vmul.f32 %v7305, %v7322
        %v7326 = vmul.f32 %v7306, %v7322
        %v7327 = vmul.f32 %v7307, %v7322
        %v7328 = vmul.f32 %v7308, %v7322
        %v7329 = vmul.f32 %v7309, %v7322
        %v7330 = vmul.f32 %v7310, %v7322
        %v7331 = vmul.f32 %v7311, %v7322
        %v7332 = vmul.f32 %v7312, %v7322
        %v7333 = vmul.f32 %v7313, %v7322
        %v7334 = vmul.f32 %v7314, %v7322
        %v7335 = vmul.f32 %v7315, %v7322
        %v7336 = vmul.f32 %v7316, %v7322
        %v7337 = vmul.f32 %v7317, %v7322
        %v7338 = vmul.f32 %v7318, %v7322
        %v7339 = vlaneseq
        %v7340 = vshrl.u32 %v7339, 7
        %v7341 = vsub.s32 1, %v7340
        %v7342 = vrot.slane %v350, %v7341
        %v7343 = vadd.f32 %v7323, %v7342
        %v7344 = vadd.f32 %v7324, %v7342
        %v7345 = vadd.f32 %v7325, %v7342
        %v7346 = vadd.f32 %v7326, %v7342
        %v7347 = vadd.f32 %v7327, %v7342
        %v7348 = vadd.f32 %v7328, %v7342
        %v7349 = vadd.f32 %v7329, %v7342
        %v7350 = vadd.f32 %v7330, %v7342
        %v7351 = vadd.f32 %v7331, %v7342
        %v7352 = vadd.f32 %v7332, %v7342
        %v7353 = vadd.f32 %v7333, %v7342
        %v7354 = vadd.f32 %v7334, %v7342
        %v7355 = vadd.f32 %v7335, %v7342
        %v7356 = vadd.f32 %v7336, %v7342
        %v7357 = vadd.f32 %v7337, %v7342
        %v7358 = vadd.f32 %v7338, %v7342
        %v7360 = vsel %vm493, %v346, 0
        %v7363 = vsel %vm493, %v347, 0
        %v7366 = vsel %vm493, %v348, 0
        %v7369 = vsel %vm493, %v349, 0
        %v7372 = vsel %vm493, %v7343, 0
        %v7375 = vsel %vm493, %v7344, 0
        %v7378 = vsel %vm493, %v7345, 0
        %v7381 = vsel %vm493, %v7346, 0
        %v7384 = vsel %vm493, %v7347, 0
        %v7387 = vsel %vm493, %v7348, 0
        %v7390 = vsel %vm493, %v7349, 0
        %v7393 = vsel %vm493, %v7350, 0
        %v7396 = vsel %vm493, %v7351, 0
        %v7399 = vsel %vm493, %v7352, 0
        %v7402 = vsel %vm493, %v7353, 0
        %v7405 = vsel %vm493, %v7354, 0
        %v7408 = vsel %vm493, %v7355, 0
        %v7411 = vsel %vm493, %v7356, 0
        %v7414 = vsel %vm493, %v7357, 0
        %v7417 = vsel %vm493, %v7358, 0
        %7419 = vmatprep.subr.mxu0 0.0
        %7420 = vmatpush1.xpose.msra.mxu0 %v7372
        %7421 = vmatprep.subr.mxu0 0.0
        %7422 = vmatpush1.xpose.msra.mxu0 %v7375
        %7423 = vmatprep.subr.mxu0 0.0
        %7424 = vmatpush1.xpose.msra.mxu0 %v7378
        %7425 = vmatprep.subr.mxu0 0.0
        %7426 = vmatpush1.xpose.msra.mxu0 %v7381
        %7427 = vmatprep.subr.mxu0 0.0
        %7428 = vmatpush1.xpose.msra.mxu0 %v7384
        %7429 = vmatprep.subr.mxu0 0.0
        %7430 = vmatpush1.xpose.msra.mxu0 %v7387
        %7431 = vmatprep.subr.mxu0 0.0
        %7432 = vmatpush1.xpose.msra.mxu0 %v7390
        %7433 = vmatprep.subr.mxu0 0.0
        %7434 = vmatpush1.xpose.msra.mxu0 %v7393
        %7435 = vmatprep.subr.mxu0 0.0
        %7436 = vmatpush1.xpose.msra.mxu0 %v7396
        %7437 = vmatprep.subr.mxu0 0.0
        %7438 = vmatpush1.xpose.msra.mxu0 %v7399
        %7439 = vmatprep.subr.mxu0 0.0
        %7440 = vmatpush1.xpose.msra.mxu0 %v7402
        %7441 = vmatprep.subr.mxu0 0.0
        %7442 = vmatpush1.xpose.msra.mxu0 %v7405
        %7443 = vmatprep.subr.mxu0 0.0
        %7444 = vmatpush1.xpose.msra.mxu0 %v7408
        %7445 = vmatprep.subr.mxu0 0.0
        %7446 = vmatpush1.xpose.msra.mxu0 %v7411
        %7447 = vmatprep.subr.mxu0 0.0
        %7448 = vmatpush1.xpose.msra.mxu0 %v7414
        %7449 = vmatprep.subr.mxu0 0.0
        %7450 = vmatpush1.xpose.msra.mxu0 %v7417
        %7451 = vmatprep.subr.mxu0 0.0
        %7452 = vmatpush1.xpose.msra.mxu0 0.0
        %7453 = vmatprep.subr.mxu0 0.0
        %7454 = vmatpush1.xpose.msra.mxu0 0.0
        %7455 = vmatprep.subr.mxu0 0.0
        %7456 = vmatpush1.xpose.msra.mxu0 0.0
        %7457 = vmatprep.subr.mxu0 0.0
        %7458 = vmatpush1.xpose.msra.mxu0 0.0
        %7459 = vmatprep.subr.mxu0 0.0
        %7460 = vmatpush1.xpose.msra.mxu0 0.0
        %7461 = vmatprep.subr.mxu0 0.0
        %7462 = vmatpush1.xpose.msra.mxu0 0.0
        %7463 = vmatprep.subr.mxu0 0.0
        %7464 = vmatpush1.xpose.msra.mxu0 0.0
        %7465 = vmatprep.subr.mxu0 0.0
        %7466 = vmatpush1.xpose.msra.mxu0 0.0
        %7467 = vmatprep.subr.mxu0 0.0
        %7468 = vmatpush1.xpose.msra.mxu0 0.0
        %7469 = vmatprep.subr.mxu0 0.0
        %7470 = vmatpush1.xpose.msra.mxu0 0.0
        %7471 = vmatprep.subr.mxu0 0.0
        %7472 = vmatpush1.xpose.msra.mxu0 0.0
        %7473 = vmatprep.subr.mxu0 0.0
        %7474 = vmatpush1.xpose.msra.mxu0 0.0
        %7475 = vmatprep.subr.mxu0 0.0
        %7476 = vmatpush1.xpose.msra.mxu0 0.0
        %7477 = vmatprep.subr.mxu0 0.0
        %7478 = vmatpush1.xpose.msra.mxu0 0.0
        %7479 = vmatprep.subr.mxu0 0.0
        %7480 = vmatpush1.xpose.msra.mxu0 0.0
        %7481 = vmatprep.subr.mxu0 0.0
        %7482 = vmatpush1.xpose.msra.mxu0 0.0
        %7483 = vmatprep.mubr.f32.mxu0 0.0
        %7484 = vmatmul.mubr.f32.gmra.mrb[0].mxu0 %v7360
        %v7485 = vpop.f32.mrb[0].mxu0
        %v7486 = vadd.f32 0.0, %v7485
        %v7487 = vpop.f32.mrb[0].mxu0
        %7488 = vmatprep.mubr.f32.mxu0 0.0
        %7489 = vmatmul.mubr.f32.gmra.mrb[0].mxu0 %v7363
        %v7490 = vpop.f32.mrb[0].mxu0
        %v7491 = vadd.f32 0.0, %v7490
        %v7492 = vpop.f32.mrb[0].mxu0
        %7493 = vmatprep.mubr.f32.mxu0 0.0
        %7494 = vmatmul.mubr.f32.gmra.mrb[0].mxu0 %v7366
        %v7495 = vpop.f32.mrb[0].mxu0
        %v7496 = vadd.f32 0.0, %v7495
        %v7497 = vpop.f32.mrb[0].mxu0
        %7498 = vmatprep.mubr.f32.mxu0 0.0
        %7499 = vmatmul.mubr.f32.gmra.mrb[0].mxu0 %v7369
        %v7500 = vpop.f32.mrb[0].mxu0
        %v7501 = vadd.f32 0.0, %v7500
        %v7502 = vpop.f32.mrb[0].mxu0
        %7503 = vdwg.mxu0
        %7504 = vst.msk [vmem:[%s299] sm:$0xff] %vm405, %v7486
        %7505 = vst.msk [vmem:[%s299 + $0x8] sm:$0xff] %vm405, %v7491
        %7506 = vst.msk [vmem:[%s299 + $0x10] sm:$0xff] %vm405, %v7496
        %7507 = vst.msk [vmem:[%s299 + $0x18] sm:$0xff] %vm405, %v7501
        %7512 = vrot.lane.b32.xlu0 %v7486, 64
        %v7513 = vpop.permute.xlu0 %7512
        %7514 = vrot.lane.b32.xlu0 %v7491, 64
        %v7515 = vpop.permute.xlu0 %7514
        %7516 = vrot.lane.b32.xlu0 %v7496, 64
        %v7517 = vpop.permute.xlu0 %7516
        %7518 = vrot.lane.b32.xlu0 %v7501, 64
        %v7519 = vpop.permute.xlu0 %7518
        %s7524 = scalar_lea.vmem %s299, 32 [#allocation11]
        %7525 = vst.msk [vmem:[%s7524] sm:$0xff] %vm405, %v7513
        %7526 = vst.msk [vmem:[%s7524 + $0x8] sm:$0xff] %vm405, %v7515
        %7527 = vst.msk [vmem:[%s7524 + $0x10] sm:$0xff] %vm405, %v7517
        %7528 = vst.msk [vmem:[%s7524 + $0x18] sm:$0xff] %vm405, %v7519
        %s7529 = sand.u32 %s164, 1
        %s7530 = scalar_lea.sflag [#allocation6], %s7529
        %s7531 = sand.u32 %s164, 1
        %s7532 = smul.addr %s7531, 64
        %s7533 = scalar_lea.vmem [#allocation11], %s7532
        // Predicated region
        $region57: #{tpu_custom_call.1} parent=43 // pred_check
          %p7534 = pneg %p174
        $region58: #{tpu_custom_call.1} parent=43 // pred_check_branch
          %7536 = sbr.rel (%p7534) target = $region60
        $region59: #{tpu_custom_call.1} parent=43 // pred_region
          %s7537 = smul.u32 2, %s25
          %s7539 = ssub.s32 1024, 1024
          %7540 = vsyncadd %s7530, %s7539
          %s7541 = smul.addr %s7537, 4
          %s7542 = smul.addr %s7541, 128
          %s7543 = scalar_lea.hbm %s6, %s7542
          %s7544 = sshll.u32 %s7533, 4
          %s7545 = int_to_ptr.vmem [resolvable:$true] %s7544
          %7550 = dma.vmem_to_hbm [thread:$0]  %s7545, 1024, %s7543, %s7530, 128, 128, 8
        $region60: #{tpu_custom_call.1} parent=43 // pred_fallthru
          _
      $region44: #{tpu_custom_call.1} parent=5 // pred_fallthru
        _
      %p7551 = scmp.le.s32.totalorder 2, %s20
      // Predicated region
      $region61: #{tpu_custom_call.1} parent=5 // pred_check
        %p7552 = pneg %p7551
      $region62: #{tpu_custom_call.1} parent=5 // pred_check_branch
        %7554 = sbr.rel (%p7552) target = $region64
      $region63: #{tpu_custom_call.1} parent=5 // pred_region
        %s7555 = ssub.s32 %s20, 2
        // Predicated region
        $region65: #{tpu_custom_call.1} parent=63 // pred_check
          %p7556 = pneg %p180
        $region66: #{tpu_custom_call.1} parent=63 // pred_check_branch
          %7558 = sbr.rel (%p7556) target = $region68
        $region67: #{tpu_custom_call.1} parent=63 // pred_region
          %s7559 = sand.u32 %s165, 1
          %s7560 = scalar_lea.sflag [#allocation6], %s7559
          %s7561 = sand.u32 %s165, 1
          %s7562 = smul.addr %s7561, 64
          %s7563 = scalar_lea.vmem [#allocation11], %s7562
          %7564 = dma.done %s7560, 1024
        $region68: #{tpu_custom_call.1} parent=63 // pred_fallthru
          _
      $region64: #{tpu_custom_call.1} parent=5 // pred_fallthru
        _
    $region6: #{tpu_custom_call.1} parent=1 // loop_footer
      %s24 = sadd.s32 1, %s20
    $region7: #{tpu_custom_call.1} parent=1 // loop_footer_branch
      %19 = sbr.rel target = $region3
    $region8: #{tpu_custom_call.1} parent=1 // loop_exit
      _
    %7565 = vsyncpa [#allocation5], 1
    %s7566 = scalar_lea.sflag [#allocation5], 1
    %7567 = vsyncpa %s7566, 1
    %7568 = vsyncpa [#allocation9], 1
    %7569 = vsyncpa [#allocation6], 1
    %s7570 = scalar_lea.sflag [#allocation6], 1
    %7571 = vsyncpa %s7570, 1
    %7572 = vsyncpa [#allocation7], 1
    %s7573 = scalar_lea.sflag [#allocation7], 1
    %7574 = vsyncpa %s7573, 1

</llo_original>
